<compile_context>
chip_gen: v7x
topology: tpu7x:2x2x1
jax: 0.10.0
libtpu: 0.0.40
codegen_flags: <defaults>
</compile_context>

<pallas_src>
import functools

import jax
import jax.numpy as jnp
from jax.experimental import pallas as pl
from jax.experimental.pallas import tpu as pltpu

LN_EPS = 1e-5  # torch.nn.LayerNorm default

_PARAM_ORDER = ('bias', 'g1', 'b1', 'wqkv', 'bqkv', 'wproj', 'bproj',
                'g2', 'b2', 'wfc1', 'bfc1', 'wfc2', 'bfc2')

try:
    _BUFFERED_ONE = pl.Buffered(1)     # single-buffer grid-invariant operands
except Exception:                      # older jax without pl.Buffered
    _BUFFERED_ONE = None

_SINGLE_BUFFER_OK = None               # resolved on the first stage pallas_call


# ----------------------------------------------------------------------------------
# small math helpers (pure jnp -> reusable by kernels and the reference)
# ----------------------------------------------------------------------------------
def _layer_norm(x, gamma, beta):
    m = jnp.mean(x, axis=-1, keepdims=True)
    m2 = jnp.mean(x * x, axis=-1, keepdims=True)
    var = jnp.maximum(m2 - m * m, 0.0)
    return (x - m) * jax.lax.rsqrt(var + LN_EPS) * gamma + beta


def _gelu(x):
    # tanh-approximate GELU: one EUP tanh + a few VPU ops on the (T, hidden) block.
    # TODO(synk): torch.nn.GELU() default is the exact erf form; the tanh approx
    # differs by <~3e-3, below the bf16-matmul noise floor used here.
    c = jnp.float32(0.7978845608028654)          # sqrt(2/pi)
    return 0.5 * x * (1.0 + jnp.tanh(c * (x + jnp.float32(0.044715) * x * x * x)))


# ----------------------------------------------------------------------------------
# in-kernel data-movement helpers
# ----------------------------------------------------------------------------------
def _split_heads(x2d, H, hd, n_win, ws):
    # (T, H*hd) -> (H*n_win, ws, hd): heads become a leading batch dim using only
    # static lane slices + a leading-axis stack (no sublane transposes).
    heads = [x2d[:, h * hd:(h + 1) * hd] for h in range(H)]
    return jnp.stack(heads, axis=0).reshape(H * n_win, ws, hd)


def _merge_heads(x3, H, T):
    # (H*n_win, ws, hd) -> (T, H*hd), head-major lane order (matches torch's proj
    # input layout) so the output projection is one (T, C) @ (C, C) matmul.
    x3 = x3.reshape(H, T, x3.shape[-1])
    return jnp.concatenate([x3[h] for h in range(H)], axis=-1)


def _roll_tokens(x2d, shift, b_blk, L):
    # per-sequence cyclic roll along the token axis of a (b_blk*L, C) block
    if shift % L == 0:
        return x2d
    C = x2d.shape[-1]
    x3 = x2d.reshape(b_blk, L, C)
    x3 = jnp.roll(x3, shift, axis=1)
    return x3.reshape(b_blk * L, C)


# ----------------------------------------------------------------------------------
# Pallas kernel: the WHOLE stage (all blocks + shifts) for a chunk of whole
# sequences laid out as (T, C) tokens, T = b_blk * L.  Per-block params are stacked
# along a leading `depth` axis; `shifts` is a static per-block tuple.
# ----------------------------------------------------------------------------------
def _swin_stage_kernel(x_ref, bias_ref, g1_ref, b1_ref, wqkv_ref, bqkv_ref,
                       wproj_ref, bproj_ref, g2_ref, b2_ref,
                       wfc1_ref, bfc1_ref, wfc2_ref, bfc2_ref, out_ref,
                       *, shifts, L, num_heads, window_size):
    x = x_ref[...]                                   # (T, C) f32
    T, C = x.shape
    H, ws = num_heads, window_size
    hd = C // H
    nW = L // ws
    b_blk = T // L
    n_win = b_blk * nW

    for d, shift in enumerate(shifts):               # unrolled over stage depth
        # ---- LN1 + (shifted-)window multi-head attention -------------------
        xn = _layer_norm(x, g1_ref[d], b1_ref[d])
        if shift:
            xn = _roll_tokens(xn, -shift, b_blk, L)

        # fused QKV: one lane-dense (T, C) @ (C, 3C) bf16 matmul, one bias add
        qkv = jnp.dot(xn.astype(jnp.bfloat16), wqkv_ref[d],
                      preferred_element_type=jnp.float32) + bqkv_ref[d]   # (T, 3C)
        q = _split_heads(qkv[:, 0 * C:1 * C], H, hd, n_win, ws).astype(jnp.bfloat16)
        k = _split_heads(qkv[:, 1 * C:2 * C], H, hd, n_win, ws).astype(jnp.bfloat16)
        v = _split_heads(qkv[:, 2 * C:3 * C], H, hd, n_win, ws).astype(jnp.bfloat16)

        # head-batched scores / bias / softmax / AV (issued once for all heads)
        s = jnp.einsum('bqd,bkd->bqk', q, k,
                       preferred_element_type=jnp.float32)       # (H*n_win, ws, ws)
        s = (s.reshape(H, b_blk, nW, ws, ws)
             + bias_ref[d][:, None]).reshape(H * n_win, ws, ws)
        s = s - jnp.max(s, axis=-1, keepdims=True)
        e = jnp.exp(s)
        a = e * pl.reciprocal(jnp.sum(e, axis=-1, keepdims=True), approx=True)
        o = jnp.einsum('bqk,bkd->bqd', a.astype(jnp.bfloat16), v,
                       preferred_element_type=jnp.float32)       # (H*n_win, ws, hd)

        # fused output projection: heads concatenated on lanes -> (T, C) @ (C, C)
        o = _merge_heads(o, H, T)
        attn = jnp.dot(o.astype(jnp.bfloat16), wproj_ref[d],
                       preferred_element_type=jnp.float32) + bproj_ref[d]
        if shift:
            attn = _roll_tokens(attn, shift, b_blk, L)
        x = x + attn                                             # residual 1 (f32)

        # ---- LN2 + MLP -------------------------------------------------------
        un = _layer_norm(x, g2_ref[d], b2_ref[d])
        hid = jnp.dot(un.astype(jnp.bfloat16), wfc1_ref[d],
                      preferred_element_type=jnp.float32) + bfc1_ref[d]
        hid = _gelu(hid)
        # TODO(synk): for hidden >> 4*C on v7x, tile the FC2 matmul over T instead
        # of holding the full (T, hidden) f32 intermediate.
        y = jnp.dot(hid.astype(jnp.bfloat16), wfc2_ref[d],
                    preferred_element_type=jnp.float32) + bfc2_ref[d]
        x = x + y                                                # residual 2

    out_ref[...] = x.astype(out_ref.dtype)


# ----------------------------------------------------------------------------------
# generation-aware sizing
# ----------------------------------------------------------------------------------
def _physical_vmem_bytes():
    try:
        info = pltpu.get_tpu_info()
        for attr in ('vmem_capacity_bytes', 'vmem_bytes', 'vmem_size_bytes'):
            v = getattr(info, attr, None)
            if v:
                return int(v)
    except Exception:
        pass
    return 64 * 1024 * 1024            # conservative: v7x per-TensorCore VMEM


def _vmem_limit_bytes():
    # ~3/4 of physical VMEM: 48 MiB on v7x, 96 MiB on v5e/v6e; leaves headroom for
    # compiler scratch and the pipeline buffers.
    return (_physical_vmem_bytes() * 3) // 4


def _choose_b_blk(B, L, C, hidden, vmem_limit):
    """Whole sequences per grid step, sized so the f32 intermediates fit VMEM."""
    # rough live bytes/token in-kernel: f32 (x, xn, qkv, attn, un, y, hid) + bf16
    # MXU operand copies
    per_token = 4 * (8 * C + hidden) + 2 * (6 * C + hidden)
    target_tokens = max(128, min(4096, (vmem_limit // 3) // max(per_token, 1)))
    want = max(1, min(B, target_tokens // max(L, 1)))
    for d in range(want, 0, -1):
        if B % d == 0 and (d == B or (d * L) % 8 == 0):
            return d
    return B


def _invariant_spec(arr, single_buffer):
    nd = arr.ndim
    idx = lambda i, _nd=nd: (0,) * _nd
    if single_buffer and _BUFFERED_ONE is not None:
        try:
            return pl.BlockSpec(arr.shape, idx, pipeline_mode=_BUFFERED_ONE)
        except TypeError:              # pipeline_mode kwarg unavailable
            pass
    return pl.BlockSpec(arr.shape, idx)


# ----------------------------------------------------------------------------------
# stage wrapper
# ----------------------------------------------------------------------------------
def _stage_call(x_tok, stacked, shifts, b_blk, L, num_heads, window_size,
                vmem_limit, single_buffer):
    BT, C = x_tok.shape
    T_BLK = b_blk * L
    kernel = functools.partial(_swin_stage_kernel, shifts=tuple(shifts), L=L,
                               num_heads=num_heads, window_size=window_size)
    in_specs = ([pl.BlockSpec((T_BLK, C), lambda i: (i, 0))] +
                [_invariant_spec(stacked[name], single_buffer)
                 for name in _PARAM_ORDER])
    return pl.pallas_call(
        kernel,
        out_shape=jax.ShapeDtypeStruct((BT, C), jnp.float32),
        grid=(BT // T_BLK,),
        in_specs=in_specs,
        out_specs=pl.BlockSpec((T_BLK, C), lambda i: (i, 0)),
        compiler_params=pltpu.CompilerParams(
            # TODO(synk): verify "parallel" shards the batch-chunk grid across
            # v7x's 2 TensorCores; otherwise switch to pltpu.CORE_PARALLEL.
            dimension_semantics=("parallel",),
            vmem_limit_bytes=vmem_limit),
    )(x_tok, *[stacked[name] for name in _PARAM_ORDER])


def swin_stage_forward(x, stacked, shifts, b_blk=None):
    global _SINGLE_BUFFER_OK
    B, L, C = x.shape
    H = stacked['bias'].shape[1]
    ws = stacked['bias'].shape[-1]
    hidden = stacked['wfc1'].shape[-1]
    vmem_limit = _vmem_limit_bytes()
    if b_blk is None:
        b_blk = _choose_b_blk(B, L, C, hidden, vmem_limit)
    x_tok = x.reshape(B * L, C)
    args = (x_tok, stacked, shifts, b_blk, L, H, ws, vmem_limit)

    if _SINGLE_BUFFER_OK is None and _BUFFERED_ONE is not None:
        try:
            out = _stage_call(*args, single_buffer=True)
            _SINGLE_BUFFER_OK = True
        except Exception:
            _SINGLE_BUFFER_OK = False
            out = _stage_call(*args, single_buffer=False)
    else:
        out = _stage_call(*args, single_buffer=bool(_SINGLE_BUFFER_OK))
    return out.reshape(B, L, C)


# ----------------------------------------------------------------------------------
# parameter preparation (done once, outside the per-call path)
# ----------------------------------------------------------------------------------
def _relative_bias(rel_table, ws):
    # relative position bias for window_size=(1, ws): index[i, j] = i - j + ws - 1
    idx = jnp.arange(ws)[:, None] - jnp.arange(ws)[None, :] + (ws - 1)   # (ws, ws)
    return jnp.transpose(rel_table[idx], (2, 0, 1))                      # (H, ws, ws)


def _shift_mask(L, ws, shift):
    # same construction as the PyTorch shifted-window attention mask (1D)
    nW = L // ws
    if shift <= 0:
        return jnp.zeros((nW, ws, ws), jnp.float32)
    pos = jnp.arange(L)
    lab = jnp.where(pos >= L - shift, 2.0,
                    jnp.where(pos >= L - ws, 1.0, 0.0)).astype(jnp.float32)
    mw = lab.reshape(nW, ws)
    am = mw[:, None, :] - mw[:, :, None]
    return jnp.where(am != 0, jnp.float32(-100.0), jnp.float32(0.0))


def prepare_block_params(bp, num_heads, window_size, shift_size, L):
    C = bp['wqkv'].shape[0]
    H, ws = num_heads, window_size
    assert C % H == 0 and L % ws == 0
    hd = C // H
    scale = jnp.float32(hd ** (-0.5))

    wqkv = bp['wqkv'].astype(jnp.float32)                 # (C, 3C): x @ wqkv + b
    bqkv = bp['bqkv'].reshape(3 * C).astype(jnp.float32)
    # fold the attention scale into the Q columns of the fused QKV weight / bias
    col_scale = jnp.concatenate([jnp.full((C,), scale, jnp.float32),
                                 jnp.ones((2 * C,), jnp.float32)])
    wqkv = wqkv * col_scale[None, :]
    bqkv = bqkv * col_scale

    bias = (_relative_bias(bp['rel_table'].astype(jnp.float32), ws)[:, None]
            + _shift_mask(L, ws, shift_size)[None])       # (H, nW, ws, ws)

    return dict(
        bias=bias.astype(jnp.float32),
        g1=bp['g1'].reshape(1, C).astype(jnp.float32),
        b1=bp['b1'].reshape(1, C).astype(jnp.float32),
        wqkv=wqkv.astype(jnp.bfloat16),
        bqkv=bqkv.reshape(1, 3 * C),
        wproj=bp['wproj'].astype(jnp.bfloat16),           # (C, C), pre-transposed
        bproj=bp['bproj'].reshape(1, C).astype(jnp.float32),
        g2=bp['g2'].reshape(1, C).astype(jnp.float32),
        b2=bp['b2'].reshape(1, C).astype(jnp.float32),
        wfc1=bp['wfc1'].astype(jnp.bfloat16),              # (C, hidden)
        bfc1=bp['bfc1'].reshape(1, -1).astype(jnp.float32),
        wfc2=bp['wfc2'].astype(jnp.bfloat16),              # (hidden, C)
        bfc2=bp['bfc2'].reshape(1, C).astype(jnp.float32),
    )


def prepare_layer_params(raw_params, num_heads, window_size, L):
    """Per-block params stacked along a leading `depth` axis + static shift tuple."""
    blocks, shifts = [], []
    for i, bp in enumerate(raw_params['blocks']):
        shift = 0 if i % 2 == 0 else window_size // 2
        blocks.append(prepare_block_params(bp, num_heads, window_size, shift, L))
        shifts.append(shift)
    stacked = {name: jnp.stack([b[name] for b in blocks]) for name in _PARAM_ORDER}
    return stacked, tuple(shifts)


# ----------------------------------------------------------------------------------
# Optional upsample: nn.Sequential(nn.Upsample(scale), nn.Conv1d(L, L, 1, bias=False))
# on (B, L, C): Upsample (nearest) rescales the last dim, the 1x1 Conv1d mixes along
# L.  Implemented as a column-tiled (L, L) @ (L, B*C2) bf16 matmul (f32 accumulate).
# TODO(synk): the PyTorch code passes `input_resolution` (a tuple for shifted blocks)
# as the Conv1d channel count, which cannot construct; we interpret it as the int L.
# ----------------------------------------------------------------------------------
def _upsample_conv_kernel(w_ref, x_ref, o_ref):
    o_ref[...] = jnp.dot(w_ref[...], x_ref[...],
                         preferred_element_type=jnp.float32).astype(o_ref.dtype)


def upsample_forward(x, conv_w, mode='up'):
    B, L, C = x.shape
    xu = jnp.repeat(x, 2, axis=-1) if mode == 'up' else x[:, :, ::2]     # nearest
    C2 = xu.shape[-1]
    N = B * C2
    x2d = jnp.transpose(xu, (1, 0, 2)).reshape(L, N).astype(jnp.bfloat16)
    w = conv_w.astype(jnp.bfloat16)
    tn = N
    for cand in (512, 256, 128):
        if N % cand == 0:
            tn = cand
            break
    y2d = pl.pallas_call(
        _upsample_conv_kernel,
        out_shape=jax.ShapeDtypeStruct((L, N), jnp.float32),
        grid=(N // tn,),
        in_specs=[_invariant_spec(w, bool(_SINGLE_BUFFER_OK)),
                  pl.BlockSpec((L, tn), lambda j: (0, j))],
        out_specs=pl.BlockSpec((L, tn), lambda j: (0, j)),
        compiler_params=pltpu.CompilerParams(
            dimension_semantics=("parallel",),
            vmem_limit_bytes=_vmem_limit_bytes()),
    )(w, x2d)
    return jnp.transpose(y2d.reshape(L, B, C2), (1, 0, 2))


def basic_layer_up_forward(x, stacked, shifts, upsample_conv_w=None,
                           upsample_mode='up'):
    x = swin_stage_forward(x, stacked, shifts)
    if upsample_conv_w is not None:
        x = upsample_forward(x, upsample_conv_w, upsample_mode)
    return x


# ----------------------------------------------------------------------------------
# pure-JAX (f32) reference mirroring the PyTorch module, for a sanity check
# ----------------------------------------------------------------------------------
def _reference_layer(x, raw_params, num_heads, window_size, conv_w, mode):
    B, L, C = x.shape
    ws, H = window_size, num_heads
    nW, hd = L // ws, C // num_heads
    scale = hd ** (-0.5)
    for i, bp in enumerate(raw_params['blocks']):
        shift = 0 if i % 2 == 0 else ws // 2
        shortcut = x
        xn = _layer_norm(x, bp['g1'].reshape(C), bp['b1'].reshape(C))
        if shift > 0:
            xn = jnp.roll(xn, -shift, axis=1)
        xw = xn.reshape(B * nW, ws, C)
        qkv = xw @ bp['wqkv'] + bp['bqkv'].reshape(3 * C)
        qkv = qkv.reshape(B * nW, ws, 3, H, hd).transpose(2, 0, 3, 1, 4)
        q, k, v = qkv[0] * scale, qkv[1], qkv[2]                      # (BW, H, ws, hd)
        attn = q @ jnp.swapaxes(k, -1, -2)                            # (BW, H, ws, ws)
        attn = attn + _relative_bias(bp['rel_table'], ws)[None]
        mask = _shift_mask(L, ws, shift)
        attn = (attn.reshape(B, nW, H, ws, ws)
                + mask[None, :, None]).reshape(B * nW, H, ws, ws)
        attn = jax.nn.softmax(attn, axis=-1)
        o = (attn @ v).transpose(0, 2, 1, 3).reshape(B * nW, ws, C)
        o = o @ bp['wproj'] + bp['bproj'].reshape(C)
        o = o.reshape(B, L, C)
        if shift > 0:
            o = jnp.roll(o, shift, axis=1)
        x = shortcut + o
        xn2 = _layer_norm(x, bp['g2'].reshape(C), bp['b2'].reshape(C))
        hmid = jax.nn.gelu(xn2 @ bp['wfc1'] + bp['bfc1'].reshape(-1), approximate=False)
        x = x + hmid @ bp['wfc2'] + bp['bfc2'].reshape(C)
    if conv_w is not None:
        xu = jnp.repeat(x, 2, axis=-1) if mode == 'up' else x[:, :, ::2]
        x = jnp.einsum('oi,bic->boc', conv_w, xu)
    return x


if __name__ == "__main__":
    B, L, dim = 2, 16, 32
    num_heads, window_size, depth = 4, 8, 2
    mlp_ratio = 4.0
    hidden = int(dim * mlp_ratio)

    key = jax.random.PRNGKey(0)
    kx, kp, kc = jax.random.split(key, 3)
    x = jax.random.normal(kx, (B, L, dim), jnp.float32)

    block_keys = jax.random.split(kp, depth)
    blocks = []
    for bk in block_keys:
        ks = jax.random.split(bk, 9)
        blocks.append(dict(
            g1=jnp.ones((1, dim), jnp.float32),
            b1=jnp.zeros((1, dim), jnp.float32),
            wqkv=0.05 * jax.random.normal(ks[0], (dim, 3 * dim), jnp.float32),
            bqkv=0.02 * jax.random.normal(ks[1], (1, 3 * dim), jnp.float32),
            rel_table=0.02 * jax.random.normal(ks[2], (2 * window_size - 1, num_heads),
                                               jnp.float32),
            wproj=0.05 * jax.random.normal(ks[3], (dim, dim), jnp.float32),
            bproj=0.02 * jax.random.normal(ks[4], (1, dim), jnp.float32),
            g2=jnp.ones((1, dim), jnp.float32),
            b2=jnp.zeros((1, dim), jnp.float32),
            wfc1=0.05 * jax.random.normal(ks[5], (dim, hidden), jnp.float32),
            bfc1=0.02 * jax.random.normal(ks[6], (1, hidden), jnp.float32),
            wfc2=0.05 * jax.random.normal(ks[7], (hidden, dim), jnp.float32),
            bfc2=0.02 * jax.random.normal(ks[8], (1, dim), jnp.float32),
        ))
    raw_params = {'blocks': blocks}

    # Conv1d(L, L, kernel_size=1, bias=False) weight, size-1 kernel dim squeezed.
    upsample_w = 0.1 * jax.random.normal(kc, (L, L), jnp.float32)

    stacked, shifts = prepare_layer_params(raw_params, num_heads, window_size, L)
    out = basic_layer_up_forward(x, stacked, shifts, upsample_conv_w=upsample_w,
                                 upsample_mode='up')
    out = jax.block_until_ready(out)

    assert out.shape == (B, L, 2 * dim), out.shape
    assert bool(jnp.all(jnp.isfinite(out)))

    # sanity check against pure-f32 JAX reference (kernel uses bf16 MXU operands with
    # f32 accumulation + tanh GELU, hence the loose tolerance)
    ref = _reference_layer(x, raw_params, num_heads, window_size, upsample_w, 'up')
    max_err = float(jnp.max(jnp.abs(out - ref)))
    assert max_err < 0.1, max_err

    print("KERNEL_OK")
</pallas_src>

<mosaic_0001>
module attributes {stable_mosaic.version = 11 : i64} {
  func.func @_swin_stage_kernel(%arg0: i32, %arg1: memref<32x32xf32, #tpu.memory_space<vmem>>, %arg2: memref<2x4x2x8x8xf32, #tpu.memory_space<vmem>>, %arg3: memref<2x1x32xf32, #tpu.memory_space<vmem>>, %arg4: memref<2x1x32xf32, #tpu.memory_space<vmem>>, %arg5: memref<2x32x96xbf16, #tpu.memory_space<vmem>>, %arg6: memref<2x1x96xf32, #tpu.memory_space<vmem>>, %arg7: memref<2x32x32xbf16, #tpu.memory_space<vmem>>, %arg8: memref<2x1x32xf32, #tpu.memory_space<vmem>>, %arg9: memref<2x1x32xf32, #tpu.memory_space<vmem>>, %arg10: memref<2x1x32xf32, #tpu.memory_space<vmem>>, %arg11: memref<2x32x128xbf16, #tpu.memory_space<vmem>>, %arg12: memref<2x1x128xf32, #tpu.memory_space<vmem>>, %arg13: memref<2x128x32xbf16, #tpu.memory_space<vmem>>, %arg14: memref<2x1x32xf32, #tpu.memory_space<vmem>>, %arg15: memref<32x32xf32, #tpu.memory_space<vmem>>) attributes {dimension_semantics = [#tpu.dimension_semantics<parallel>], iteration_bounds = array<i64: 1>, scalar_prefetch = 0 : i64, scratch_operands = 0 : i64, tpu.core_type = #tpu.core_type<tc>, window_params = [{transform_indices = @transform_0, window_bounds = array<i64: 32, 32>}, {pipeline_mode = #tpu.pipeline_mode<synchronous>, transform_indices = @transform_1, window_bounds = array<i64: 2, 4, 2, 8, 8>}, {pipeline_mode = #tpu.pipeline_mode<synchronous>, transform_indices = @transform_2, window_bounds = array<i64: 2, 1, 32>}, {pipeline_mode = #tpu.pipeline_mode<synchronous>, transform_indices = @transform_3, window_bounds = array<i64: 2, 1, 32>}, {pipeline_mode = #tpu.pipeline_mode<synchronous>, transform_indices = @transform_4, window_bounds = array<i64: 2, 32, 96>}, {pipeline_mode = #tpu.pipeline_mode<synchronous>, transform_indices = @transform_5, window_bounds = array<i64: 2, 1, 96>}, {pipeline_mode = #tpu.pipeline_mode<synchronous>, transform_indices = @transform_6, window_bounds = array<i64: 2, 32, 32>}, {pipeline_mode = #tpu.pipeline_mode<synchronous>, transform_indices = @transform_7, window_bounds = array<i64: 2, 1, 32>}, {pipeline_mode = #tpu.pipeline_mode<synchronous>, transform_indices = @transform_8, window_bounds = array<i64: 2, 1, 32>}, {pipeline_mode = #tpu.pipeline_mode<synchronous>, transform_indices = @transform_9, window_bounds = array<i64: 2, 1, 32>}, {pipeline_mode = #tpu.pipeline_mode<synchronous>, transform_indices = @transform_10, window_bounds = array<i64: 2, 32, 128>}, {pipeline_mode = #tpu.pipeline_mode<synchronous>, transform_indices = @transform_11, window_bounds = array<i64: 2, 1, 128>}, {pipeline_mode = #tpu.pipeline_mode<synchronous>, transform_indices = @transform_12, window_bounds = array<i64: 2, 128, 32>}, {pipeline_mode = #tpu.pipeline_mode<synchronous>, transform_indices = @transform_13, window_bounds = array<i64: 2, 1, 32>}, {transform_indices = @transform_14, window_bounds = array<i64: 32, 32>}]} {
    %c0 = arith.constant 0 : index
    %c0_0 = arith.constant 0 : index
    %0 = vector.load %arg1[%c0, %c0_0] : memref<32x32xf32, #tpu.memory_space<vmem>>, vector<32x32xf32>
    %c0_1 = arith.constant 0 : index
    %c0_2 = arith.constant 0 : index
    %c0_3 = arith.constant 0 : index
    %1 = vector.load %arg3[%c0_1, %c0_2, %c0_3] : memref<2x1x32xf32, #tpu.memory_space<vmem>>, vector<1x1x32xf32>
    %2 = vector.shape_cast %1 : vector<1x1x32xf32> to vector<1x32xf32>
    %c0_4 = arith.constant 0 : index
    %c0_5 = arith.constant 0 : index
    %c0_6 = arith.constant 0 : index
    %3 = vector.load %arg4[%c0_4, %c0_5, %c0_6] : memref<2x1x32xf32, #tpu.memory_space<vmem>>, vector<1x1x32xf32>
    %4 = vector.shape_cast %3 : vector<1x1x32xf32> to vector<1x32xf32>
    %cst = arith.constant dense<0.000000e+00> : vector<32xf32>
    %5 = vector.multi_reduction <add>, %0, %cst [1] : vector<32x32xf32> to vector<32xf32>
    %6 = vector.shape_cast %5 : vector<32xf32> to vector<32x1xf32>
    %cst_7 = arith.constant 3.200000e+01 : f32
    %7 = vector.broadcast %cst_7 : f32 to vector<32x1xf32>
    %8 = arith.divf %6, %7 : vector<32x1xf32>
    %9 = arith.mulf %0, %0 : vector<32x32xf32>
    %cst_8 = arith.constant dense<0.000000e+00> : vector<32xf32>
    %10 = vector.multi_reduction <add>, %9, %cst_8 [1] : vector<32x32xf32> to vector<32xf32>
    %11 = vector.shape_cast %10 : vector<32xf32> to vector<32x1xf32>
    %cst_9 = arith.constant 3.200000e+01 : f32
    %12 = vector.broadcast %cst_9 : f32 to vector<32x1xf32>
    %13 = arith.divf %11, %12 : vector<32x1xf32>
    %14 = arith.mulf %8, %8 : vector<32x1xf32>
    %15 = arith.subf %13, %14 : vector<32x1xf32>
    %cst_10 = arith.constant 0.000000e+00 : f32
    %16 = vector.broadcast %cst_10 : f32 to vector<32x1xf32>
    %17 = arith.maximumf %15, %16 : vector<32x1xf32>
    %18 = vector.broadcast %8 : vector<32x1xf32> to vector<32x32xf32>
    %19 = arith.subf %0, %18 : vector<32x32xf32>
    %cst_11 = arith.constant 9.99999974E-6 : f32
    %20 = vector.broadcast %cst_11 : f32 to vector<32x1xf32>
    %21 = arith.addf %17, %20 : vector<32x1xf32>
    %22 = math.rsqrt %21 : vector<32x1xf32>
    %23 = vector.broadcast %22 : vector<32x1xf32> to vector<32x32xf32>
    %24 = arith.mulf %19, %23 : vector<32x32xf32>
    %25 = vector.broadcast %2 : vector<1x32xf32> to vector<32x32xf32>
    %26 = arith.mulf %24, %25 : vector<32x32xf32>
    %27 = vector.broadcast %4 : vector<1x32xf32> to vector<32x32xf32>
    %28 = arith.addf %26, %27 : vector<32x32xf32>
    %29 = arith.truncf %28 : vector<32x32xf32> to vector<32x32xbf16>
    %c0_12 = arith.constant 0 : index
    %c0_13 = arith.constant 0 : index
    %c0_14 = arith.constant 0 : index
    %30 = vector.load %arg5[%c0_12, %c0_13, %c0_14] : memref<2x32x96xbf16, #tpu.memory_space<vmem>>, vector<1x32x96xbf16>
    %31 = vector.shape_cast %30 : vector<1x32x96xbf16> to vector<32x96xbf16>
    %cst_15 = arith.constant dense<0.000000e+00> : vector<32x96xf32>
    %32 = tpu.matmul %29, %31, %cst_15 {dimension_numbers = #tpu.dot_dimension_numbers<[1], [0], [0], [1], [0, 0, 1, 1], [], []>} : vector<32x32xbf16>, vector<32x96xbf16>, vector<32x96xf32> -> vector<32x96xf32>
    %c0_16 = arith.constant 0 : index
    %c0_17 = arith.constant 0 : index
    %c0_18 = arith.constant 0 : index
    %33 = vector.load %arg6[%c0_16, %c0_17, %c0_18] : memref<2x1x96xf32, #tpu.memory_space<vmem>>, vector<1x1x96xf32>
    %34 = vector.shape_cast %33 : vector<1x1x96xf32> to vector<1x96xf32>
    %35 = vector.broadcast %34 : vector<1x96xf32> to vector<32x96xf32>
    %36 = arith.addf %32, %35 : vector<32x96xf32>
    %37 = vector.extract_strided_slice %36 {offsets = [0, 0], sizes = [32, 32], strides = [1, 1]} : vector<32x96xf32> to vector<32x32xf32>
    %38 = vector.extract_strided_slice %37 {offsets = [0, 0], sizes = [32, 8], strides = [1, 1]} : vector<32x32xf32> to vector<32x8xf32>
    %39 = vector.extract_strided_slice %37 {offsets = [0, 8], sizes = [32, 8], strides = [1, 1]} : vector<32x32xf32> to vector<32x8xf32>
    %40 = vector.extract_strided_slice %37 {offsets = [0, 16], sizes = [32, 8], strides = [1, 1]} : vector<32x32xf32> to vector<32x8xf32>
    %41 = vector.extract_strided_slice %37 {offsets = [0, 24], sizes = [32, 8], strides = [1, 1]} : vector<32x32xf32> to vector<32x8xf32>
    %42 = vector.shape_cast %38 : vector<32x8xf32> to vector<1x32x8xf32>
    %43 = vector.shape_cast %39 : vector<32x8xf32> to vector<1x32x8xf32>
    %44 = vector.shape_cast %40 : vector<32x8xf32> to vector<1x32x8xf32>
    %45 = vector.shape_cast %41 : vector<32x8xf32> to vector<1x32x8xf32>
    %46 = tpu.concatenate %42, %43, %44, %45 in 0 : vector<1x32x8xf32>, vector<1x32x8xf32>, vector<1x32x8xf32>, vector<1x32x8xf32> -> vector<4x32x8xf32>
    %47 = vector.shape_cast %46 : vector<4x32x8xf32> to vector<16x8x8xf32>
    %48 = arith.truncf %47 : vector<16x8x8xf32> to vector<16x8x8xbf16>
    %49 = vector.extract_strided_slice %36 {offsets = [0, 32], sizes = [32, 32], strides = [1, 1]} : vector<32x96xf32> to vector<32x32xf32>
    %50 = vector.extract_strided_slice %49 {offsets = [0, 0], sizes = [32, 8], strides = [1, 1]} : vector<32x32xf32> to vector<32x8xf32>
    %51 = vector.extract_strided_slice %49 {offsets = [0, 8], sizes = [32, 8], strides = [1, 1]} : vector<32x32xf32> to vector<32x8xf32>
    %52 = vector.extract_strided_slice %49 {offsets = [0, 16], sizes = [32, 8], strides = [1, 1]} : vector<32x32xf32> to vector<32x8xf32>
    %53 = vector.extract_strided_slice %49 {offsets = [0, 24], sizes = [32, 8], strides = [1, 1]} : vector<32x32xf32> to vector<32x8xf32>
    %54 = vector.shape_cast %50 : vector<32x8xf32> to vector<1x32x8xf32>
    %55 = vector.shape_cast %51 : vector<32x8xf32> to vector<1x32x8xf32>
    %56 = vector.shape_cast %52 : vector<32x8xf32> to vector<1x32x8xf32>
    %57 = vector.shape_cast %53 : vector<32x8xf32> to vector<1x32x8xf32>
    %58 = tpu.concatenate %54, %55, %56, %57 in 0 : vector<1x32x8xf32>, vector<1x32x8xf32>, vector<1x32x8xf32>, vector<1x32x8xf32> -> vector<4x32x8xf32>
    %59 = vector.shape_cast %58 : vector<4x32x8xf32> to vector<16x8x8xf32>
    %60 = arith.truncf %59 : vector<16x8x8xf32> to vector<16x8x8xbf16>
    %61 = vector.extract_strided_slice %36 {offsets = [0, 64], sizes = [32, 32], strides = [1, 1]} : vector<32x96xf32> to vector<32x32xf32>
    %62 = vector.extract_strided_slice %61 {offsets = [0, 0], sizes = [32, 8], strides = [1, 1]} : vector<32x32xf32> to vector<32x8xf32>
    %63 = vector.extract_strided_slice %61 {offsets = [0, 8], sizes = [32, 8], strides = [1, 1]} : vector<32x32xf32> to vector<32x8xf32>
    %64 = vector.extract_strided_slice %61 {offsets = [0, 16], sizes = [32, 8], strides = [1, 1]} : vector<32x32xf32> to vector<32x8xf32>
    %65 = vector.extract_strided_slice %61 {offsets = [0, 24], sizes = [32, 8], strides = [1, 1]} : vector<32x32xf32> to vector<32x8xf32>
    %66 = vector.shape_cast %62 : vector<32x8xf32> to vector<1x32x8xf32>
    %67 = vector.shape_cast %63 : vector<32x8xf32> to vector<1x32x8xf32>
    %68 = vector.shape_cast %64 : vector<32x8xf32> to vector<1x32x8xf32>
    %69 = vector.shape_cast %65 : vector<32x8xf32> to vector<1x32x8xf32>
    %70 = tpu.concatenate %66, %67, %68, %69 in 0 : vector<1x32x8xf32>, vector<1x32x8xf32>, vector<1x32x8xf32>, vector<1x32x8xf32> -> vector<4x32x8xf32>
    %71 = vector.shape_cast %70 : vector<4x32x8xf32> to vector<16x8x8xf32>
    %72 = arith.truncf %71 : vector<16x8x8xf32> to vector<16x8x8xbf16>
    "tpu.trace_start"() <{level = 10 : i32, message = "bqd,bkd->bqk"}> : () -> ()
    %cst_19 = arith.constant dense<0.000000e+00> : vector<16x8x8xf32>
    %73 = tpu.matmul %48, %60, %cst_19 {dimension_numbers = #tpu.dot_dimension_numbers<[2], [2], [1], [1], [0, 0, 0, 1, 1, 1], [0], [0]>} : vector<16x8x8xbf16>, vector<16x8x8xbf16>, vector<16x8x8xf32> -> vector<16x8x8xf32>
    "tpu.trace_stop"() : () -> ()
    %74 = vector.shape_cast %73 : vector<16x8x8xf32> to vector<4x2x2x8x8xf32>
    %c0_20 = arith.constant 0 : index
    %c0_21 = arith.constant 0 : index
    %c0_22 = arith.constant 0 : index
    %c0_23 = arith.constant 0 : index
    %c0_24 = arith.constant 0 : index
    %75 = vector.load %arg2[%c0_20, %c0_21, %c0_22, %c0_23, %c0_24] : memref<2x4x2x8x8xf32, #tpu.memory_space<vmem>>, vector<1x4x2x8x8xf32>
    %76 = vector.shape_cast %75 : vector<1x4x2x8x8xf32> to vector<4x2x8x8xf32>
    %77 = vector.shape_cast %76 : vector<4x2x8x8xf32> to vector<4x1x2x8x8xf32>
    %78 = vector.broadcast %77 : vector<4x1x2x8x8xf32> to vector<4x2x2x8x8xf32>
    %79 = arith.addf %74, %78 : vector<4x2x2x8x8xf32>
    %80 = vector.shape_cast %79 : vector<4x2x2x8x8xf32> to vector<16x8x8xf32>
    %cst_25 = arith.constant dense<0xFF800000> : vector<16x8xf32>
    %81 = vector.multi_reduction <maximumf>, %80, %cst_25 [2] : vector<16x8x8xf32> to vector<16x8xf32>
    %82 = vector.shape_cast %81 : vector<16x8xf32> to vector<16x8x1xf32>
    %83 = vector.broadcast %82 : vector<16x8x1xf32> to vector<16x8x8xf32>
    %84 = arith.subf %80, %83 : vector<16x8x8xf32>
    %85 = math.exp %84 : vector<16x8x8xf32>
    %cst_26 = arith.constant dense<0.000000e+00> : vector<16x8xf32>
    %86 = vector.multi_reduction <add>, %85, %cst_26 [2] : vector<16x8x8xf32> to vector<16x8xf32>
    %87 = vector.shape_cast %86 : vector<16x8xf32> to vector<16x8x1xf32>
    %88 = tpu.reciprocal %87 {approx = true} : vector<16x8x1xf32> -> vector<16x8x1xf32>
    %89 = vector.broadcast %88 : vector<16x8x1xf32> to vector<16x8x8xf32>
    %90 = arith.mulf %85, %89 : vector<16x8x8xf32>
    %91 = arith.truncf %90 : vector<16x8x8xf32> to vector<16x8x8xbf16>
    "tpu.trace_start"() <{level = 10 : i32, message = "bqk,bkd->bqd"}> : () -> ()
    %cst_27 = arith.constant dense<0.000000e+00> : vector<16x8x8xf32>
    %92 = tpu.matmul %91, %72, %cst_27 {dimension_numbers = #tpu.dot_dimension_numbers<[2], [1], [1], [2], [0, 0, 0, 1, 1, 2], [0], [0]>} : vector<16x8x8xbf16>, vector<16x8x8xbf16>, vector<16x8x8xf32> -> vector<16x8x8xf32>
    "tpu.trace_stop"() : () -> ()
    %93 = vector.shape_cast %92 : vector<16x8x8xf32> to vector<4x32x8xf32>
    %94 = vector.extract_strided_slice %93 {offsets = [0, 0, 0], sizes = [1, 32, 8], strides = [1, 1, 1]} : vector<4x32x8xf32> to vector<1x32x8xf32>
    %95 = vector.shape_cast %94 : vector<1x32x8xf32> to vector<32x8xf32>
    %96 = vector.extract_strided_slice %93 {offsets = [1, 0, 0], sizes = [1, 32, 8], strides = [1, 1, 1]} : vector<4x32x8xf32> to vector<1x32x8xf32>
    %97 = vector.shape_cast %96 : vector<1x32x8xf32> to vector<32x8xf32>
    %98 = vector.extract_strided_slice %93 {offsets = [2, 0, 0], sizes = [1, 32, 8], strides = [1, 1, 1]} : vector<4x32x8xf32> to vector<1x32x8xf32>
    %99 = vector.shape_cast %98 : vector<1x32x8xf32> to vector<32x8xf32>
    %100 = vector.extract_strided_slice %93 {offsets = [3, 0, 0], sizes = [1, 32, 8], strides = [1, 1, 1]} : vector<4x32x8xf32> to vector<1x32x8xf32>
    %101 = vector.shape_cast %100 : vector<1x32x8xf32> to vector<32x8xf32>
    %102 = tpu.concatenate %95, %97, %99, %101 in 1 : vector<32x8xf32>, vector<32x8xf32>, vector<32x8xf32>, vector<32x8xf32> -> vector<32x32xf32>
    %103 = arith.truncf %102 : vector<32x32xf32> to vector<32x32xbf16>
    %c0_28 = arith.constant 0 : index
    %c0_29 = arith.constant 0 : index
    %c0_30 = arith.constant 0 : index
    %104 = vector.load %arg7[%c0_28, %c0_29, %c0_30] : memref<2x32x32xbf16, #tpu.memory_space<vmem>>, vector<1x32x32xbf16>
    %105 = vector.shape_cast %104 : vector<1x32x32xbf16> to vector<32x32xbf16>
    %cst_31 = arith.constant dense<0.000000e+00> : vector<32x32xf32>
    %106 = tpu.matmul %103, %105, %cst_31 {dimension_numbers = #tpu.dot_dimension_numbers<[1], [0], [0], [1], [0, 0, 1, 1], [], []>} : vector<32x32xbf16>, vector<32x32xbf16>, vector<32x32xf32> -> vector<32x32xf32>
    %c0_32 = arith.constant 0 : index
    %c0_33 = arith.constant 0 : index
    %c0_34 = arith.constant 0 : index
    %107 = vector.load %arg8[%c0_32, %c0_33, %c0_34] : memref<2x1x32xf32, #tpu.memory_space<vmem>>, vector<1x1x32xf32>
    %108 = vector.shape_cast %107 : vector<1x1x32xf32> to vector<1x32xf32>
    %109 = vector.broadcast %108 : vector<1x32xf32> to vector<32x32xf32>
    %110 = arith.addf %106, %109 : vector<32x32xf32>
    %111 = arith.addf %0, %110 : vector<32x32xf32>
    %c0_35 = arith.constant 0 : index
    %c0_36 = arith.constant 0 : index
    %c0_37 = arith.constant 0 : index
    %112 = vector.load %arg9[%c0_35, %c0_36, %c0_37] : memref<2x1x32xf32, #tpu.memory_space<vmem>>, vector<1x1x32xf32>
    %113 = vector.shape_cast %112 : vector<1x1x32xf32> to vector<1x32xf32>
    %c0_38 = arith.constant 0 : index
    %c0_39 = arith.constant 0 : index
    %c0_40 = arith.constant 0 : index
    %114 = vector.load %arg10[%c0_38, %c0_39, %c0_40] : memref<2x1x32xf32, #tpu.memory_space<vmem>>, vector<1x1x32xf32>
    %115 = vector.shape_cast %114 : vector<1x1x32xf32> to vector<1x32xf32>
    %cst_41 = arith.constant dense<0.000000e+00> : vector<32xf32>
    %116 = vector.multi_reduction <add>, %111, %cst_41 [1] : vector<32x32xf32> to vector<32xf32>
    %117 = vector.shape_cast %116 : vector<32xf32> to vector<32x1xf32>
    %cst_42 = arith.constant 3.200000e+01 : f32
    %118 = vector.broadcast %cst_42 : f32 to vector<32x1xf32>
    %119 = arith.divf %117, %118 : vector<32x1xf32>
    %120 = arith.mulf %111, %111 : vector<32x32xf32>
    %cst_43 = arith.constant dense<0.000000e+00> : vector<32xf32>
    %121 = vector.multi_reduction <add>, %120, %cst_43 [1] : vector<32x32xf32> to vector<32xf32>
    %122 = vector.shape_cast %121 : vector<32xf32> to vector<32x1xf32>
    %cst_44 = arith.constant 3.200000e+01 : f32
    %123 = vector.broadcast %cst_44 : f32 to vector<32x1xf32>
    %124 = arith.divf %122, %123 : vector<32x1xf32>
    %125 = arith.mulf %119, %119 : vector<32x1xf32>
    %126 = arith.subf %124, %125 : vector<32x1xf32>
    %cst_45 = arith.constant 0.000000e+00 : f32
    %127 = vector.broadcast %cst_45 : f32 to vector<32x1xf32>
    %128 = arith.maximumf %126, %127 : vector<32x1xf32>
    %129 = vector.broadcast %119 : vector<32x1xf32> to vector<32x32xf32>
    %130 = arith.subf %111, %129 : vector<32x32xf32>
    %cst_46 = arith.constant 9.99999974E-6 : f32
    %131 = vector.broadcast %cst_46 : f32 to vector<32x1xf32>
    %132 = arith.addf %128, %131 : vector<32x1xf32>
    %133 = math.rsqrt %132 : vector<32x1xf32>
    %134 = vector.broadcast %133 : vector<32x1xf32> to vector<32x32xf32>
    %135 = arith.mulf %130, %134 : vector<32x32xf32>
    %136 = vector.broadcast %113 : vector<1x32xf32> to vector<32x32xf32>
    %137 = arith.mulf %135, %136 : vector<32x32xf32>
    %138 = vector.broadcast %115 : vector<1x32xf32> to vector<32x32xf32>
    %139 = arith.addf %137, %138 : vector<32x32xf32>
    %140 = arith.truncf %139 : vector<32x32xf32> to vector<32x32xbf16>
    %c0_47 = arith.constant 0 : index
    %c0_48 = arith.constant 0 : index
    %c0_49 = arith.constant 0 : index
    %141 = vector.load %arg11[%c0_47, %c0_48, %c0_49] : memref<2x32x128xbf16, #tpu.memory_space<vmem>>, vector<1x32x128xbf16>
    %142 = vector.shape_cast %141 : vector<1x32x128xbf16> to vector<32x128xbf16>
    %cst_50 = arith.constant dense<0.000000e+00> : vector<32x128xf32>
    %143 = tpu.matmul %140, %142, %cst_50 {dimension_numbers = #tpu.dot_dimension_numbers<[1], [0], [0], [1], [0, 0, 1, 1], [], []>} : vector<32x32xbf16>, vector<32x128xbf16>, vector<32x128xf32> -> vector<32x128xf32>
    %c0_51 = arith.constant 0 : index
    %c0_52 = arith.constant 0 : index
    %c0_53 = arith.constant 0 : index
    %144 = vector.load %arg12[%c0_51, %c0_52, %c0_53] : memref<2x1x128xf32, #tpu.memory_space<vmem>>, vector<1x1x128xf32>
    %145 = vector.shape_cast %144 : vector<1x1x128xf32> to vector<1x128xf32>
    %146 = vector.broadcast %145 : vector<1x128xf32> to vector<32x128xf32>
    %147 = arith.addf %143, %146 : vector<32x128xf32>
    %cst_54 = arith.constant 5.000000e-01 : f32
    %148 = vector.broadcast %cst_54 : f32 to vector<32x128xf32>
    %149 = arith.mulf %148, %147 : vector<32x128xf32>
    %cst_55 = arith.constant 4.471500e-02 : f32
    %150 = vector.broadcast %cst_55 : f32 to vector<32x128xf32>
    %151 = arith.mulf %150, %147 : vector<32x128xf32>
    %152 = arith.mulf %151, %147 : vector<32x128xf32>
    %153 = arith.mulf %152, %147 : vector<32x128xf32>
    %154 = arith.addf %147, %153 : vector<32x128xf32>
    %cst_56 = arith.constant 0.797884583 : f32
    %155 = vector.broadcast %cst_56 : f32 to vector<32x128xf32>
    %156 = arith.mulf %155, %154 : vector<32x128xf32>
    %157 = math.tanh %156 : vector<32x128xf32>
    %cst_57 = arith.constant 1.000000e+00 : f32
    %158 = vector.broadcast %cst_57 : f32 to vector<32x128xf32>
    %159 = arith.addf %158, %157 : vector<32x128xf32>
    %160 = arith.mulf %149, %159 : vector<32x128xf32>
    %161 = arith.truncf %160 : vector<32x128xf32> to vector<32x128xbf16>
    %c0_58 = arith.constant 0 : index
    %c0_59 = arith.constant 0 : index
    %c0_60 = arith.constant 0 : index
    %162 = vector.load %arg13[%c0_58, %c0_59, %c0_60] : memref<2x128x32xbf16, #tpu.memory_space<vmem>>, vector<1x128x32xbf16>
    %163 = vector.shape_cast %162 : vector<1x128x32xbf16> to vector<128x32xbf16>
    %cst_61 = arith.constant dense<0.000000e+00> : vector<32x32xf32>
    %164 = tpu.matmul %161, %163, %cst_61 {dimension_numbers = #tpu.dot_dimension_numbers<[1], [0], [0], [1], [0, 0, 1, 1], [], []>} : vector<32x128xbf16>, vector<128x32xbf16>, vector<32x32xf32> -> vector<32x32xf32>
    %c0_62 = arith.constant 0 : index
    %c0_63 = arith.constant 0 : index
    %c0_64 = arith.constant 0 : index
    %165 = vector.load %arg14[%c0_62, %c0_63, %c0_64] : memref<2x1x32xf32, #tpu.memory_space<vmem>>, vector<1x1x32xf32>
    %166 = vector.shape_cast %165 : vector<1x1x32xf32> to vector<1x32xf32>
    %167 = vector.broadcast %166 : vector<1x32xf32> to vector<32x32xf32>
    %168 = arith.addf %164, %167 : vector<32x32xf32>
    %169 = arith.addf %111, %168 : vector<32x32xf32>
    %c1 = arith.constant 1 : index
    %c0_65 = arith.constant 0 : index
    %c0_66 = arith.constant 0 : index
    %170 = vector.load %arg3[%c1, %c0_65, %c0_66] : memref<2x1x32xf32, #tpu.memory_space<vmem>>, vector<1x1x32xf32>
    %171 = vector.shape_cast %170 : vector<1x1x32xf32> to vector<1x32xf32>
    %c1_67 = arith.constant 1 : index
    %c0_68 = arith.constant 0 : index
    %c0_69 = arith.constant 0 : index
    %172 = vector.load %arg4[%c1_67, %c0_68, %c0_69] : memref<2x1x32xf32, #tpu.memory_space<vmem>>, vector<1x1x32xf32>
    %173 = vector.shape_cast %172 : vector<1x1x32xf32> to vector<1x32xf32>
    %cst_70 = arith.constant dense<0.000000e+00> : vector<32xf32>
    %174 = vector.multi_reduction <add>, %169, %cst_70 [1] : vector<32x32xf32> to vector<32xf32>
    %175 = vector.shape_cast %174 : vector<32xf32> to vector<32x1xf32>
    %cst_71 = arith.constant 3.200000e+01 : f32
    %176 = vector.broadcast %cst_71 : f32 to vector<32x1xf32>
    %177 = arith.divf %175, %176 : vector<32x1xf32>
    %178 = arith.mulf %169, %169 : vector<32x32xf32>
    %cst_72 = arith.constant dense<0.000000e+00> : vector<32xf32>
    %179 = vector.multi_reduction <add>, %178, %cst_72 [1] : vector<32x32xf32> to vector<32xf32>
    %180 = vector.shape_cast %179 : vector<32xf32> to vector<32x1xf32>
    %cst_73 = arith.constant 3.200000e+01 : f32
    %181 = vector.broadcast %cst_73 : f32 to vector<32x1xf32>
    %182 = arith.divf %180, %181 : vector<32x1xf32>
    %183 = arith.mulf %177, %177 : vector<32x1xf32>
    %184 = arith.subf %182, %183 : vector<32x1xf32>
    %cst_74 = arith.constant 0.000000e+00 : f32
    %185 = vector.broadcast %cst_74 : f32 to vector<32x1xf32>
    %186 = arith.maximumf %184, %185 : vector<32x1xf32>
    %187 = vector.broadcast %177 : vector<32x1xf32> to vector<32x32xf32>
    %188 = arith.subf %169, %187 : vector<32x32xf32>
    %cst_75 = arith.constant 9.99999974E-6 : f32
    %189 = vector.broadcast %cst_75 : f32 to vector<32x1xf32>
    %190 = arith.addf %186, %189 : vector<32x1xf32>
    %191 = math.rsqrt %190 : vector<32x1xf32>
    %192 = vector.broadcast %191 : vector<32x1xf32> to vector<32x32xf32>
    %193 = arith.mulf %188, %192 : vector<32x32xf32>
    %194 = vector.broadcast %171 : vector<1x32xf32> to vector<32x32xf32>
    %195 = arith.mulf %193, %194 : vector<32x32xf32>
    %196 = vector.broadcast %173 : vector<1x32xf32> to vector<32x32xf32>
    %197 = arith.addf %195, %196 : vector<32x32xf32>
    %198 = vector.shape_cast %197 : vector<32x32xf32> to vector<2x16x32xf32>
    %199 = vector.extract_strided_slice %198 {offsets = [0, 4, 0], sizes = [2, 12, 32], strides = [1, 1, 1]} : vector<2x16x32xf32> to vector<2x12x32xf32>
    %200 = vector.extract_strided_slice %198 {offsets = [0, 0, 0], sizes = [2, 4, 32], strides = [1, 1, 1]} : vector<2x16x32xf32> to vector<2x4x32xf32>
    %201 = tpu.concatenate %199, %200 in 1 : vector<2x12x32xf32>, vector<2x4x32xf32> -> vector<2x16x32xf32>
    %202 = vector.shape_cast %201 : vector<2x16x32xf32> to vector<32x32xf32>
    %203 = arith.truncf %202 : vector<32x32xf32> to vector<32x32xbf16>
    %c1_76 = arith.constant 1 : index
    %c0_77 = arith.constant 0 : index
    %c0_78 = arith.constant 0 : index
    %204 = vector.load %arg5[%c1_76, %c0_77, %c0_78] : memref<2x32x96xbf16, #tpu.memory_space<vmem>>, vector<1x32x96xbf16>
    %205 = vector.shape_cast %204 : vector<1x32x96xbf16> to vector<32x96xbf16>
    %cst_79 = arith.constant dense<0.000000e+00> : vector<32x96xf32>
    %206 = tpu.matmul %203, %205, %cst_79 {dimension_numbers = #tpu.dot_dimension_numbers<[1], [0], [0], [1], [0, 0, 1, 1], [], []>} : vector<32x32xbf16>, vector<32x96xbf16>, vector<32x96xf32> -> vector<32x96xf32>
    %c1_80 = arith.constant 1 : index
    %c0_81 = arith.constant 0 : index
    %c0_82 = arith.constant 0 : index
    %207 = vector.load %arg6[%c1_80, %c0_81, %c0_82] : memref<2x1x96xf32, #tpu.memory_space<vmem>>, vector<1x1x96xf32>
    %208 = vector.shape_cast %207 : vector<1x1x96xf32> to vector<1x96xf32>
    %209 = vector.broadcast %208 : vector<1x96xf32> to vector<32x96xf32>
    %210 = arith.addf %206, %209 : vector<32x96xf32>
    %211 = vector.extract_strided_slice %210 {offsets = [0, 0], sizes = [32, 32], strides = [1, 1]} : vector<32x96xf32> to vector<32x32xf32>
    %212 = vector.extract_strided_slice %211 {offsets = [0, 0], sizes = [32, 8], strides = [1, 1]} : vector<32x32xf32> to vector<32x8xf32>
    %213 = vector.extract_strided_slice %211 {offsets = [0, 8], sizes = [32, 8], strides = [1, 1]} : vector<32x32xf32> to vector<32x8xf32>
    %214 = vector.extract_strided_slice %211 {offsets = [0, 16], sizes = [32, 8], strides = [1, 1]} : vector<32x32xf32> to vector<32x8xf32>
    %215 = vector.extract_strided_slice %211 {offsets = [0, 24], sizes = [32, 8], strides = [1, 1]} : vector<32x32xf32> to vector<32x8xf32>
    %216 = vector.shape_cast %212 : vector<32x8xf32> to vector<1x32x8xf32>
    %217 = vector.shape_cast %213 : vector<32x8xf32> to vector<1x32x8xf32>
    %218 = vector.shape_cast %214 : vector<32x8xf32> to vector<1x32x8xf32>
    %219 = vector.shape_cast %215 : vector<32x8xf32> to vector<1x32x8xf32>
    %220 = tpu.concatenate %216, %217, %218, %219 in 0 : vector<1x32x8xf32>, vector<1x32x8xf32>, vector<1x32x8xf32>, vector<1x32x8xf32> -> vector<4x32x8xf32>
    %221 = vector.shape_cast %220 : vector<4x32x8xf32> to vector<16x8x8xf32>
    %222 = arith.truncf %221 : vector<16x8x8xf32> to vector<16x8x8xbf16>
    %223 = vector.extract_strided_slice %210 {offsets = [0, 32], sizes = [32, 32], strides = [1, 1]} : vector<32x96xf32> to vector<32x32xf32>
    %224 = vector.extract_strided_slice %223 {offsets = [0, 0], sizes = [32, 8], strides = [1, 1]} : vector<32x32xf32> to vector<32x8xf32>
    %225 = vector.extract_strided_slice %223 {offsets = [0, 8], sizes = [32, 8], strides = [1, 1]} : vector<32x32xf32> to vector<32x8xf32>
    %226 = vector.extract_strided_slice %223 {offsets = [0, 16], sizes = [32, 8], strides = [1, 1]} : vector<32x32xf32> to vector<32x8xf32>
    %227 = vector.extract_strided_slice %223 {offsets = [0, 24], sizes = [32, 8], strides = [1, 1]} : vector<32x32xf32> to vector<32x8xf32>
    %228 = vector.shape_cast %224 : vector<32x8xf32> to vector<1x32x8xf32>
    %229 = vector.shape_cast %225 : vector<32x8xf32> to vector<1x32x8xf32>
    %230 = vector.shape_cast %226 : vector<32x8xf32> to vector<1x32x8xf32>
    %231 = vector.shape_cast %227 : vector<32x8xf32> to vector<1x32x8xf32>
    %232 = tpu.concatenate %228, %229, %230, %231 in 0 : vector<1x32x8xf32>, vector<1x32x8xf32>, vector<1x32x8xf32>, vector<1x32x8xf32> -> vector<4x32x8xf32>
    %233 = vector.shape_cast %232 : vector<4x32x8xf32> to vector<16x8x8xf32>
    %234 = arith.truncf %233 : vector<16x8x8xf32> to vector<16x8x8xbf16>
    %235 = vector.extract_strided_slice %210 {offsets = [0, 64], sizes = [32, 32], strides = [1, 1]} : vector<32x96xf32> to vector<32x32xf32>
    %236 = vector.extract_strided_slice %235 {offsets = [0, 0], sizes = [32, 8], strides = [1, 1]} : vector<32x32xf32> to vector<32x8xf32>
    %237 = vector.extract_strided_slice %235 {offsets = [0, 8], sizes = [32, 8], strides = [1, 1]} : vector<32x32xf32> to vector<32x8xf32>
    %238 = vector.extract_strided_slice %235 {offsets = [0, 16], sizes = [32, 8], strides = [1, 1]} : vector<32x32xf32> to vector<32x8xf32>
    %239 = vector.extract_strided_slice %235 {offsets = [0, 24], sizes = [32, 8], strides = [1, 1]} : vector<32x32xf32> to vector<32x8xf32>
    %240 = vector.shape_cast %236 : vector<32x8xf32> to vector<1x32x8xf32>
    %241 = vector.shape_cast %237 : vector<32x8xf32> to vector<1x32x8xf32>
    %242 = vector.shape_cast %238 : vector<32x8xf32> to vector<1x32x8xf32>
    %243 = vector.shape_cast %239 : vector<32x8xf32> to vector<1x32x8xf32>
    %244 = tpu.concatenate %240, %241, %242, %243 in 0 : vector<1x32x8xf32>, vector<1x32x8xf32>, vector<1x32x8xf32>, vector<1x32x8xf32> -> vector<4x32x8xf32>
    %245 = vector.shape_cast %244 : vector<4x32x8xf32> to vector<16x8x8xf32>
    %246 = arith.truncf %245 : vector<16x8x8xf32> to vector<16x8x8xbf16>
    "tpu.trace_start"() <{level = 10 : i32, message = "bqd,bkd->bqk"}> : () -> ()
    %cst_83 = arith.constant dense<0.000000e+00> : vector<16x8x8xf32>
    %247 = tpu.matmul %222, %234, %cst_83 {dimension_numbers = #tpu.dot_dimension_numbers<[2], [2], [1], [1], [0, 0, 0, 1, 1, 1], [0], [0]>} : vector<16x8x8xbf16>, vector<16x8x8xbf16>, vector<16x8x8xf32> -> vector<16x8x8xf32>
    "tpu.trace_stop"() : () -> ()
    %248 = vector.shape_cast %247 : vector<16x8x8xf32> to vector<4x2x2x8x8xf32>
    %c1_84 = arith.constant 1 : index
    %c0_85 = arith.constant 0 : index
    %c0_86 = arith.constant 0 : index
    %c0_87 = arith.constant 0 : index
    %c0_88 = arith.constant 0 : index
    %249 = vector.load %arg2[%c1_84, %c0_85, %c0_86, %c0_87, %c0_88] : memref<2x4x2x8x8xf32, #tpu.memory_space<vmem>>, vector<1x4x2x8x8xf32>
    %250 = vector.shape_cast %249 : vector<1x4x2x8x8xf32> to vector<4x2x8x8xf32>
    %251 = vector.shape_cast %250 : vector<4x2x8x8xf32> to vector<4x1x2x8x8xf32>
    %252 = vector.broadcast %251 : vector<4x1x2x8x8xf32> to vector<4x2x2x8x8xf32>
    %253 = arith.addf %248, %252 : vector<4x2x2x8x8xf32>
    %254 = vector.shape_cast %253 : vector<4x2x2x8x8xf32> to vector<16x8x8xf32>
    %cst_89 = arith.constant dense<0xFF800000> : vector<16x8xf32>
    %255 = vector.multi_reduction <maximumf>, %254, %cst_89 [2] : vector<16x8x8xf32> to vector<16x8xf32>
    %256 = vector.shape_cast %255 : vector<16x8xf32> to vector<16x8x1xf32>
    %257 = vector.broadcast %256 : vector<16x8x1xf32> to vector<16x8x8xf32>
    %258 = arith.subf %254, %257 : vector<16x8x8xf32>
    %259 = math.exp %258 : vector<16x8x8xf32>
    %cst_90 = arith.constant dense<0.000000e+00> : vector<16x8xf32>
    %260 = vector.multi_reduction <add>, %259, %cst_90 [2] : vector<16x8x8xf32> to vector<16x8xf32>
    %261 = vector.shape_cast %260 : vector<16x8xf32> to vector<16x8x1xf32>
    %262 = tpu.reciprocal %261 {approx = true} : vector<16x8x1xf32> -> vector<16x8x1xf32>
    %263 = vector.broadcast %262 : vector<16x8x1xf32> to vector<16x8x8xf32>
    %264 = arith.mulf %259, %263 : vector<16x8x8xf32>
    %265 = arith.truncf %264 : vector<16x8x8xf32> to vector<16x8x8xbf16>
    "tpu.trace_start"() <{level = 10 : i32, message = "bqk,bkd->bqd"}> : () -> ()
    %cst_91 = arith.constant dense<0.000000e+00> : vector<16x8x8xf32>
    %266 = tpu.matmul %265, %246, %cst_91 {dimension_numbers = #tpu.dot_dimension_numbers<[2], [1], [1], [2], [0, 0, 0, 1, 1, 2], [0], [0]>} : vector<16x8x8xbf16>, vector<16x8x8xbf16>, vector<16x8x8xf32> -> vector<16x8x8xf32>
    "tpu.trace_stop"() : () -> ()
    %267 = vector.shape_cast %266 : vector<16x8x8xf32> to vector<4x32x8xf32>
    %268 = vector.extract_strided_slice %267 {offsets = [0, 0, 0], sizes = [1, 32, 8], strides = [1, 1, 1]} : vector<4x32x8xf32> to vector<1x32x8xf32>
    %269 = vector.shape_cast %268 : vector<1x32x8xf32> to vector<32x8xf32>
    %270 = vector.extract_strided_slice %267 {offsets = [1, 0, 0], sizes = [1, 32, 8], strides = [1, 1, 1]} : vector<4x32x8xf32> to vector<1x32x8xf32>
    %271 = vector.shape_cast %270 : vector<1x32x8xf32> to vector<32x8xf32>
    %272 = vector.extract_strided_slice %267 {offsets = [2, 0, 0], sizes = [1, 32, 8], strides = [1, 1, 1]} : vector<4x32x8xf32> to vector<1x32x8xf32>
    %273 = vector.shape_cast %272 : vector<1x32x8xf32> to vector<32x8xf32>
    %274 = vector.extract_strided_slice %267 {offsets = [3, 0, 0], sizes = [1, 32, 8], strides = [1, 1, 1]} : vector<4x32x8xf32> to vector<1x32x8xf32>
    %275 = vector.shape_cast %274 : vector<1x32x8xf32> to vector<32x8xf32>
    %276 = tpu.concatenate %269, %271, %273, %275 in 1 : vector<32x8xf32>, vector<32x8xf32>, vector<32x8xf32>, vector<32x8xf32> -> vector<32x32xf32>
    %277 = arith.truncf %276 : vector<32x32xf32> to vector<32x32xbf16>
    %c1_92 = arith.constant 1 : index
    %c0_93 = arith.constant 0 : index
    %c0_94 = arith.constant 0 : index
    %278 = vector.load %arg7[%c1_92, %c0_93, %c0_94] : memref<2x32x32xbf16, #tpu.memory_space<vmem>>, vector<1x32x32xbf16>
    %279 = vector.shape_cast %278 : vector<1x32x32xbf16> to vector<32x32xbf16>
    %cst_95 = arith.constant dense<0.000000e+00> : vector<32x32xf32>
    %280 = tpu.matmul %277, %279, %cst_95 {dimension_numbers = #tpu.dot_dimension_numbers<[1], [0], [0], [1], [0, 0, 1, 1], [], []>} : vector<32x32xbf16>, vector<32x32xbf16>, vector<32x32xf32> -> vector<32x32xf32>
    %c1_96 = arith.constant 1 : index
    %c0_97 = arith.constant 0 : index
    %c0_98 = arith.constant 0 : index
    %281 = vector.load %arg8[%c1_96, %c0_97, %c0_98] : memref<2x1x32xf32, #tpu.memory_space<vmem>>, vector<1x1x32xf32>
    %282 = vector.shape_cast %281 : vector<1x1x32xf32> to vector<1x32xf32>
    %283 = vector.broadcast %282 : vector<1x32xf32> to vector<32x32xf32>
    %284 = arith.addf %280, %283 : vector<32x32xf32>
    %285 = vector.shape_cast %284 : vector<32x32xf32> to vector<2x16x32xf32>
    %286 = vector.extract_strided_slice %285 {offsets = [0, 12, 0], sizes = [2, 4, 32], strides = [1, 1, 1]} : vector<2x16x32xf32> to vector<2x4x32xf32>
    %287 = vector.extract_strided_slice %285 {offsets = [0, 0, 0], sizes = [2, 12, 32], strides = [1, 1, 1]} : vector<2x16x32xf32> to vector<2x12x32xf32>
    %288 = tpu.concatenate %286, %287 in 1 : vector<2x4x32xf32>, vector<2x12x32xf32> -> vector<2x16x32xf32>
    %289 = vector.shape_cast %288 : vector<2x16x32xf32> to vector<32x32xf32>
    %290 = arith.addf %169, %289 : vector<32x32xf32>
    %c1_99 = arith.constant 1 : index
    %c0_100 = arith.constant 0 : index
    %c0_101 = arith.constant 0 : index
    %291 = vector.load %arg9[%c1_99, %c0_100, %c0_101] : memref<2x1x32xf32, #tpu.memory_space<vmem>>, vector<1x1x32xf32>
    %292 = vector.shape_cast %291 : vector<1x1x32xf32> to vector<1x32xf32>
    %c1_102 = arith.constant 1 : index
    %c0_103 = arith.constant 0 : index
    %c0_104 = arith.constant 0 : index
    %293 = vector.load %arg10[%c1_102, %c0_103, %c0_104] : memref<2x1x32xf32, #tpu.memory_space<vmem>>, vector<1x1x32xf32>
    %294 = vector.shape_cast %293 : vector<1x1x32xf32> to vector<1x32xf32>
    %cst_105 = arith.constant dense<0.000000e+00> : vector<32xf32>
    %295 = vector.multi_reduction <add>, %290, %cst_105 [1] : vector<32x32xf32> to vector<32xf32>
    %296 = vector.shape_cast %295 : vector<32xf32> to vector<32x1xf32>
    %cst_106 = arith.constant 3.200000e+01 : f32
    %297 = vector.broadcast %cst_106 : f32 to vector<32x1xf32>
    %298 = arith.divf %296, %297 : vector<32x1xf32>
    %299 = arith.mulf %290, %290 : vector<32x32xf32>
    %cst_107 = arith.constant dense<0.000000e+00> : vector<32xf32>
    %300 = vector.multi_reduction <add>, %299, %cst_107 [1] : vector<32x32xf32> to vector<32xf32>
    %301 = vector.shape_cast %300 : vector<32xf32> to vector<32x1xf32>
    %cst_108 = arith.constant 3.200000e+01 : f32
    %302 = vector.broadcast %cst_108 : f32 to vector<32x1xf32>
    %303 = arith.divf %301, %302 : vector<32x1xf32>
    %304 = arith.mulf %298, %298 : vector<32x1xf32>
    %305 = arith.subf %303, %304 : vector<32x1xf32>
    %cst_109 = arith.constant 0.000000e+00 : f32
    %306 = vector.broadcast %cst_109 : f32 to vector<32x1xf32>
    %307 = arith.maximumf %305, %306 : vector<32x1xf32>
    %308 = vector.broadcast %298 : vector<32x1xf32> to vector<32x32xf32>
    %309 = arith.subf %290, %308 : vector<32x32xf32>
    %cst_110 = arith.constant 9.99999974E-6 : f32
    %310 = vector.broadcast %cst_110 : f32 to vector<32x1xf32>
    %311 = arith.addf %307, %310 : vector<32x1xf32>
    %312 = math.rsqrt %311 : vector<32x1xf32>
    %313 = vector.broadcast %312 : vector<32x1xf32> to vector<32x32xf32>
    %314 = arith.mulf %309, %313 : vector<32x32xf32>
    %315 = vector.broadcast %292 : vector<1x32xf32> to vector<32x32xf32>
    %316 = arith.mulf %314, %315 : vector<32x32xf32>
    %317 = vector.broadcast %294 : vector<1x32xf32> to vector<32x32xf32>
    %318 = arith.addf %316, %317 : vector<32x32xf32>
    %319 = arith.truncf %318 : vector<32x32xf32> to vector<32x32xbf16>
    %c1_111 = arith.constant 1 : index
    %c0_112 = arith.constant 0 : index
    %c0_113 = arith.constant 0 : index
    %320 = vector.load %arg11[%c1_111, %c0_112, %c0_113] : memref<2x32x128xbf16, #tpu.memory_space<vmem>>, vector<1x32x128xbf16>
    %321 = vector.shape_cast %320 : vector<1x32x128xbf16> to vector<32x128xbf16>
    %cst_114 = arith.constant dense<0.000000e+00> : vector<32x128xf32>
    %322 = tpu.matmul %319, %321, %cst_114 {dimension_numbers = #tpu.dot_dimension_numbers<[1], [0], [0], [1], [0, 0, 1, 1], [], []>} : vector<32x32xbf16>, vector<32x128xbf16>, vector<32x128xf32> -> vector<32x128xf32>
    %c1_115 = arith.constant 1 : index
    %c0_116 = arith.constant 0 : index
    %c0_117 = arith.constant 0 : index
    %323 = vector.load %arg12[%c1_115, %c0_116, %c0_117] : memref<2x1x128xf32, #tpu.memory_space<vmem>>, vector<1x1x128xf32>
    %324 = vector.shape_cast %323 : vector<1x1x128xf32> to vector<1x128xf32>
    %325 = vector.broadcast %324 : vector<1x128xf32> to vector<32x128xf32>
    %326 = arith.addf %322, %325 : vector<32x128xf32>
    %cst_118 = arith.constant 5.000000e-01 : f32
    %327 = vector.broadcast %cst_118 : f32 to vector<32x128xf32>
    %328 = arith.mulf %327, %326 : vector<32x128xf32>
    %cst_119 = arith.constant 4.471500e-02 : f32
    %329 = vector.broadcast %cst_119 : f32 to vector<32x128xf32>
    %330 = arith.mulf %329, %326 : vector<32x128xf32>
    %331 = arith.mulf %330, %326 : vector<32x128xf32>
    %332 = arith.mulf %331, %326 : vector<32x128xf32>
    %333 = arith.addf %326, %332 : vector<32x128xf32>
    %cst_120 = arith.constant 0.797884583 : f32
    %334 = vector.broadcast %cst_120 : f32 to vector<32x128xf32>
    %335 = arith.mulf %334, %333 : vector<32x128xf32>
    %336 = math.tanh %335 : vector<32x128xf32>
    %cst_121 = arith.constant 1.000000e+00 : f32
    %337 = vector.broadcast %cst_121 : f32 to vector<32x128xf32>
    %338 = arith.addf %337, %336 : vector<32x128xf32>
    %339 = arith.mulf %328, %338 : vector<32x128xf32>
    %340 = arith.truncf %339 : vector<32x128xf32> to vector<32x128xbf16>
    %c1_122 = arith.constant 1 : index
    %c0_123 = arith.constant 0 : index
    %c0_124 = arith.constant 0 : index
    %341 = vector.load %arg13[%c1_122, %c0_123, %c0_124] : memref<2x128x32xbf16, #tpu.memory_space<vmem>>, vector<1x128x32xbf16>
    %342 = vector.shape_cast %341 : vector<1x128x32xbf16> to vector<128x32xbf16>
    %cst_125 = arith.constant dense<0.000000e+00> : vector<32x32xf32>
    %343 = tpu.matmul %340, %342, %cst_125 {dimension_numbers = #tpu.dot_dimension_numbers<[1], [0], [0], [1], [0, 0, 1, 1], [], []>} : vector<32x128xbf16>, vector<128x32xbf16>, vector<32x32xf32> -> vector<32x32xf32>
    %c1_126 = arith.constant 1 : index
    %c0_127 = arith.constant 0 : index
    %c0_128 = arith.constant 0 : index
    %344 = vector.load %arg14[%c1_126, %c0_127, %c0_128] : memref<2x1x32xf32, #tpu.memory_space<vmem>>, vector<1x1x32xf32>
    %345 = vector.shape_cast %344 : vector<1x1x32xf32> to vector<1x32xf32>
    %346 = vector.broadcast %345 : vector<1x32xf32> to vector<32x32xf32>
    %347 = arith.addf %343, %346 : vector<32x32xf32>
    %348 = arith.addf %290, %347 : vector<32x32xf32>
    %c0_129 = arith.constant 0 : index
    %c0_130 = arith.constant 0 : index
    %349 = vector.load %arg15[%c0_129, %c0_130] : memref<32x32xf32, #tpu.memory_space<vmem>>, vector<32x32xf32>
    tpu.vector_store %arg15[%c0_129, %c0_130], %348 {strides = array<i32>} : memref<32x32xf32, #tpu.memory_space<vmem>>, vector<32x32xf32>,
    return
  }
  func.func @transform_0(%arg0: i32) -> (i32, i32) {
    %c0_i32 = arith.constant 0 : i32
    %c0_i32_0 = arith.constant 0 : i32
    return %arg0, %c0_i32 : i32, i32
  }
  func.func @transform_1(%arg0: i32) -> (i32, i32, i32, i32, i32) {
    %c0_i32 = arith.constant 0 : i32
    %c0_i32_0 = arith.constant 0 : i32
    %c0_i32_1 = arith.constant 0 : i32
    %c0_i32_2 = arith.constant 0 : i32
    %c0_i32_3 = arith.constant 0 : i32
    %c0_i32_4 = arith.constant 0 : i32
    return %c0_i32, %c0_i32_0, %c0_i32_1, %c0_i32_2, %c0_i32_3 : i32, i32, i32, i32, i32
  }
  func.func @transform_2(%arg0: i32) -> (i32, i32, i32) {
    %c0_i32 = arith.constant 0 : i32
    %c0_i32_0 = arith.constant 0 : i32
    %c0_i32_1 = arith.constant 0 : i32
    %c0_i32_2 = arith.constant 0 : i32
    return %c0_i32, %c0_i32_0, %c0_i32_1 : i32, i32, i32
  }
  func.func @transform_3(%arg0: i32) -> (i32, i32, i32) {
    %c0_i32 = arith.constant 0 : i32
    %c0_i32_0 = arith.constant 0 : i32
    %c0_i32_1 = arith.constant 0 : i32
    %c0_i32_2 = arith.constant 0 : i32
    return %c0_i32, %c0_i32_0, %c0_i32_1 : i32, i32, i32
  }
  func.func @transform_4(%arg0: i32) -> (i32, i32, i32) {
    %c0_i32 = arith.constant 0 : i32
    %c0_i32_0 = arith.constant 0 : i32
    %c0_i32_1 = arith.constant 0 : i32
    %c0_i32_2 = arith.constant 0 : i32
    return %c0_i32, %c0_i32_0, %c0_i32_1 : i32, i32, i32
  }
  func.func @transform_5(%arg0: i32) -> (i32, i32, i32) {
    %c0_i32 = arith.constant 0 : i32
    %c0_i32_0 = arith.constant 0 : i32
    %c0_i32_1 = arith.constant 0 : i32
    %c0_i32_2 = arith.constant 0 : i32
    return %c0_i32, %c0_i32_0, %c0_i32_1 : i32, i32, i32
  }
  func.func @transform_6(%arg0: i32) -> (i32, i32, i32) {
    %c0_i32 = arith.constant 0 : i32
    %c0_i32_0 = arith.constant 0 : i32
    %c0_i32_1 = arith.constant 0 : i32
    %c0_i32_2 = arith.constant 0 : i32
    return %c0_i32, %c0_i32_0, %c0_i32_1 : i32, i32, i32
  }
  func.func @transform_7(%arg0: i32) -> (i32, i32, i32) {
    %c0_i32 = arith.constant 0 : i32
    %c0_i32_0 = arith.constant 0 : i32
    %c0_i32_1 = arith.constant 0 : i32
    %c0_i32_2 = arith.constant 0 : i32
    return %c0_i32, %c0_i32_0, %c0_i32_1 : i32, i32, i32
  }
  func.func @transform_8(%arg0: i32) -> (i32, i32, i32) {
    %c0_i32 = arith.constant 0 : i32
    %c0_i32_0 = arith.constant 0 : i32
    %c0_i32_1 = arith.constant 0 : i32
    %c0_i32_2 = arith.constant 0 : i32
    return %c0_i32, %c0_i32_0, %c0_i32_1 : i32, i32, i32
  }
  func.func @transform_9(%arg0: i32) -> (i32, i32, i32) {
    %c0_i32 = arith.constant 0 : i32
    %c0_i32_0 = arith.constant 0 : i32
    %c0_i32_1 = arith.constant 0 : i32
    %c0_i32_2 = arith.constant 0 : i32
    return %c0_i32, %c0_i32_0, %c0_i32_1 : i32, i32, i32
  }
  func.func @transform_10(%arg0: i32) -> (i32, i32, i32) {
    %c0_i32 = arith.constant 0 : i32
    %c0_i32_0 = arith.constant 0 : i32
    %c0_i32_1 = arith.constant 0 : i32
    %c0_i32_2 = arith.constant 0 : i32
    return %c0_i32, %c0_i32_0, %c0_i32_1 : i32, i32, i32
  }
  func.func @transform_11(%arg0: i32) -> (i32, i32, i32) {
    %c0_i32 = arith.constant 0 : i32
    %c0_i32_0 = arith.constant 0 : i32
    %c0_i32_1 = arith.constant 0 : i32
    %c0_i32_2 = arith.constant 0 : i32
    return %c0_i32, %c0_i32_0, %c0_i32_1 : i32, i32, i32
  }
  func.func @transform_12(%arg0: i32) -> (i32, i32, i32) {
    %c0_i32 = arith.constant 0 : i32
    %c0_i32_0 = arith.constant 0 : i32
    %c0_i32_1 = arith.constant 0 : i32
    %c0_i32_2 = arith.constant 0 : i32
    return %c0_i32, %c0_i32_0, %c0_i32_1 : i32, i32, i32
  }
  func.func @transform_13(%arg0: i32) -> (i32, i32, i32) {
    %c0_i32 = arith.constant 0 : i32
    %c0_i32_0 = arith.constant 0 : i32
    %c0_i32_1 = arith.constant 0 : i32
    %c0_i32_2 = arith.constant 0 : i32
    return %c0_i32, %c0_i32_0, %c0_i32_1 : i32, i32, i32
  }
  func.func @transform_14(%arg0: i32) -> (i32, i32) {
    %c0_i32 = arith.constant 0 : i32
    %c0_i32_0 = arith.constant 0 : i32
    return %arg0, %c0_i32 : i32, i32
  }
}

module attributes {stable_mosaic.version = 11 : i64} {
  func.func @_swin_stage_kernel(%arg0: i32, %arg1: memref<32x32xf32, #tpu.memory_space<vmem>>, %arg2: memref<2x4x2x8x8xf32, #tpu.memory_space<vmem>>, %arg3: memref<2x1x32xf32, #tpu.memory_space<vmem>>, %arg4: memref<2x1x32xf32, #tpu.memory_space<vmem>>, %arg5: memref<2x32x96xbf16, #tpu.memory_space<vmem>>, %arg6: memref<2x1x96xf32, #tpu.memory_space<vmem>>, %arg7: memref<2x32x32xbf16, #tpu.memory_space<vmem>>, %arg8: memref<2x1x32xf32, #tpu.memory_space<vmem>>, %arg9: memref<2x1x32xf32, #tpu.memory_space<vmem>>, %arg10: memref<2x1x32xf32, #tpu.memory_space<vmem>>, %arg11: memref<2x32x128xbf16, #tpu.memory_space<vmem>>, %arg12: memref<2x1x128xf32, #tpu.memory_space<vmem>>, %arg13: memref<2x128x32xbf16, #tpu.memory_space<vmem>>, %arg14: memref<2x1x32xf32, #tpu.memory_space<vmem>>, %arg15: memref<32x32xf32, #tpu.memory_space<vmem>>) attributes {dimension_semantics = [#tpu.dimension_semantics<parallel>], iteration_bounds = array<i64: 1>, scalar_prefetch = 0 : i64, scratch_operands = 0 : i64, tpu.core_type = #tpu.core_type<tc>, window_params = [{transform_indices = @transform_0, window_bounds = array<i64: 32, 32>}, {pipeline_mode = #tpu.pipeline_mode<synchronous>, transform_indices = @transform_1, window_bounds = array<i64: 2, 4, 2, 8, 8>}, {pipeline_mode = #tpu.pipeline_mode<synchronous>, transform_indices = @transform_2, window_bounds = array<i64: 2, 1, 32>}, {pipeline_mode = #tpu.pipeline_mode<synchronous>, transform_indices = @transform_3, window_bounds = array<i64: 2, 1, 32>}, {pipeline_mode = #tpu.pipeline_mode<synchronous>, transform_indices = @transform_4, window_bounds = array<i64: 2, 32, 96>}, {pipeline_mode = #tpu.pipeline_mode<synchronous>, transform_indices = @transform_5, window_bounds = array<i64: 2, 1, 96>}, {pipeline_mode = #tpu.pipeline_mode<synchronous>, transform_indices = @transform_6, window_bounds = array<i64: 2, 32, 32>}, {pipeline_mode = #tpu.pipeline_mode<synchronous>, transform_indices = @transform_7, window_bounds = array<i64: 2, 1, 32>}, {pipeline_mode = #tpu.pipeline_mode<synchronous>, transform_indices = @transform_8, window_bounds = array<i64: 2, 1, 32>}, {pipeline_mode = #tpu.pipeline_mode<synchronous>, transform_indices = @transform_9, window_bounds = array<i64: 2, 1, 32>}, {pipeline_mode = #tpu.pipeline_mode<synchronous>, transform_indices = @transform_10, window_bounds = array<i64: 2, 32, 128>}, {pipeline_mode = #tpu.pipeline_mode<synchronous>, transform_indices = @transform_11, window_bounds = array<i64: 2, 1, 128>}, {pipeline_mode = #tpu.pipeline_mode<synchronous>, transform_indices = @transform_12, window_bounds = array<i64: 2, 128, 32>}, {pipeline_mode = #tpu.pipeline_mode<synchronous>, transform_indices = @transform_13, window_bounds = array<i64: 2, 1, 32>}, {transform_indices = @transform_14, window_bounds = array<i64: 32, 32>}]} {
    %c0 = arith.constant 0 : index
    %c0_0 = arith.constant 0 : index
    %0 = vector.load %arg1[%c0, %c0_0] : memref<32x32xf32, #tpu.memory_space<vmem>>, vector<32x32xf32>
    %c0_1 = arith.constant 0 : index
    %c0_2 = arith.constant 0 : index
    %c0_3 = arith.constant 0 : index
    %1 = vector.load %arg3[%c0_1, %c0_2, %c0_3] : memref<2x1x32xf32, #tpu.memory_space<vmem>>, vector<1x1x32xf32>
    %2 = vector.shape_cast %1 : vector<1x1x32xf32> to vector<1x32xf32>
    %c0_4 = arith.constant 0 : index
    %c0_5 = arith.constant 0 : index
    %c0_6 = arith.constant 0 : index
    %3 = vector.load %arg4[%c0_4, %c0_5, %c0_6] : memref<2x1x32xf32, #tpu.memory_space<vmem>>, vector<1x1x32xf32>
    %4 = vector.shape_cast %3 : vector<1x1x32xf32> to vector<1x32xf32>
    %cst = arith.constant dense<0.000000e+00> : vector<32xf32>
    %5 = vector.multi_reduction <add>, %0, %cst [1] : vector<32x32xf32> to vector<32xf32>
    %6 = vector.shape_cast %5 : vector<32xf32> to vector<32x1xf32>
    %cst_7 = arith.constant 3.200000e+01 : f32
    %7 = vector.broadcast %cst_7 : f32 to vector<32x1xf32>
    %8 = arith.divf %6, %7 : vector<32x1xf32>
    %9 = arith.mulf %0, %0 : vector<32x32xf32>
    %cst_8 = arith.constant dense<0.000000e+00> : vector<32xf32>
    %10 = vector.multi_reduction <add>, %9, %cst_8 [1] : vector<32x32xf32> to vector<32xf32>
    %11 = vector.shape_cast %10 : vector<32xf32> to vector<32x1xf32>
    %cst_9 = arith.constant 3.200000e+01 : f32
    %12 = vector.broadcast %cst_9 : f32 to vector<32x1xf32>
    %13 = arith.divf %11, %12 : vector<32x1xf32>
    %14 = arith.mulf %8, %8 : vector<32x1xf32>
    %15 = arith.subf %13, %14 : vector<32x1xf32>
    %cst_10 = arith.constant 0.000000e+00 : f32
    %16 = vector.broadcast %cst_10 : f32 to vector<32x1xf32>
    %17 = arith.maximumf %15, %16 : vector<32x1xf32>
    %18 = vector.broadcast %8 : vector<32x1xf32> to vector<32x32xf32>
    %19 = arith.subf %0, %18 : vector<32x32xf32>
    %cst_11 = arith.constant 9.99999974E-6 : f32
    %20 = vector.broadcast %cst_11 : f32 to vector<32x1xf32>
    %21 = arith.addf %17, %20 : vector<32x1xf32>
    %22 = math.rsqrt %21 : vector<32x1xf32>
    %23 = vector.broadcast %22 : vector<32x1xf32> to vector<32x32xf32>
    %24 = arith.mulf %19, %23 : vector<32x32xf32>
    %25 = vector.broadcast %2 : vector<1x32xf32> to vector<32x32xf32>
    %26 = arith.mulf %24, %25 : vector<32x32xf32>
    %27 = vector.broadcast %4 : vector<1x32xf32> to vector<32x32xf32>
    %28 = arith.addf %26, %27 : vector<32x32xf32>
    %29 = arith.truncf %28 : vector<32x32xf32> to vector<32x32xbf16>
    %c0_12 = arith.constant 0 : index
    %c0_13 = arith.constant 0 : index
    %c0_14 = arith.constant 0 : index
    %30 = vector.load %arg5[%c0_12, %c0_13, %c0_14] : memref<2x32x96xbf16, #tpu.memory_space<vmem>>, vector<1x32x96xbf16>
    %31 = vector.shape_cast %30 : vector<1x32x96xbf16> to vector<32x96xbf16>
    %cst_15 = arith.constant dense<0.000000e+00> : vector<32x96xf32>
    %32 = tpu.matmul %29, %31, %cst_15 {dimension_numbers = #tpu.dot_dimension_numbers<[1], [0], [0], [1], [0, 0, 1, 1], [], []>} : vector<32x32xbf16>, vector<32x96xbf16>, vector<32x96xf32> -> vector<32x96xf32>
    %c0_16 = arith.constant 0 : index
    %c0_17 = arith.constant 0 : index
    %c0_18 = arith.constant 0 : index
    %33 = vector.load %arg6[%c0_16, %c0_17, %c0_18] : memref<2x1x96xf32, #tpu.memory_space<vmem>>, vector<1x1x96xf32>
    %34 = vector.shape_cast %33 : vector<1x1x96xf32> to vector<1x96xf32>
    %35 = vector.broadcast %34 : vector<1x96xf32> to vector<32x96xf32>
    %36 = arith.addf %32, %35 : vector<32x96xf32>
    %37 = vector.extract_strided_slice %36 {offsets = [0, 0], sizes = [32, 32], strides = [1, 1]} : vector<32x96xf32> to vector<32x32xf32>
    %38 = vector.extract_strided_slice %37 {offsets = [0, 0], sizes = [32, 8], strides = [1, 1]} : vector<32x32xf32> to vector<32x8xf32>
    %39 = vector.extract_strided_slice %37 {offsets = [0, 8], sizes = [32, 8], strides = [1, 1]} : vector<32x32xf32> to vector<32x8xf32>
    %40 = vector.extract_strided_slice %37 {offsets = [0, 16], sizes = [32, 8], strides = [1, 1]} : vector<32x32xf32> to vector<32x8xf32>
    %41 = vector.extract_strided_slice %37 {offsets = [0, 24], sizes = [32, 8], strides = [1, 1]} : vector<32x32xf32> to vector<32x8xf32>
    %42 = vector.shape_cast %38 : vector<32x8xf32> to vector<1x32x8xf32>
    %43 = vector.shape_cast %39 : vector<32x8xf32> to vector<1x32x8xf32>
    %44 = vector.shape_cast %40 : vector<32x8xf32> to vector<1x32x8xf32>
    %45 = vector.shape_cast %41 : vector<32x8xf32> to vector<1x32x8xf32>
    %46 = tpu.concatenate %42, %43, %44, %45 in 0 : vector<1x32x8xf32>, vector<1x32x8xf32>, vector<1x32x8xf32>, vector<1x32x8xf32> -> vector<4x32x8xf32>
    %47 = vector.shape_cast %46 : vector<4x32x8xf32> to vector<16x8x8xf32>
    %48 = arith.truncf %47 : vector<16x8x8xf32> to vector<16x8x8xbf16>
    %49 = vector.extract_strided_slice %36 {offsets = [0, 32], sizes = [32, 32], strides = [1, 1]} : vector<32x96xf32> to vector<32x32xf32>
    %50 = vector.extract_strided_slice %49 {offsets = [0, 0], sizes = [32, 8], strides = [1, 1]} : vector<32x32xf32> to vector<32x8xf32>
    %51 = vector.extract_strided_slice %49 {offsets = [0, 8], sizes = [32, 8], strides = [1, 1]} : vector<32x32xf32> to vector<32x8xf32>
    %52 = vector.extract_strided_slice %49 {offsets = [0, 16], sizes = [32, 8], strides = [1, 1]} : vector<32x32xf32> to vector<32x8xf32>
    %53 = vector.extract_strided_slice %49 {offsets = [0, 24], sizes = [32, 8], strides = [1, 1]} : vector<32x32xf32> to vector<32x8xf32>
    %54 = vector.shape_cast %50 : vector<32x8xf32> to vector<1x32x8xf32>
    %55 = vector.shape_cast %51 : vector<32x8xf32> to vector<1x32x8xf32>
    %56 = vector.shape_cast %52 : vector<32x8xf32> to vector<1x32x8xf32>
    %57 = vector.shape_cast %53 : vector<32x8xf32> to vector<1x32x8xf32>
    %58 = tpu.concatenate %54, %55, %56, %57 in 0 : vector<1x32x8xf32>, vector<1x32x8xf32>, vector<1x32x8xf32>, vector<1x32x8xf32> -> vector<4x32x8xf32>
    %59 = vector.shape_cast %58 : vector<4x32x8xf32> to vector<16x8x8xf32>
    %60 = arith.truncf %59 : vector<16x8x8xf32> to vector<16x8x8xbf16>
    %61 = vector.extract_strided_slice %36 {offsets = [0, 64], sizes = [32, 32], strides = [1, 1]} : vector<32x96xf32> to vector<32x32xf32>
    %62 = vector.extract_strided_slice %61 {offsets = [0, 0], sizes = [32, 8], strides = [1, 1]} : vector<32x32xf32> to vector<32x8xf32>
    %63 = vector.extract_strided_slice %61 {offsets = [0, 8], sizes = [32, 8], strides = [1, 1]} : vector<32x32xf32> to vector<32x8xf32>
    %64 = vector.extract_strided_slice %61 {offsets = [0, 16], sizes = [32, 8], strides = [1, 1]} : vector<32x32xf32> to vector<32x8xf32>
    %65 = vector.extract_strided_slice %61 {offsets = [0, 24], sizes = [32, 8], strides = [1, 1]} : vector<32x32xf32> to vector<32x8xf32>
    %66 = vector.shape_cast %62 : vector<32x8xf32> to vector<1x32x8xf32>
    %67 = vector.shape_cast %63 : vector<32x8xf32> to vector<1x32x8xf32>
    %68 = vector.shape_cast %64 : vector<32x8xf32> to vector<1x32x8xf32>
    %69 = vector.shape_cast %65 : vector<32x8xf32> to vector<1x32x8xf32>
    %70 = tpu.concatenate %66, %67, %68, %69 in 0 : vector<1x32x8xf32>, vector<1x32x8xf32>, vector<1x32x8xf32>, vector<1x32x8xf32> -> vector<4x32x8xf32>
    %71 = vector.shape_cast %70 : vector<4x32x8xf32> to vector<16x8x8xf32>
    %72 = arith.truncf %71 : vector<16x8x8xf32> to vector<16x8x8xbf16>
    "tpu.trace_start"() <{level = 10 : i32, message = "bqd,bkd->bqk"}> : () -> ()
    %cst_19 = arith.constant dense<0.000000e+00> : vector<16x8x8xf32>
    %73 = tpu.matmul %48, %60, %cst_19 {dimension_numbers = #tpu.dot_dimension_numbers<[2], [2], [1], [1], [0, 0, 0, 1, 1, 1], [0], [0]>} : vector<16x8x8xbf16>, vector<16x8x8xbf16>, vector<16x8x8xf32> -> vector<16x8x8xf32>
    "tpu.trace_stop"() : () -> ()
    %74 = vector.shape_cast %73 : vector<16x8x8xf32> to vector<4x2x2x8x8xf32>
    %c0_20 = arith.constant 0 : index
    %c0_21 = arith.constant 0 : index
    %c0_22 = arith.constant 0 : index
    %c0_23 = arith.constant 0 : index
    %c0_24 = arith.constant 0 : index
    %75 = vector.load %arg2[%c0_20, %c0_21, %c0_22, %c0_23, %c0_24] : memref<2x4x2x8x8xf32, #tpu.memory_space<vmem>>, vector<1x4x2x8x8xf32>
    %76 = vector.shape_cast %75 : vector<1x4x2x8x8xf32> to vector<4x2x8x8xf32>
    %77 = vector.shape_cast %76 : vector<4x2x8x8xf32> to vector<4x1x2x8x8xf32>
    %78 = vector.broadcast %77 : vector<4x1x2x8x8xf32> to vector<4x2x2x8x8xf32>
    %79 = arith.addf %74, %78 : vector<4x2x2x8x8xf32>
    %80 = vector.shape_cast %79 : vector<4x2x2x8x8xf32> to vector<16x8x8xf32>
    %cst_25 = arith.constant dense<0xFF800000> : vector<16x8xf32>
    %81 = vector.multi_reduction <maximumf>, %80, %cst_25 [2] : vector<16x8x8xf32> to vector<16x8xf32>
    %82 = vector.shape_cast %81 : vector<16x8xf32> to vector<16x8x1xf32>
    %83 = vector.broadcast %82 : vector<16x8x1xf32> to vector<16x8x8xf32>
    %84 = arith.subf %80, %83 : vector<16x8x8xf32>
    %85 = math.exp %84 : vector<16x8x8xf32>
    %cst_26 = arith.constant dense<0.000000e+00> : vector<16x8xf32>
    %86 = vector.multi_reduction <add>, %85, %cst_26 [2] : vector<16x8x8xf32> to vector<16x8xf32>
    %87 = vector.shape_cast %86 : vector<16x8xf32> to vector<16x8x1xf32>
    %88 = tpu.reciprocal %87 {approx = true} : vector<16x8x1xf32> -> vector<16x8x1xf32>
    %89 = vector.broadcast %88 : vector<16x8x1xf32> to vector<16x8x8xf32>
    %90 = arith.mulf %85, %89 : vector<16x8x8xf32>
    %91 = arith.truncf %90 : vector<16x8x8xf32> to vector<16x8x8xbf16>
    "tpu.trace_start"() <{level = 10 : i32, message = "bqk,bkd->bqd"}> : () -> ()
    %cst_27 = arith.constant dense<0.000000e+00> : vector<16x8x8xf32>
    %92 = tpu.matmul %91, %72, %cst_27 {dimension_numbers = #tpu.dot_dimension_numbers<[2], [1], [1], [2], [0, 0, 0, 1, 1, 2], [0], [0]>} : vector<16x8x8xbf16>, vector<16x8x8xbf16>, vector<16x8x8xf32> -> vector<16x8x8xf32>
    "tpu.trace_stop"() : () -> ()
    %93 = vector.shape_cast %92 : vector<16x8x8xf32> to vector<4x32x8xf32>
    %94 = vector.extract_strided_slice %93 {offsets = [0, 0, 0], sizes = [1, 32, 8], strides = [1, 1, 1]} : vector<4x32x8xf32> to vector<1x32x8xf32>
    %95 = vector.shape_cast %94 : vector<1x32x8xf32> to vector<32x8xf32>
    %96 = vector.extract_strided_slice %93 {offsets = [1, 0, 0], sizes = [1, 32, 8], strides = [1, 1, 1]} : vector<4x32x8xf32> to vector<1x32x8xf32>
    %97 = vector.shape_cast %96 : vector<1x32x8xf32> to vector<32x8xf32>
    %98 = vector.extract_strided_slice %93 {offsets = [2, 0, 0], sizes = [1, 32, 8], strides = [1, 1, 1]} : vector<4x32x8xf32> to vector<1x32x8xf32>
    %99 = vector.shape_cast %98 : vector<1x32x8xf32> to vector<32x8xf32>
    %100 = vector.extract_strided_slice %93 {offsets = [3, 0, 0], sizes = [1, 32, 8], strides = [1, 1, 1]} : vector<4x32x8xf32> to vector<1x32x8xf32>
    %101 = vector.shape_cast %100 : vector<1x32x8xf32> to vector<32x8xf32>
    %102 = tpu.concatenate %95, %97, %99, %101 in 1 : vector<32x8xf32>, vector<32x8xf32>, vector<32x8xf32>, vector<32x8xf32> -> vector<32x32xf32>
    %103 = arith.truncf %102 : vector<32x32xf32> to vector<32x32xbf16>
    %c0_28 = arith.constant 0 : index
    %c0_29 = arith.constant 0 : index
    %c0_30 = arith.constant 0 : index
    %104 = vector.load %arg7[%c0_28, %c0_29, %c0_30] : memref<2x32x32xbf16, #tpu.memory_space<vmem>>, vector<1x32x32xbf16>
    %105 = vector.shape_cast %104 : vector<1x32x32xbf16> to vector<32x32xbf16>
    %cst_31 = arith.constant dense<0.000000e+00> : vector<32x32xf32>
    %106 = tpu.matmul %103, %105, %cst_31 {dimension_numbers = #tpu.dot_dimension_numbers<[1], [0], [0], [1], [0, 0, 1, 1], [], []>} : vector<32x32xbf16>, vector<32x32xbf16>, vector<32x32xf32> -> vector<32x32xf32>
    %c0_32 = arith.constant 0 : index
    %c0_33 = arith.constant 0 : index
    %c0_34 = arith.constant 0 : index
    %107 = vector.load %arg8[%c0_32, %c0_33, %c0_34] : memref<2x1x32xf32, #tpu.memory_space<vmem>>, vector<1x1x32xf32>
    %108 = vector.shape_cast %107 : vector<1x1x32xf32> to vector<1x32xf32>
    %109 = vector.broadcast %108 : vector<1x32xf32> to vector<32x32xf32>
    %110 = arith.addf %106, %109 : vector<32x32xf32>
    %111 = arith.addf %0, %110 : vector<32x32xf32>
    %c0_35 = arith.constant 0 : index
    %c0_36 = arith.constant 0 : index
    %c0_37 = arith.constant 0 : index
    %112 = vector.load %arg9[%c0_35, %c0_36, %c0_37] : memref<2x1x32xf32, #tpu.memory_space<vmem>>, vector<1x1x32xf32>
    %113 = vector.shape_cast %112 : vector<1x1x32xf32> to vector<1x32xf32>
    %c0_38 = arith.constant 0 : index
    %c0_39 = arith.constant 0 : index
    %c0_40 = arith.constant 0 : index
    %114 = vector.load %arg10[%c0_38, %c0_39, %c0_40] : memref<2x1x32xf32, #tpu.memory_space<vmem>>, vector<1x1x32xf32>
    %115 = vector.shape_cast %114 : vector<1x1x32xf32> to vector<1x32xf32>
    %cst_41 = arith.constant dense<0.000000e+00> : vector<32xf32>
    %116 = vector.multi_reduction <add>, %111, %cst_41 [1] : vector<32x32xf32> to vector<32xf32>
    %117 = vector.shape_cast %116 : vector<32xf32> to vector<32x1xf32>
    %cst_42 = arith.constant 3.200000e+01 : f32
    %118 = vector.broadcast %cst_42 : f32 to vector<32x1xf32>
    %119 = arith.divf %117, %118 : vector<32x1xf32>
    %120 = arith.mulf %111, %111 : vector<32x32xf32>
    %cst_43 = arith.constant dense<0.000000e+00> : vector<32xf32>
    %121 = vector.multi_reduction <add>, %120, %cst_43 [1] : vector<32x32xf32> to vector<32xf32>
    %122 = vector.shape_cast %121 : vector<32xf32> to vector<32x1xf32>
    %cst_44 = arith.constant 3.200000e+01 : f32
    %123 = vector.broadcast %cst_44 : f32 to vector<32x1xf32>
    %124 = arith.divf %122, %123 : vector<32x1xf32>
    %125 = arith.mulf %119, %119 : vector<32x1xf32>
    %126 = arith.subf %124, %125 : vector<32x1xf32>
    %cst_45 = arith.constant 0.000000e+00 : f32
    %127 = vector.broadcast %cst_45 : f32 to vector<32x1xf32>
    %128 = arith.maximumf %126, %127 : vector<32x1xf32>
    %129 = vector.broadcast %119 : vector<32x1xf32> to vector<32x32xf32>
    %130 = arith.subf %111, %129 : vector<32x32xf32>
    %cst_46 = arith.constant 9.99999974E-6 : f32
    %131 = vector.broadcast %cst_46 : f32 to vector<32x1xf32>
    %132 = arith.addf %128, %131 : vector<32x1xf32>
    %133 = math.rsqrt %132 : vector<32x1xf32>
    %134 = vector.broadcast %133 : vector<32x1xf32> to vector<32x32xf32>
    %135 = arith.mulf %130, %134 : vector<32x32xf32>
    %136 = vector.broadcast %113 : vector<1x32xf32> to vector<32x32xf32>
    %137 = arith.mulf %135, %136 : vector<32x32xf32>
    %138 = vector.broadcast %115 : vector<1x32xf32> to vector<32x32xf32>
    %139 = arith.addf %137, %138 : vector<32x32xf32>
    %140 = arith.truncf %139 : vector<32x32xf32> to vector<32x32xbf16>
    %c0_47 = arith.constant 0 : index
    %c0_48 = arith.constant 0 : index
    %c0_49 = arith.constant 0 : index
    %141 = vector.load %arg11[%c0_47, %c0_48, %c0_49] : memref<2x32x128xbf16, #tpu.memory_space<vmem>>, vector<1x32x128xbf16>
    %142 = vector.shape_cast %141 : vector<1x32x128xbf16> to vector<32x128xbf16>
    %cst_50 = arith.constant dense<0.000000e+00> : vector<32x128xf32>
    %143 = tpu.matmul %140, %142, %cst_50 {dimension_numbers = #tpu.dot_dimension_numbers<[1], [0], [0], [1], [0, 0, 1, 1], [], []>} : vector<32x32xbf16>, vector<32x128xbf16>, vector<32x128xf32> -> vector<32x128xf32>
    %c0_51 = arith.constant 0 : index
    %c0_52 = arith.constant 0 : index
    %c0_53 = arith.constant 0 : index
    %144 = vector.load %arg12[%c0_51, %c0_52, %c0_53] : memref<2x1x128xf32, #tpu.memory_space<vmem>>, vector<1x1x128xf32>
    %145 = vector.shape_cast %144 : vector<1x1x128xf32> to vector<1x128xf32>
    %146 = vector.broadcast %145 : vector<1x128xf32> to vector<32x128xf32>
    %147 = arith.addf %143, %146 : vector<32x128xf32>
    %cst_54 = arith.constant 5.000000e-01 : f32
    %148 = vector.broadcast %cst_54 : f32 to vector<32x128xf32>
    %149 = arith.mulf %148, %147 : vector<32x128xf32>
    %cst_55 = arith.constant 4.471500e-02 : f32
    %150 = vector.broadcast %cst_55 : f32 to vector<32x128xf32>
    %151 = arith.mulf %150, %147 : vector<32x128xf32>
    %152 = arith.mulf %151, %147 : vector<32x128xf32>
    %153 = arith.mulf %152, %147 : vector<32x128xf32>
    %154 = arith.addf %147, %153 : vector<32x128xf32>
    %cst_56 = arith.constant 0.797884583 : f32
    %155 = vector.broadcast %cst_56 : f32 to vector<32x128xf32>
    %156 = arith.mulf %155, %154 : vector<32x128xf32>
    %157 = math.tanh %156 : vector<32x128xf32>
    %cst_57 = arith.constant 1.000000e+00 : f32
    %158 = vector.broadcast %cst_57 : f32 to vector<32x128xf32>
    %159 = arith.addf %158, %157 : vector<32x128xf32>
    %160 = arith.mulf %149, %159 : vector<32x128xf32>
    %161 = arith.truncf %160 : vector<32x128xf32> to vector<32x128xbf16>
    %c0_58 = arith.constant 0 : index
    %c0_59 = arith.constant 0 : index
    %c0_60 = arith.constant 0 : index
    %162 = vector.load %arg13[%c0_58, %c0_59, %c0_60] : memref<2x128x32xbf16, #tpu.memory_space<vmem>>, vector<1x128x32xbf16>
    %163 = vector.shape_cast %162 : vector<1x128x32xbf16> to vector<128x32xbf16>
    %cst_61 = arith.constant dense<0.000000e+00> : vector<32x32xf32>
    %164 = tpu.matmul %161, %163, %cst_61 {dimension_numbers = #tpu.dot_dimension_numbers<[1], [0], [0], [1], [0, 0, 1, 1], [], []>} : vector<32x128xbf16>, vector<128x32xbf16>, vector<32x32xf32> -> vector<32x32xf32>
    %c0_62 = arith.constant 0 : index
    %c0_63 = arith.constant 0 : index
    %c0_64 = arith.constant 0 : index
    %165 = vector.load %arg14[%c0_62, %c0_63, %c0_64] : memref<2x1x32xf32, #tpu.memory_space<vmem>>, vector<1x1x32xf32>
    %166 = vector.shape_cast %165 : vector<1x1x32xf32> to vector<1x32xf32>
    %167 = vector.broadcast %166 : vector<1x32xf32> to vector<32x32xf32>
    %168 = arith.addf %164, %167 : vector<32x32xf32>
    %169 = arith.addf %111, %168 : vector<32x32xf32>
    %c1 = arith.constant 1 : index
    %c0_65 = arith.constant 0 : index
    %c0_66 = arith.constant 0 : index
    %170 = vector.load %arg3[%c1, %c0_65, %c0_66] : memref<2x1x32xf32, #tpu.memory_space<vmem>>, vector<1x1x32xf32>
    %171 = vector.shape_cast %170 : vector<1x1x32xf32> to vector<1x32xf32>
    %c1_67 = arith.constant 1 : index
    %c0_68 = arith.constant 0 : index
    %c0_69 = arith.constant 0 : index
    %172 = vector.load %arg4[%c1_67, %c0_68, %c0_69] : memref<2x1x32xf32, #tpu.memory_space<vmem>>, vector<1x1x32xf32>
    %173 = vector.shape_cast %172 : vector<1x1x32xf32> to vector<1x32xf32>
    %cst_70 = arith.constant dense<0.000000e+00> : vector<32xf32>
    %174 = vector.multi_reduction <add>, %169, %cst_70 [1] : vector<32x32xf32> to vector<32xf32>
    %175 = vector.shape_cast %174 : vector<32xf32> to vector<32x1xf32>
    %cst_71 = arith.constant 3.200000e+01 : f32
    %176 = vector.broadcast %cst_71 : f32 to vector<32x1xf32>
    %177 = arith.divf %175, %176 : vector<32x1xf32>
    %178 = arith.mulf %169, %169 : vector<32x32xf32>
    %cst_72 = arith.constant dense<0.000000e+00> : vector<32xf32>
    %179 = vector.multi_reduction <add>, %178, %cst_72 [1] : vector<32x32xf32> to vector<32xf32>
    %180 = vector.shape_cast %179 : vector<32xf32> to vector<32x1xf32>
    %cst_73 = arith.constant 3.200000e+01 : f32
    %181 = vector.broadcast %cst_73 : f32 to vector<32x1xf32>
    %182 = arith.divf %180, %181 : vector<32x1xf32>
    %183 = arith.mulf %177, %177 : vector<32x1xf32>
    %184 = arith.subf %182, %183 : vector<32x1xf32>
    %cst_74 = arith.constant 0.000000e+00 : f32
    %185 = vector.broadcast %cst_74 : f32 to vector<32x1xf32>
    %186 = arith.maximumf %184, %185 : vector<32x1xf32>
    %187 = vector.broadcast %177 : vector<32x1xf32> to vector<32x32xf32>
    %188 = arith.subf %169, %187 : vector<32x32xf32>
    %cst_75 = arith.constant 9.99999974E-6 : f32
    %189 = vector.broadcast %cst_75 : f32 to vector<32x1xf32>
    %190 = arith.addf %186, %189 : vector<32x1xf32>
    %191 = math.rsqrt %190 : vector<32x1xf32>
    %192 = vector.broadcast %191 : vector<32x1xf32> to vector<32x32xf32>
    %193 = arith.mulf %188, %192 : vector<32x32xf32>
    %194 = vector.broadcast %171 : vector<1x32xf32> to vector<32x32xf32>
    %195 = arith.mulf %193, %194 : vector<32x32xf32>
    %196 = vector.broadcast %173 : vector<1x32xf32> to vector<32x32xf32>
    %197 = arith.addf %195, %196 : vector<32x32xf32>
    %198 = vector.shape_cast %197 : vector<32x32xf32> to vector<2x16x32xf32>
    %199 = vector.extract_strided_slice %198 {offsets = [0, 4, 0], sizes = [2, 12, 32], strides = [1, 1, 1]} : vector<2x16x32xf32> to vector<2x12x32xf32>
    %200 = vector.extract_strided_slice %198 {offsets = [0, 0, 0], sizes = [2, 4, 32], strides = [1, 1, 1]} : vector<2x16x32xf32> to vector<2x4x32xf32>
    %201 = tpu.concatenate %199, %200 in 1 : vector<2x12x32xf32>, vector<2x4x32xf32> -> vector<2x16x32xf32>
    %202 = vector.shape_cast %201 : vector<2x16x32xf32> to vector<32x32xf32>
    %203 = arith.truncf %202 : vector<32x32xf32> to vector<32x32xbf16>
    %c1_76 = arith.constant 1 : index
    %c0_77 = arith.constant 0 : index
    %c0_78 = arith.constant 0 : index
    %204 = vector.load %arg5[%c1_76, %c0_77, %c0_78] : memref<2x32x96xbf16, #tpu.memory_space<vmem>>, vector<1x32x96xbf16>
    %205 = vector.shape_cast %204 : vector<1x32x96xbf16> to vector<32x96xbf16>
    %cst_79 = arith.constant dense<0.000000e+00> : vector<32x96xf32>
    %206 = tpu.matmul %203, %205, %cst_79 {dimension_numbers = #tpu.dot_dimension_numbers<[1], [0], [0], [1], [0, 0, 1, 1], [], []>} : vector<32x32xbf16>, vector<32x96xbf16>, vector<32x96xf32> -> vector<32x96xf32>
    %c1_80 = arith.constant 1 : index
    %c0_81 = arith.constant 0 : index
    %c0_82 = arith.constant 0 : index
    %207 = vector.load %arg6[%c1_80, %c0_81, %c0_82] : memref<2x1x96xf32, #tpu.memory_space<vmem>>, vector<1x1x96xf32>
    %208 = vector.shape_cast %207 : vector<1x1x96xf32> to vector<1x96xf32>
    %209 = vector.broadcast %208 : vector<1x96xf32> to vector<32x96xf32>
    %210 = arith.addf %206, %209 : vector<32x96xf32>
    %211 = vector.extract_strided_slice %210 {offsets = [0, 0], sizes = [32, 32], strides = [1, 1]} : vector<32x96xf32> to vector<32x32xf32>
    %212 = vector.extract_strided_slice %211 {offsets = [0, 0], sizes = [32, 8], strides = [1, 1]} : vector<32x32xf32> to vector<32x8xf32>
    %213 = vector.extract_strided_slice %211 {offsets = [0, 8], sizes = [32, 8], strides = [1, 1]} : vector<32x32xf32> to vector<32x8xf32>
    %214 = vector.extract_strided_slice %211 {offsets = [0, 16], sizes = [32, 8], strides = [1, 1]} : vector<32x32xf32> to vector<32x8xf32>
    %215 = vector.extract_strided_slice %211 {offsets = [0, 24], sizes = [32, 8], strides = [1, 1]} : vector<32x32xf32> to vector<32x8xf32>
    %216 = vector.shape_cast %212 : vector<32x8xf32> to vector<1x32x8xf32>
    %217 = vector.shape_cast %213 : vector<32x8xf32> to vector<1x32x8xf32>
    %218 = vector.shape_cast %214 : vector<32x8xf32> to vector<1x32x8xf32>
    %219 = vector.shape_cast %215 : vector<32x8xf32> to vector<1x32x8xf32>
    %220 = tpu.concatenate %216, %217, %218, %219 in 0 : vector<1x32x8xf32>, vector<1x32x8xf32>, vector<1x32x8xf32>, vector<1x32x8xf32> -> vector<4x32x8xf32>
    %221 = vector.shape_cast %220 : vector<4x32x8xf32> to vector<16x8x8xf32>
    %222 = arith.truncf %221 : vector<16x8x8xf32> to vector<16x8x8xbf16>
    %223 = vector.extract_strided_slice %210 {offsets = [0, 32], sizes = [32, 32], strides = [1, 1]} : vector<32x96xf32> to vector<32x32xf32>
    %224 = vector.extract_strided_slice %223 {offsets = [0, 0], sizes = [32, 8], strides = [1, 1]} : vector<32x32xf32> to vector<32x8xf32>
    %225 = vector.extract_strided_slice %223 {offsets = [0, 8], sizes = [32, 8], strides = [1, 1]} : vector<32x32xf32> to vector<32x8xf32>
    %226 = vector.extract_strided_slice %223 {offsets = [0, 16], sizes = [32, 8], strides = [1, 1]} : vector<32x32xf32> to vector<32x8xf32>
    %227 = vector.extract_strided_slice %223 {offsets = [0, 24], sizes = [32, 8], strides = [1, 1]} : vector<32x32xf32> to vector<32x8xf32>
    %228 = vector.shape_cast %224 : vector<32x8xf32> to vector<1x32x8xf32>
    %229 = vector.shape_cast %225 : vector<32x8xf32> to vector<1x32x8xf32>
    %230 = vector.shape_cast %226 : vector<32x8xf32> to vector<1x32x8xf32>
    %231 = vector.shape_cast %227 : vector<32x8xf32> to vector<1x32x8xf32>
    %232 = tpu.concatenate %228, %229, %230, %231 in 0 : vector<1x32x8xf32>, vector<1x32x8xf32>, vector<1x32x8xf32>, vector<1x32x8xf32> -> vector<4x32x8xf32>
    %233 = vector.shape_cast %232 : vector<4x32x8xf32> to vector<16x8x8xf32>
    %234 = arith.truncf %233 : vector<16x8x8xf32> to vector<16x8x8xbf16>
    %235 = vector.extract_strided_slice %210 {offsets = [0, 64], sizes = [32, 32], strides = [1, 1]} : vector<32x96xf32> to vector<32x32xf32>
    %236 = vector.extract_strided_slice %235 {offsets = [0, 0], sizes = [32, 8], strides = [1, 1]} : vector<32x32xf32> to vector<32x8xf32>
    %237 = vector.extract_strided_slice %235 {offsets = [0, 8], sizes = [32, 8], strides = [1, 1]} : vector<32x32xf32> to vector<32x8xf32>
    %238 = vector.extract_strided_slice %235 {offsets = [0, 16], sizes = [32, 8], strides = [1, 1]} : vector<32x32xf32> to vector<32x8xf32>
    %239 = vector.extract_strided_slice %235 {offsets = [0, 24], sizes = [32, 8], strides = [1, 1]} : vector<32x32xf32> to vector<32x8xf32>
    %240 = vector.shape_cast %236 : vector<32x8xf32> to vector<1x32x8xf32>
    %241 = vector.shape_cast %237 : vector<32x8xf32> to vector<1x32x8xf32>
    %242 = vector.shape_cast %238 : vector<32x8xf32> to vector<1x32x8xf32>
    %243 = vector.shape_cast %239 : vector<32x8xf32> to vector<1x32x8xf32>
    %244 = tpu.concatenate %240, %241, %242, %243 in 0 : vector<1x32x8xf32>, vector<1x32x8xf32>, vector<1x32x8xf32>, vector<1x32x8xf32> -> vector<4x32x8xf32>
    %245 = vector.shape_cast %244 : vector<4x32x8xf32> to vector<16x8x8xf32>
    %246 = arith.truncf %245 : vector<16x8x8xf32> to vector<16x8x8xbf16>
    "tpu.trace_start"() <{level = 10 : i32, message = "bqd,bkd->bqk"}> : () -> ()
    %cst_83 = arith.constant dense<0.000000e+00> : vector<16x8x8xf32>
    %247 = tpu.matmul %222, %234, %cst_83 {dimension_numbers = #tpu.dot_dimension_numbers<[2], [2], [1], [1], [0, 0, 0, 1, 1, 1], [0], [0]>} : vector<16x8x8xbf16>, vector<16x8x8xbf16>, vector<16x8x8xf32> -> vector<16x8x8xf32>
    "tpu.trace_stop"() : () -> ()
    %248 = vector.shape_cast %247 : vector<16x8x8xf32> to vector<4x2x2x8x8xf32>
    %c1_84 = arith.constant 1 : index
    %c0_85 = arith.constant 0 : index
    %c0_86 = arith.constant 0 : index
    %c0_87 = arith.constant 0 : index
    %c0_88 = arith.constant 0 : index
    %249 = vector.load %arg2[%c1_84, %c0_85, %c0_86, %c0_87, %c0_88] : memref<2x4x2x8x8xf32, #tpu.memory_space<vmem>>, vector<1x4x2x8x8xf32>
    %250 = vector.shape_cast %249 : vector<1x4x2x8x8xf32> to vector<4x2x8x8xf32>
    %251 = vector.shape_cast %250 : vector<4x2x8x8xf32> to vector<4x1x2x8x8xf32>
    %252 = vector.broadcast %251 : vector<4x1x2x8x8xf32> to vector<4x2x2x8x8xf32>
    %253 = arith.addf %248, %252 : vector<4x2x2x8x8xf32>
    %254 = vector.shape_cast %253 : vector<4x2x2x8x8xf32> to vector<16x8x8xf32>
    %cst_89 = arith.constant dense<0xFF800000> : vector<16x8xf32>
    %255 = vector.multi_reduction <maximumf>, %254, %cst_89 [2] : vector<16x8x8xf32> to vector<16x8xf32>
    %256 = vector.shape_cast %255 : vector<16x8xf32> to vector<16x8x1xf32>
    %257 = vector.broadcast %256 : vector<16x8x1xf32> to vector<16x8x8xf32>
    %258 = arith.subf %254, %257 : vector<16x8x8xf32>
    %259 = math.exp %258 : vector<16x8x8xf32>
    %cst_90 = arith.constant dense<0.000000e+00> : vector<16x8xf32>
    %260 = vector.multi_reduction <add>, %259, %cst_90 [2] : vector<16x8x8xf32> to vector<16x8xf32>
    %261 = vector.shape_cast %260 : vector<16x8xf32> to vector<16x8x1xf32>
    %262 = tpu.reciprocal %261 {approx = true} : vector<16x8x1xf32> -> vector<16x8x1xf32>
    %263 = vector.broadcast %262 : vector<16x8x1xf32> to vector<16x8x8xf32>
    %264 = arith.mulf %259, %263 : vector<16x8x8xf32>
    %265 = arith.truncf %264 : vector<16x8x8xf32> to vector<16x8x8xbf16>
    "tpu.trace_start"() <{level = 10 : i32, message = "bqk,bkd->bqd"}> : () -> ()
    %cst_91 = arith.constant dense<0.000000e+00> : vector<16x8x8xf32>
    %266 = tpu.matmul %265, %246, %cst_91 {dimension_numbers = #tpu.dot_dimension_numbers<[2], [1], [1], [2], [0, 0, 0, 1, 1, 2], [0], [0]>} : vector<16x8x8xbf16>, vector<16x8x8xbf16>, vector<16x8x8xf32> -> vector<16x8x8xf32>
    "tpu.trace_stop"() : () -> ()
    %267 = vector.shape_cast %266 : vector<16x8x8xf32> to vector<4x32x8xf32>
    %268 = vector.extract_strided_slice %267 {offsets = [0, 0, 0], sizes = [1, 32, 8], strides = [1, 1, 1]} : vector<4x32x8xf32> to vector<1x32x8xf32>
    %269 = vector.shape_cast %268 : vector<1x32x8xf32> to vector<32x8xf32>
    %270 = vector.extract_strided_slice %267 {offsets = [1, 0, 0], sizes = [1, 32, 8], strides = [1, 1, 1]} : vector<4x32x8xf32> to vector<1x32x8xf32>
    %271 = vector.shape_cast %270 : vector<1x32x8xf32> to vector<32x8xf32>
    %272 = vector.extract_strided_slice %267 {offsets = [2, 0, 0], sizes = [1, 32, 8], strides = [1, 1, 1]} : vector<4x32x8xf32> to vector<1x32x8xf32>
    %273 = vector.shape_cast %272 : vector<1x32x8xf32> to vector<32x8xf32>
    %274 = vector.extract_strided_slice %267 {offsets = [3, 0, 0], sizes = [1, 32, 8], strides = [1, 1, 1]} : vector<4x32x8xf32> to vector<1x32x8xf32>
    %275 = vector.shape_cast %274 : vector<1x32x8xf32> to vector<32x8xf32>
    %276 = tpu.concatenate %269, %271, %273, %275 in 1 : vector<32x8xf32>, vector<32x8xf32>, vector<32x8xf32>, vector<32x8xf32> -> vector<32x32xf32>
    %277 = arith.truncf %276 : vector<32x32xf32> to vector<32x32xbf16>
    %c1_92 = arith.constant 1 : index
    %c0_93 = arith.constant 0 : index
    %c0_94 = arith.constant 0 : index
    %278 = vector.load %arg7[%c1_92, %c0_93, %c0_94] : memref<2x32x32xbf16, #tpu.memory_space<vmem>>, vector<1x32x32xbf16>
    %279 = vector.shape_cast %278 : vector<1x32x32xbf16> to vector<32x32xbf16>
    %cst_95 = arith.constant dense<0.000000e+00> : vector<32x32xf32>
    %280 = tpu.matmul %277, %279, %cst_95 {dimension_numbers = #tpu.dot_dimension_numbers<[1], [0], [0], [1], [0, 0, 1, 1], [], []>} : vector<32x32xbf16>, vector<32x32xbf16>, vector<32x32xf32> -> vector<32x32xf32>
    %c1_96 = arith.constant 1 : index
    %c0_97 = arith.constant 0 : index
    %c0_98 = arith.constant 0 : index
    %281 = vector.load %arg8[%c1_96, %c0_97, %c0_98] : memref<2x1x32xf32, #tpu.memory_space<vmem>>, vector<1x1x32xf32>
    %282 = vector.shape_cast %281 : vector<1x1x32xf32> to vector<1x32xf32>
    %283 = vector.broadcast %282 : vector<1x32xf32> to vector<32x32xf32>
    %284 = arith.addf %280, %283 : vector<32x32xf32>
    %285 = vector.shape_cast %284 : vector<32x32xf32> to vector<2x16x32xf32>
    %286 = vector.extract_strided_slice %285 {offsets = [0, 12, 0], sizes = [2, 4, 32], strides = [1, 1, 1]} : vector<2x16x32xf32> to vector<2x4x32xf32>
    %287 = vector.extract_strided_slice %285 {offsets = [0, 0, 0], sizes = [2, 12, 32], strides = [1, 1, 1]} : vector<2x16x32xf32> to vector<2x12x32xf32>
    %288 = tpu.concatenate %286, %287 in 1 : vector<2x4x32xf32>, vector<2x12x32xf32> -> vector<2x16x32xf32>
    %289 = vector.shape_cast %288 : vector<2x16x32xf32> to vector<32x32xf32>
    %290 = arith.addf %169, %289 : vector<32x32xf32>
    %c1_99 = arith.constant 1 : index
    %c0_100 = arith.constant 0 : index
    %c0_101 = arith.constant 0 : index
    %291 = vector.load %arg9[%c1_99, %c0_100, %c0_101] : memref<2x1x32xf32, #tpu.memory_space<vmem>>, vector<1x1x32xf32>
    %292 = vector.shape_cast %291 : vector<1x1x32xf32> to vector<1x32xf32>
    %c1_102 = arith.constant 1 : index
    %c0_103 = arith.constant 0 : index
    %c0_104 = arith.constant 0 : index
    %293 = vector.load %arg10[%c1_102, %c0_103, %c0_104] : memref<2x1x32xf32, #tpu.memory_space<vmem>>, vector<1x1x32xf32>
    %294 = vector.shape_cast %293 : vector<1x1x32xf32> to vector<1x32xf32>
    %cst_105 = arith.constant dense<0.000000e+00> : vector<32xf32>
    %295 = vector.multi_reduction <add>, %290, %cst_105 [1] : vector<32x32xf32> to vector<32xf32>
    %296 = vector.shape_cast %295 : vector<32xf32> to vector<32x1xf32>
    %cst_106 = arith.constant 3.200000e+01 : f32
    %297 = vector.broadcast %cst_106 : f32 to vector<32x1xf32>
    %298 = arith.divf %296, %297 : vector<32x1xf32>
    %299 = arith.mulf %290, %290 : vector<32x32xf32>
    %cst_107 = arith.constant dense<0.000000e+00> : vector<32xf32>
    %300 = vector.multi_reduction <add>, %299, %cst_107 [1] : vector<32x32xf32> to vector<32xf32>
    %301 = vector.shape_cast %300 : vector<32xf32> to vector<32x1xf32>
    %cst_108 = arith.constant 3.200000e+01 : f32
    %302 = vector.broadcast %cst_108 : f32 to vector<32x1xf32>
    %303 = arith.divf %301, %302 : vector<32x1xf32>
    %304 = arith.mulf %298, %298 : vector<32x1xf32>
    %305 = arith.subf %303, %304 : vector<32x1xf32>
    %cst_109 = arith.constant 0.000000e+00 : f32
    %306 = vector.broadcast %cst_109 : f32 to vector<32x1xf32>
    %307 = arith.maximumf %305, %306 : vector<32x1xf32>
    %308 = vector.broadcast %298 : vector<32x1xf32> to vector<32x32xf32>
    %309 = arith.subf %290, %308 : vector<32x32xf32>
    %cst_110 = arith.constant 9.99999974E-6 : f32
    %310 = vector.broadcast %cst_110 : f32 to vector<32x1xf32>
    %311 = arith.addf %307, %310 : vector<32x1xf32>
    %312 = math.rsqrt %311 : vector<32x1xf32>
    %313 = vector.broadcast %312 : vector<32x1xf32> to vector<32x32xf32>
    %314 = arith.mulf %309, %313 : vector<32x32xf32>
    %315 = vector.broadcast %292 : vector<1x32xf32> to vector<32x32xf32>
    %316 = arith.mulf %314, %315 : vector<32x32xf32>
    %317 = vector.broadcast %294 : vector<1x32xf32> to vector<32x32xf32>
    %318 = arith.addf %316, %317 : vector<32x32xf32>
    %319 = arith.truncf %318 : vector<32x32xf32> to vector<32x32xbf16>
    %c1_111 = arith.constant 1 : index
    %c0_112 = arith.constant 0 : index
    %c0_113 = arith.constant 0 : index
    %320 = vector.load %arg11[%c1_111, %c0_112, %c0_113] : memref<2x32x128xbf16, #tpu.memory_space<vmem>>, vector<1x32x128xbf16>
    %321 = vector.shape_cast %320 : vector<1x32x128xbf16> to vector<32x128xbf16>
    %cst_114 = arith.constant dense<0.000000e+00> : vector<32x128xf32>
    %322 = tpu.matmul %319, %321, %cst_114 {dimension_numbers = #tpu.dot_dimension_numbers<[1], [0], [0], [1], [0, 0, 1, 1], [], []>} : vector<32x32xbf16>, vector<32x128xbf16>, vector<32x128xf32> -> vector<32x128xf32>
    %c1_115 = arith.constant 1 : index
    %c0_116 = arith.constant 0 : index
    %c0_117 = arith.constant 0 : index
    %323 = vector.load %arg12[%c1_115, %c0_116, %c0_117] : memref<2x1x128xf32, #tpu.memory_space<vmem>>, vector<1x1x128xf32>
    %324 = vector.shape_cast %323 : vector<1x1x128xf32> to vector<1x128xf32>
    %325 = vector.broadcast %324 : vector<1x128xf32> to vector<32x128xf32>
    %326 = arith.addf %322, %325 : vector<32x128xf32>
    %cst_118 = arith.constant 5.000000e-01 : f32
    %327 = vector.broadcast %cst_118 : f32 to vector<32x128xf32>
    %328 = arith.mulf %327, %326 : vector<32x128xf32>
    %cst_119 = arith.constant 4.471500e-02 : f32
    %329 = vector.broadcast %cst_119 : f32 to vector<32x128xf32>
    %330 = arith.mulf %329, %326 : vector<32x128xf32>
    %331 = arith.mulf %330, %326 : vector<32x128xf32>
    %332 = arith.mulf %331, %326 : vector<32x128xf32>
    %333 = arith.addf %326, %332 : vector<32x128xf32>
    %cst_120 = arith.constant 0.797884583 : f32
    %334 = vector.broadcast %cst_120 : f32 to vector<32x128xf32>
    %335 = arith.mulf %334, %333 : vector<32x128xf32>
    %336 = math.tanh %335 : vector<32x128xf32>
    %cst_121 = arith.constant 1.000000e+00 : f32
    %337 = vector.broadcast %cst_121 : f32 to vector<32x128xf32>
    %338 = arith.addf %337, %336 : vector<32x128xf32>
    %339 = arith.mulf %328, %338 : vector<32x128xf32>
    %340 = arith.truncf %339 : vector<32x128xf32> to vector<32x128xbf16>
    %c1_122 = arith.constant 1 : index
    %c0_123 = arith.constant 0 : index
    %c0_124 = arith.constant 0 : index
    %341 = vector.load %arg13[%c1_122, %c0_123, %c0_124] : memref<2x128x32xbf16, #tpu.memory_space<vmem>>, vector<1x128x32xbf16>
    %342 = vector.shape_cast %341 : vector<1x128x32xbf16> to vector<128x32xbf16>
    %cst_125 = arith.constant dense<0.000000e+00> : vector<32x32xf32>
    %343 = tpu.matmul %340, %342, %cst_125 {dimension_numbers = #tpu.dot_dimension_numbers<[1], [0], [0], [1], [0, 0, 1, 1], [], []>} : vector<32x128xbf16>, vector<128x32xbf16>, vector<32x32xf32> -> vector<32x32xf32>
    %c1_126 = arith.constant 1 : index
    %c0_127 = arith.constant 0 : index
    %c0_128 = arith.constant 0 : index
    %344 = vector.load %arg14[%c1_126, %c0_127, %c0_128] : memref<2x1x32xf32, #tpu.memory_space<vmem>>, vector<1x1x32xf32>
    %345 = vector.shape_cast %344 : vector<1x1x32xf32> to vector<1x32xf32>
    %346 = vector.broadcast %345 : vector<1x32xf32> to vector<32x32xf32>
    %347 = arith.addf %343, %346 : vector<32x32xf32>
    %348 = arith.addf %290, %347 : vector<32x32xf32>
    %c0_129 = arith.constant 0 : index
    %c0_130 = arith.constant 0 : index
    %349 = vector.load %arg15[%c0_129, %c0_130] : memref<32x32xf32, #tpu.memory_space<vmem>>, vector<32x32xf32>
    tpu.vector_store %arg15[%c0_129, %c0_130], %348 {strides = array<i32>} : memref<32x32xf32, #tpu.memory_space<vmem>>, vector<32x32xf32>,
    return
  }
  func.func @transform_0(%arg0: i32) -> (i32, i32) {
    %c0_i32 = arith.constant 0 : i32
    %c0_i32_0 = arith.constant 0 : i32
    return %arg0, %c0_i32 : i32, i32
  }
  func.func @transform_1(%arg0: i32) -> (i32, i32, i32, i32, i32) {
    %c0_i32 = arith.constant 0 : i32
    %c0_i32_0 = arith.constant 0 : i32
    %c0_i32_1 = arith.constant 0 : i32
    %c0_i32_2 = arith.constant 0 : i32
    %c0_i32_3 = arith.constant 0 : i32
    %c0_i32_4 = arith.constant 0 : i32
    return %c0_i32, %c0_i32_0, %c0_i32_1, %c0_i32_2, %c0_i32_3 : i32, i32, i32, i32, i32
  }
  func.func @transform_2(%arg0: i32) -> (i32, i32, i32) {
    %c0_i32 = arith.constant 0 : i32
    %c0_i32_0 = arith.constant 0 : i32
    %c0_i32_1 = arith.constant 0 : i32
    %c0_i32_2 = arith.constant 0 : i32
    return %c0_i32, %c0_i32_0, %c0_i32_1 : i32, i32, i32
  }
  func.func @transform_3(%arg0: i32) -> (i32, i32, i32) {
    %c0_i32 = arith.constant 0 : i32
    %c0_i32_0 = arith.constant 0 : i32
    %c0_i32_1 = arith.constant 0 : i32
    %c0_i32_2 = arith.constant 0 : i32
    return %c0_i32, %c0_i32_0, %c0_i32_1 : i32, i32, i32
  }
  func.func @transform_4(%arg0: i32) -> (i32, i32, i32) {
    %c0_i32 = arith.constant 0 : i32
    %c0_i32_0 = arith.constant 0 : i32
    %c0_i32_1 = arith.constant 0 : i32
    %c0_i32_2 = arith.constant 0 : i32
    return %c0_i32, %c0_i32_0, %c0_i32_1 : i32, i32, i32
  }
  func.func @transform_5(%arg0: i32) -> (i32, i32, i32) {
    %c0_i32 = arith.constant 0 : i32
    %c0_i32_0 = arith.constant 0 : i32
    %c0_i32_1 = arith.constant 0 : i32
    %c0_i32_2 = arith.constant 0 : i32
    return %c0_i32, %c0_i32_0, %c0_i32_1 : i32, i32, i32
  }
  func.func @transform_6(%arg0: i32) -> (i32, i32, i32) {
    %c0_i32 = arith.constant 0 : i32
    %c0_i32_0 = arith.constant 0 : i32
    %c0_i32_1 = arith.constant 0 : i32
    %c0_i32_2 = arith.constant 0 : i32
    return %c0_i32, %c0_i32_0, %c0_i32_1 : i32, i32, i32
  }
  func.func @transform_7(%arg0: i32) -> (i32, i32, i32) {
    %c0_i32 = arith.constant 0 : i32
    %c0_i32_0 = arith.constant 0 : i32
    %c0_i32_1 = arith.constant 0 : i32
    %c0_i32_2 = arith.constant 0 : i32
    return %c0_i32, %c0_i32_0, %c0_i32_1 : i32, i32, i32
  }
  func.func @transform_8(%arg0: i32) -> (i32, i32, i32) {
    %c0_i32 = arith.constant 0 : i32
    %c0_i32_0 = arith.constant 0 : i32
    %c0_i32_1 = arith.constant 0 : i32
    %c0_i32_2 = arith.constant 0 : i32
    return %c0_i32, %c0_i32_0, %c0_i32_1 : i32, i32, i32
  }
  func.func @transform_9(%arg0: i32) -> (i32, i32, i32) {
    %c0_i32 = arith.constant 0 : i32
    %c0_i32_0 = arith.constant 0 : i32
    %c0_i32_1 = arith.constant 0 : i32
    %c0_i32_2 = arith.constant 0 : i32
    return %c0_i32, %c0_i32_0, %c0_i32_1 : i32, i32, i32
  }
  func.func @transform_10(%arg0: i32) -> (i32, i32, i32) {
    %c0_i32 = arith.constant 0 : i32
    %c0_i32_0 = arith.constant 0 : i32
    %c0_i32_1 = arith.constant 0 : i32
    %c0_i32_2 = arith.constant 0 : i32
    return %c0_i32, %c0_i32_0, %c0_i32_1 : i32, i32, i32
  }
  func.func @transform_11(%arg0: i32) -> (i32, i32, i32) {
    %c0_i32 = arith.constant 0 : i32
    %c0_i32_0 = arith.constant 0 : i32
    %c0_i32_1 = arith.constant 0 : i32
    %c0_i32_2 = arith.constant 0 : i32
    return %c0_i32, %c0_i32_0, %c0_i32_1 : i32, i32, i32
  }
  func.func @transform_12(%arg0: i32) -> (i32, i32, i32) {
    %c0_i32 = arith.constant 0 : i32
    %c0_i32_0 = arith.constant 0 : i32
    %c0_i32_1 = arith.constant 0 : i32
    %c0_i32_2 = arith.constant 0 : i32
    return %c0_i32, %c0_i32_0, %c0_i32_1 : i32, i32, i32
  }
  func.func @transform_13(%arg0: i32) -> (i32, i32, i32) {
    %c0_i32 = arith.constant 0 : i32
    %c0_i32_0 = arith.constant 0 : i32
    %c0_i32_1 = arith.constant 0 : i32
    %c0_i32_2 = arith.constant 0 : i32
    return %c0_i32, %c0_i32_0, %c0_i32_1 : i32, i32, i32
  }
  func.func @transform_14(%arg0: i32) -> (i32, i32) {
    %c0_i32 = arith.constant 0 : i32
    %c0_i32_0 = arith.constant 0 : i32
    return %arg0, %c0_i32 : i32, i32
  }
}

</mosaic_0001>

<llo_original>
// kernel: tpu_custom_call.1
$region0: #{tpu_custom_call.1}
  #allocation0 [shape = 'u32[]', space=smem, size = 0x4, offset = 0x4, fixed_abs, tag = 'smem constant byte address 0x4 - core index']
  #allocation1 [shape = 'u32[144,128]{1,0:T(1,128)}', space=vmem, size = 0x12000, scoped, tag = 'internal scratch']
  %s0 = inlined_call_operand.vmem [shape: f32[32,32], index: 0, kind: input, shape index: {}]
  %s1 = inlined_call_operand.vmem [shape: f32[2,4,2,8,8], index: 1, kind: input, shape index: {}]
  %s2 = inlined_call_operand.vmem [shape: f32[2,1,32], index: 2, kind: input, shape index: {}]
  %s3 = inlined_call_operand.vmem [shape: f32[2,1,32], index: 3, kind: input, shape index: {}]
  %s4 = inlined_call_operand.hbm [shape: bf16[2,32,96], index: 4, kind: input, shape index: {}]
  %s5 = inlined_call_operand.vmem [shape: f32[2,1,96], index: 5, kind: input, shape index: {}]
  %s6 = inlined_call_operand.hbm [shape: bf16[2,32,32], index: 6, kind: input, shape index: {}]
  %s7 = inlined_call_operand.vmem [shape: f32[2,1,32], index: 7, kind: input, shape index: {}]
  %s8 = inlined_call_operand.vmem [shape: f32[2,1,32], index: 8, kind: input, shape index: {}]
  %s9 = inlined_call_operand.vmem [shape: f32[2,1,32], index: 9, kind: input, shape index: {}]
  %s10 = inlined_call_operand.hbm [shape: bf16[2,32,128], index: 10, kind: input, shape index: {}]
  %s11 = inlined_call_operand.hbm [shape: f32[2,1,128], index: 11, kind: input, shape index: {}]
  %s12 = inlined_call_operand.vmem [shape: bf16[2,128,32], index: 12, kind: input, shape index: {}]
  %s13 = inlined_call_operand.vmem [shape: f32[2,1,32], index: 13, kind: input, shape index: {}]
  %s14 = inlined_call_operand.hbm [shape: f32[32,32], index: 14, kind: output, shape index: {}]
  %s15 = sld [smem:[#allocation0]]
  $region82: #{tpu_custom_call.1} parent=0
    _
  %s17 = ssub.s32 1, %s15
  %s18 = scalar_select 0, %s17, %s15
  $region1: #{tpu_custom_call.1} parent=0
    #allocation2 [shape = 'u8[16384]{0}', space=vmem, size = 0x4000, scoped, tag = 'input window, operand 4, single buffered']
    #allocation3 [shape = 's32[1]{0}', space=sflag, size = 0x4, scoped, tag = 'scoped memory for tpu_custom_call.1']
    #allocation4 [shape = 's32[1]{0}', space=sflag, size = 0x4, scoped, tag = 'scoped memory for tpu_custom_call.1']
    #allocation5 [shape = 'u8[16384]{0}', space=vmem, size = 0x4000, scoped, tag = 'input window, operand 6, single buffered']
    #allocation6 [shape = 's32[1]{0}', space=sflag, size = 0x4, scoped, tag = 'scoped memory for tpu_custom_call.1']
    #allocation7 [shape = 'u8[16384]{0}', space=vmem, size = 0x4000, scoped, tag = 'input window, operand 10, single buffered']
    #allocation8 [shape = 'u8[1024]{0}', space=vmem, size = 0x400, scoped, tag = 'input window, operand 11, single buffered']
    #allocation9 [shape = 's32[1]{0}', space=sflag, size = 0x4, scoped, tag = 'scoped memory for tpu_custom_call.1']
    #allocation10 [shape = 'u8[16384]{0}', space=vmem, size = 0x4000, scoped, tag = 'output window, operand 0, single buffered']
    %19 = vsyncpa [#allocation3], 0
    %20 = vsyncpa [#allocation6], 0
    %21 = vsyncpa [#allocation9], 0
    %22 = vsyncpa [#allocation4], 0
    // Predicated region
    $region2: #{tpu_custom_call.1} parent=1 // pred_check
      _
    $region3: #{tpu_custom_call.1} parent=1 // pred_check_branch
      %24 = sbr.rel (0) target = $region5
    $region4: #{tpu_custom_call.1} parent=1 // pred_region
      _
    $region5: #{tpu_custom_call.1} parent=1 // pred_fallthru
      _
    // Predicated region
    $region6: #{tpu_custom_call.1} parent=1 // pred_check
      _
    $region7: #{tpu_custom_call.1} parent=1 // pred_check_branch
      %26 = sbr.rel (0) target = $region9
    $region8: #{tpu_custom_call.1} parent=1 // pred_region
      _
    $region9: #{tpu_custom_call.1} parent=1 // pred_fallthru
      _
    // Predicated region
    $region10: #{tpu_custom_call.1} parent=1 // pred_check
      _
    $region11: #{tpu_custom_call.1} parent=1 // pred_check_branch
      %28 = sbr.rel (0) target = $region13
    $region12: #{tpu_custom_call.1} parent=1 // pred_region
      _
    $region13: #{tpu_custom_call.1} parent=1 // pred_fallthru
      _
    // Predicated region
    $region14: #{tpu_custom_call.1} parent=1 // pred_check
      _
    $region15: #{tpu_custom_call.1} parent=1 // pred_check_branch
      %30 = sbr.rel (0) target = $region17
    $region16: #{tpu_custom_call.1} parent=1 // pred_region
      _
    $region17: #{tpu_custom_call.1} parent=1 // pred_fallthru
      _
    // Predicated region
    $region18: #{tpu_custom_call.1} parent=1 // pred_check
      _
    $region19: #{tpu_custom_call.1} parent=1 // pred_check_branch
      %32 = sbr.rel (0) target = $region21
    $region20: #{tpu_custom_call.1} parent=1 // pred_region
      %s34 = ssub.s32 512, 512
      %35 = vsyncadd [#allocation3], %s34
      %s36 = sshll.u32 [#allocation2], 4
      %s37 = int_to_ptr.vmem [resolvable:$true] %s36
      %42 = dma.hbm_to_vmem [thread:$0]  %s4, 512, %s37, [#allocation3], 64, 64, 4
    $region21: #{tpu_custom_call.1} parent=1 // pred_fallthru
      _
    // Predicated region
    $region22: #{tpu_custom_call.1} parent=1 // pred_check
      _
    $region23: #{tpu_custom_call.1} parent=1 // pred_check_branch
      %44 = sbr.rel (0) target = $region25
    $region24: #{tpu_custom_call.1} parent=1 // pred_region
      _
    $region25: #{tpu_custom_call.1} parent=1 // pred_fallthru
      _
    // Predicated region
    $region26: #{tpu_custom_call.1} parent=1 // pred_check
      _
    $region27: #{tpu_custom_call.1} parent=1 // pred_check_branch
      %46 = sbr.rel (0) target = $region29
    $region28: #{tpu_custom_call.1} parent=1 // pred_region
      %s48 = ssub.s32 512, 512
      %49 = vsyncadd [#allocation6], %s48
      %s50 = sshll.u32 [#allocation5], 4
      %s51 = int_to_ptr.vmem [resolvable:$true] %s50
      %56 = dma.hbm_to_vmem [thread:$0]  %s6, 512, %s51, [#allocation6], 64, 64, 4
    $region29: #{tpu_custom_call.1} parent=1 // pred_fallthru
      _
    // Predicated region
    $region30: #{tpu_custom_call.1} parent=1 // pred_check
      _
    $region31: #{tpu_custom_call.1} parent=1 // pred_check_branch
      %58 = sbr.rel (0) target = $region33
    $region32: #{tpu_custom_call.1} parent=1 // pred_region
      _
    $region33: #{tpu_custom_call.1} parent=1 // pred_fallthru
      _
    // Predicated region
    $region34: #{tpu_custom_call.1} parent=1 // pred_check
      _
    $region35: #{tpu_custom_call.1} parent=1 // pred_check_branch
      %60 = sbr.rel (0) target = $region37
    $region36: #{tpu_custom_call.1} parent=1 // pred_region
      _
    $region37: #{tpu_custom_call.1} parent=1 // pred_fallthru
      _
    // Predicated region
    $region38: #{tpu_custom_call.1} parent=1 // pred_check
      _
    $region39: #{tpu_custom_call.1} parent=1 // pred_check_branch
      %62 = sbr.rel (0) target = $region41
    $region40: #{tpu_custom_call.1} parent=1 // pred_region
      _
    $region41: #{tpu_custom_call.1} parent=1 // pred_fallthru
      _
    // Predicated region
    $region42: #{tpu_custom_call.1} parent=1 // pred_check
      _
    $region43: #{tpu_custom_call.1} parent=1 // pred_check_branch
      %64 = sbr.rel (0) target = $region45
    $region44: #{tpu_custom_call.1} parent=1 // pred_region
      %s66 = ssub.s32 512, 512
      %67 = vsyncadd [#allocation6], %s66
      %s68 = sshll.u32 [#allocation7], 4
      %s69 = int_to_ptr.vmem [resolvable:$true] %s68
      %74 = dma.hbm_to_vmem [thread:$0]  %s10, 512, %s69, [#allocation6], 64, 64, 4
    $region45: #{tpu_custom_call.1} parent=1 // pred_fallthru
      _
    // Predicated region
    $region46: #{tpu_custom_call.1} parent=1 // pred_check
      _
    $region47: #{tpu_custom_call.1} parent=1 // pred_check_branch
      %76 = sbr.rel (0) target = $region49
    $region48: #{tpu_custom_call.1} parent=1 // pred_region
      %s78 = ssub.s32 32, 32
      %79 = vsyncadd [#allocation9], %s78
      %s80 = sshll.u32 [#allocation8], 4
      %s81 = int_to_ptr.vmem [resolvable:$true] %s80
      %86 = dma.hbm_to_vmem [thread:$0]  %s11, 32, %s81, [#allocation9], 16, 16, 1
    $region49: #{tpu_custom_call.1} parent=1 // pred_fallthru
      _
    // Predicated region
    $region50: #{tpu_custom_call.1} parent=1 // pred_check
      _
    $region51: #{tpu_custom_call.1} parent=1 // pred_check_branch
      %88 = sbr.rel (0) target = $region53
    $region52: #{tpu_custom_call.1} parent=1 // pred_region
      _
    $region53: #{tpu_custom_call.1} parent=1 // pred_fallthru
      _
    // Predicated region
    $region54: #{tpu_custom_call.1} parent=1 // pred_check
      _
    $region55: #{tpu_custom_call.1} parent=1 // pred_check_branch
      %90 = sbr.rel (0) target = $region57
    $region56: #{tpu_custom_call.1} parent=1 // pred_region
      _
    $region57: #{tpu_custom_call.1} parent=1 // pred_fallthru
      _
    // Predicated region
    $region58: #{tpu_custom_call.1} parent=1 // pred_check
      _
    $region59: #{tpu_custom_call.1} parent=1 // pred_check_branch
      %92 = sbr.rel (0) target = $region61
    $region60: #{tpu_custom_call.1} parent=1 // pred_region
      %93 = dma.done [#allocation3], 512
    $region61: #{tpu_custom_call.1} parent=1 // pred_fallthru
      _
    // Predicated region
    $region62: #{tpu_custom_call.1} parent=1 // pred_check
      _
    $region63: #{tpu_custom_call.1} parent=1 // pred_check_branch
      %95 = sbr.rel (0) target = $region65
    $region64: #{tpu_custom_call.1} parent=1 // pred_region
      %96 = dma.done [#allocation6], 512
    $region65: #{tpu_custom_call.1} parent=1 // pred_fallthru
      _
    // Predicated region
    $region66: #{tpu_custom_call.1} parent=1 // pred_check
      _
    $region67: #{tpu_custom_call.1} parent=1 // pred_check_branch
      %98 = sbr.rel (0) target = $region69
    $region68: #{tpu_custom_call.1} parent=1 // pred_region
      %99 = dma.done [#allocation6], 512
    $region69: #{tpu_custom_call.1} parent=1 // pred_fallthru
      _
    // Predicated region
    $region70: #{tpu_custom_call.1} parent=1 // pred_check
      _
    $region71: #{tpu_custom_call.1} parent=1 // pred_check_branch
      %101 = sbr.rel (0) target = $region73
    $region72: #{tpu_custom_call.1} parent=1 // pred_region
      %102 = dma.done [#allocation9], 32
    $region73: #{tpu_custom_call.1} parent=1 // pred_fallthru
      _
    %v104 = vld [vmem:[%s0] sm:$0xff]
    %v105 = vld [vmem:[%s0 + $0x8] sm:$0xff]
    %v106 = vld [vmem:[%s0 + $0x10] sm:$0xff]
    %v107 = vld [vmem:[%s0 + $0x18] sm:$0xff]
    %v108 = vld [vmem:[%s2] sm:$0x1]
    %v109 = vld [vmem:[%s3] sm:$0x1]
    %vm110 = vcmask 261120
    %v111 = vsel %vm110, %v104, 0.0
    %112 = vadd.xlane.f32.xlu0 %v111
    %v113 = vpop.xlane.xlu0 %112
    %v114 = vsel %vm110, %v105, 0.0
    %115 = vadd.xlane.f32.xlu0 %v114
    %v116 = vpop.xlane.xlu0 %115
    %v117 = vsel %vm110, %v106, 0.0
    %118 = vadd.xlane.f32.xlu0 %v117
    %v119 = vpop.xlane.xlu0 %118
    %v120 = vsel %vm110, %v107, 0.0
    %121 = vadd.xlane.f32.xlu0 %v120
    %v122 = vpop.xlane.xlu0 %121
    %v123 = vrcp.pop 32.0
    %v124 = vmul.f32 %v113, %v123
    %v125 = vmul.f32 %v116, %v123
    %v126 = vmul.f32 %v119, %v123
    %v127 = vmul.f32 %v122, %v123
    %v128 = vmul.f32 %v104, %v104
    %v129 = vmul.f32 %v105, %v105
    %v130 = vmul.f32 %v106, %v106
    %v131 = vmul.f32 %v107, %v107
    %v132 = vsel %vm110, %v128, 0.0
    %133 = vadd.xlane.f32.xlu0 %v132
    %v134 = vpop.xlane.xlu0 %133
    %v135 = vsel %vm110, %v129, 0.0
    %136 = vadd.xlane.f32.xlu0 %v135
    %v137 = vpop.xlane.xlu0 %136
    %v138 = vsel %vm110, %v130, 0.0
    %139 = vadd.xlane.f32.xlu0 %v138
    %v140 = vpop.xlane.xlu0 %139
    %v141 = vsel %vm110, %v131, 0.0
    %142 = vadd.xlane.f32.xlu0 %v141
    %v143 = vpop.xlane.xlu0 %142
    %v144 = vmul.f32 %v134, %v123
    %v145 = vmul.f32 %v137, %v123
    %v146 = vmul.f32 %v140, %v123
    %v147 = vmul.f32 %v143, %v123
    %v148 = vmul.f32 %v124, %v124
    %v149 = vmul.f32 %v125, %v125
    %v150 = vmul.f32 %v126, %v126
    %v151 = vmul.f32 %v127, %v127
    %v152 = vsub.f32 %v144, %v148
    %v153 = vsub.f32 %v145, %v149
    %v154 = vsub.f32 %v146, %v150
    %v155 = vsub.f32 %v147, %v151
    %v156 = vmax.f32 %v152, 0.0
    %v157 = vmax.f32 %v153, 0.0
    %v158 = vmax.f32 %v154, 0.0
    %v159 = vmax.f32 %v155, 0.0
    %v160 = vsub.f32 %v104, %v124
    %v161 = vsub.f32 %v105, %v125
    %v162 = vsub.f32 %v106, %v126
    %v163 = vsub.f32 %v107, %v127
    %v164 = vadd.f32 %v156, 1e-05
    %v165 = vadd.f32 %v157, 1e-05
    %v166 = vadd.f32 %v158, 1e-05
    %v167 = vadd.f32 %v159, 1e-05
    %v168 = vrsqrt.pop %v164
    %v169 = vrsqrt.pop %v165
    %v170 = vrsqrt.pop %v166
    %v171 = vrsqrt.pop %v167
    %v172 = vmul.f32 %v160, %v168
    %v173 = vmul.f32 %v161, %v169
    %v174 = vmul.f32 %v162, %v170
    %v175 = vmul.f32 %v163, %v171
    %v177 = vlaneseq
    %v178 = vshrl.u32 %v177, 7
    %v179 = vsub.s32 0, %v178
    %v180 = vrot.slane %v108, %v179
    %v182 = vmul.f32 %v172, %v180
    %v183 = vmul.f32 %v173, %v180
    %v184 = vmul.f32 %v174, %v180
    %v185 = vmul.f32 %v175, %v180
    %v187 = vlaneseq
    %v188 = vshrl.u32 %v187, 7
    %v189 = vsub.s32 0, %v188
    %v190 = vrot.slane %v109, %v189
    %v192 = vadd.f32 %v182, %v190
    %v193 = vadd.f32 %v183, %v190
    %v194 = vadd.f32 %v184, %v190
    %v195 = vadd.f32 %v185, %v190
    %v196 = vpack.c.bf16 %v193, %v192
    %v197 = vpack.c.bf16 %v195, %v194
    %v198 = vld [vmem:[#allocation2] sm:$0xf]
    %v199 = vld [vmem:[#allocation2 + $0x4] sm:$0xf]
    %v200 = vld [vmem:[#allocation2 + $0x8] sm:$0xf]
    %v201 = vld [vmem:[#allocation2 + $0xc] sm:$0xf]
    %v202 = vld [vmem:[%s5] sm:$0x1]
    %v204 = vlaneseq
    %v205 = vshrl.u32 %v204, 7
    %v206 = vsub.s32 0, %v205
    %v207 = vrot.slane %v202, %v206
    %v213 = vunpack.c.l.b16 %v198
    %v214 = vunpack.c.l.b16 %v199
    %v215 = vunpack.c.l.b16 %v200
    %v216 = vunpack.c.l.b16 %v201
    %v217 = vpack.c.b16 %v214, %v213
    %v218 = vpack.c.b16 %v216, %v215
    %v222 = vsel %vm110, %v196, 0
    %v225 = vsel %vm110, %v197, 0
    %227 = vmatprep.subr.bf16.mxu0 0
    %228 = vmatpush1.bf16.msra.mxu0 %v217
    %229 = vmatprep.subr.bf16.mxu0 0
    %230 = vmatpush1.bf16.msra.mxu0 %v218
    %231 = vmatprep.subr.bf16.mxu0 0
    %232 = vmatpush1.bf16.msra.mxu0 0
    %233 = vmatprep.subr.bf16.mxu0 0
    %234 = vmatpush1.bf16.msra.mxu0 0
    %235 = vmatprep.subr.bf16.mxu0 0
    %236 = vmatpush1.bf16.msra.mxu0 0
    %237 = vmatprep.subr.bf16.mxu0 0
    %238 = vmatpush1.bf16.msra.mxu0 0
    %239 = vmatprep.subr.bf16.mxu0 0
    %240 = vmatpush1.bf16.msra.mxu0 0
    %241 = vmatprep.subr.bf16.mxu0 0
    %242 = vmatpush1.bf16.msra.mxu0 0
    %243 = vmatprep.subr.bf16.mxu0 0
    %244 = vmatpush1.bf16.msra.mxu0 0
    %245 = vmatprep.subr.bf16.mxu0 0
    %246 = vmatpush1.bf16.msra.mxu0 0
    %247 = vmatprep.subr.bf16.mxu0 0
    %248 = vmatpush1.bf16.msra.mxu0 0
    %249 = vmatprep.subr.bf16.mxu0 0
    %250 = vmatpush1.bf16.msra.mxu0 0
    %251 = vmatprep.subr.bf16.mxu0 0
    %252 = vmatpush1.bf16.msra.mxu0 0
    %253 = vmatprep.subr.bf16.mxu0 0
    %254 = vmatpush1.bf16.msra.mxu0 0
    %255 = vmatprep.subr.bf16.mxu0 0
    %256 = vmatpush1.bf16.msra.mxu0 0
    %257 = vmatprep.subr.bf16.mxu0 0
    %258 = vmatpush1.bf16.msra.mxu0 0
    %259 = vmatprep.mubr.bf16.mxu0 0
    %260 = vmatmul.mubr.bf16.gmra.mrb[0].mxu0 %v222
    %v261 = vpop.f32.mrb[0].mxu0
    %v262 = vadd.f32 %v207, %v261
    %v263 = vpop.f32.mrb[0].mxu0
    %v264 = vpop.f32.mrb[0].mxu0
    %v265 = vadd.f32 %v207, %v264
    %v266 = vpop.f32.mrb[0].mxu0
    %267 = vmatprep.mubr.bf16.mxu0 0
    %268 = vmatmul.mubr.bf16.gmra.mrb[0].mxu0 %v225
    %v269 = vpop.f32.mrb[0].mxu0
    %v270 = vadd.f32 %v207, %v269
    %v271 = vpop.f32.mrb[0].mxu0
    %v272 = vpop.f32.mrb[0].mxu0
    %v273 = vadd.f32 %v207, %v272
    %v274 = vpop.f32.mrb[0].mxu0
    %275 = vdwg.mxu0
    %280 = vrot.lane.b32.xlu0 %v262, 120
    %v281 = vpop.permute.xlu0 %280
    %282 = vrot.lane.b32.xlu0 %v265, 120
    %v283 = vpop.permute.xlu0 %282
    %284 = vrot.lane.b32.xlu0 %v270, 120
    %v285 = vpop.permute.xlu0 %284
    %286 = vrot.lane.b32.xlu0 %v273, 120
    %v287 = vpop.permute.xlu0 %286
    %292 = vrot.lane.b32.xlu0 %v262, 112
    %v293 = vpop.permute.xlu0 %292
    %294 = vrot.lane.b32.xlu0 %v265, 112
    %v295 = vpop.permute.xlu0 %294
    %296 = vrot.lane.b32.xlu0 %v270, 112
    %v297 = vpop.permute.xlu0 %296
    %298 = vrot.lane.b32.xlu0 %v273, 112
    %v299 = vpop.permute.xlu0 %298
    %304 = vrot.lane.b32.xlu0 %v262, 104
    %v305 = vpop.permute.xlu0 %304
    %306 = vrot.lane.b32.xlu0 %v265, 104
    %v307 = vpop.permute.xlu0 %306
    %308 = vrot.lane.b32.xlu0 %v270, 104
    %v309 = vpop.permute.xlu0 %308
    %310 = vrot.lane.b32.xlu0 %v273, 104
    %v311 = vpop.permute.xlu0 %310
    %v316 = vpack.c.bf16 %v262, %v262
    %v317 = vpack.c.bf16 %v265, %v265
    %v318 = vpack.c.bf16 %v270, %v270
    %v319 = vpack.c.bf16 %v273, %v273
    %v320 = vpack.c.bf16 %v281, %v281
    %v321 = vpack.c.bf16 %v283, %v283
    %v322 = vpack.c.bf16 %v285, %v285
    %v323 = vpack.c.bf16 %v287, %v287
    %v324 = vpack.c.bf16 %v293, %v293
    %v325 = vpack.c.bf16 %v295, %v295
    %v326 = vpack.c.bf16 %v297, %v297
    %v327 = vpack.c.bf16 %v299, %v299
    %v328 = vpack.c.bf16 %v305, %v305
    %v329 = vpack.c.bf16 %v307, %v307
    %v330 = vpack.c.bf16 %v309, %v309
    %v331 = vpack.c.bf16 %v311, %v311
    %333 = vrot.lane.b32.xlu0 %v316, 96
    %v334 = vpop.permute.xlu0 %333
    %vm335 = vcmask 64512
    %v337 = vsel %vm335, %v316, 0
    %v340 = vsel %vm335, %v334, 0
    %342 = vmatprep.subr.bf16.mxu0 0
    %343 = vmatpush1.bf16.xpose.msra.mxu0 %v340
    %344 = vmatprep.subr.bf16.mxu0 0
    %345 = vmatpush1.bf16.xpose.msra.mxu0 0
    %346 = vmatprep.subr.bf16.mxu0 0
    %347 = vmatpush1.bf16.xpose.msra.mxu0 0
    %348 = vmatprep.subr.bf16.mxu0 0
    %349 = vmatpush1.bf16.xpose.msra.mxu0 0
    %350 = vmatprep.subr.bf16.mxu0 0
    %351 = vmatpush1.bf16.xpose.msra.mxu0 0
    %352 = vmatprep.subr.bf16.mxu0 0
    %353 = vmatpush1.bf16.xpose.msra.mxu0 0
    %354 = vmatprep.subr.bf16.mxu0 0
    %355 = vmatpush1.bf16.xpose.msra.mxu0 0
    %356 = vmatprep.subr.bf16.mxu0 0
    %357 = vmatpush1.bf16.xpose.msra.mxu0 0
    %358 = vmatprep.subr.bf16.mxu0 0
    %359 = vmatpush1.bf16.xpose.msra.mxu0 0
    %360 = vmatprep.subr.bf16.mxu0 0
    %361 = vmatpush1.bf16.xpose.msra.mxu0 0
    %362 = vmatprep.subr.bf16.mxu0 0
    %363 = vmatpush1.bf16.xpose.msra.mxu0 0
    %364 = vmatprep.subr.bf16.mxu0 0
    %365 = vmatpush1.bf16.xpose.msra.mxu0 0
    %366 = vmatprep.subr.bf16.mxu0 0
    %367 = vmatpush1.bf16.xpose.msra.mxu0 0
    %368 = vmatprep.subr.bf16.mxu0 0
    %369 = vmatpush1.bf16.xpose.msra.mxu0 0
    %370 = vmatprep.subr.bf16.mxu0 0
    %371 = vmatpush1.bf16.xpose.msra.mxu0 0
    %372 = vmatprep.subr.bf16.mxu0 0
    %373 = vmatpush1.bf16.xpose.msra.mxu0 0
    %374 = vmatprep.mubr.bf16.mxu0 0
    %375 = vmatmul.mubr.bf16.gmra.mrb[0].mxu0 %v337
    %v376 = vpop.f32.mrb[0].mxu0
    %v377 = vadd.f32 0.0, %v376
    %v378 = vpop.f32.mrb[0].mxu0
    %v379 = vpop.f32.mrb[0].mxu0
    %v380 = vpop.f32.mrb[0].mxu0
    %381 = vdwg.mxu0
    %383 = vrot.lane.b32.xlu0 %v317, 96
    %v384 = vpop.permute.xlu0 %383
    %v386 = vsel %vm335, %v317, 0
    %v389 = vsel %vm335, %v384, 0
    %391 = vmatprep.subr.bf16.mxu0 0
    %392 = vmatpush1.bf16.xpose.msra.mxu0 %v389
    %393 = vmatprep.subr.bf16.mxu0 0
    %394 = vmatpush1.bf16.xpose.msra.mxu0 0
    %395 = vmatprep.subr.bf16.mxu0 0
    %396 = vmatpush1.bf16.xpose.msra.mxu0 0
    %397 = vmatprep.subr.bf16.mxu0 0
    %398 = vmatpush1.bf16.xpose.msra.mxu0 0
    %399 = vmatprep.subr.bf16.mxu0 0
    %400 = vmatpush1.bf16.xpose.msra.mxu0 0
    %401 = vmatprep.subr.bf16.mxu0 0
    %402 = vmatpush1.bf16.xpose.msra.mxu0 0
    %403 = vmatprep.subr.bf16.mxu0 0
    %404 = vmatpush1.bf16.xpose.msra.mxu0 0
    %405 = vmatprep.subr.bf16.mxu0 0
    %406 = vmatpush1.bf16.xpose.msra.mxu0 0
    %407 = vmatprep.subr.bf16.mxu0 0
    %408 = vmatpush1.bf16.xpose.msra.mxu0 0
    %409 = vmatprep.subr.bf16.mxu0 0
    %410 = vmatpush1.bf16.xpose.msra.mxu0 0
    %411 = vmatprep.subr.bf16.mxu0 0
    %412 = vmatpush1.bf16.xpose.msra.mxu0 0
    %413 = vmatprep.subr.bf16.mxu0 0
    %414 = vmatpush1.bf16.xpose.msra.mxu0 0
    %415 = vmatprep.subr.bf16.mxu0 0
    %416 = vmatpush1.bf16.xpose.msra.mxu0 0
    %417 = vmatprep.subr.bf16.mxu0 0
    %418 = vmatpush1.bf16.xpose.msra.mxu0 0
    %419 = vmatprep.subr.bf16.mxu0 0
    %420 = vmatpush1.bf16.xpose.msra.mxu0 0
    %421 = vmatprep.subr.bf16.mxu0 0
    %422 = vmatpush1.bf16.xpose.msra.mxu0 0
    %423 = vmatprep.mubr.bf16.mxu0 0
    %424 = vmatmul.mubr.bf16.gmra.mrb[0].mxu0 %v386
    %v425 = vpop.f32.mrb[0].mxu0
    %v426 = vadd.f32 0.0, %v425
    %v427 = vpop.f32.mrb[0].mxu0
    %v428 = vpop.f32.mrb[0].mxu0
    %v429 = vpop.f32.mrb[0].mxu0
    %430 = vdwg.mxu0
    %432 = vrot.lane.b32.xlu0 %v318, 96
    %v433 = vpop.permute.xlu0 %432
    %v435 = vsel %vm335, %v318, 0
    %v438 = vsel %vm335, %v433, 0
    %440 = vmatprep.subr.bf16.mxu0 0
    %441 = vmatpush1.bf16.xpose.msra.mxu0 %v438
    %442 = vmatprep.subr.bf16.mxu0 0
    %443 = vmatpush1.bf16.xpose.msra.mxu0 0
    %444 = vmatprep.subr.bf16.mxu0 0
    %445 = vmatpush1.bf16.xpose.msra.mxu0 0
    %446 = vmatprep.subr.bf16.mxu0 0
    %447 = vmatpush1.bf16.xpose.msra.mxu0 0
    %448 = vmatprep.subr.bf16.mxu0 0
    %449 = vmatpush1.bf16.xpose.msra.mxu0 0
    %450 = vmatprep.subr.bf16.mxu0 0
    %451 = vmatpush1.bf16.xpose.msra.mxu0 0
    %452 = vmatprep.subr.bf16.mxu0 0
    %453 = vmatpush1.bf16.xpose.msra.mxu0 0
    %454 = vmatprep.subr.bf16.mxu0 0
    %455 = vmatpush1.bf16.xpose.msra.mxu0 0
    %456 = vmatprep.subr.bf16.mxu0 0
    %457 = vmatpush1.bf16.xpose.msra.mxu0 0
    %458 = vmatprep.subr.bf16.mxu0 0
    %459 = vmatpush1.bf16.xpose.msra.mxu0 0
    %460 = vmatprep.subr.bf16.mxu0 0
    %461 = vmatpush1.bf16.xpose.msra.mxu0 0
    %462 = vmatprep.subr.bf16.mxu0 0
    %463 = vmatpush1.bf16.xpose.msra.mxu0 0
    %464 = vmatprep.subr.bf16.mxu0 0
    %465 = vmatpush1.bf16.xpose.msra.mxu0 0
    %466 = vmatprep.subr.bf16.mxu0 0
    %467 = vmatpush1.bf16.xpose.msra.mxu0 0
    %468 = vmatprep.subr.bf16.mxu0 0
    %469 = vmatpush1.bf16.xpose.msra.mxu0 0
    %470 = vmatprep.subr.bf16.mxu0 0
    %471 = vmatpush1.bf16.xpose.msra.mxu0 0
    %472 = vmatprep.mubr.bf16.mxu0 0
    %473 = vmatmul.mubr.bf16.gmra.mrb[0].mxu0 %v435
    %v474 = vpop.f32.mrb[0].mxu0
    %v475 = vadd.f32 0.0, %v474
    %v476 = vpop.f32.mrb[0].mxu0
    %v477 = vpop.f32.mrb[0].mxu0
    %v478 = vpop.f32.mrb[0].mxu0
    %479 = vdwg.mxu0
    %481 = vrot.lane.b32.xlu0 %v319, 96
    %v482 = vpop.permute.xlu0 %481
    %v484 = vsel %vm335, %v319, 0
    %v487 = vsel %vm335, %v482, 0
    %489 = vmatprep.subr.bf16.mxu0 0
    %490 = vmatpush1.bf16.xpose.msra.mxu0 %v487
    %491 = vmatprep.subr.bf16.mxu0 0
    %492 = vmatpush1.bf16.xpose.msra.mxu0 0
    %493 = vmatprep.subr.bf16.mxu0 0
    %494 = vmatpush1.bf16.xpose.msra.mxu0 0
    %495 = vmatprep.subr.bf16.mxu0 0
    %496 = vmatpush1.bf16.xpose.msra.mxu0 0
    %497 = vmatprep.subr.bf16.mxu0 0
    %498 = vmatpush1.bf16.xpose.msra.mxu0 0
    %499 = vmatprep.subr.bf16.mxu0 0
    %500 = vmatpush1.bf16.xpose.msra.mxu0 0
    %501 = vmatprep.subr.bf16.mxu0 0
    %502 = vmatpush1.bf16.xpose.msra.mxu0 0
    %503 = vmatprep.subr.bf16.mxu0 0
    %504 = vmatpush1.bf16.xpose.msra.mxu0 0
    %505 = vmatprep.subr.bf16.mxu0 0
    %506 = vmatpush1.bf16.xpose.msra.mxu0 0
    %507 = vmatprep.subr.bf16.mxu0 0
    %508 = vmatpush1.bf16.xpose.msra.mxu0 0
    %509 = vmatprep.subr.bf16.mxu0 0
    %510 = vmatpush1.bf16.xpose.msra.mxu0 0
    %511 = vmatprep.subr.bf16.mxu0 0
    %512 = vmatpush1.bf16.xpose.msra.mxu0 0
    %513 = vmatprep.subr.bf16.mxu0 0
    %514 = vmatpush1.bf16.xpose.msra.mxu0 0
    %515 = vmatprep.subr.bf16.mxu0 0
    %516 = vmatpush1.bf16.xpose.msra.mxu0 0
    %517 = vmatprep.subr.bf16.mxu0 0
    %518 = vmatpush1.bf16.xpose.msra.mxu0 0
    %519 = vmatprep.subr.bf16.mxu0 0
    %520 = vmatpush1.bf16.xpose.msra.mxu0 0
    %521 = vmatprep.mubr.bf16.mxu0 0
    %522 = vmatmul.mubr.bf16.gmra.mrb[0].mxu0 %v484
    %v523 = vpop.f32.mrb[0].mxu0
    %v524 = vadd.f32 0.0, %v523
    %v525 = vpop.f32.mrb[0].mxu0
    %v526 = vpop.f32.mrb[0].mxu0
    %v527 = vpop.f32.mrb[0].mxu0
    %528 = vdwg.mxu0
    %530 = vrot.lane.b32.xlu0 %v320, 96
    %v531 = vpop.permute.xlu0 %530
    %v533 = vsel %vm335, %v320, 0
    %v536 = vsel %vm335, %v531, 0
    %538 = vmatprep.subr.bf16.mxu0 0
    %539 = vmatpush1.bf16.xpose.msra.mxu0 %v536
    %540 = vmatprep.subr.bf16.mxu0 0
    %541 = vmatpush1.bf16.xpose.msra.mxu0 0
    %542 = vmatprep.subr.bf16.mxu0 0
    %543 = vmatpush1.bf16.xpose.msra.mxu0 0
    %544 = vmatprep.subr.bf16.mxu0 0
    %545 = vmatpush1.bf16.xpose.msra.mxu0 0
    %546 = vmatprep.subr.bf16.mxu0 0
    %547 = vmatpush1.bf16.xpose.msra.mxu0 0
    %548 = vmatprep.subr.bf16.mxu0 0
    %549 = vmatpush1.bf16.xpose.msra.mxu0 0
    %550 = vmatprep.subr.bf16.mxu0 0
    %551 = vmatpush1.bf16.xpose.msra.mxu0 0
    %552 = vmatprep.subr.bf16.mxu0 0
    %553 = vmatpush1.bf16.xpose.msra.mxu0 0
    %554 = vmatprep.subr.bf16.mxu0 0
    %555 = vmatpush1.bf16.xpose.msra.mxu0 0
    %556 = vmatprep.subr.bf16.mxu0 0
    %557 = vmatpush1.bf16.xpose.msra.mxu0 0
    %558 = vmatprep.subr.bf16.mxu0 0
    %559 = vmatpush1.bf16.xpose.msra.mxu0 0
    %560 = vmatprep.subr.bf16.mxu0 0
    %561 = vmatpush1.bf16.xpose.msra.mxu0 0
    %562 = vmatprep.subr.bf16.mxu0 0
    %563 = vmatpush1.bf16.xpose.msra.mxu0 0
    %564 = vmatprep.subr.bf16.mxu0 0
    %565 = vmatpush1.bf16.xpose.msra.mxu0 0
    %566 = vmatprep.subr.bf16.mxu0 0
    %567 = vmatpush1.bf16.xpose.msra.mxu0 0
    %568 = vmatprep.subr.bf16.mxu0 0
    %569 = vmatpush1.bf16.xpose.msra.mxu0 0
    %570 = vmatprep.mubr.bf16.mxu0 0
    %571 = vmatmul.mubr.bf16.gmra.mrb[0].mxu0 %v533
    %v572 = vpop.f32.mrb[0].mxu0
    %v573 = vadd.f32 0.0, %v572
    %v574 = vpop.f32.mrb[0].mxu0
    %v575 = vpop.f32.mrb[0].mxu0
    %v576 = vpop.f32.mrb[0].mxu0
    %577 = vdwg.mxu0
    %579 = vrot.lane.b32.xlu0 %v321, 96
    %v580 = vpop.permute.xlu0 %579
    %v582 = vsel %vm335, %v321, 0
    %v585 = vsel %vm335, %v580, 0
    %587 = vmatprep.subr.bf16.mxu0 0
    %588 = vmatpush1.bf16.xpose.msra.mxu0 %v585
    %589 = vmatprep.subr.bf16.mxu0 0
    %590 = vmatpush1.bf16.xpose.msra.mxu0 0
    %591 = vmatprep.subr.bf16.mxu0 0
    %592 = vmatpush1.bf16.xpose.msra.mxu0 0
    %593 = vmatprep.subr.bf16.mxu0 0
    %594 = vmatpush1.bf16.xpose.msra.mxu0 0
    %595 = vmatprep.subr.bf16.mxu0 0
    %596 = vmatpush1.bf16.xpose.msra.mxu0 0
    %597 = vmatprep.subr.bf16.mxu0 0
    %598 = vmatpush1.bf16.xpose.msra.mxu0 0
    %599 = vmatprep.subr.bf16.mxu0 0
    %600 = vmatpush1.bf16.xpose.msra.mxu0 0
    %601 = vmatprep.subr.bf16.mxu0 0
    %602 = vmatpush1.bf16.xpose.msra.mxu0 0
    %603 = vmatprep.subr.bf16.mxu0 0
    %604 = vmatpush1.bf16.xpose.msra.mxu0 0
    %605 = vmatprep.subr.bf16.mxu0 0
    %606 = vmatpush1.bf16.xpose.msra.mxu0 0
    %607 = vmatprep.subr.bf16.mxu0 0
    %608 = vmatpush1.bf16.xpose.msra.mxu0 0
    %609 = vmatprep.subr.bf16.mxu0 0
    %610 = vmatpush1.bf16.xpose.msra.mxu0 0
    %611 = vmatprep.subr.bf16.mxu0 0
    %612 = vmatpush1.bf16.xpose.msra.mxu0 0
    %613 = vmatprep.subr.bf16.mxu0 0
    %614 = vmatpush1.bf16.xpose.msra.mxu0 0
    %615 = vmatprep.subr.bf16.mxu0 0
    %616 = vmatpush1.bf16.xpose.msra.mxu0 0
    %617 = vmatprep.subr.bf16.mxu0 0
    %618 = vmatpush1.bf16.xpose.msra.mxu0 0
    %619 = vmatprep.mubr.bf16.mxu0 0
    %620 = vmatmul.mubr.bf16.gmra.mrb[0].mxu0 %v582
    %v621 = vpop.f32.mrb[0].mxu0
    %v622 = vadd.f32 0.0, %v621
    %v623 = vpop.f32.mrb[0].mxu0
    %v624 = vpop.f32.mrb[0].mxu0
    %v625 = vpop.f32.mrb[0].mxu0
    %626 = vdwg.mxu0
    %628 = vrot.lane.b32.xlu0 %v322, 96
    %v629 = vpop.permute.xlu0 %628
    %v631 = vsel %vm335, %v322, 0
    %v634 = vsel %vm335, %v629, 0
    %636 = vmatprep.subr.bf16.mxu0 0
    %637 = vmatpush1.bf16.xpose.msra.mxu0 %v634
    %638 = vmatprep.subr.bf16.mxu0 0
    %639 = vmatpush1.bf16.xpose.msra.mxu0 0
    %640 = vmatprep.subr.bf16.mxu0 0
    %641 = vmatpush1.bf16.xpose.msra.mxu0 0
    %642 = vmatprep.subr.bf16.mxu0 0
    %643 = vmatpush1.bf16.xpose.msra.mxu0 0
    %644 = vmatprep.subr.bf16.mxu0 0
    %645 = vmatpush1.bf16.xpose.msra.mxu0 0
    %646 = vmatprep.subr.bf16.mxu0 0
    %647 = vmatpush1.bf16.xpose.msra.mxu0 0
    %648 = vmatprep.subr.bf16.mxu0 0
    %649 = vmatpush1.bf16.xpose.msra.mxu0 0
    %650 = vmatprep.subr.bf16.mxu0 0
    %651 = vmatpush1.bf16.xpose.msra.mxu0 0
    %652 = vmatprep.subr.bf16.mxu0 0
    %653 = vmatpush1.bf16.xpose.msra.mxu0 0
    %654 = vmatprep.subr.bf16.mxu0 0
    %655 = vmatpush1.bf16.xpose.msra.mxu0 0
    %656 = vmatprep.subr.bf16.mxu0 0
    %657 = vmatpush1.bf16.xpose.msra.mxu0 0
    %658 = vmatprep.subr.bf16.mxu0 0
    %659 = vmatpush1.bf16.xpose.msra.mxu0 0
    %660 = vmatprep.subr.bf16.mxu0 0
    %661 = vmatpush1.bf16.xpose.msra.mxu0 0
    %662 = vmatprep.subr.bf16.mxu0 0
    %663 = vmatpush1.bf16.xpose.msra.mxu0 0
    %664 = vmatprep.subr.bf16.mxu0 0
    %665 = vmatpush1.bf16.xpose.msra.mxu0 0
    %666 = vmatprep.subr.bf16.mxu0 0
    %667 = vmatpush1.bf16.xpose.msra.mxu0 0
    %668 = vmatprep.mubr.bf16.mxu0 0
    %669 = vmatmul.mubr.bf16.gmra.mrb[0].mxu0 %v631
    %v670 = vpop.f32.mrb[0].mxu0
    %v671 = vadd.f32 0.0, %v670
    %v672 = vpop.f32.mrb[0].mxu0
    %v673 = vpop.f32.mrb[0].mxu0
    %v674 = vpop.f32.mrb[0].mxu0
    %675 = vdwg.mxu0
    %677 = vrot.lane.b32.xlu0 %v323, 96
    %v678 = vpop.permute.xlu0 %677
    %v680 = vsel %vm335, %v323, 0
    %v683 = vsel %vm335, %v678, 0
    %685 = vmatprep.subr.bf16.mxu0 0
    %686 = vmatpush1.bf16.xpose.msra.mxu0 %v683
    %687 = vmatprep.subr.bf16.mxu0 0
    %688 = vmatpush1.bf16.xpose.msra.mxu0 0
    %689 = vmatprep.subr.bf16.mxu0 0
    %690 = vmatpush1.bf16.xpose.msra.mxu0 0
    %691 = vmatprep.subr.bf16.mxu0 0
    %692 = vmatpush1.bf16.xpose.msra.mxu0 0
    %693 = vmatprep.subr.bf16.mxu0 0
    %694 = vmatpush1.bf16.xpose.msra.mxu0 0
    %695 = vmatprep.subr.bf16.mxu0 0
    %696 = vmatpush1.bf16.xpose.msra.mxu0 0
    %697 = vmatprep.subr.bf16.mxu0 0
    %698 = vmatpush1.bf16.xpose.msra.mxu0 0
    %699 = vmatprep.subr.bf16.mxu0 0
    %700 = vmatpush1.bf16.xpose.msra.mxu0 0
    %701 = vmatprep.subr.bf16.mxu0 0
    %702 = vmatpush1.bf16.xpose.msra.mxu0 0
    %703 = vmatprep.subr.bf16.mxu0 0
    %704 = vmatpush1.bf16.xpose.msra.mxu0 0
    %705 = vmatprep.subr.bf16.mxu0 0
    %706 = vmatpush1.bf16.xpose.msra.mxu0 0
    %707 = vmatprep.subr.bf16.mxu0 0
    %708 = vmatpush1.bf16.xpose.msra.mxu0 0
    %709 = vmatprep.subr.bf16.mxu0 0
    %710 = vmatpush1.bf16.xpose.msra.mxu0 0
    %711 = vmatprep.subr.bf16.mxu0 0
    %712 = vmatpush1.bf16.xpose.msra.mxu0 0
    %713 = vmatprep.subr.bf16.mxu0 0
    %714 = vmatpush1.bf16.xpose.msra.mxu0 0
    %715 = vmatprep.subr.bf16.mxu0 0
    %716 = vmatpush1.bf16.xpose.msra.mxu0 0
    %717 = vmatprep.mubr.bf16.mxu0 0
    %718 = vmatmul.mubr.bf16.gmra.mrb[0].mxu0 %v680
    %v719 = vpop.f32.mrb[0].mxu0
    %v720 = vadd.f32 0.0, %v719
    %v721 = vpop.f32.mrb[0].mxu0
    %v722 = vpop.f32.mrb[0].mxu0
    %v723 = vpop.f32.mrb[0].mxu0
    %724 = vdwg.mxu0
    %726 = vrot.lane.b32.xlu0 %v324, 96
    %v727 = vpop.permute.xlu0 %726
    %v729 = vsel %vm335, %v324, 0
    %v732 = vsel %vm335, %v727, 0
    %734 = vmatprep.subr.bf16.mxu0 0
    %735 = vmatpush1.bf16.xpose.msra.mxu0 %v732
    %736 = vmatprep.subr.bf16.mxu0 0
    %737 = vmatpush1.bf16.xpose.msra.mxu0 0
    %738 = vmatprep.subr.bf16.mxu0 0
    %739 = vmatpush1.bf16.xpose.msra.mxu0 0
    %740 = vmatprep.subr.bf16.mxu0 0
    %741 = vmatpush1.bf16.xpose.msra.mxu0 0
    %742 = vmatprep.subr.bf16.mxu0 0
    %743 = vmatpush1.bf16.xpose.msra.mxu0 0
    %744 = vmatprep.subr.bf16.mxu0 0
    %745 = vmatpush1.bf16.xpose.msra.mxu0 0
    %746 = vmatprep.subr.bf16.mxu0 0
    %747 = vmatpush1.bf16.xpose.msra.mxu0 0
    %748 = vmatprep.subr.bf16.mxu0 0
    %749 = vmatpush1.bf16.xpose.msra.mxu0 0
    %750 = vmatprep.subr.bf16.mxu0 0
    %751 = vmatpush1.bf16.xpose.msra.mxu0 0
    %752 = vmatprep.subr.bf16.mxu0 0
    %753 = vmatpush1.bf16.xpose.msra.mxu0 0
    %754 = vmatprep.subr.bf16.mxu0 0
    %755 = vmatpush1.bf16.xpose.msra.mxu0 0
    %756 = vmatprep.subr.bf16.mxu0 0
    %757 = vmatpush1.bf16.xpose.msra.mxu0 0
    %758 = vmatprep.subr.bf16.mxu0 0
    %759 = vmatpush1.bf16.xpose.msra.mxu0 0
    %760 = vmatprep.subr.bf16.mxu0 0
    %761 = vmatpush1.bf16.xpose.msra.mxu0 0
    %762 = vmatprep.subr.bf16.mxu0 0
    %763 = vmatpush1.bf16.xpose.msra.mxu0 0
    %764 = vmatprep.subr.bf16.mxu0 0
    %765 = vmatpush1.bf16.xpose.msra.mxu0 0
    %766 = vmatprep.mubr.bf16.mxu0 0
    %767 = vmatmul.mubr.bf16.gmra.mrb[0].mxu0 %v729
    %v768 = vpop.f32.mrb[0].mxu0
    %v769 = vadd.f32 0.0, %v768
    %v770 = vpop.f32.mrb[0].mxu0
    %v771 = vpop.f32.mrb[0].mxu0
    %v772 = vpop.f32.mrb[0].mxu0
    %773 = vdwg.mxu0
    %775 = vrot.lane.b32.xlu0 %v325, 96
    %v776 = vpop.permute.xlu0 %775
    %v778 = vsel %vm335, %v325, 0
    %v781 = vsel %vm335, %v776, 0
    %783 = vmatprep.subr.bf16.mxu0 0
    %784 = vmatpush1.bf16.xpose.msra.mxu0 %v781
    %785 = vmatprep.subr.bf16.mxu0 0
    %786 = vmatpush1.bf16.xpose.msra.mxu0 0
    %787 = vmatprep.subr.bf16.mxu0 0
    %788 = vmatpush1.bf16.xpose.msra.mxu0 0
    %789 = vmatprep.subr.bf16.mxu0 0
    %790 = vmatpush1.bf16.xpose.msra.mxu0 0
    %791 = vmatprep.subr.bf16.mxu0 0
    %792 = vmatpush1.bf16.xpose.msra.mxu0 0
    %793 = vmatprep.subr.bf16.mxu0 0
    %794 = vmatpush1.bf16.xpose.msra.mxu0 0
    %795 = vmatprep.subr.bf16.mxu0 0
    %796 = vmatpush1.bf16.xpose.msra.mxu0 0
    %797 = vmatprep.subr.bf16.mxu0 0
    %798 = vmatpush1.bf16.xpose.msra.mxu0 0
    %799 = vmatprep.subr.bf16.mxu0 0
    %800 = vmatpush1.bf16.xpose.msra.mxu0 0
    %801 = vmatprep.subr.bf16.mxu0 0
    %802 = vmatpush1.bf16.xpose.msra.mxu0 0
    %803 = vmatprep.subr.bf16.mxu0 0
    %804 = vmatpush1.bf16.xpose.msra.mxu0 0
    %805 = vmatprep.subr.bf16.mxu0 0
    %806 = vmatpush1.bf16.xpose.msra.mxu0 0
    %807 = vmatprep.subr.bf16.mxu0 0
    %808 = vmatpush1.bf16.xpose.msra.mxu0 0
    %809 = vmatprep.subr.bf16.mxu0 0
    %810 = vmatpush1.bf16.xpose.msra.mxu0 0
    %811 = vmatprep.subr.bf16.mxu0 0
    %812 = vmatpush1.bf16.xpose.msra.mxu0 0
    %813 = vmatprep.subr.bf16.mxu0 0
    %814 = vmatpush1.bf16.xpose.msra.mxu0 0
    %815 = vmatprep.mubr.bf16.mxu0 0
    %816 = vmatmul.mubr.bf16.gmra.mrb[0].mxu0 %v778
    %v817 = vpop.f32.mrb[0].mxu0
    %v818 = vadd.f32 0.0, %v817
    %v819 = vpop.f32.mrb[0].mxu0
    %v820 = vpop.f32.mrb[0].mxu0
    %v821 = vpop.f32.mrb[0].mxu0
    %822 = vdwg.mxu0
    %824 = vrot.lane.b32.xlu0 %v326, 96
    %v825 = vpop.permute.xlu0 %824
    %v827 = vsel %vm335, %v326, 0
    %v830 = vsel %vm335, %v825, 0
    %832 = vmatprep.subr.bf16.mxu0 0
    %833 = vmatpush1.bf16.xpose.msra.mxu0 %v830
    %834 = vmatprep.subr.bf16.mxu0 0
    %835 = vmatpush1.bf16.xpose.msra.mxu0 0
    %836 = vmatprep.subr.bf16.mxu0 0
    %837 = vmatpush1.bf16.xpose.msra.mxu0 0
    %838 = vmatprep.subr.bf16.mxu0 0
    %839 = vmatpush1.bf16.xpose.msra.mxu0 0
    %840 = vmatprep.subr.bf16.mxu0 0
    %841 = vmatpush1.bf16.xpose.msra.mxu0 0
    %842 = vmatprep.subr.bf16.mxu0 0
    %843 = vmatpush1.bf16.xpose.msra.mxu0 0
    %844 = vmatprep.subr.bf16.mxu0 0
    %845 = vmatpush1.bf16.xpose.msra.mxu0 0
    %846 = vmatprep.subr.bf16.mxu0 0
    %847 = vmatpush1.bf16.xpose.msra.mxu0 0
    %848 = vmatprep.subr.bf16.mxu0 0
    %849 = vmatpush1.bf16.xpose.msra.mxu0 0
    %850 = vmatprep.subr.bf16.mxu0 0
    %851 = vmatpush1.bf16.xpose.msra.mxu0 0
    %852 = vmatprep.subr.bf16.mxu0 0
    %853 = vmatpush1.bf16.xpose.msra.mxu0 0
    %854 = vmatprep.subr.bf16.mxu0 0
    %855 = vmatpush1.bf16.xpose.msra.mxu0 0
    %856 = vmatprep.subr.bf16.mxu0 0
    %857 = vmatpush1.bf16.xpose.msra.mxu0 0
    %858 = vmatprep.subr.bf16.mxu0 0
    %859 = vmatpush1.bf16.xpose.msra.mxu0 0
    %860 = vmatprep.subr.bf16.mxu0 0
    %861 = vmatpush1.bf16.xpose.msra.mxu0 0
    %862 = vmatprep.subr.bf16.mxu0 0
    %863 = vmatpush1.bf16.xpose.msra.mxu0 0
    %864 = vmatprep.mubr.bf16.mxu0 0
    %865 = vmatmul.mubr.bf16.gmra.mrb[0].mxu0 %v827
    %v866 = vpop.f32.mrb[0].mxu0
    %v867 = vadd.f32 0.0, %v866
    %v868 = vpop.f32.mrb[0].mxu0
    %v869 = vpop.f32.mrb[0].mxu0
    %v870 = vpop.f32.mrb[0].mxu0
    %871 = vdwg.mxu0
    %873 = vrot.lane.b32.xlu0 %v327, 96
    %v874 = vpop.permute.xlu0 %873
    %v876 = vsel %vm335, %v327, 0
    %v879 = vsel %vm335, %v874, 0
    %881 = vmatprep.subr.bf16.mxu0 0
    %882 = vmatpush1.bf16.xpose.msra.mxu0 %v879
    %883 = vmatprep.subr.bf16.mxu0 0
    %884 = vmatpush1.bf16.xpose.msra.mxu0 0
    %885 = vmatprep.subr.bf16.mxu0 0
    %886 = vmatpush1.bf16.xpose.msra.mxu0 0
    %887 = vmatprep.subr.bf16.mxu0 0
    %888 = vmatpush1.bf16.xpose.msra.mxu0 0
    %889 = vmatprep.subr.bf16.mxu0 0
    %890 = vmatpush1.bf16.xpose.msra.mxu0 0
    %891 = vmatprep.subr.bf16.mxu0 0
    %892 = vmatpush1.bf16.xpose.msra.mxu0 0
    %893 = vmatprep.subr.bf16.mxu0 0
    %894 = vmatpush1.bf16.xpose.msra.mxu0 0
    %895 = vmatprep.subr.bf16.mxu0 0
    %896 = vmatpush1.bf16.xpose.msra.mxu0 0
    %897 = vmatprep.subr.bf16.mxu0 0
    %898 = vmatpush1.bf16.xpose.msra.mxu0 0
    %899 = vmatprep.subr.bf16.mxu0 0
    %900 = vmatpush1.bf16.xpose.msra.mxu0 0
    %901 = vmatprep.subr.bf16.mxu0 0
    %902 = vmatpush1.bf16.xpose.msra.mxu0 0
    %903 = vmatprep.subr.bf16.mxu0 0
    %904 = vmatpush1.bf16.xpose.msra.mxu0 0
    %905 = vmatprep.subr.bf16.mxu0 0
    %906 = vmatpush1.bf16.xpose.msra.mxu0 0
    %907 = vmatprep.subr.bf16.mxu0 0
    %908 = vmatpush1.bf16.xpose.msra.mxu0 0
    %909 = vmatprep.subr.bf16.mxu0 0
    %910 = vmatpush1.bf16.xpose.msra.mxu0 0
    %911 = vmatprep.subr.bf16.mxu0 0
    %912 = vmatpush1.bf16.xpose.msra.mxu0 0
    %913 = vmatprep.mubr.bf16.mxu0 0
    %914 = vmatmul.mubr.bf16.gmra.mrb[0].mxu0 %v876
    %v915 = vpop.f32.mrb[0].mxu0
    %v916 = vadd.f32 0.0, %v915
    %v917 = vpop.f32.mrb[0].mxu0
    %v918 = vpop.f32.mrb[0].mxu0
    %v919 = vpop.f32.mrb[0].mxu0
    %920 = vdwg.mxu0
    %922 = vrot.lane.b32.xlu0 %v328, 96
    %v923 = vpop.permute.xlu0 %922
    %v925 = vsel %vm335, %v328, 0
    %v928 = vsel %vm335, %v923, 0
    %930 = vmatprep.subr.bf16.mxu0 0
    %931 = vmatpush1.bf16.xpose.msra.mxu0 %v928
    %932 = vmatprep.subr.bf16.mxu0 0
    %933 = vmatpush1.bf16.xpose.msra.mxu0 0
    %934 = vmatprep.subr.bf16.mxu0 0
    %935 = vmatpush1.bf16.xpose.msra.mxu0 0
    %936 = vmatprep.subr.bf16.mxu0 0
    %937 = vmatpush1.bf16.xpose.msra.mxu0 0
    %938 = vmatprep.subr.bf16.mxu0 0
    %939 = vmatpush1.bf16.xpose.msra.mxu0 0
    %940 = vmatprep.subr.bf16.mxu0 0
    %941 = vmatpush1.bf16.xpose.msra.mxu0 0
    %942 = vmatprep.subr.bf16.mxu0 0
    %943 = vmatpush1.bf16.xpose.msra.mxu0 0
    %944 = vmatprep.subr.bf16.mxu0 0
    %945 = vmatpush1.bf16.xpose.msra.mxu0 0
    %946 = vmatprep.subr.bf16.mxu0 0
    %947 = vmatpush1.bf16.xpose.msra.mxu0 0
    %948 = vmatprep.subr.bf16.mxu0 0
    %949 = vmatpush1.bf16.xpose.msra.mxu0 0
    %950 = vmatprep.subr.bf16.mxu0 0
    %951 = vmatpush1.bf16.xpose.msra.mxu0 0
    %952 = vmatprep.subr.bf16.mxu0 0
    %953 = vmatpush1.bf16.xpose.msra.mxu0 0
    %954 = vmatprep.subr.bf16.mxu0 0
    %955 = vmatpush1.bf16.xpose.msra.mxu0 0
    %956 = vmatprep.subr.bf16.mxu0 0
    %957 = vmatpush1.bf16.xpose.msra.mxu0 0
    %958 = vmatprep.subr.bf16.mxu0 0
    %959 = vmatpush1.bf16.xpose.msra.mxu0 0
    %960 = vmatprep.subr.bf16.mxu0 0
    %961 = vmatpush1.bf16.xpose.msra.mxu0 0
    %962 = vmatprep.mubr.bf16.mxu0 0
    %963 = vmatmul.mubr.bf16.gmra.mrb[0].mxu0 %v925
    %v964 = vpop.f32.mrb[0].mxu0
    %v965 = vadd.f32 0.0, %v964
    %v966 = vpop.f32.mrb[0].mxu0
    %v967 = vpop.f32.mrb[0].mxu0
    %v968 = vpop.f32.mrb[0].mxu0
    %969 = vdwg.mxu0
    %971 = vrot.lane.b32.xlu0 %v329, 96
    %v972 = vpop.permute.xlu0 %971
    %v974 = vsel %vm335, %v329, 0
    %v977 = vsel %vm335, %v972, 0
    %979 = vmatprep.subr.bf16.mxu0 0
    %980 = vmatpush1.bf16.xpose.msra.mxu0 %v977
    %981 = vmatprep.subr.bf16.mxu0 0
    %982 = vmatpush1.bf16.xpose.msra.mxu0 0
    %983 = vmatprep.subr.bf16.mxu0 0
    %984 = vmatpush1.bf16.xpose.msra.mxu0 0
    %985 = vmatprep.subr.bf16.mxu0 0
    %986 = vmatpush1.bf16.xpose.msra.mxu0 0
    %987 = vmatprep.subr.bf16.mxu0 0
    %988 = vmatpush1.bf16.xpose.msra.mxu0 0
    %989 = vmatprep.subr.bf16.mxu0 0
    %990 = vmatpush1.bf16.xpose.msra.mxu0 0
    %991 = vmatprep.subr.bf16.mxu0 0
    %992 = vmatpush1.bf16.xpose.msra.mxu0 0
    %993 = vmatprep.subr.bf16.mxu0 0
    %994 = vmatpush1.bf16.xpose.msra.mxu0 0
    %995 = vmatprep.subr.bf16.mxu0 0
    %996 = vmatpush1.bf16.xpose.msra.mxu0 0
    %997 = vmatprep.subr.bf16.mxu0 0
    %998 = vmatpush1.bf16.xpose.msra.mxu0 0
    %999 = vmatprep.subr.bf16.mxu0 0
    %1000 = vmatpush1.bf16.xpose.msra.mxu0 0
    %1001 = vmatprep.subr.bf16.mxu0 0
    %1002 = vmatpush1.bf16.xpose.msra.mxu0 0
    %1003 = vmatprep.subr.bf16.mxu0 0
    %1004 = vmatpush1.bf16.xpose.msra.mxu0 0
    %1005 = vmatprep.subr.bf16.mxu0 0
    %1006 = vmatpush1.bf16.xpose.msra.mxu0 0
    %1007 = vmatprep.subr.bf16.mxu0 0
    %1008 = vmatpush1.bf16.xpose.msra.mxu0 0
    %1009 = vmatprep.subr.bf16.mxu0 0
    %1010 = vmatpush1.bf16.xpose.msra.mxu0 0
    %1011 = vmatprep.mubr.bf16.mxu0 0
    %1012 = vmatmul.mubr.bf16.gmra.mrb[0].mxu0 %v974
    %v1013 = vpop.f32.mrb[0].mxu0
    %v1014 = vadd.f32 0.0, %v1013
    %v1015 = vpop.f32.mrb[0].mxu0
    %v1016 = vpop.f32.mrb[0].mxu0
    %v1017 = vpop.f32.mrb[0].mxu0
    %1018 = vdwg.mxu0
    %1020 = vrot.lane.b32.xlu0 %v330, 96
    %v1021 = vpop.permute.xlu0 %1020
    %v1023 = vsel %vm335, %v330, 0
    %v1026 = vsel %vm335, %v1021, 0
    %1028 = vmatprep.subr.bf16.mxu0 0
    %1029 = vmatpush1.bf16.xpose.msra.mxu0 %v1026
    %1030 = vmatprep.subr.bf16.mxu0 0
    %1031 = vmatpush1.bf16.xpose.msra.mxu0 0
    %1032 = vmatprep.subr.bf16.mxu0 0
    %1033 = vmatpush1.bf16.xpose.msra.mxu0 0
    %1034 = vmatprep.subr.bf16.mxu0 0
    %1035 = vmatpush1.bf16.xpose.msra.mxu0 0
    %1036 = vmatprep.subr.bf16.mxu0 0
    %1037 = vmatpush1.bf16.xpose.msra.mxu0 0
    %1038 = vmatprep.subr.bf16.mxu0 0
    %1039 = vmatpush1.bf16.xpose.msra.mxu0 0
    %1040 = vmatprep.subr.bf16.mxu0 0
    %1041 = vmatpush1.bf16.xpose.msra.mxu0 0
    %1042 = vmatprep.subr.bf16.mxu0 0
    %1043 = vmatpush1.bf16.xpose.msra.mxu0 0
    %1044 = vmatprep.subr.bf16.mxu0 0
    %1045 = vmatpush1.bf16.xpose.msra.mxu0 0
    %1046 = vmatprep.subr.bf16.mxu0 0
    %1047 = vmatpush1.bf16.xpose.msra.mxu0 0
    %1048 = vmatprep.subr.bf16.mxu0 0
    %1049 = vmatpush1.bf16.xpose.msra.mxu0 0
    %1050 = vmatprep.subr.bf16.mxu0 0
    %1051 = vmatpush1.bf16.xpose.msra.mxu0 0
    %1052 = vmatprep.subr.bf16.mxu0 0
    %1053 = vmatpush1.bf16.xpose.msra.mxu0 0
    %1054 = vmatprep.subr.bf16.mxu0 0
    %1055 = vmatpush1.bf16.xpose.msra.mxu0 0
    %1056 = vmatprep.subr.bf16.mxu0 0
    %1057 = vmatpush1.bf16.xpose.msra.mxu0 0
    %1058 = vmatprep.subr.bf16.mxu0 0
    %1059 = vmatpush1.bf16.xpose.msra.mxu0 0
    %1060 = vmatprep.mubr.bf16.mxu0 0
    %1061 = vmatmul.mubr.bf16.gmra.mrb[0].mxu0 %v1023
    %v1062 = vpop.f32.mrb[0].mxu0
    %v1063 = vadd.f32 0.0, %v1062
    %v1064 = vpop.f32.mrb[0].mxu0
    %v1065 = vpop.f32.mrb[0].mxu0
    %v1066 = vpop.f32.mrb[0].mxu0
    %1067 = vdwg.mxu0
    %1069 = vrot.lane.b32.xlu0 %v331, 96
    %v1070 = vpop.permute.xlu0 %1069
    %v1072 = vsel %vm335, %v331, 0
    %v1075 = vsel %vm335, %v1070, 0
    %1077 = vmatprep.subr.bf16.mxu0 0
    %1078 = vmatpush1.bf16.xpose.msra.mxu0 %v1075
    %1079 = vmatprep.subr.bf16.mxu0 0
    %1080 = vmatpush1.bf16.xpose.msra.mxu0 0
    %1081 = vmatprep.subr.bf16.mxu0 0
    %1082 = vmatpush1.bf16.xpose.msra.mxu0 0
    %1083 = vmatprep.subr.bf16.mxu0 0
    %1084 = vmatpush1.bf16.xpose.msra.mxu0 0
    %1085 = vmatprep.subr.bf16.mxu0 0
    %1086 = vmatpush1.bf16.xpose.msra.mxu0 0
    %1087 = vmatprep.subr.bf16.mxu0 0
    %1088 = vmatpush1.bf16.xpose.msra.mxu0 0
    %1089 = vmatprep.subr.bf16.mxu0 0
    %1090 = vmatpush1.bf16.xpose.msra.mxu0 0
    %1091 = vmatprep.subr.bf16.mxu0 0
    %1092 = vmatpush1.bf16.xpose.msra.mxu0 0
    %1093 = vmatprep.subr.bf16.mxu0 0
    %1094 = vmatpush1.bf16.xpose.msra.mxu0 0
    %1095 = vmatprep.subr.bf16.mxu0 0
    %1096 = vmatpush1.bf16.xpose.msra.mxu0 0
    %1097 = vmatprep.subr.bf16.mxu0 0
    %1098 = vmatpush1.bf16.xpose.msra.mxu0 0
    %1099 = vmatprep.subr.bf16.mxu0 0
    %1100 = vmatpush1.bf16.xpose.msra.mxu0 0
    %1101 = vmatprep.subr.bf16.mxu0 0
    %1102 = vmatpush1.bf16.xpose.msra.mxu0 0
    %1103 = vmatprep.subr.bf16.mxu0 0
    %1104 = vmatpush1.bf16.xpose.msra.mxu0 0
    %1105 = vmatprep.subr.bf16.mxu0 0
    %1106 = vmatpush1.bf16.xpose.msra.mxu0 0
    %1107 = vmatprep.subr.bf16.mxu0 0
    %1108 = vmatpush1.bf16.xpose.msra.mxu0 0
    %1109 = vmatprep.mubr.bf16.mxu0 0
    %1110 = vmatmul.mubr.bf16.gmra.mrb[0].mxu0 %v1072
    %v1111 = vpop.f32.mrb[0].mxu0
    %v1112 = vadd.f32 0.0, %v1111
    %v1113 = vpop.f32.mrb[0].mxu0
    %v1114 = vpop.f32.mrb[0].mxu0
    %v1115 = vpop.f32.mrb[0].mxu0
    %1116 = vdwg.mxu0
    %v1117 = vld [vmem:[%s1] sm:$0xff]
    %v1118 = vld [vmem:[%s1 + $0x8] sm:$0xff]
    %v1119 = vld [vmem:[%s1 + $0x10] sm:$0xff]
    %v1120 = vld [vmem:[%s1 + $0x18] sm:$0xff]
    %v1121 = vld [vmem:[%s1 + $0x20] sm:$0xff]
    %v1122 = vld [vmem:[%s1 + $0x28] sm:$0xff]
    %v1123 = vld [vmem:[%s1 + $0x30] sm:$0xff]
    %v1124 = vld [vmem:[%s1 + $0x38] sm:$0xff]
    %v1125 = vadd.f32 %v377, %v1117
    %v1126 = vadd.f32 %v426, %v1118
    %v1127 = vadd.f32 %v475, %v1117
    %v1128 = vadd.f32 %v524, %v1118
    %v1129 = vadd.f32 %v573, %v1119
    %v1130 = vadd.f32 %v622, %v1120
    %v1131 = vadd.f32 %v671, %v1119
    %v1132 = vadd.f32 %v720, %v1120
    %v1133 = vadd.f32 %v769, %v1121
    %v1134 = vadd.f32 %v818, %v1122
    %v1135 = vadd.f32 %v867, %v1121
    %v1136 = vadd.f32 %v916, %v1122
    %v1137 = vadd.f32 %v965, %v1123
    %v1138 = vadd.f32 %v1014, %v1124
    %v1139 = vadd.f32 %v1063, %v1123
    %v1140 = vadd.f32 %v1112, %v1124
    %v1141 = vsel %vm335, %v1125, -inf
    %1142 = vmax.xlane.f32.xlu0 %v1141
    %v1143 = vpop.xlane.xlu0 %1142
    %v1144 = vsel %vm335, %v1126, -inf
    %1145 = vmax.xlane.f32.xlu0 %v1144
    %v1146 = vpop.xlane.xlu0 %1145
    %v1147 = vsel %vm335, %v1127, -inf
    %1148 = vmax.xlane.f32.xlu0 %v1147
    %v1149 = vpop.xlane.xlu0 %1148
    %v1150 = vsel %vm335, %v1128, -inf
    %1151 = vmax.xlane.f32.xlu0 %v1150
    %v1152 = vpop.xlane.xlu0 %1151
    %v1153 = vsel %vm335, %v1129, -inf
    %1154 = vmax.xlane.f32.xlu0 %v1153
    %v1155 = vpop.xlane.xlu0 %1154
    %v1156 = vsel %vm335, %v1130, -inf
    %1157 = vmax.xlane.f32.xlu0 %v1156
    %v1158 = vpop.xlane.xlu0 %1157
    %v1159 = vsel %vm335, %v1131, -inf
    %1160 = vmax.xlane.f32.xlu0 %v1159
    %v1161 = vpop.xlane.xlu0 %1160
    %v1162 = vsel %vm335, %v1132, -inf
    %1163 = vmax.xlane.f32.xlu0 %v1162
    %v1164 = vpop.xlane.xlu0 %1163
    %v1165 = vsel %vm335, %v1133, -inf
    %1166 = vmax.xlane.f32.xlu0 %v1165
    %v1167 = vpop.xlane.xlu0 %1166
    %v1168 = vsel %vm335, %v1134, -inf
    %1169 = vmax.xlane.f32.xlu0 %v1168
    %v1170 = vpop.xlane.xlu0 %1169
    %v1171 = vsel %vm335, %v1135, -inf
    %1172 = vmax.xlane.f32.xlu0 %v1171
    %v1173 = vpop.xlane.xlu0 %1172
    %v1174 = vsel %vm335, %v1136, -inf
    %1175 = vmax.xlane.f32.xlu0 %v1174
    %v1176 = vpop.xlane.xlu0 %1175
    %v1177 = vsel %vm335, %v1137, -inf
    %1178 = vmax.xlane.f32.xlu0 %v1177
    %v1179 = vpop.xlane.xlu0 %1178
    %v1180 = vsel %vm335, %v1138, -inf
    %1181 = vmax.xlane.f32.xlu0 %v1180
    %v1182 = vpop.xlane.xlu0 %1181
    %v1183 = vsel %vm335, %v1139, -inf
    %1184 = vmax.xlane.f32.xlu0 %v1183
    %v1185 = vpop.xlane.xlu0 %1184
    %v1186 = vsel %vm335, %v1140, -inf
    %1187 = vmax.xlane.f32.xlu0 %v1186
    %v1188 = vpop.xlane.xlu0 %1187
    %v1189 = vsub.f32 %v1125, %v1143
    %v1190 = vsub.f32 %v1126, %v1146
    %v1191 = vsub.f32 %v1127, %v1149
    %v1192 = vsub.f32 %v1128, %v1152
    %v1193 = vsub.f32 %v1129, %v1155
    %v1194 = vsub.f32 %v1130, %v1158
    %v1195 = vsub.f32 %v1131, %v1161
    %v1196 = vsub.f32 %v1132, %v1164
    %v1197 = vsub.f32 %v1133, %v1167
    %v1198 = vsub.f32 %v1134, %v1170
    %v1199 = vsub.f32 %v1135, %v1173
    %v1200 = vsub.f32 %v1136, %v1176
    %v1201 = vsub.f32 %v1137, %v1179
    %v1202 = vsub.f32 %v1138, %v1182
    %v1203 = vsub.f32 %v1139, %v1185
    %v1204 = vsub.f32 %v1140, %v1188
    %v1205 = vmul.f32 %v1189, 1.442695
    %v1206 = vpow.pop %v1205
    %v1207 = vmul.f32 %v1190, 1.442695
    %v1208 = vpow.pop %v1207
    %v1209 = vmul.f32 %v1191, 1.442695
    %v1210 = vpow.pop %v1209
    %v1211 = vmul.f32 %v1192, 1.442695
    %v1212 = vpow.pop %v1211
    %v1213 = vmul.f32 %v1193, 1.442695
    %v1214 = vpow.pop %v1213
    %v1215 = vmul.f32 %v1194, 1.442695
    %v1216 = vpow.pop %v1215
    %v1217 = vmul.f32 %v1195, 1.442695
    %v1218 = vpow.pop %v1217
    %v1219 = vmul.f32 %v1196, 1.442695
    %v1220 = vpow.pop %v1219
    %v1221 = vmul.f32 %v1197, 1.442695
    %v1222 = vpow.pop %v1221
    %v1223 = vmul.f32 %v1198, 1.442695
    %v1224 = vpow.pop %v1223
    %v1225 = vmul.f32 %v1199, 1.442695
    %v1226 = vpow.pop %v1225
    %v1227 = vmul.f32 %v1200, 1.442695
    %v1228 = vpow.pop %v1227
    %v1229 = vmul.f32 %v1201, 1.442695
    %v1230 = vpow.pop %v1229
    %v1231 = vmul.f32 %v1202, 1.442695
    %v1232 = vpow.pop %v1231
    %v1233 = vmul.f32 %v1203, 1.442695
    %v1234 = vpow.pop %v1233
    %v1235 = vmul.f32 %v1204, 1.442695
    %v1236 = vpow.pop %v1235
    %v1237 = vsel %vm335, %v1206, 0.0
    %1238 = vadd.xlane.f32.xlu0 %v1237
    %v1239 = vpop.xlane.xlu0 %1238
    %v1240 = vsel %vm335, %v1208, 0.0
    %1241 = vadd.xlane.f32.xlu0 %v1240
    %v1242 = vpop.xlane.xlu0 %1241
    %v1243 = vsel %vm335, %v1210, 0.0
    %1244 = vadd.xlane.f32.xlu0 %v1243
    %v1245 = vpop.xlane.xlu0 %1244
    %v1246 = vsel %vm335, %v1212, 0.0
    %1247 = vadd.xlane.f32.xlu0 %v1246
    %v1248 = vpop.xlane.xlu0 %1247
    %v1249 = vsel %vm335, %v1214, 0.0
    %1250 = vadd.xlane.f32.xlu0 %v1249
    %v1251 = vpop.xlane.xlu0 %1250
    %v1252 = vsel %vm335, %v1216, 0.0
    %1253 = vadd.xlane.f32.xlu0 %v1252
    %v1254 = vpop.xlane.xlu0 %1253
    %v1255 = vsel %vm335, %v1218, 0.0
    %1256 = vadd.xlane.f32.xlu0 %v1255
    %v1257 = vpop.xlane.xlu0 %1256
    %v1258 = vsel %vm335, %v1220, 0.0
    %1259 = vadd.xlane.f32.xlu0 %v1258
    %v1260 = vpop.xlane.xlu0 %1259
    %v1261 = vsel %vm335, %v1222, 0.0
    %1262 = vadd.xlane.f32.xlu0 %v1261
    %v1263 = vpop.xlane.xlu0 %1262
    %v1264 = vsel %vm335, %v1224, 0.0
    %1265 = vadd.xlane.f32.xlu0 %v1264
    %v1266 = vpop.xlane.xlu0 %1265
    %v1267 = vsel %vm335, %v1226, 0.0
    %1268 = vadd.xlane.f32.xlu0 %v1267
    %v1269 = vpop.xlane.xlu0 %1268
    %v1270 = vsel %vm335, %v1228, 0.0
    %1271 = vadd.xlane.f32.xlu0 %v1270
    %v1272 = vpop.xlane.xlu0 %1271
    %v1273 = vsel %vm335, %v1230, 0.0
    %1274 = vadd.xlane.f32.xlu0 %v1273
    %v1275 = vpop.xlane.xlu0 %1274
    %v1276 = vsel %vm335, %v1232, 0.0
    %1277 = vadd.xlane.f32.xlu0 %v1276
    %v1278 = vpop.xlane.xlu0 %1277
    %v1279 = vsel %vm335, %v1234, 0.0
    %1280 = vadd.xlane.f32.xlu0 %v1279
    %v1281 = vpop.xlane.xlu0 %1280
    %v1282 = vsel %vm335, %v1236, 0.0
    %1283 = vadd.xlane.f32.xlu0 %v1282
    %v1284 = vpop.xlane.xlu0 %1283
    %v1285 = vrcp.pop %v1239
    %v1286 = vrcp.pop %v1242
    %v1287 = vrcp.pop %v1245
    %v1288 = vrcp.pop %v1248
    %v1289 = vrcp.pop %v1251
    %v1290 = vrcp.pop %v1254
    %v1291 = vrcp.pop %v1257
    %v1292 = vrcp.pop %v1260
    %v1293 = vrcp.pop %v1263
    %v1294 = vrcp.pop %v1266
    %v1295 = vrcp.pop %v1269
    %v1296 = vrcp.pop %v1272
    %v1297 = vrcp.pop %v1275
    %v1298 = vrcp.pop %v1278
    %v1299 = vrcp.pop %v1281
    %v1300 = vrcp.pop %v1284
    %v1301 = vmul.f32 %v1206, %v1285
    %v1302 = vmul.f32 %v1208, %v1286
    %v1303 = vmul.f32 %v1210, %v1287
    %v1304 = vmul.f32 %v1212, %v1288
    %v1305 = vmul.f32 %v1214, %v1289
    %v1306 = vmul.f32 %v1216, %v1290
    %v1307 = vmul.f32 %v1218, %v1291
    %v1308 = vmul.f32 %v1220, %v1292
    %v1309 = vmul.f32 %v1222, %v1293
    %v1310 = vmul.f32 %v1224, %v1294
    %v1311 = vmul.f32 %v1226, %v1295
    %v1312 = vmul.f32 %v1228, %v1296
    %v1313 = vmul.f32 %v1230, %v1297
    %v1314 = vmul.f32 %v1232, %v1298
    %v1315 = vmul.f32 %v1234, %v1299
    %v1316 = vmul.f32 %v1236, %v1300
    %v1317 = vpack.c.bf16 %v1301, %v1301
    %v1318 = vpack.c.bf16 %v1302, %v1302
    %v1319 = vpack.c.bf16 %v1303, %v1303
    %v1320 = vpack.c.bf16 %v1304, %v1304
    %v1321 = vpack.c.bf16 %v1305, %v1305
    %v1322 = vpack.c.bf16 %v1306, %v1306
    %v1323 = vpack.c.bf16 %v1307, %v1307
    %v1324 = vpack.c.bf16 %v1308, %v1308
    %v1325 = vpack.c.bf16 %v1309, %v1309
    %v1326 = vpack.c.bf16 %v1310, %v1310
    %v1327 = vpack.c.bf16 %v1311, %v1311
    %v1328 = vpack.c.bf16 %v1312, %v1312
    %v1329 = vpack.c.bf16 %v1313, %v1313
    %v1330 = vpack.c.bf16 %v1314, %v1314
    %v1331 = vpack.c.bf16 %v1315, %v1315
    %v1332 = vpack.c.bf16 %v1316, %v1316
    %1333 = vrot.lane.b32.xlu0 %v316, 64
    %v1334 = vpop.permute.xlu0 %1333
    %v1336 = vsel %vm335, %v1317, 0
    %vm1338 = vcmask 1043456
    %v1340 = vsel %vm1338, %v1334, 0
    %1342 = vmatprep.subr.bf16.mxu0 0
    %1343 = vmatpush1.bf16.msra.mxu0 %v1340
    %1344 = vmatprep.subr.bf16.mxu0 0
    %1345 = vmatpush1.bf16.msra.mxu0 0
    %1346 = vmatprep.subr.bf16.mxu0 0
    %1347 = vmatpush1.bf16.msra.mxu0 0
    %1348 = vmatprep.subr.bf16.mxu0 0
    %1349 = vmatpush1.bf16.msra.mxu0 0
    %1350 = vmatprep.subr.bf16.mxu0 0
    %1351 = vmatpush1.bf16.msra.mxu0 0
    %1352 = vmatprep.subr.bf16.mxu0 0
    %1353 = vmatpush1.bf16.msra.mxu0 0
    %1354 = vmatprep.subr.bf16.mxu0 0
    %1355 = vmatpush1.bf16.msra.mxu0 0
    %1356 = vmatprep.subr.bf16.mxu0 0
    %1357 = vmatpush1.bf16.msra.mxu0 0
    %1358 = vmatprep.subr.bf16.mxu0 0
    %1359 = vmatpush1.bf16.msra.mxu0 0
    %1360 = vmatprep.subr.bf16.mxu0 0
    %1361 = vmatpush1.bf16.msra.mxu0 0
    %1362 = vmatprep.subr.bf16.mxu0 0
    %1363 = vmatpush1.bf16.msra.mxu0 0
    %1364 = vmatprep.subr.bf16.mxu0 0
    %1365 = vmatpush1.bf16.msra.mxu0 0
    %1366 = vmatprep.subr.bf16.mxu0 0
    %1367 = vmatpush1.bf16.msra.mxu0 0
    %1368 = vmatprep.subr.bf16.mxu0 0
    %1369 = vmatpush1.bf16.msra.mxu0 0
    %1370 = vmatprep.subr.bf16.mxu0 0
    %1371 = vmatpush1.bf16.msra.mxu0 0
    %1372 = vmatprep.subr.bf16.mxu0 0
    %1373 = vmatpush1.bf16.msra.mxu0 0
    %1374 = vmatprep.mubr.bf16.mxu0 0
    %1375 = vmatmul.mubr.bf16.gmra.mrb[0].mxu0 %v1336
    %v1376 = vpop.f32.mrb[0].mxu0
    %v1377 = vadd.f32 0.0, %v1376
    %v1378 = vpop.f32.mrb[0].mxu0
    %v1379 = vpop.f32.mrb[0].mxu0
    %v1380 = vpop.f32.mrb[0].mxu0
    %1381 = vdwg.mxu0
    %1382 = vrot.lane.b32.xlu0 %v317, 64
    %v1383 = vpop.permute.xlu0 %1382
    %v1385 = vsel %vm335, %v1318, 0
    %v1388 = vsel %vm1338, %v1383, 0
    %1390 = vmatprep.subr.bf16.mxu0 0
    %1391 = vmatpush1.bf16.msra.mxu0 %v1388
    %1392 = vmatprep.subr.bf16.mxu0 0
    %1393 = vmatpush1.bf16.msra.mxu0 0
    %1394 = vmatprep.subr.bf16.mxu0 0
    %1395 = vmatpush1.bf16.msra.mxu0 0
    %1396 = vmatprep.subr.bf16.mxu0 0
    %1397 = vmatpush1.bf16.msra.mxu0 0
    %1398 = vmatprep.subr.bf16.mxu0 0
    %1399 = vmatpush1.bf16.msra.mxu0 0
    %1400 = vmatprep.subr.bf16.mxu0 0
    %1401 = vmatpush1.bf16.msra.mxu0 0
    %1402 = vmatprep.subr.bf16.mxu0 0
    %1403 = vmatpush1.bf16.msra.mxu0 0
    %1404 = vmatprep.subr.bf16.mxu0 0
    %1405 = vmatpush1.bf16.msra.mxu0 0
    %1406 = vmatprep.subr.bf16.mxu0 0
    %1407 = vmatpush1.bf16.msra.mxu0 0
    %1408 = vmatprep.subr.bf16.mxu0 0
    %1409 = vmatpush1.bf16.msra.mxu0 0
    %1410 = vmatprep.subr.bf16.mxu0 0
    %1411 = vmatpush1.bf16.msra.mxu0 0
    %1412 = vmatprep.subr.bf16.mxu0 0
    %1413 = vmatpush1.bf16.msra.mxu0 0
    %1414 = vmatprep.subr.bf16.mxu0 0
    %1415 = vmatpush1.bf16.msra.mxu0 0
    %1416 = vmatprep.subr.bf16.mxu0 0
    %1417 = vmatpush1.bf16.msra.mxu0 0
    %1418 = vmatprep.subr.bf16.mxu0 0
    %1419 = vmatpush1.bf16.msra.mxu0 0
    %1420 = vmatprep.subr.bf16.mxu0 0
    %1421 = vmatpush1.bf16.msra.mxu0 0
    %1422 = vmatprep.mubr.bf16.mxu0 0
    %1423 = vmatmul.mubr.bf16.gmra.mrb[0].mxu0 %v1385
    %v1424 = vpop.f32.mrb[0].mxu0
    %v1425 = vadd.f32 0.0, %v1424
    %v1426 = vpop.f32.mrb[0].mxu0
    %v1427 = vpop.f32.mrb[0].mxu0
    %v1428 = vpop.f32.mrb[0].mxu0
    %1429 = vdwg.mxu0
    %1430 = vrot.lane.b32.xlu0 %v318, 64
    %v1431 = vpop.permute.xlu0 %1430
    %v1433 = vsel %vm335, %v1319, 0
    %v1436 = vsel %vm1338, %v1431, 0
    %1438 = vmatprep.subr.bf16.mxu0 0
    %1439 = vmatpush1.bf16.msra.mxu0 %v1436
    %1440 = vmatprep.subr.bf16.mxu0 0
    %1441 = vmatpush1.bf16.msra.mxu0 0
    %1442 = vmatprep.subr.bf16.mxu0 0
    %1443 = vmatpush1.bf16.msra.mxu0 0
    %1444 = vmatprep.subr.bf16.mxu0 0
    %1445 = vmatpush1.bf16.msra.mxu0 0
    %1446 = vmatprep.subr.bf16.mxu0 0
    %1447 = vmatpush1.bf16.msra.mxu0 0
    %1448 = vmatprep.subr.bf16.mxu0 0
    %1449 = vmatpush1.bf16.msra.mxu0 0
    %1450 = vmatprep.subr.bf16.mxu0 0
    %1451 = vmatpush1.bf16.msra.mxu0 0
    %1452 = vmatprep.subr.bf16.mxu0 0
    %1453 = vmatpush1.bf16.msra.mxu0 0
    %1454 = vmatprep.subr.bf16.mxu0 0
    %1455 = vmatpush1.bf16.msra.mxu0 0
    %1456 = vmatprep.subr.bf16.mxu0 0
    %1457 = vmatpush1.bf16.msra.mxu0 0
    %1458 = vmatprep.subr.bf16.mxu0 0
    %1459 = vmatpush1.bf16.msra.mxu0 0
    %1460 = vmatprep.subr.bf16.mxu0 0
    %1461 = vmatpush1.bf16.msra.mxu0 0
    %1462 = vmatprep.subr.bf16.mxu0 0
    %1463 = vmatpush1.bf16.msra.mxu0 0
    %1464 = vmatprep.subr.bf16.mxu0 0
    %1465 = vmatpush1.bf16.msra.mxu0 0
    %1466 = vmatprep.subr.bf16.mxu0 0
    %1467 = vmatpush1.bf16.msra.mxu0 0
    %1468 = vmatprep.subr.bf16.mxu0 0
    %1469 = vmatpush1.bf16.msra.mxu0 0
    %1470 = vmatprep.mubr.bf16.mxu0 0
    %1471 = vmatmul.mubr.bf16.gmra.mrb[0].mxu0 %v1433
    %v1472 = vpop.f32.mrb[0].mxu0
    %v1473 = vadd.f32 0.0, %v1472
    %v1474 = vpop.f32.mrb[0].mxu0
    %v1475 = vpop.f32.mrb[0].mxu0
    %v1476 = vpop.f32.mrb[0].mxu0
    %1477 = vdwg.mxu0
    %1478 = vrot.lane.b32.xlu0 %v319, 64
    %v1479 = vpop.permute.xlu0 %1478
    %v1481 = vsel %vm335, %v1320, 0
    %v1484 = vsel %vm1338, %v1479, 0
    %1486 = vmatprep.subr.bf16.mxu0 0
    %1487 = vmatpush1.bf16.msra.mxu0 %v1484
    %1488 = vmatprep.subr.bf16.mxu0 0
    %1489 = vmatpush1.bf16.msra.mxu0 0
    %1490 = vmatprep.subr.bf16.mxu0 0
    %1491 = vmatpush1.bf16.msra.mxu0 0
    %1492 = vmatprep.subr.bf16.mxu0 0
    %1493 = vmatpush1.bf16.msra.mxu0 0
    %1494 = vmatprep.subr.bf16.mxu0 0
    %1495 = vmatpush1.bf16.msra.mxu0 0
    %1496 = vmatprep.subr.bf16.mxu0 0
    %1497 = vmatpush1.bf16.msra.mxu0 0
    %1498 = vmatprep.subr.bf16.mxu0 0
    %1499 = vmatpush1.bf16.msra.mxu0 0
    %1500 = vmatprep.subr.bf16.mxu0 0
    %1501 = vmatpush1.bf16.msra.mxu0 0
    %1502 = vmatprep.subr.bf16.mxu0 0
    %1503 = vmatpush1.bf16.msra.mxu0 0
    %1504 = vmatprep.subr.bf16.mxu0 0
    %1505 = vmatpush1.bf16.msra.mxu0 0
    %1506 = vmatprep.subr.bf16.mxu0 0
    %1507 = vmatpush1.bf16.msra.mxu0 0
    %1508 = vmatprep.subr.bf16.mxu0 0
    %1509 = vmatpush1.bf16.msra.mxu0 0
    %1510 = vmatprep.subr.bf16.mxu0 0
    %1511 = vmatpush1.bf16.msra.mxu0 0
    %1512 = vmatprep.subr.bf16.mxu0 0
    %1513 = vmatpush1.bf16.msra.mxu0 0
    %1514 = vmatprep.subr.bf16.mxu0 0
    %1515 = vmatpush1.bf16.msra.mxu0 0
    %1516 = vmatprep.subr.bf16.mxu0 0
    %1517 = vmatpush1.bf16.msra.mxu0 0
    %1518 = vmatprep.mubr.bf16.mxu0 0
    %1519 = vmatmul.mubr.bf16.gmra.mrb[0].mxu0 %v1481
    %v1520 = vpop.f32.mrb[0].mxu0
    %v1521 = vadd.f32 0.0, %v1520
    %v1522 = vpop.f32.mrb[0].mxu0
    %v1523 = vpop.f32.mrb[0].mxu0
    %v1524 = vpop.f32.mrb[0].mxu0
    %1525 = vdwg.mxu0
    %1526 = vrot.lane.b32.xlu0 %v320, 64
    %v1527 = vpop.permute.xlu0 %1526
    %v1529 = vsel %vm335, %v1321, 0
    %v1532 = vsel %vm1338, %v1527, 0
    %1534 = vmatprep.subr.bf16.mxu0 0
    %1535 = vmatpush1.bf16.msra.mxu0 %v1532
    %1536 = vmatprep.subr.bf16.mxu0 0
    %1537 = vmatpush1.bf16.msra.mxu0 0
    %1538 = vmatprep.subr.bf16.mxu0 0
    %1539 = vmatpush1.bf16.msra.mxu0 0
    %1540 = vmatprep.subr.bf16.mxu0 0
    %1541 = vmatpush1.bf16.msra.mxu0 0
    %1542 = vmatprep.subr.bf16.mxu0 0
    %1543 = vmatpush1.bf16.msra.mxu0 0
    %1544 = vmatprep.subr.bf16.mxu0 0
    %1545 = vmatpush1.bf16.msra.mxu0 0
    %1546 = vmatprep.subr.bf16.mxu0 0
    %1547 = vmatpush1.bf16.msra.mxu0 0
    %1548 = vmatprep.subr.bf16.mxu0 0
    %1549 = vmatpush1.bf16.msra.mxu0 0
    %1550 = vmatprep.subr.bf16.mxu0 0
    %1551 = vmatpush1.bf16.msra.mxu0 0
    %1552 = vmatprep.subr.bf16.mxu0 0
    %1553 = vmatpush1.bf16.msra.mxu0 0
    %1554 = vmatprep.subr.bf16.mxu0 0
    %1555 = vmatpush1.bf16.msra.mxu0 0
    %1556 = vmatprep.subr.bf16.mxu0 0
    %1557 = vmatpush1.bf16.msra.mxu0 0
    %1558 = vmatprep.subr.bf16.mxu0 0
    %1559 = vmatpush1.bf16.msra.mxu0 0
    %1560 = vmatprep.subr.bf16.mxu0 0
    %1561 = vmatpush1.bf16.msra.mxu0 0
    %1562 = vmatprep.subr.bf16.mxu0 0
    %1563 = vmatpush1.bf16.msra.mxu0 0
    %1564 = vmatprep.subr.bf16.mxu0 0
    %1565 = vmatpush1.bf16.msra.mxu0 0
    %1566 = vmatprep.mubr.bf16.mxu0 0
    %1567 = vmatmul.mubr.bf16.gmra.mrb[0].mxu0 %v1529
    %v1568 = vpop.f32.mrb[0].mxu0
    %v1569 = vadd.f32 0.0, %v1568
    %v1570 = vpop.f32.mrb[0].mxu0
    %v1571 = vpop.f32.mrb[0].mxu0
    %v1572 = vpop.f32.mrb[0].mxu0
    %1573 = vdwg.mxu0
    %1574 = vrot.lane.b32.xlu0 %v321, 64
    %v1575 = vpop.permute.xlu0 %1574
    %v1577 = vsel %vm335, %v1322, 0
    %v1580 = vsel %vm1338, %v1575, 0
    %1582 = vmatprep.subr.bf16.mxu0 0
    %1583 = vmatpush1.bf16.msra.mxu0 %v1580
    %1584 = vmatprep.subr.bf16.mxu0 0
    %1585 = vmatpush1.bf16.msra.mxu0 0
    %1586 = vmatprep.subr.bf16.mxu0 0
    %1587 = vmatpush1.bf16.msra.mxu0 0
    %1588 = vmatprep.subr.bf16.mxu0 0
    %1589 = vmatpush1.bf16.msra.mxu0 0
    %1590 = vmatprep.subr.bf16.mxu0 0
    %1591 = vmatpush1.bf16.msra.mxu0 0
    %1592 = vmatprep.subr.bf16.mxu0 0
    %1593 = vmatpush1.bf16.msra.mxu0 0
    %1594 = vmatprep.subr.bf16.mxu0 0
    %1595 = vmatpush1.bf16.msra.mxu0 0
    %1596 = vmatprep.subr.bf16.mxu0 0
    %1597 = vmatpush1.bf16.msra.mxu0 0
    %1598 = vmatprep.subr.bf16.mxu0 0
    %1599 = vmatpush1.bf16.msra.mxu0 0
    %1600 = vmatprep.subr.bf16.mxu0 0
    %1601 = vmatpush1.bf16.msra.mxu0 0
    %1602 = vmatprep.subr.bf16.mxu0 0
    %1603 = vmatpush1.bf16.msra.mxu0 0
    %1604 = vmatprep.subr.bf16.mxu0 0
    %1605 = vmatpush1.bf16.msra.mxu0 0
    %1606 = vmatprep.subr.bf16.mxu0 0
    %1607 = vmatpush1.bf16.msra.mxu0 0
    %1608 = vmatprep.subr.bf16.mxu0 0
    %1609 = vmatpush1.bf16.msra.mxu0 0
    %1610 = vmatprep.subr.bf16.mxu0 0
    %1611 = vmatpush1.bf16.msra.mxu0 0
    %1612 = vmatprep.subr.bf16.mxu0 0
    %1613 = vmatpush1.bf16.msra.mxu0 0
    %1614 = vmatprep.mubr.bf16.mxu0 0
    %1615 = vmatmul.mubr.bf16.gmra.mrb[0].mxu0 %v1577
    %v1616 = vpop.f32.mrb[0].mxu0
    %v1617 = vadd.f32 0.0, %v1616
    %v1618 = vpop.f32.mrb[0].mxu0
    %v1619 = vpop.f32.mrb[0].mxu0
    %v1620 = vpop.f32.mrb[0].mxu0
    %1621 = vdwg.mxu0
    %1622 = vrot.lane.b32.xlu0 %v322, 64
    %v1623 = vpop.permute.xlu0 %1622
    %v1625 = vsel %vm335, %v1323, 0
    %v1628 = vsel %vm1338, %v1623, 0
    %1630 = vmatprep.subr.bf16.mxu0 0
    %1631 = vmatpush1.bf16.msra.mxu0 %v1628
    %1632 = vmatprep.subr.bf16.mxu0 0
    %1633 = vmatpush1.bf16.msra.mxu0 0
    %1634 = vmatprep.subr.bf16.mxu0 0
    %1635 = vmatpush1.bf16.msra.mxu0 0
    %1636 = vmatprep.subr.bf16.mxu0 0
    %1637 = vmatpush1.bf16.msra.mxu0 0
    %1638 = vmatprep.subr.bf16.mxu0 0
    %1639 = vmatpush1.bf16.msra.mxu0 0
    %1640 = vmatprep.subr.bf16.mxu0 0
    %1641 = vmatpush1.bf16.msra.mxu0 0
    %1642 = vmatprep.subr.bf16.mxu0 0
    %1643 = vmatpush1.bf16.msra.mxu0 0
    %1644 = vmatprep.subr.bf16.mxu0 0
    %1645 = vmatpush1.bf16.msra.mxu0 0
    %1646 = vmatprep.subr.bf16.mxu0 0
    %1647 = vmatpush1.bf16.msra.mxu0 0
    %1648 = vmatprep.subr.bf16.mxu0 0
    %1649 = vmatpush1.bf16.msra.mxu0 0
    %1650 = vmatprep.subr.bf16.mxu0 0
    %1651 = vmatpush1.bf16.msra.mxu0 0
    %1652 = vmatprep.subr.bf16.mxu0 0
    %1653 = vmatpush1.bf16.msra.mxu0 0
    %1654 = vmatprep.subr.bf16.mxu0 0
    %1655 = vmatpush1.bf16.msra.mxu0 0
    %1656 = vmatprep.subr.bf16.mxu0 0
    %1657 = vmatpush1.bf16.msra.mxu0 0
    %1658 = vmatprep.subr.bf16.mxu0 0
    %1659 = vmatpush1.bf16.msra.mxu0 0
    %1660 = vmatprep.subr.bf16.mxu0 0
    %1661 = vmatpush1.bf16.msra.mxu0 0
    %1662 = vmatprep.mubr.bf16.mxu0 0
    %1663 = vmatmul.mubr.bf16.gmra.mrb[0].mxu0 %v1625
    %v1664 = vpop.f32.mrb[0].mxu0
    %v1665 = vadd.f32 0.0, %v1664
    %v1666 = vpop.f32.mrb[0].mxu0
    %v1667 = vpop.f32.mrb[0].mxu0
    %v1668 = vpop.f32.mrb[0].mxu0
    %1669 = vdwg.mxu0
    %1670 = vrot.lane.b32.xlu0 %v323, 64
    %v1671 = vpop.permute.xlu0 %1670
    %v1673 = vsel %vm335, %v1324, 0
    %v1676 = vsel %vm1338, %v1671, 0
    %1678 = vmatprep.subr.bf16.mxu0 0
    %1679 = vmatpush1.bf16.msra.mxu0 %v1676
    %1680 = vmatprep.subr.bf16.mxu0 0
    %1681 = vmatpush1.bf16.msra.mxu0 0
    %1682 = vmatprep.subr.bf16.mxu0 0
    %1683 = vmatpush1.bf16.msra.mxu0 0
    %1684 = vmatprep.subr.bf16.mxu0 0
    %1685 = vmatpush1.bf16.msra.mxu0 0
    %1686 = vmatprep.subr.bf16.mxu0 0
    %1687 = vmatpush1.bf16.msra.mxu0 0
    %1688 = vmatprep.subr.bf16.mxu0 0
    %1689 = vmatpush1.bf16.msra.mxu0 0
    %1690 = vmatprep.subr.bf16.mxu0 0
    %1691 = vmatpush1.bf16.msra.mxu0 0
    %1692 = vmatprep.subr.bf16.mxu0 0
    %1693 = vmatpush1.bf16.msra.mxu0 0
    %1694 = vmatprep.subr.bf16.mxu0 0
    %1695 = vmatpush1.bf16.msra.mxu0 0
    %1696 = vmatprep.subr.bf16.mxu0 0
    %1697 = vmatpush1.bf16.msra.mxu0 0
    %1698 = vmatprep.subr.bf16.mxu0 0
    %1699 = vmatpush1.bf16.msra.mxu0 0
    %1700 = vmatprep.subr.bf16.mxu0 0
    %1701 = vmatpush1.bf16.msra.mxu0 0
    %1702 = vmatprep.subr.bf16.mxu0 0
    %1703 = vmatpush1.bf16.msra.mxu0 0
    %1704 = vmatprep.subr.bf16.mxu0 0
    %1705 = vmatpush1.bf16.msra.mxu0 0
    %1706 = vmatprep.subr.bf16.mxu0 0
    %1707 = vmatpush1.bf16.msra.mxu0 0
    %1708 = vmatprep.subr.bf16.mxu0 0
    %1709 = vmatpush1.bf16.msra.mxu0 0
    %1710 = vmatprep.mubr.bf16.mxu0 0
    %1711 = vmatmul.mubr.bf16.gmra.mrb[0].mxu0 %v1673
    %v1712 = vpop.f32.mrb[0].mxu0
    %v1713 = vadd.f32 0.0, %v1712
    %v1714 = vpop.f32.mrb[0].mxu0
    %v1715 = vpop.f32.mrb[0].mxu0
    %v1716 = vpop.f32.mrb[0].mxu0
    %1717 = vdwg.mxu0
    %1718 = vrot.lane.b32.xlu0 %v324, 64
    %v1719 = vpop.permute.xlu0 %1718
    %v1721 = vsel %vm335, %v1325, 0
    %v1724 = vsel %vm1338, %v1719, 0
    %1726 = vmatprep.subr.bf16.mxu0 0
    %1727 = vmatpush1.bf16.msra.mxu0 %v1724
    %1728 = vmatprep.subr.bf16.mxu0 0
    %1729 = vmatpush1.bf16.msra.mxu0 0
    %1730 = vmatprep.subr.bf16.mxu0 0
    %1731 = vmatpush1.bf16.msra.mxu0 0
    %1732 = vmatprep.subr.bf16.mxu0 0
    %1733 = vmatpush1.bf16.msra.mxu0 0
    %1734 = vmatprep.subr.bf16.mxu0 0
    %1735 = vmatpush1.bf16.msra.mxu0 0
    %1736 = vmatprep.subr.bf16.mxu0 0
    %1737 = vmatpush1.bf16.msra.mxu0 0
    %1738 = vmatprep.subr.bf16.mxu0 0
    %1739 = vmatpush1.bf16.msra.mxu0 0
    %1740 = vmatprep.subr.bf16.mxu0 0
    %1741 = vmatpush1.bf16.msra.mxu0 0
    %1742 = vmatprep.subr.bf16.mxu0 0
    %1743 = vmatpush1.bf16.msra.mxu0 0
    %1744 = vmatprep.subr.bf16.mxu0 0
    %1745 = vmatpush1.bf16.msra.mxu0 0
    %1746 = vmatprep.subr.bf16.mxu0 0
    %1747 = vmatpush1.bf16.msra.mxu0 0
    %1748 = vmatprep.subr.bf16.mxu0 0
    %1749 = vmatpush1.bf16.msra.mxu0 0
    %1750 = vmatprep.subr.bf16.mxu0 0
    %1751 = vmatpush1.bf16.msra.mxu0 0
    %1752 = vmatprep.subr.bf16.mxu0 0
    %1753 = vmatpush1.bf16.msra.mxu0 0
    %1754 = vmatprep.subr.bf16.mxu0 0
    %1755 = vmatpush1.bf16.msra.mxu0 0
    %1756 = vmatprep.subr.bf16.mxu0 0
    %1757 = vmatpush1.bf16.msra.mxu0 0
    %1758 = vmatprep.mubr.bf16.mxu0 0
    %1759 = vmatmul.mubr.bf16.gmra.mrb[0].mxu0 %v1721
    %v1760 = vpop.f32.mrb[0].mxu0
    %v1761 = vadd.f32 0.0, %v1760
    %v1762 = vpop.f32.mrb[0].mxu0
    %v1763 = vpop.f32.mrb[0].mxu0
    %v1764 = vpop.f32.mrb[0].mxu0
    %1765 = vdwg.mxu0
    %1766 = vrot.lane.b32.xlu0 %v325, 64
    %v1767 = vpop.permute.xlu0 %1766
    %v1769 = vsel %vm335, %v1326, 0
    %v1772 = vsel %vm1338, %v1767, 0
    %1774 = vmatprep.subr.bf16.mxu0 0
    %1775 = vmatpush1.bf16.msra.mxu0 %v1772
    %1776 = vmatprep.subr.bf16.mxu0 0
    %1777 = vmatpush1.bf16.msra.mxu0 0
    %1778 = vmatprep.subr.bf16.mxu0 0
    %1779 = vmatpush1.bf16.msra.mxu0 0
    %1780 = vmatprep.subr.bf16.mxu0 0
    %1781 = vmatpush1.bf16.msra.mxu0 0
    %1782 = vmatprep.subr.bf16.mxu0 0
    %1783 = vmatpush1.bf16.msra.mxu0 0
    %1784 = vmatprep.subr.bf16.mxu0 0
    %1785 = vmatpush1.bf16.msra.mxu0 0
    %1786 = vmatprep.subr.bf16.mxu0 0
    %1787 = vmatpush1.bf16.msra.mxu0 0
    %1788 = vmatprep.subr.bf16.mxu0 0
    %1789 = vmatpush1.bf16.msra.mxu0 0
    %1790 = vmatprep.subr.bf16.mxu0 0
    %1791 = vmatpush1.bf16.msra.mxu0 0
    %1792 = vmatprep.subr.bf16.mxu0 0
    %1793 = vmatpush1.bf16.msra.mxu0 0
    %1794 = vmatprep.subr.bf16.mxu0 0
    %1795 = vmatpush1.bf16.msra.mxu0 0
    %1796 = vmatprep.subr.bf16.mxu0 0
    %1797 = vmatpush1.bf16.msra.mxu0 0
    %1798 = vmatprep.subr.bf16.mxu0 0
    %1799 = vmatpush1.bf16.msra.mxu0 0
    %1800 = vmatprep.subr.bf16.mxu0 0
    %1801 = vmatpush1.bf16.msra.mxu0 0
    %1802 = vmatprep.subr.bf16.mxu0 0
    %1803 = vmatpush1.bf16.msra.mxu0 0
    %1804 = vmatprep.subr.bf16.mxu0 0
    %1805 = vmatpush1.bf16.msra.mxu0 0
    %1806 = vmatprep.mubr.bf16.mxu0 0
    %1807 = vmatmul.mubr.bf16.gmra.mrb[0].mxu0 %v1769
    %v1808 = vpop.f32.mrb[0].mxu0
    %v1809 = vadd.f32 0.0, %v1808
    %v1810 = vpop.f32.mrb[0].mxu0
    %v1811 = vpop.f32.mrb[0].mxu0
    %v1812 = vpop.f32.mrb[0].mxu0
    %1813 = vdwg.mxu0
    %1814 = vrot.lane.b32.xlu0 %v326, 64
    %v1815 = vpop.permute.xlu0 %1814
    %v1817 = vsel %vm335, %v1327, 0
    %v1820 = vsel %vm1338, %v1815, 0
    %1822 = vmatprep.subr.bf16.mxu0 0
    %1823 = vmatpush1.bf16.msra.mxu0 %v1820
    %1824 = vmatprep.subr.bf16.mxu0 0
    %1825 = vmatpush1.bf16.msra.mxu0 0
    %1826 = vmatprep.subr.bf16.mxu0 0
    %1827 = vmatpush1.bf16.msra.mxu0 0
    %1828 = vmatprep.subr.bf16.mxu0 0
    %1829 = vmatpush1.bf16.msra.mxu0 0
    %1830 = vmatprep.subr.bf16.mxu0 0
    %1831 = vmatpush1.bf16.msra.mxu0 0
    %1832 = vmatprep.subr.bf16.mxu0 0
    %1833 = vmatpush1.bf16.msra.mxu0 0
    %1834 = vmatprep.subr.bf16.mxu0 0
    %1835 = vmatpush1.bf16.msra.mxu0 0
    %1836 = vmatprep.subr.bf16.mxu0 0
    %1837 = vmatpush1.bf16.msra.mxu0 0
    %1838 = vmatprep.subr.bf16.mxu0 0
    %1839 = vmatpush1.bf16.msra.mxu0 0
    %1840 = vmatprep.subr.bf16.mxu0 0
    %1841 = vmatpush1.bf16.msra.mxu0 0
    %1842 = vmatprep.subr.bf16.mxu0 0
    %1843 = vmatpush1.bf16.msra.mxu0 0
    %1844 = vmatprep.subr.bf16.mxu0 0
    %1845 = vmatpush1.bf16.msra.mxu0 0
    %1846 = vmatprep.subr.bf16.mxu0 0
    %1847 = vmatpush1.bf16.msra.mxu0 0
    %1848 = vmatprep.subr.bf16.mxu0 0
    %1849 = vmatpush1.bf16.msra.mxu0 0
    %1850 = vmatprep.subr.bf16.mxu0 0
    %1851 = vmatpush1.bf16.msra.mxu0 0
    %1852 = vmatprep.subr.bf16.mxu0 0
    %1853 = vmatpush1.bf16.msra.mxu0 0
    %1854 = vmatprep.mubr.bf16.mxu0 0
    %1855 = vmatmul.mubr.bf16.gmra.mrb[0].mxu0 %v1817
    %v1856 = vpop.f32.mrb[0].mxu0
    %v1857 = vadd.f32 0.0, %v1856
    %v1858 = vpop.f32.mrb[0].mxu0
    %v1859 = vpop.f32.mrb[0].mxu0
    %v1860 = vpop.f32.mrb[0].mxu0
    %1861 = vdwg.mxu0
    %1862 = vrot.lane.b32.xlu0 %v327, 64
    %v1863 = vpop.permute.xlu0 %1862
    %v1865 = vsel %vm335, %v1328, 0
    %v1868 = vsel %vm1338, %v1863, 0
    %1870 = vmatprep.subr.bf16.mxu0 0
    %1871 = vmatpush1.bf16.msra.mxu0 %v1868
    %1872 = vmatprep.subr.bf16.mxu0 0
    %1873 = vmatpush1.bf16.msra.mxu0 0
    %1874 = vmatprep.subr.bf16.mxu0 0
    %1875 = vmatpush1.bf16.msra.mxu0 0
    %1876 = vmatprep.subr.bf16.mxu0 0
    %1877 = vmatpush1.bf16.msra.mxu0 0
    %1878 = vmatprep.subr.bf16.mxu0 0
    %1879 = vmatpush1.bf16.msra.mxu0 0
    %1880 = vmatprep.subr.bf16.mxu0 0
    %1881 = vmatpush1.bf16.msra.mxu0 0
    %1882 = vmatprep.subr.bf16.mxu0 0
    %1883 = vmatpush1.bf16.msra.mxu0 0
    %1884 = vmatprep.subr.bf16.mxu0 0
    %1885 = vmatpush1.bf16.msra.mxu0 0
    %1886 = vmatprep.subr.bf16.mxu0 0
    %1887 = vmatpush1.bf16.msra.mxu0 0
    %1888 = vmatprep.subr.bf16.mxu0 0
    %1889 = vmatpush1.bf16.msra.mxu0 0
    %1890 = vmatprep.subr.bf16.mxu0 0
    %1891 = vmatpush1.bf16.msra.mxu0 0
    %1892 = vmatprep.subr.bf16.mxu0 0
    %1893 = vmatpush1.bf16.msra.mxu0 0
    %1894 = vmatprep.subr.bf16.mxu0 0
    %1895 = vmatpush1.bf16.msra.mxu0 0
    %1896 = vmatprep.subr.bf16.mxu0 0
    %1897 = vmatpush1.bf16.msra.mxu0 0
    %1898 = vmatprep.subr.bf16.mxu0 0
    %1899 = vmatpush1.bf16.msra.mxu0 0
    %1900 = vmatprep.subr.bf16.mxu0 0
    %1901 = vmatpush1.bf16.msra.mxu0 0
    %1902 = vmatprep.mubr.bf16.mxu0 0
    %1903 = vmatmul.mubr.bf16.gmra.mrb[0].mxu0 %v1865
    %v1904 = vpop.f32.mrb[0].mxu0
    %v1905 = vadd.f32 0.0, %v1904
    %v1906 = vpop.f32.mrb[0].mxu0
    %v1907 = vpop.f32.mrb[0].mxu0
    %v1908 = vpop.f32.mrb[0].mxu0
    %1909 = vdwg.mxu0
    %1910 = vrot.lane.b32.xlu0 %v328, 64
    %v1911 = vpop.permute.xlu0 %1910
    %v1913 = vsel %vm335, %v1329, 0
    %v1916 = vsel %vm1338, %v1911, 0
    %1918 = vmatprep.subr.bf16.mxu0 0
    %1919 = vmatpush1.bf16.msra.mxu0 %v1916
    %1920 = vmatprep.subr.bf16.mxu0 0
    %1921 = vmatpush1.bf16.msra.mxu0 0
    %1922 = vmatprep.subr.bf16.mxu0 0
    %1923 = vmatpush1.bf16.msra.mxu0 0
    %1924 = vmatprep.subr.bf16.mxu0 0
    %1925 = vmatpush1.bf16.msra.mxu0 0
    %1926 = vmatprep.subr.bf16.mxu0 0
    %1927 = vmatpush1.bf16.msra.mxu0 0
    %1928 = vmatprep.subr.bf16.mxu0 0
    %1929 = vmatpush1.bf16.msra.mxu0 0
    %1930 = vmatprep.subr.bf16.mxu0 0
    %1931 = vmatpush1.bf16.msra.mxu0 0
    %1932 = vmatprep.subr.bf16.mxu0 0
    %1933 = vmatpush1.bf16.msra.mxu0 0
    %1934 = vmatprep.subr.bf16.mxu0 0
    %1935 = vmatpush1.bf16.msra.mxu0 0
    %1936 = vmatprep.subr.bf16.mxu0 0
    %1937 = vmatpush1.bf16.msra.mxu0 0
    %1938 = vmatprep.subr.bf16.mxu0 0
    %1939 = vmatpush1.bf16.msra.mxu0 0
    %1940 = vmatprep.subr.bf16.mxu0 0
    %1941 = vmatpush1.bf16.msra.mxu0 0
    %1942 = vmatprep.subr.bf16.mxu0 0
    %1943 = vmatpush1.bf16.msra.mxu0 0
    %1944 = vmatprep.subr.bf16.mxu0 0
    %1945 = vmatpush1.bf16.msra.mxu0 0
    %1946 = vmatprep.subr.bf16.mxu0 0
    %1947 = vmatpush1.bf16.msra.mxu0 0
    %1948 = vmatprep.subr.bf16.mxu0 0
    %1949 = vmatpush1.bf16.msra.mxu0 0
    %1950 = vmatprep.mubr.bf16.mxu0 0
    %1951 = vmatmul.mubr.bf16.gmra.mrb[0].mxu0 %v1913
    %v1952 = vpop.f32.mrb[0].mxu0
    %v1953 = vadd.f32 0.0, %v1952
    %v1954 = vpop.f32.mrb[0].mxu0
    %v1955 = vpop.f32.mrb[0].mxu0
    %v1956 = vpop.f32.mrb[0].mxu0
    %1957 = vdwg.mxu0
    %1958 = vrot.lane.b32.xlu0 %v329, 64
    %v1959 = vpop.permute.xlu0 %1958
    %v1961 = vsel %vm335, %v1330, 0
    %v1964 = vsel %vm1338, %v1959, 0
    %1966 = vmatprep.subr.bf16.mxu0 0
    %1967 = vmatpush1.bf16.msra.mxu0 %v1964
    %1968 = vmatprep.subr.bf16.mxu0 0
    %1969 = vmatpush1.bf16.msra.mxu0 0
    %1970 = vmatprep.subr.bf16.mxu0 0
    %1971 = vmatpush1.bf16.msra.mxu0 0
    %1972 = vmatprep.subr.bf16.mxu0 0
    %1973 = vmatpush1.bf16.msra.mxu0 0
    %1974 = vmatprep.subr.bf16.mxu0 0
    %1975 = vmatpush1.bf16.msra.mxu0 0
    %1976 = vmatprep.subr.bf16.mxu0 0
    %1977 = vmatpush1.bf16.msra.mxu0 0
    %1978 = vmatprep.subr.bf16.mxu0 0
    %1979 = vmatpush1.bf16.msra.mxu0 0
    %1980 = vmatprep.subr.bf16.mxu0 0
    %1981 = vmatpush1.bf16.msra.mxu0 0
    %1982 = vmatprep.subr.bf16.mxu0 0
    %1983 = vmatpush1.bf16.msra.mxu0 0
    %1984 = vmatprep.subr.bf16.mxu0 0
    %1985 = vmatpush1.bf16.msra.mxu0 0
    %1986 = vmatprep.subr.bf16.mxu0 0
    %1987 = vmatpush1.bf16.msra.mxu0 0
    %1988 = vmatprep.subr.bf16.mxu0 0
    %1989 = vmatpush1.bf16.msra.mxu0 0
    %1990 = vmatprep.subr.bf16.mxu0 0
    %1991 = vmatpush1.bf16.msra.mxu0 0
    %1992 = vmatprep.subr.bf16.mxu0 0
    %1993 = vmatpush1.bf16.msra.mxu0 0
    %1994 = vmatprep.subr.bf16.mxu0 0
    %1995 = vmatpush1.bf16.msra.mxu0 0
    %1996 = vmatprep.subr.bf16.mxu0 0
    %1997 = vmatpush1.bf16.msra.mxu0 0
    %1998 = vmatprep.mubr.bf16.mxu0 0
    %1999 = vmatmul.mubr.bf16.gmra.mrb[0].mxu0 %v1961
    %v2000 = vpop.f32.mrb[0].mxu0
    %v2001 = vadd.f32 0.0, %v2000
    %v2002 = vpop.f32.mrb[0].mxu0
    %v2003 = vpop.f32.mrb[0].mxu0
    %v2004 = vpop.f32.mrb[0].mxu0
    %2005 = vdwg.mxu0
    %2006 = vrot.lane.b32.xlu0 %v330, 64
    %v2007 = vpop.permute.xlu0 %2006
    %v2009 = vsel %vm335, %v1331, 0
    %v2012 = vsel %vm1338, %v2007, 0
    %2014 = vmatprep.subr.bf16.mxu0 0
    %2015 = vmatpush1.bf16.msra.mxu0 %v2012
    %2016 = vmatprep.subr.bf16.mxu0 0
    %2017 = vmatpush1.bf16.msra.mxu0 0
    %2018 = vmatprep.subr.bf16.mxu0 0
    %2019 = vmatpush1.bf16.msra.mxu0 0
    %2020 = vmatprep.subr.bf16.mxu0 0
    %2021 = vmatpush1.bf16.msra.mxu0 0
    %2022 = vmatprep.subr.bf16.mxu0 0
    %2023 = vmatpush1.bf16.msra.mxu0 0
    %2024 = vmatprep.subr.bf16.mxu0 0
    %2025 = vmatpush1.bf16.msra.mxu0 0
    %2026 = vmatprep.subr.bf16.mxu0 0
    %2027 = vmatpush1.bf16.msra.mxu0 0
    %2028 = vmatprep.subr.bf16.mxu0 0
    %2029 = vmatpush1.bf16.msra.mxu0 0
    %2030 = vmatprep.subr.bf16.mxu0 0
    %2031 = vmatpush1.bf16.msra.mxu0 0
    %2032 = vmatprep.subr.bf16.mxu0 0
    %2033 = vmatpush1.bf16.msra.mxu0 0
    %2034 = vmatprep.subr.bf16.mxu0 0
    %2035 = vmatpush1.bf16.msra.mxu0 0
    %2036 = vmatprep.subr.bf16.mxu0 0
    %2037 = vmatpush1.bf16.msra.mxu0 0
    %2038 = vmatprep.subr.bf16.mxu0 0
    %2039 = vmatpush1.bf16.msra.mxu0 0
    %2040 = vmatprep.subr.bf16.mxu0 0
    %2041 = vmatpush1.bf16.msra.mxu0 0
    %2042 = vmatprep.subr.bf16.mxu0 0
    %2043 = vmatpush1.bf16.msra.mxu0 0
    %2044 = vmatprep.subr.bf16.mxu0 0
    %2045 = vmatpush1.bf16.msra.mxu0 0
    %2046 = vmatprep.mubr.bf16.mxu0 0
    %2047 = vmatmul.mubr.bf16.gmra.mrb[0].mxu0 %v2009
    %v2048 = vpop.f32.mrb[0].mxu0
    %v2049 = vadd.f32 0.0, %v2048
    %v2050 = vpop.f32.mrb[0].mxu0
    %v2051 = vpop.f32.mrb[0].mxu0
    %v2052 = vpop.f32.mrb[0].mxu0
    %2053 = vdwg.mxu0
    %2054 = vrot.lane.b32.xlu0 %v331, 64
    %v2055 = vpop.permute.xlu0 %2054
    %v2057 = vsel %vm335, %v1332, 0
    %v2060 = vsel %vm1338, %v2055, 0
    %2062 = vmatprep.subr.bf16.mxu0 0
    %2063 = vmatpush1.bf16.msra.mxu0 %v2060
    %2064 = vmatprep.subr.bf16.mxu0 0
    %2065 = vmatpush1.bf16.msra.mxu0 0
    %2066 = vmatprep.subr.bf16.mxu0 0
    %2067 = vmatpush1.bf16.msra.mxu0 0
    %2068 = vmatprep.subr.bf16.mxu0 0
    %2069 = vmatpush1.bf16.msra.mxu0 0
    %2070 = vmatprep.subr.bf16.mxu0 0
    %2071 = vmatpush1.bf16.msra.mxu0 0
    %2072 = vmatprep.subr.bf16.mxu0 0
    %2073 = vmatpush1.bf16.msra.mxu0 0
    %2074 = vmatprep.subr.bf16.mxu0 0
    %2075 = vmatpush1.bf16.msra.mxu0 0
    %2076 = vmatprep.subr.bf16.mxu0 0
    %2077 = vmatpush1.bf16.msra.mxu0 0
    %2078 = vmatprep.subr.bf16.mxu0 0
    %2079 = vmatpush1.bf16.msra.mxu0 0
    %2080 = vmatprep.subr.bf16.mxu0 0
    %2081 = vmatpush1.bf16.msra.mxu0 0
    %2082 = vmatprep.subr.bf16.mxu0 0
    %2083 = vmatpush1.bf16.msra.mxu0 0
    %2084 = vmatprep.subr.bf16.mxu0 0
    %2085 = vmatpush1.bf16.msra.mxu0 0
    %2086 = vmatprep.subr.bf16.mxu0 0
    %2087 = vmatpush1.bf16.msra.mxu0 0
    %2088 = vmatprep.subr.bf16.mxu0 0
    %2089 = vmatpush1.bf16.msra.mxu0 0
    %2090 = vmatprep.subr.bf16.mxu0 0
    %2091 = vmatpush1.bf16.msra.mxu0 0
    %2092 = vmatprep.subr.bf16.mxu0 0
    %2093 = vmatpush1.bf16.msra.mxu0 0
    %2094 = vmatprep.mubr.bf16.mxu0 0
    %2095 = vmatmul.mubr.bf16.gmra.mrb[0].mxu0 %v2057
    %v2096 = vpop.f32.mrb[0].mxu0
    %v2097 = vadd.f32 0.0, %v2096
    %v2098 = vpop.f32.mrb[0].mxu0
    %v2099 = vpop.f32.mrb[0].mxu0
    %v2100 = vpop.f32.mrb[0].mxu0
    %2101 = vdwg.mxu0
    %2106 = vrot.lane.b32.xlu0 %v1569, 8
    %v2107 = vpop.permute.xlu0 %2106
    %2108 = vrot.lane.b32.xlu0 %v1617, 8
    %v2109 = vpop.permute.xlu0 %2108
    %2110 = vrot.lane.b32.xlu0 %v1665, 8
    %v2111 = vpop.permute.xlu0 %2110
    %2112 = vrot.lane.b32.xlu0 %v1713, 8
    %v2113 = vpop.permute.xlu0 %2112
    %2122 = vrot.lane.b32.xlu0 %v1761, 16
    %v2123 = vpop.permute.xlu0 %2122
    %2124 = vrot.lane.b32.xlu0 %v1809, 16
    %v2125 = vpop.permute.xlu0 %2124
    %2126 = vrot.lane.b32.xlu0 %v1857, 16
    %v2127 = vpop.permute.xlu0 %2126
    %2128 = vrot.lane.b32.xlu0 %v1905, 16
    %v2129 = vpop.permute.xlu0 %2128
    %2138 = vrot.lane.b32.xlu0 %v1953, 24
    %v2139 = vpop.permute.xlu0 %2138
    %2140 = vrot.lane.b32.xlu0 %v2001, 24
    %v2141 = vpop.permute.xlu0 %2140
    %2142 = vrot.lane.b32.xlu0 %v2049, 24
    %v2143 = vpop.permute.xlu0 %2142
    %2144 = vrot.lane.b32.xlu0 %v2097, 24
    %v2145 = vpop.permute.xlu0 %2144
    %v2150 = vsel %vm335, %v1377, %v2107
    %v2151 = vsel %vm335, %v1425, %v2109
    %v2152 = vsel %vm335, %v1473, %v2111
    %v2153 = vsel %vm335, %v1521, %v2113
    %vm2154 = vcmask 130048
    %v2155 = vsel %vm2154, %v2150, %v2123
    %v2156 = vsel %vm2154, %v2151, %v2125
    %v2157 = vsel %vm2154, %v2152, %v2127
    %v2158 = vsel %vm2154, %v2153, %v2129
    %vm2159 = vcmask 195584
    %v2160 = vsel %vm2159, %v2155, %v2139
    %v2161 = vsel %vm2159, %v2156, %v2141
    %v2162 = vsel %vm2159, %v2157, %v2143
    %v2163 = vsel %vm2159, %v2158, %v2145
    %v2164 = vpack.c.bf16 %v2161, %v2160
    %v2165 = vpack.c.bf16 %v2163, %v2162
    %v2166 = vld [vmem:[#allocation5] sm:$0xf]
    %v2167 = vld [vmem:[#allocation5 + $0x4] sm:$0xf]
    %v2168 = vld [vmem:[#allocation5 + $0x8] sm:$0xf]
    %v2169 = vld [vmem:[#allocation5 + $0xc] sm:$0xf]
    %v2170 = vld [vmem:[%s7] sm:$0x1]
    %v2172 = vlaneseq
    %v2173 = vshrl.u32 %v2172, 7
    %v2174 = vsub.s32 0, %v2173
    %v2175 = vrot.slane %v2170, %v2174
    %v2181 = vunpack.c.l.b16 %v2166
    %v2182 = vunpack.c.l.b16 %v2167
    %v2183 = vunpack.c.l.b16 %v2168
    %v2184 = vunpack.c.l.b16 %v2169
    %v2185 = vpack.c.b16 %v2182, %v2181
    %v2186 = vpack.c.b16 %v2184, %v2183
    %v2190 = vsel %vm110, %v2164, 0
    %v2193 = vsel %vm110, %v2165, 0
    %2195 = vmatprep.subr.bf16.mxu0 0
    %2196 = vmatpush1.bf16.msra.mxu0 %v2185
    %2197 = vmatprep.subr.bf16.mxu0 0
    %2198 = vmatpush1.bf16.msra.mxu0 %v2186
    %2199 = vmatprep.subr.bf16.mxu0 0
    %2200 = vmatpush1.bf16.msra.mxu0 0
    %2201 = vmatprep.subr.bf16.mxu0 0
    %2202 = vmatpush1.bf16.msra.mxu0 0
    %2203 = vmatprep.subr.bf16.mxu0 0
    %2204 = vmatpush1.bf16.msra.mxu0 0
    %2205 = vmatprep.subr.bf16.mxu0 0
    %2206 = vmatpush1.bf16.msra.mxu0 0
    %2207 = vmatprep.subr.bf16.mxu0 0
    %2208 = vmatpush1.bf16.msra.mxu0 0
    %2209 = vmatprep.subr.bf16.mxu0 0
    %2210 = vmatpush1.bf16.msra.mxu0 0
    %2211 = vmatprep.subr.bf16.mxu0 0
    %2212 = vmatpush1.bf16.msra.mxu0 0
    %2213 = vmatprep.subr.bf16.mxu0 0
    %2214 = vmatpush1.bf16.msra.mxu0 0
    %2215 = vmatprep.subr.bf16.mxu0 0
    %2216 = vmatpush1.bf16.msra.mxu0 0
    %2217 = vmatprep.subr.bf16.mxu0 0
    %2218 = vmatpush1.bf16.msra.mxu0 0
    %2219 = vmatprep.subr.bf16.mxu0 0
    %2220 = vmatpush1.bf16.msra.mxu0 0
    %2221 = vmatprep.subr.bf16.mxu0 0
    %2222 = vmatpush1.bf16.msra.mxu0 0
    %2223 = vmatprep.subr.bf16.mxu0 0
    %2224 = vmatpush1.bf16.msra.mxu0 0
    %2225 = vmatprep.subr.bf16.mxu0 0
    %2226 = vmatpush1.bf16.msra.mxu0 0
    %2227 = vmatprep.mubr.bf16.mxu0 0
    %2228 = vmatmul.mubr.bf16.gmra.mrb[0].mxu0 %v2190
    %v2229 = vpop.f32.mrb[0].mxu0
    %v2230 = vadd.f32 %v2175, %v2229
    %v2231 = vpop.f32.mrb[0].mxu0
    %v2232 = vpop.f32.mrb[0].mxu0
    %v2233 = vadd.f32 %v2175, %v2232
    %v2234 = vpop.f32.mrb[0].mxu0
    %2235 = vmatprep.mubr.bf16.mxu0 0
    %2236 = vmatmul.mubr.bf16.gmra.mrb[0].mxu0 %v2193
    %v2237 = vpop.f32.mrb[0].mxu0
    %v2238 = vadd.f32 %v2175, %v2237
    %v2239 = vpop.f32.mrb[0].mxu0
    %v2240 = vpop.f32.mrb[0].mxu0
    %v2241 = vadd.f32 %v2175, %v2240
    %v2242 = vpop.f32.mrb[0].mxu0
    %2243 = vdwg.mxu0
    %v2244 = vadd.f32 %v104, %v2230
    %v2245 = vadd.f32 %v105, %v2233
    %v2246 = vadd.f32 %v106, %v2238
    %v2247 = vadd.f32 %v107, %v2241
    %v2248 = vld [vmem:[%s8] sm:$0x1]
    %v2249 = vld [vmem:[%s9] sm:$0x1]
    %v2250 = vsel %vm110, %v2244, 0.0
    %2251 = vadd.xlane.f32.xlu0 %v2250
    %v2252 = vpop.xlane.xlu0 %2251
    %v2253 = vsel %vm110, %v2245, 0.0
    %2254 = vadd.xlane.f32.xlu0 %v2253
    %v2255 = vpop.xlane.xlu0 %2254
    %v2256 = vsel %vm110, %v2246, 0.0
    %2257 = vadd.xlane.f32.xlu0 %v2256
    %v2258 = vpop.xlane.xlu0 %2257
    %v2259 = vsel %vm110, %v2247, 0.0
    %2260 = vadd.xlane.f32.xlu0 %v2259
    %v2261 = vpop.xlane.xlu0 %2260
    %v2262 = vmul.f32 %v2252, %v123
    %v2263 = vmul.f32 %v2255, %v123
    %v2264 = vmul.f32 %v2258, %v123
    %v2265 = vmul.f32 %v2261, %v123
    %v2266 = vmul.f32 %v2244, %v2244
    %v2267 = vmul.f32 %v2245, %v2245
    %v2268 = vmul.f32 %v2246, %v2246
    %v2269 = vmul.f32 %v2247, %v2247
    %v2270 = vsel %vm110, %v2266, 0.0
    %2271 = vadd.xlane.f32.xlu0 %v2270
    %v2272 = vpop.xlane.xlu0 %2271
    %v2273 = vsel %vm110, %v2267, 0.0
    %2274 = vadd.xlane.f32.xlu0 %v2273
    %v2275 = vpop.xlane.xlu0 %2274
    %v2276 = vsel %vm110, %v2268, 0.0
    %2277 = vadd.xlane.f32.xlu0 %v2276
    %v2278 = vpop.xlane.xlu0 %2277
    %v2279 = vsel %vm110, %v2269, 0.0
    %2280 = vadd.xlane.f32.xlu0 %v2279
    %v2281 = vpop.xlane.xlu0 %2280
    %v2282 = vmul.f32 %v2272, %v123
    %v2283 = vmul.f32 %v2275, %v123
    %v2284 = vmul.f32 %v2278, %v123
    %v2285 = vmul.f32 %v2281, %v123
    %v2286 = vmul.f32 %v2262, %v2262
    %v2287 = vmul.f32 %v2263, %v2263
    %v2288 = vmul.f32 %v2264, %v2264
    %v2289 = vmul.f32 %v2265, %v2265
    %v2290 = vsub.f32 %v2282, %v2286
    %v2291 = vsub.f32 %v2283, %v2287
    %v2292 = vsub.f32 %v2284, %v2288
    %v2293 = vsub.f32 %v2285, %v2289
    %v2294 = vmax.f32 %v2290, 0.0
    %v2295 = vmax.f32 %v2291, 0.0
    %v2296 = vmax.f32 %v2292, 0.0
    %v2297 = vmax.f32 %v2293, 0.0
    %v2298 = vsub.f32 %v2244, %v2262
    %v2299 = vsub.f32 %v2245, %v2263
    %v2300 = vsub.f32 %v2246, %v2264
    %v2301 = vsub.f32 %v2247, %v2265
    %v2302 = vadd.f32 %v2294, 1e-05
    %v2303 = vadd.f32 %v2295, 1e-05
    %v2304 = vadd.f32 %v2296, 1e-05
    %v2305 = vadd.f32 %v2297, 1e-05
    %v2306 = vrsqrt.pop %v2302
    %v2307 = vrsqrt.pop %v2303
    %v2308 = vrsqrt.pop %v2304
    %v2309 = vrsqrt.pop %v2305
    %v2310 = vmul.f32 %v2298, %v2306
    %v2311 = vmul.f32 %v2299, %v2307
    %v2312 = vmul.f32 %v2300, %v2308
    %v2313 = vmul.f32 %v2301, %v2309
    %v2315 = vlaneseq
    %v2316 = vshrl.u32 %v2315, 7
    %v2317 = vsub.s32 0, %v2316
    %v2318 = vrot.slane %v2248, %v2317
    %v2320 = vmul.f32 %v2310, %v2318
    %v2321 = vmul.f32 %v2311, %v2318
    %v2322 = vmul.f32 %v2312, %v2318
    %v2323 = vmul.f32 %v2313, %v2318
    %v2325 = vlaneseq
    %v2326 = vshrl.u32 %v2325, 7
    %v2327 = vsub.s32 0, %v2326
    %v2328 = vrot.slane %v2249, %v2327
    %v2330 = vadd.f32 %v2320, %v2328
    %v2331 = vadd.f32 %v2321, %v2328
    %v2332 = vadd.f32 %v2322, %v2328
    %v2333 = vadd.f32 %v2323, %v2328
    %v2334 = vpack.c.bf16 %v2331, %v2330
    %v2335 = vpack.c.bf16 %v2333, %v2332
    %v2336 = vld [vmem:[#allocation7] sm:$0xf]
    %v2337 = vld [vmem:[#allocation7 + $0x4] sm:$0xf]
    %v2338 = vld [vmem:[#allocation7 + $0x8] sm:$0xf]
    %v2339 = vld [vmem:[#allocation7 + $0xc] sm:$0xf]
    %v2340 = vld [vmem:[#allocation8] sm:$0x1]
    %v2342 = vlaneseq
    %v2343 = vshrl.u32 %v2342, 7
    %v2344 = vsub.s32 0, %v2343
    %v2345 = vrot.slane %v2340, %v2344
    %v2351 = vunpack.c.l.b16 %v2336
    %v2352 = vunpack.c.l.b16 %v2337
    %v2353 = vunpack.c.l.b16 %v2338
    %v2354 = vunpack.c.l.b16 %v2339
    %v2355 = vpack.c.b16 %v2352, %v2351
    %v2356 = vpack.c.b16 %v2354, %v2353
    %v2360 = vsel %vm110, %v2334, 0
    %v2363 = vsel %vm110, %v2335, 0
    %2365 = vmatprep.subr.bf16.mxu0 0
    %2366 = vmatpush1.bf16.msra.mxu0 %v2355
    %2367 = vmatprep.subr.bf16.mxu0 0
    %2368 = vmatpush1.bf16.msra.mxu0 %v2356
    %2369 = vmatprep.subr.bf16.mxu0 0
    %2370 = vmatpush1.bf16.msra.mxu0 0
    %2371 = vmatprep.subr.bf16.mxu0 0
    %2372 = vmatpush1.bf16.msra.mxu0 0
    %2373 = vmatprep.subr.bf16.mxu0 0
    %2374 = vmatpush1.bf16.msra.mxu0 0
    %2375 = vmatprep.subr.bf16.mxu0 0
    %2376 = vmatpush1.bf16.msra.mxu0 0
    %2377 = vmatprep.subr.bf16.mxu0 0
    %2378 = vmatpush1.bf16.msra.mxu0 0
    %2379 = vmatprep.subr.bf16.mxu0 0
    %2380 = vmatpush1.bf16.msra.mxu0 0
    %2381 = vmatprep.subr.bf16.mxu0 0
    %2382 = vmatpush1.bf16.msra.mxu0 0
    %2383 = vmatprep.subr.bf16.mxu0 0
    %2384 = vmatpush1.bf16.msra.mxu0 0
    %2385 = vmatprep.subr.bf16.mxu0 0
    %2386 = vmatpush1.bf16.msra.mxu0 0
    %2387 = vmatprep.subr.bf16.mxu0 0
    %2388 = vmatpush1.bf16.msra.mxu0 0
    %2389 = vmatprep.subr.bf16.mxu0 0
    %2390 = vmatpush1.bf16.msra.mxu0 0
    %2391 = vmatprep.subr.bf16.mxu0 0
    %2392 = vmatpush1.bf16.msra.mxu0 0
    %2393 = vmatprep.subr.bf16.mxu0 0
    %2394 = vmatpush1.bf16.msra.mxu0 0
    %2395 = vmatprep.subr.bf16.mxu0 0
    %2396 = vmatpush1.bf16.msra.mxu0 0
    %2397 = vmatprep.mubr.bf16.mxu0 0
    %2398 = vmatmul.mubr.bf16.gmra.mrb[0].mxu0 %v2360
    %v2399 = vpop.f32.mrb[0].mxu0
    %v2400 = vadd.f32 %v2345, %v2399
    %v2401 = vpop.f32.mrb[0].mxu0
    %v2402 = vpop.f32.mrb[0].mxu0
    %v2403 = vadd.f32 %v2345, %v2402
    %v2404 = vpop.f32.mrb[0].mxu0
    %2405 = vmatprep.mubr.bf16.mxu0 0
    %2406 = vmatmul.mubr.bf16.gmra.mrb[0].mxu0 %v2363
    %v2407 = vpop.f32.mrb[0].mxu0
    %v2408 = vadd.f32 %v2345, %v2407
    %v2409 = vpop.f32.mrb[0].mxu0
    %v2410 = vpop.f32.mrb[0].mxu0
    %v2411 = vadd.f32 %v2345, %v2410
    %v2412 = vpop.f32.mrb[0].mxu0
    %2413 = vdwg.mxu0
    %v2414 = vmul.f32 %v2400, 0.5
    %v2415 = vmul.f32 %v2403, 0.5
    %v2416 = vmul.f32 %v2408, 0.5
    %v2417 = vmul.f32 %v2411, 0.5
    %v2418 = vmul.f32 %v2400, 0.044715
    %v2419 = vmul.f32 %v2403, 0.044715
    %v2420 = vmul.f32 %v2408, 0.044715
    %v2421 = vmul.f32 %v2411, 0.044715
    %v2422 = vmul.f32 %v2418, %v2400
    %v2423 = vmul.f32 %v2419, %v2403
    %v2424 = vmul.f32 %v2420, %v2408
    %v2425 = vmul.f32 %v2421, %v2411
    %v2426 = vmul.f32 %v2422, %v2400
    %v2427 = vmul.f32 %v2423, %v2403
    %v2428 = vmul.f32 %v2424, %v2408
    %v2429 = vmul.f32 %v2425, %v2411
    %v2430 = vadd.f32 %v2400, %v2426
    %v2431 = vadd.f32 %v2403, %v2427
    %v2432 = vadd.f32 %v2408, %v2428
    %v2433 = vadd.f32 %v2411, %v2429
    %v2434 = vmul.f32 %v2430, 0.7978846
    %v2435 = vmul.f32 %v2431, 0.7978846
    %v2436 = vmul.f32 %v2432, 0.7978846
    %v2437 = vmul.f32 %v2433, 0.7978846
    %v2438 = vtanh.pop %v2434
    %v2439 = vtanh.pop %v2435
    %v2440 = vtanh.pop %v2436
    %v2441 = vtanh.pop %v2437
    %v2442 = vadd.f32 %v2438, 1.0
    %v2443 = vadd.f32 %v2439, 1.0
    %v2444 = vadd.f32 %v2440, 1.0
    %v2445 = vadd.f32 %v2441, 1.0
    %v2446 = vmul.f32 %v2414, %v2442
    %v2447 = vmul.f32 %v2415, %v2443
    %v2448 = vmul.f32 %v2416, %v2444
    %v2449 = vmul.f32 %v2417, %v2445
    %v2450 = vpack.c.bf16 %v2447, %v2446
    %v2451 = vpack.c.bf16 %v2449, %v2448
    %v2452 = vld [vmem:[%s12] sm:$0xf]
    %v2453 = vld [vmem:[%s12 + $0x4] sm:$0xf]
    %v2454 = vld [vmem:[%s12 + $0x8] sm:$0xf]
    %v2455 = vld [vmem:[%s12 + $0xc] sm:$0xf]
    %v2456 = vld [vmem:[%s12 + $0x10] sm:$0xf]
    %v2457 = vld [vmem:[%s12 + $0x14] sm:$0xf]
    %v2458 = vld [vmem:[%s12 + $0x18] sm:$0xf]
    %v2459 = vld [vmem:[%s12 + $0x1c] sm:$0xf]
    %v2460 = vld [vmem:[%s12 + $0x20] sm:$0xf]
    %v2461 = vld [vmem:[%s12 + $0x24] sm:$0xf]
    %v2462 = vld [vmem:[%s12 + $0x28] sm:$0xf]
    %v2463 = vld [vmem:[%s12 + $0x2c] sm:$0xf]
    %v2464 = vld [vmem:[%s12 + $0x30] sm:$0xf]
    %v2465 = vld [vmem:[%s12 + $0x34] sm:$0xf]
    %v2466 = vld [vmem:[%s12 + $0x38] sm:$0xf]
    %v2467 = vld [vmem:[%s12 + $0x3c] sm:$0xf]
    %v2468 = vld [vmem:[%s13] sm:$0x1]
    %v2470 = vlaneseq
    %v2471 = vshrl.u32 %v2470, 7
    %v2472 = vsub.s32 0, %v2471
    %v2473 = vrot.slane %v2468, %v2472
    %v2491 = vunpack.c.l.b16 %v2452
    %v2492 = vunpack.c.l.b16 %v2453
    %v2493 = vunpack.c.l.b16 %v2454
    %v2494 = vunpack.c.l.b16 %v2455
    %v2495 = vunpack.c.l.b16 %v2456
    %v2496 = vunpack.c.l.b16 %v2457
    %v2497 = vunpack.c.l.b16 %v2458
    %v2498 = vunpack.c.l.b16 %v2459
    %v2499 = vunpack.c.l.b16 %v2460
    %v2500 = vunpack.c.l.b16 %v2461
    %v2501 = vunpack.c.l.b16 %v2462
    %v2502 = vunpack.c.l.b16 %v2463
    %v2503 = vunpack.c.l.b16 %v2464
    %v2504 = vunpack.c.l.b16 %v2465
    %v2505 = vunpack.c.l.b16 %v2466
    %v2506 = vunpack.c.l.b16 %v2467
    %v2507 = vpack.c.b16 %v2492, %v2491
    %v2508 = vpack.c.b16 %v2494, %v2493
    %v2509 = vpack.c.b16 %v2496, %v2495
    %v2510 = vpack.c.b16 %v2498, %v2497
    %v2511 = vpack.c.b16 %v2500, %v2499
    %v2512 = vpack.c.b16 %v2502, %v2501
    %v2513 = vpack.c.b16 %v2504, %v2503
    %v2514 = vpack.c.b16 %v2506, %v2505
    %2523 = vmatprep.subr.bf16.mxu0 0
    %2524 = vmatpush1.bf16.msra.mxu0 %v2507
    %2525 = vmatprep.subr.bf16.mxu0 0
    %2526 = vmatpush1.bf16.msra.mxu0 %v2508
    %2527 = vmatprep.subr.bf16.mxu0 0
    %2528 = vmatpush1.bf16.msra.mxu0 %v2509
    %2529 = vmatprep.subr.bf16.mxu0 0
    %2530 = vmatpush1.bf16.msra.mxu0 %v2510
    %2531 = vmatprep.subr.bf16.mxu0 0
    %2532 = vmatpush1.bf16.msra.mxu0 %v2511
    %2533 = vmatprep.subr.bf16.mxu0 0
    %2534 = vmatpush1.bf16.msra.mxu0 %v2512
    %2535 = vmatprep.subr.bf16.mxu0 0
    %2536 = vmatpush1.bf16.msra.mxu0 %v2513
    %2537 = vmatprep.subr.bf16.mxu0 0
    %2538 = vmatpush1.bf16.msra.mxu0 %v2514
    %2539 = vmatprep.subr.bf16.mxu0 0
    %2540 = vmatpush1.bf16.msra.mxu0 0
    %2541 = vmatprep.subr.bf16.mxu0 0
    %2542 = vmatpush1.bf16.msra.mxu0 0
    %2543 = vmatprep.subr.bf16.mxu0 0
    %2544 = vmatpush1.bf16.msra.mxu0 0
    %2545 = vmatprep.subr.bf16.mxu0 0
    %2546 = vmatpush1.bf16.msra.mxu0 0
    %2547 = vmatprep.subr.bf16.mxu0 0
    %2548 = vmatpush1.bf16.msra.mxu0 0
    %2549 = vmatprep.subr.bf16.mxu0 0
    %2550 = vmatpush1.bf16.msra.mxu0 0
    %2551 = vmatprep.subr.bf16.mxu0 0
    %2552 = vmatpush1.bf16.msra.mxu0 0
    %2553 = vmatprep.subr.bf16.mxu0 0
    %2554 = vmatpush1.bf16.msra.mxu0 0
    %2555 = vmatprep.mubr.bf16.mxu0 0
    %2556 = vmatmul.mubr.bf16.gmra.mrb[0].mxu0 %v2450
    %v2557 = vpop.f32.mrb[0].mxu0
    %v2558 = vadd.f32 %v2473, %v2557
    %v2559 = vpop.f32.mrb[0].mxu0
    %v2560 = vpop.f32.mrb[0].mxu0
    %v2561 = vadd.f32 %v2473, %v2560
    %v2562 = vpop.f32.mrb[0].mxu0
    %2563 = vmatprep.mubr.bf16.mxu0 0
    %2564 = vmatmul.mubr.bf16.gmra.mrb[0].mxu0 %v2451
    %v2565 = vpop.f32.mrb[0].mxu0
    %v2566 = vadd.f32 %v2473, %v2565
    %v2567 = vpop.f32.mrb[0].mxu0
    %v2568 = vpop.f32.mrb[0].mxu0
    %v2569 = vadd.f32 %v2473, %v2568
    %v2570 = vpop.f32.mrb[0].mxu0
    %2571 = vdwg.mxu0
    %v2572 = vadd.f32 %v2244, %v2558
    %v2573 = vadd.f32 %v2245, %v2561
    %v2574 = vadd.f32 %v2246, %v2566
    %v2575 = vadd.f32 %v2247, %v2569
    %s2576 = scalar_lea.vmem %s2, 1
    %v2577 = vld [vmem:[%s2576] sm:$0x1]
    %s2578 = scalar_lea.vmem %s3, 1
    %v2579 = vld [vmem:[%s2578] sm:$0x1]
    %v2580 = vsel %vm110, %v2572, 0.0
    %2581 = vadd.xlane.f32.xlu0 %v2580
    %v2582 = vpop.xlane.xlu0 %2581
    %v2583 = vsel %vm110, %v2573, 0.0
    %2584 = vadd.xlane.f32.xlu0 %v2583
    %v2585 = vpop.xlane.xlu0 %2584
    %v2586 = vsel %vm110, %v2574, 0.0
    %2587 = vadd.xlane.f32.xlu0 %v2586
    %v2588 = vpop.xlane.xlu0 %2587
    %v2589 = vsel %vm110, %v2575, 0.0
    %2590 = vadd.xlane.f32.xlu0 %v2589
    %v2591 = vpop.xlane.xlu0 %2590
    %v2592 = vmul.f32 %v2582, %v123
    %v2593 = vmul.f32 %v2585, %v123
    %v2594 = vmul.f32 %v2588, %v123
    %v2595 = vmul.f32 %v2591, %v123
    %v2596 = vmul.f32 %v2572, %v2572
    %v2597 = vmul.f32 %v2573, %v2573
    %v2598 = vmul.f32 %v2574, %v2574
    %v2599 = vmul.f32 %v2575, %v2575
    %v2600 = vsel %vm110, %v2596, 0.0
    %2601 = vadd.xlane.f32.xlu0 %v2600
    %v2602 = vpop.xlane.xlu0 %2601
    %v2603 = vsel %vm110, %v2597, 0.0
    %2604 = vadd.xlane.f32.xlu0 %v2603
    %v2605 = vpop.xlane.xlu0 %2604
    %v2606 = vsel %vm110, %v2598, 0.0
    %2607 = vadd.xlane.f32.xlu0 %v2606
    %v2608 = vpop.xlane.xlu0 %2607
    %v2609 = vsel %vm110, %v2599, 0.0
    %2610 = vadd.xlane.f32.xlu0 %v2609
    %v2611 = vpop.xlane.xlu0 %2610
    %v2612 = vmul.f32 %v2602, %v123
    %v2613 = vmul.f32 %v2605, %v123
    %v2614 = vmul.f32 %v2608, %v123
    %v2615 = vmul.f32 %v2611, %v123
    %v2616 = vmul.f32 %v2592, %v2592
    %v2617 = vmul.f32 %v2593, %v2593
    %v2618 = vmul.f32 %v2594, %v2594
    %v2619 = vmul.f32 %v2595, %v2595
    %v2620 = vsub.f32 %v2612, %v2616
    %v2621 = vsub.f32 %v2613, %v2617
    %v2622 = vsub.f32 %v2614, %v2618
    %v2623 = vsub.f32 %v2615, %v2619
    %v2624 = vmax.f32 %v2620, 0.0
    %v2625 = vmax.f32 %v2621, 0.0
    %v2626 = vmax.f32 %v2622, 0.0
    %v2627 = vmax.f32 %v2623, 0.0
    %v2628 = vsub.f32 %v2572, %v2592
    %v2629 = vsub.f32 %v2573, %v2593
    %v2630 = vsub.f32 %v2574, %v2594
    %v2631 = vsub.f32 %v2575, %v2595
    %v2632 = vadd.f32 %v2624, 1e-05
    %v2633 = vadd.f32 %v2625, 1e-05
    %v2634 = vadd.f32 %v2626, 1e-05
    %v2635 = vadd.f32 %v2627, 1e-05
    %v2636 = vrsqrt.pop %v2632
    %v2637 = vrsqrt.pop %v2633
    %v2638 = vrsqrt.pop %v2634
    %v2639 = vrsqrt.pop %v2635
    %v2640 = vmul.f32 %v2628, %v2636
    %v2641 = vmul.f32 %v2629, %v2637
    %v2642 = vmul.f32 %v2630, %v2638
    %v2643 = vmul.f32 %v2631, %v2639
    %v2645 = vlaneseq
    %v2646 = vshrl.u32 %v2645, 7
    %v2647 = vsub.s32 0, %v2646
    %v2648 = vrot.slane %v2577, %v2647
    %v2650 = vmul.f32 %v2640, %v2648
    %v2651 = vmul.f32 %v2641, %v2648
    %v2652 = vmul.f32 %v2642, %v2648
    %v2653 = vmul.f32 %v2643, %v2648
    %v2655 = vlaneseq
    %v2656 = vshrl.u32 %v2655, 7
    %v2657 = vsub.s32 0, %v2656
    %v2658 = vrot.slane %v2579, %v2657
    %v2660 = vadd.f32 %v2650, %v2658
    %v2661 = vadd.f32 %v2651, %v2658
    %v2662 = vadd.f32 %v2652, %v2658
    %v2663 = vadd.f32 %v2653, %v2658
    %v2668 = vrot.slane %v2660, 4
    %v2669 = vrot.slane %v2661, 4
    %v2670 = vsel %vm1338, %v2668, %v2669
    %v2671 = vrot.slane %v2662, 4
    %v2672 = vrot.slane %v2663, 4
    %v2673 = vsel %vm1338, %v2671, %v2672
    %v2680 = vsel %vm1338, %v2669, %v2668
    %v2681 = vsel %vm1338, %v2672, %v2671
    %v2682 = vpack.c.bf16 %v2680, %v2670
    %v2683 = vpack.c.bf16 %v2681, %v2673
    %s2684 = scalar_lea.vmem [#allocation2], 16
    %v2685 = vld [vmem:[%s2684] sm:$0xf]
    %v2686 = vld [vmem:[%s2684 + $0x4] sm:$0xf]
    %v2687 = vld [vmem:[%s2684 + $0x8] sm:$0xf]
    %v2688 = vld [vmem:[%s2684 + $0xc] sm:$0xf]
    %s2689 = scalar_lea.vmem %s5, 1
    %v2690 = vld [vmem:[%s2689] sm:$0x1]
    %v2692 = vlaneseq
    %v2693 = vshrl.u32 %v2692, 7
    %v2694 = vsub.s32 0, %v2693
    %v2695 = vrot.slane %v2690, %v2694
    %v2701 = vunpack.c.l.b16 %v2685
    %v2702 = vunpack.c.l.b16 %v2686
    %v2703 = vunpack.c.l.b16 %v2687
    %v2704 = vunpack.c.l.b16 %v2688
    %v2705 = vpack.c.b16 %v2702, %v2701
    %v2706 = vpack.c.b16 %v2704, %v2703
    %v2710 = vsel %vm110, %v2682, 0
    %v2713 = vsel %vm110, %v2683, 0
    %2715 = vmatprep.subr.bf16.mxu0 0
    %2716 = vmatpush1.bf16.msra.mxu0 %v2705
    %2717 = vmatprep.subr.bf16.mxu0 0
    %2718 = vmatpush1.bf16.msra.mxu0 %v2706
    %2719 = vmatprep.subr.bf16.mxu0 0
    %2720 = vmatpush1.bf16.msra.mxu0 0
    %2721 = vmatprep.subr.bf16.mxu0 0
    %2722 = vmatpush1.bf16.msra.mxu0 0
    %2723 = vmatprep.subr.bf16.mxu0 0
    %2724 = vmatpush1.bf16.msra.mxu0 0
    %2725 = vmatprep.subr.bf16.mxu0 0
    %2726 = vmatpush1.bf16.msra.mxu0 0
    %2727 = vmatprep.subr.bf16.mxu0 0
    %2728 = vmatpush1.bf16.msra.mxu0 0
    %2729 = vmatprep.subr.bf16.mxu0 0
    %2730 = vmatpush1.bf16.msra.mxu0 0
    %2731 = vmatprep.subr.bf16.mxu0 0
    %2732 = vmatpush1.bf16.msra.mxu0 0
    %2733 = vmatprep.subr.bf16.mxu0 0
    %2734 = vmatpush1.bf16.msra.mxu0 0
    %2735 = vmatprep.subr.bf16.mxu0 0
    %2736 = vmatpush1.bf16.msra.mxu0 0
    %2737 = vmatprep.subr.bf16.mxu0 0
    %2738 = vmatpush1.bf16.msra.mxu0 0
    %2739 = vmatprep.subr.bf16.mxu0 0
    %2740 = vmatpush1.bf16.msra.mxu0 0
    %2741 = vmatprep.subr.bf16.mxu0 0
    %2742 = vmatpush1.bf16.msra.mxu0 0
    %2743 = vmatprep.subr.bf16.mxu0 0
    %2744 = vmatpush1.bf16.msra.mxu0 0
    %2745 = vmatprep.subr.bf16.mxu0 0
    %2746 = vmatpush1.bf16.msra.mxu0 0
    %2747 = vmatprep.mubr.bf16.mxu0 0
    %2748 = vmatmul.mubr.bf16.gmra.mrb[0].mxu0 %v2710
    %v2749 = vpop.f32.mrb[0].mxu0
    %v2750 = vadd.f32 %v2695, %v2749
    %v2751 = vpop.f32.mrb[0].mxu0
    %v2752 = vpop.f32.mrb[0].mxu0
    %v2753 = vadd.f32 %v2695, %v2752
    %v2754 = vpop.f32.mrb[0].mxu0
    %2755 = vmatprep.mubr.bf16.mxu0 0
    %2756 = vmatmul.mubr.bf16.gmra.mrb[0].mxu0 %v2713
    %v2757 = vpop.f32.mrb[0].mxu0
    %v2758 = vadd.f32 %v2695, %v2757
    %v2759 = vpop.f32.mrb[0].mxu0
    %v2760 = vpop.f32.mrb[0].mxu0
    %v2761 = vadd.f32 %v2695, %v2760
    %v2762 = vpop.f32.mrb[0].mxu0
    %2763 = vdwg.mxu0
    %2768 = vrot.lane.b32.xlu0 %v2750, 120
    %v2769 = vpop.permute.xlu0 %2768
    %2770 = vrot.lane.b32.xlu0 %v2753, 120
    %v2771 = vpop.permute.xlu0 %2770
    %2772 = vrot.lane.b32.xlu0 %v2758, 120
    %v2773 = vpop.permute.xlu0 %2772
    %2774 = vrot.lane.b32.xlu0 %v2761, 120
    %v2775 = vpop.permute.xlu0 %2774
    %2780 = vrot.lane.b32.xlu0 %v2750, 112
    %v2781 = vpop.permute.xlu0 %2780
    %2782 = vrot.lane.b32.xlu0 %v2753, 112
    %v2783 = vpop.permute.xlu0 %2782
    %2784 = vrot.lane.b32.xlu0 %v2758, 112
    %v2785 = vpop.permute.xlu0 %2784
    %2786 = vrot.lane.b32.xlu0 %v2761, 112
    %v2787 = vpop.permute.xlu0 %2786
    %2792 = vrot.lane.b32.xlu0 %v2750, 104
    %v2793 = vpop.permute.xlu0 %2792
    %2794 = vrot.lane.b32.xlu0 %v2753, 104
    %v2795 = vpop.permute.xlu0 %2794
    %2796 = vrot.lane.b32.xlu0 %v2758, 104
    %v2797 = vpop.permute.xlu0 %2796
    %2798 = vrot.lane.b32.xlu0 %v2761, 104
    %v2799 = vpop.permute.xlu0 %2798
    %v2804 = vpack.c.bf16 %v2750, %v2750
    %v2805 = vpack.c.bf16 %v2753, %v2753
    %v2806 = vpack.c.bf16 %v2758, %v2758
    %v2807 = vpack.c.bf16 %v2761, %v2761
    %v2808 = vpack.c.bf16 %v2769, %v2769
    %v2809 = vpack.c.bf16 %v2771, %v2771
    %v2810 = vpack.c.bf16 %v2773, %v2773
    %v2811 = vpack.c.bf16 %v2775, %v2775
    %v2812 = vpack.c.bf16 %v2781, %v2781
    %v2813 = vpack.c.bf16 %v2783, %v2783
    %v2814 = vpack.c.bf16 %v2785, %v2785
    %v2815 = vpack.c.bf16 %v2787, %v2787
    %v2816 = vpack.c.bf16 %v2793, %v2793
    %v2817 = vpack.c.bf16 %v2795, %v2795
    %v2818 = vpack.c.bf16 %v2797, %v2797
    %v2819 = vpack.c.bf16 %v2799, %v2799
    %2821 = vrot.lane.b32.xlu0 %v2804, 96
    %v2822 = vpop.permute.xlu0 %2821
    %v2824 = vsel %vm335, %v2804, 0
    %v2827 = vsel %vm335, %v2822, 0
    %2829 = vmatprep.subr.bf16.mxu0 0
    %2830 = vmatpush1.bf16.xpose.msra.mxu0 %v2827
    %2831 = vmatprep.subr.bf16.mxu0 0
    %2832 = vmatpush1.bf16.xpose.msra.mxu0 0
    %2833 = vmatprep.subr.bf16.mxu0 0
    %2834 = vmatpush1.bf16.xpose.msra.mxu0 0
    %2835 = vmatprep.subr.bf16.mxu0 0
    %2836 = vmatpush1.bf16.xpose.msra.mxu0 0
    %2837 = vmatprep.subr.bf16.mxu0 0
    %2838 = vmatpush1.bf16.xpose.msra.mxu0 0
    %2839 = vmatprep.subr.bf16.mxu0 0
    %2840 = vmatpush1.bf16.xpose.msra.mxu0 0
    %2841 = vmatprep.subr.bf16.mxu0 0
    %2842 = vmatpush1.bf16.xpose.msra.mxu0 0
    %2843 = vmatprep.subr.bf16.mxu0 0
    %2844 = vmatpush1.bf16.xpose.msra.mxu0 0
    %2845 = vmatprep.subr.bf16.mxu0 0
    %2846 = vmatpush1.bf16.xpose.msra.mxu0 0
    %2847 = vmatprep.subr.bf16.mxu0 0
    %2848 = vmatpush1.bf16.xpose.msra.mxu0 0
    %2849 = vmatprep.subr.bf16.mxu0 0
    %2850 = vmatpush1.bf16.xpose.msra.mxu0 0
    %2851 = vmatprep.subr.bf16.mxu0 0
    %2852 = vmatpush1.bf16.xpose.msra.mxu0 0
    %2853 = vmatprep.subr.bf16.mxu0 0
    %2854 = vmatpush1.bf16.xpose.msra.mxu0 0
    %2855 = vmatprep.subr.bf16.mxu0 0
    %2856 = vmatpush1.bf16.xpose.msra.mxu0 0
    %2857 = vmatprep.subr.bf16.mxu0 0
    %2858 = vmatpush1.bf16.xpose.msra.mxu0 0
    %2859 = vmatprep.subr.bf16.mxu0 0
    %2860 = vmatpush1.bf16.xpose.msra.mxu0 0
    %2861 = vmatprep.mubr.bf16.mxu0 0
    %2862 = vmatmul.mubr.bf16.gmra.mrb[0].mxu0 %v2824
    %v2863 = vpop.f32.mrb[0].mxu0
    %v2864 = vadd.f32 0.0, %v2863
    %v2865 = vpop.f32.mrb[0].mxu0
    %v2866 = vpop.f32.mrb[0].mxu0
    %v2867 = vpop.f32.mrb[0].mxu0
    %2868 = vdwg.mxu0
    %2870 = vrot.lane.b32.xlu0 %v2805, 96
    %v2871 = vpop.permute.xlu0 %2870
    %v2873 = vsel %vm335, %v2805, 0
    %v2876 = vsel %vm335, %v2871, 0
    %2878 = vmatprep.subr.bf16.mxu0 0
    %2879 = vmatpush1.bf16.xpose.msra.mxu0 %v2876
    %2880 = vmatprep.subr.bf16.mxu0 0
    %2881 = vmatpush1.bf16.xpose.msra.mxu0 0
    %2882 = vmatprep.subr.bf16.mxu0 0
    %2883 = vmatpush1.bf16.xpose.msra.mxu0 0
    %2884 = vmatprep.subr.bf16.mxu0 0
    %2885 = vmatpush1.bf16.xpose.msra.mxu0 0
    %2886 = vmatprep.subr.bf16.mxu0 0
    %2887 = vmatpush1.bf16.xpose.msra.mxu0 0
    %2888 = vmatprep.subr.bf16.mxu0 0
    %2889 = vmatpush1.bf16.xpose.msra.mxu0 0
    %2890 = vmatprep.subr.bf16.mxu0 0
    %2891 = vmatpush1.bf16.xpose.msra.mxu0 0
    %2892 = vmatprep.subr.bf16.mxu0 0
    %2893 = vmatpush1.bf16.xpose.msra.mxu0 0
    %2894 = vmatprep.subr.bf16.mxu0 0
    %2895 = vmatpush1.bf16.xpose.msra.mxu0 0
    %2896 = vmatprep.subr.bf16.mxu0 0
    %2897 = vmatpush1.bf16.xpose.msra.mxu0 0
    %2898 = vmatprep.subr.bf16.mxu0 0
    %2899 = vmatpush1.bf16.xpose.msra.mxu0 0
    %2900 = vmatprep.subr.bf16.mxu0 0
    %2901 = vmatpush1.bf16.xpose.msra.mxu0 0
    %2902 = vmatprep.subr.bf16.mxu0 0
    %2903 = vmatpush1.bf16.xpose.msra.mxu0 0
    %2904 = vmatprep.subr.bf16.mxu0 0
    %2905 = vmatpush1.bf16.xpose.msra.mxu0 0
    %2906 = vmatprep.subr.bf16.mxu0 0
    %2907 = vmatpush1.bf16.xpose.msra.mxu0 0
    %2908 = vmatprep.subr.bf16.mxu0 0
    %2909 = vmatpush1.bf16.xpose.msra.mxu0 0
    %2910 = vmatprep.mubr.bf16.mxu0 0
    %2911 = vmatmul.mubr.bf16.gmra.mrb[0].mxu0 %v2873
    %v2912 = vpop.f32.mrb[0].mxu0
    %v2913 = vadd.f32 0.0, %v2912
    %v2914 = vpop.f32.mrb[0].mxu0
    %v2915 = vpop.f32.mrb[0].mxu0
    %v2916 = vpop.f32.mrb[0].mxu0
    %2917 = vdwg.mxu0
    %2919 = vrot.lane.b32.xlu0 %v2806, 96
    %v2920 = vpop.permute.xlu0 %2919
    %v2922 = vsel %vm335, %v2806, 0
    %v2925 = vsel %vm335, %v2920, 0
    %2927 = vmatprep.subr.bf16.mxu0 0
    %2928 = vmatpush1.bf16.xpose.msra.mxu0 %v2925
    %2929 = vmatprep.subr.bf16.mxu0 0
    %2930 = vmatpush1.bf16.xpose.msra.mxu0 0
    %2931 = vmatprep.subr.bf16.mxu0 0
    %2932 = vmatpush1.bf16.xpose.msra.mxu0 0
    %2933 = vmatprep.subr.bf16.mxu0 0
    %2934 = vmatpush1.bf16.xpose.msra.mxu0 0
    %2935 = vmatprep.subr.bf16.mxu0 0
    %2936 = vmatpush1.bf16.xpose.msra.mxu0 0
    %2937 = vmatprep.subr.bf16.mxu0 0
    %2938 = vmatpush1.bf16.xpose.msra.mxu0 0
    %2939 = vmatprep.subr.bf16.mxu0 0
    %2940 = vmatpush1.bf16.xpose.msra.mxu0 0
    %2941 = vmatprep.subr.bf16.mxu0 0
    %2942 = vmatpush1.bf16.xpose.msra.mxu0 0
    %2943 = vmatprep.subr.bf16.mxu0 0
    %2944 = vmatpush1.bf16.xpose.msra.mxu0 0
    %2945 = vmatprep.subr.bf16.mxu0 0
    %2946 = vmatpush1.bf16.xpose.msra.mxu0 0
    %2947 = vmatprep.subr.bf16.mxu0 0
    %2948 = vmatpush1.bf16.xpose.msra.mxu0 0
    %2949 = vmatprep.subr.bf16.mxu0 0
    %2950 = vmatpush1.bf16.xpose.msra.mxu0 0
    %2951 = vmatprep.subr.bf16.mxu0 0
    %2952 = vmatpush1.bf16.xpose.msra.mxu0 0
    %2953 = vmatprep.subr.bf16.mxu0 0
    %2954 = vmatpush1.bf16.xpose.msra.mxu0 0
    %2955 = vmatprep.subr.bf16.mxu0 0
    %2956 = vmatpush1.bf16.xpose.msra.mxu0 0
    %2957 = vmatprep.subr.bf16.mxu0 0
    %2958 = vmatpush1.bf16.xpose.msra.mxu0 0
    %2959 = vmatprep.mubr.bf16.mxu0 0
    %2960 = vmatmul.mubr.bf16.gmra.mrb[0].mxu0 %v2922
    %v2961 = vpop.f32.mrb[0].mxu0
    %v2962 = vadd.f32 0.0, %v2961
    %v2963 = vpop.f32.mrb[0].mxu0
    %v2964 = vpop.f32.mrb[0].mxu0
    %v2965 = vpop.f32.mrb[0].mxu0
    %2966 = vdwg.mxu0
    %2968 = vrot.lane.b32.xlu0 %v2807, 96
    %v2969 = vpop.permute.xlu0 %2968
    %v2971 = vsel %vm335, %v2807, 0
    %v2974 = vsel %vm335, %v2969, 0
    %2976 = vmatprep.subr.bf16.mxu0 0
    %2977 = vmatpush1.bf16.xpose.msra.mxu0 %v2974
    %2978 = vmatprep.subr.bf16.mxu0 0
    %2979 = vmatpush1.bf16.xpose.msra.mxu0 0
    %2980 = vmatprep.subr.bf16.mxu0 0
    %2981 = vmatpush1.bf16.xpose.msra.mxu0 0
    %2982 = vmatprep.subr.bf16.mxu0 0
    %2983 = vmatpush1.bf16.xpose.msra.mxu0 0
    %2984 = vmatprep.subr.bf16.mxu0 0
    %2985 = vmatpush1.bf16.xpose.msra.mxu0 0
    %2986 = vmatprep.subr.bf16.mxu0 0
    %2987 = vmatpush1.bf16.xpose.msra.mxu0 0
    %2988 = vmatprep.subr.bf16.mxu0 0
    %2989 = vmatpush1.bf16.xpose.msra.mxu0 0
    %2990 = vmatprep.subr.bf16.mxu0 0
    %2991 = vmatpush1.bf16.xpose.msra.mxu0 0
    %2992 = vmatprep.subr.bf16.mxu0 0
    %2993 = vmatpush1.bf16.xpose.msra.mxu0 0
    %2994 = vmatprep.subr.bf16.mxu0 0
    %2995 = vmatpush1.bf16.xpose.msra.mxu0 0
    %2996 = vmatprep.subr.bf16.mxu0 0
    %2997 = vmatpush1.bf16.xpose.msra.mxu0 0
    %2998 = vmatprep.subr.bf16.mxu0 0
    %2999 = vmatpush1.bf16.xpose.msra.mxu0 0
    %3000 = vmatprep.subr.bf16.mxu0 0
    %3001 = vmatpush1.bf16.xpose.msra.mxu0 0
    %3002 = vmatprep.subr.bf16.mxu0 0
    %3003 = vmatpush1.bf16.xpose.msra.mxu0 0
    %3004 = vmatprep.subr.bf16.mxu0 0
    %3005 = vmatpush1.bf16.xpose.msra.mxu0 0
    %3006 = vmatprep.subr.bf16.mxu0 0
    %3007 = vmatpush1.bf16.xpose.msra.mxu0 0
    %3008 = vmatprep.mubr.bf16.mxu0 0
    %3009 = vmatmul.mubr.bf16.gmra.mrb[0].mxu0 %v2971
    %v3010 = vpop.f32.mrb[0].mxu0
    %v3011 = vadd.f32 0.0, %v3010
    %v3012 = vpop.f32.mrb[0].mxu0
    %v3013 = vpop.f32.mrb[0].mxu0
    %v3014 = vpop.f32.mrb[0].mxu0
    %3015 = vdwg.mxu0
    %3017 = vrot.lane.b32.xlu0 %v2808, 96
    %v3018 = vpop.permute.xlu0 %3017
    %v3020 = vsel %vm335, %v2808, 0
    %v3023 = vsel %vm335, %v3018, 0
    %3025 = vmatprep.subr.bf16.mxu0 0
    %3026 = vmatpush1.bf16.xpose.msra.mxu0 %v3023
    %3027 = vmatprep.subr.bf16.mxu0 0
    %3028 = vmatpush1.bf16.xpose.msra.mxu0 0
    %3029 = vmatprep.subr.bf16.mxu0 0
    %3030 = vmatpush1.bf16.xpose.msra.mxu0 0
    %3031 = vmatprep.subr.bf16.mxu0 0
    %3032 = vmatpush1.bf16.xpose.msra.mxu0 0
    %3033 = vmatprep.subr.bf16.mxu0 0
    %3034 = vmatpush1.bf16.xpose.msra.mxu0 0
    %3035 = vmatprep.subr.bf16.mxu0 0
    %3036 = vmatpush1.bf16.xpose.msra.mxu0 0
    %3037 = vmatprep.subr.bf16.mxu0 0
    %3038 = vmatpush1.bf16.xpose.msra.mxu0 0
    %3039 = vmatprep.subr.bf16.mxu0 0
    %3040 = vmatpush1.bf16.xpose.msra.mxu0 0
    %3041 = vmatprep.subr.bf16.mxu0 0
    %3042 = vmatpush1.bf16.xpose.msra.mxu0 0
    %3043 = vmatprep.subr.bf16.mxu0 0
    %3044 = vmatpush1.bf16.xpose.msra.mxu0 0
    %3045 = vmatprep.subr.bf16.mxu0 0
    %3046 = vmatpush1.bf16.xpose.msra.mxu0 0
    %3047 = vmatprep.subr.bf16.mxu0 0
    %3048 = vmatpush1.bf16.xpose.msra.mxu0 0
    %3049 = vmatprep.subr.bf16.mxu0 0
    %3050 = vmatpush1.bf16.xpose.msra.mxu0 0
    %3051 = vmatprep.subr.bf16.mxu0 0
    %3052 = vmatpush1.bf16.xpose.msra.mxu0 0
    %3053 = vmatprep.subr.bf16.mxu0 0
    %3054 = vmatpush1.bf16.xpose.msra.mxu0 0
    %3055 = vmatprep.subr.bf16.mxu0 0
    %3056 = vmatpush1.bf16.xpose.msra.mxu0 0
    %3057 = vmatprep.mubr.bf16.mxu0 0
    %3058 = vmatmul.mubr.bf16.gmra.mrb[0].mxu0 %v3020
    %v3059 = vpop.f32.mrb[0].mxu0
    %v3060 = vadd.f32 0.0, %v3059
    %v3061 = vpop.f32.mrb[0].mxu0
    %v3062 = vpop.f32.mrb[0].mxu0
    %v3063 = vpop.f32.mrb[0].mxu0
    %3064 = vdwg.mxu0
    %3066 = vrot.lane.b32.xlu0 %v2809, 96
    %v3067 = vpop.permute.xlu0 %3066
    %v3069 = vsel %vm335, %v2809, 0
    %v3072 = vsel %vm335, %v3067, 0
    %3074 = vmatprep.subr.bf16.mxu0 0
    %3075 = vmatpush1.bf16.xpose.msra.mxu0 %v3072
    %3076 = vmatprep.subr.bf16.mxu0 0
    %3077 = vmatpush1.bf16.xpose.msra.mxu0 0
    %3078 = vmatprep.subr.bf16.mxu0 0
    %3079 = vmatpush1.bf16.xpose.msra.mxu0 0
    %3080 = vmatprep.subr.bf16.mxu0 0
    %3081 = vmatpush1.bf16.xpose.msra.mxu0 0
    %3082 = vmatprep.subr.bf16.mxu0 0
    %3083 = vmatpush1.bf16.xpose.msra.mxu0 0
    %3084 = vmatprep.subr.bf16.mxu0 0
    %3085 = vmatpush1.bf16.xpose.msra.mxu0 0
    %3086 = vmatprep.subr.bf16.mxu0 0
    %3087 = vmatpush1.bf16.xpose.msra.mxu0 0
    %3088 = vmatprep.subr.bf16.mxu0 0
    %3089 = vmatpush1.bf16.xpose.msra.mxu0 0
    %3090 = vmatprep.subr.bf16.mxu0 0
    %3091 = vmatpush1.bf16.xpose.msra.mxu0 0
    %3092 = vmatprep.subr.bf16.mxu0 0
    %3093 = vmatpush1.bf16.xpose.msra.mxu0 0
    %3094 = vmatprep.subr.bf16.mxu0 0
    %3095 = vmatpush1.bf16.xpose.msra.mxu0 0
    %3096 = vmatprep.subr.bf16.mxu0 0
    %3097 = vmatpush1.bf16.xpose.msra.mxu0 0
    %3098 = vmatprep.subr.bf16.mxu0 0
    %3099 = vmatpush1.bf16.xpose.msra.mxu0 0
    %3100 = vmatprep.subr.bf16.mxu0 0
    %3101 = vmatpush1.bf16.xpose.msra.mxu0 0
    %3102 = vmatprep.subr.bf16.mxu0 0
    %3103 = vmatpush1.bf16.xpose.msra.mxu0 0
    %3104 = vmatprep.subr.bf16.mxu0 0
    %3105 = vmatpush1.bf16.xpose.msra.mxu0 0
    %3106 = vmatprep.mubr.bf16.mxu0 0
    %3107 = vmatmul.mubr.bf16.gmra.mrb[0].mxu0 %v3069
    %v3108 = vpop.f32.mrb[0].mxu0
    %v3109 = vadd.f32 0.0, %v3108
    %v3110 = vpop.f32.mrb[0].mxu0
    %v3111 = vpop.f32.mrb[0].mxu0
    %v3112 = vpop.f32.mrb[0].mxu0
    %3113 = vdwg.mxu0
    %3115 = vrot.lane.b32.xlu0 %v2810, 96
    %v3116 = vpop.permute.xlu0 %3115
    %v3118 = vsel %vm335, %v2810, 0
    %v3121 = vsel %vm335, %v3116, 0
    %3123 = vmatprep.subr.bf16.mxu0 0
    %3124 = vmatpush1.bf16.xpose.msra.mxu0 %v3121
    %3125 = vmatprep.subr.bf16.mxu0 0
    %3126 = vmatpush1.bf16.xpose.msra.mxu0 0
    %3127 = vmatprep.subr.bf16.mxu0 0
    %3128 = vmatpush1.bf16.xpose.msra.mxu0 0
    %3129 = vmatprep.subr.bf16.mxu0 0
    %3130 = vmatpush1.bf16.xpose.msra.mxu0 0
    %3131 = vmatprep.subr.bf16.mxu0 0
    %3132 = vmatpush1.bf16.xpose.msra.mxu0 0
    %3133 = vmatprep.subr.bf16.mxu0 0
    %3134 = vmatpush1.bf16.xpose.msra.mxu0 0
    %3135 = vmatprep.subr.bf16.mxu0 0
    %3136 = vmatpush1.bf16.xpose.msra.mxu0 0
    %3137 = vmatprep.subr.bf16.mxu0 0
    %3138 = vmatpush1.bf16.xpose.msra.mxu0 0
    %3139 = vmatprep.subr.bf16.mxu0 0
    %3140 = vmatpush1.bf16.xpose.msra.mxu0 0
    %3141 = vmatprep.subr.bf16.mxu0 0
    %3142 = vmatpush1.bf16.xpose.msra.mxu0 0
    %3143 = vmatprep.subr.bf16.mxu0 0
    %3144 = vmatpush1.bf16.xpose.msra.mxu0 0
    %3145 = vmatprep.subr.bf16.mxu0 0
    %3146 = vmatpush1.bf16.xpose.msra.mxu0 0
    %3147 = vmatprep.subr.bf16.mxu0 0
    %3148 = vmatpush1.bf16.xpose.msra.mxu0 0
    %3149 = vmatprep.subr.bf16.mxu0 0
    %3150 = vmatpush1.bf16.xpose.msra.mxu0 0
    %3151 = vmatprep.subr.bf16.mxu0 0
    %3152 = vmatpush1.bf16.xpose.msra.mxu0 0
    %3153 = vmatprep.subr.bf16.mxu0 0
    %3154 = vmatpush1.bf16.xpose.msra.mxu0 0
    %3155 = vmatprep.mubr.bf16.mxu0 0
    %3156 = vmatmul.mubr.bf16.gmra.mrb[0].mxu0 %v3118
    %v3157 = vpop.f32.mrb[0].mxu0
    %v3158 = vadd.f32 0.0, %v3157
    %v3159 = vpop.f32.mrb[0].mxu0
    %v3160 = vpop.f32.mrb[0].mxu0
    %v3161 = vpop.f32.mrb[0].mxu0
    %3162 = vdwg.mxu0
    %3164 = vrot.lane.b32.xlu0 %v2811, 96
    %v3165 = vpop.permute.xlu0 %3164
    %v3167 = vsel %vm335, %v2811, 0
    %v3170 = vsel %vm335, %v3165, 0
    %3172 = vmatprep.subr.bf16.mxu0 0
    %3173 = vmatpush1.bf16.xpose.msra.mxu0 %v3170
    %3174 = vmatprep.subr.bf16.mxu0 0
    %3175 = vmatpush1.bf16.xpose.msra.mxu0 0
    %3176 = vmatprep.subr.bf16.mxu0 0
    %3177 = vmatpush1.bf16.xpose.msra.mxu0 0
    %3178 = vmatprep.subr.bf16.mxu0 0
    %3179 = vmatpush1.bf16.xpose.msra.mxu0 0
    %3180 = vmatprep.subr.bf16.mxu0 0
    %3181 = vmatpush1.bf16.xpose.msra.mxu0 0
    %3182 = vmatprep.subr.bf16.mxu0 0
    %3183 = vmatpush1.bf16.xpose.msra.mxu0 0
    %3184 = vmatprep.subr.bf16.mxu0 0
    %3185 = vmatpush1.bf16.xpose.msra.mxu0 0
    %3186 = vmatprep.subr.bf16.mxu0 0
    %3187 = vmatpush1.bf16.xpose.msra.mxu0 0
    %3188 = vmatprep.subr.bf16.mxu0 0
    %3189 = vmatpush1.bf16.xpose.msra.mxu0 0
    %3190 = vmatprep.subr.bf16.mxu0 0
    %3191 = vmatpush1.bf16.xpose.msra.mxu0 0
    %3192 = vmatprep.subr.bf16.mxu0 0
    %3193 = vmatpush1.bf16.xpose.msra.mxu0 0
    %3194 = vmatprep.subr.bf16.mxu0 0
    %3195 = vmatpush1.bf16.xpose.msra.mxu0 0
    %3196 = vmatprep.subr.bf16.mxu0 0
    %3197 = vmatpush1.bf16.xpose.msra.mxu0 0
    %3198 = vmatprep.subr.bf16.mxu0 0
    %3199 = vmatpush1.bf16.xpose.msra.mxu0 0
    %3200 = vmatprep.subr.bf16.mxu0 0
    %3201 = vmatpush1.bf16.xpose.msra.mxu0 0
    %3202 = vmatprep.subr.bf16.mxu0 0
    %3203 = vmatpush1.bf16.xpose.msra.mxu0 0
    %3204 = vmatprep.mubr.bf16.mxu0 0
    %3205 = vmatmul.mubr.bf16.gmra.mrb[0].mxu0 %v3167
    %v3206 = vpop.f32.mrb[0].mxu0
    %v3207 = vadd.f32 0.0, %v3206
    %v3208 = vpop.f32.mrb[0].mxu0
    %v3209 = vpop.f32.mrb[0].mxu0
    %v3210 = vpop.f32.mrb[0].mxu0
    %3211 = vdwg.mxu0
    %3213 = vrot.lane.b32.xlu0 %v2812, 96
    %v3214 = vpop.permute.xlu0 %3213
    %v3216 = vsel %vm335, %v2812, 0
    %v3219 = vsel %vm335, %v3214, 0
    %3221 = vmatprep.subr.bf16.mxu0 0
    %3222 = vmatpush1.bf16.xpose.msra.mxu0 %v3219
    %3223 = vmatprep.subr.bf16.mxu0 0
    %3224 = vmatpush1.bf16.xpose.msra.mxu0 0
    %3225 = vmatprep.subr.bf16.mxu0 0
    %3226 = vmatpush1.bf16.xpose.msra.mxu0 0
    %3227 = vmatprep.subr.bf16.mxu0 0
    %3228 = vmatpush1.bf16.xpose.msra.mxu0 0
    %3229 = vmatprep.subr.bf16.mxu0 0
    %3230 = vmatpush1.bf16.xpose.msra.mxu0 0
    %3231 = vmatprep.subr.bf16.mxu0 0
    %3232 = vmatpush1.bf16.xpose.msra.mxu0 0
    %3233 = vmatprep.subr.bf16.mxu0 0
    %3234 = vmatpush1.bf16.xpose.msra.mxu0 0
    %3235 = vmatprep.subr.bf16.mxu0 0
    %3236 = vmatpush1.bf16.xpose.msra.mxu0 0
    %3237 = vmatprep.subr.bf16.mxu0 0
    %3238 = vmatpush1.bf16.xpose.msra.mxu0 0
    %3239 = vmatprep.subr.bf16.mxu0 0
    %3240 = vmatpush1.bf16.xpose.msra.mxu0 0
    %3241 = vmatprep.subr.bf16.mxu0 0
    %3242 = vmatpush1.bf16.xpose.msra.mxu0 0
    %3243 = vmatprep.subr.bf16.mxu0 0
    %3244 = vmatpush1.bf16.xpose.msra.mxu0 0
    %3245 = vmatprep.subr.bf16.mxu0 0
    %3246 = vmatpush1.bf16.xpose.msra.mxu0 0
    %3247 = vmatprep.subr.bf16.mxu0 0
    %3248 = vmatpush1.bf16.xpose.msra.mxu0 0
    %3249 = vmatprep.subr.bf16.mxu0 0
    %3250 = vmatpush1.bf16.xpose.msra.mxu0 0
    %3251 = vmatprep.subr.bf16.mxu0 0
    %3252 = vmatpush1.bf16.xpose.msra.mxu0 0
    %3253 = vmatprep.mubr.bf16.mxu0 0
    %3254 = vmatmul.mubr.bf16.gmra.mrb[0].mxu0 %v3216
    %v3255 = vpop.f32.mrb[0].mxu0
    %v3256 = vadd.f32 0.0, %v3255
    %v3257 = vpop.f32.mrb[0].mxu0
    %v3258 = vpop.f32.mrb[0].mxu0
    %v3259 = vpop.f32.mrb[0].mxu0
    %3260 = vdwg.mxu0
    %3262 = vrot.lane.b32.xlu0 %v2813, 96
    %v3263 = vpop.permute.xlu0 %3262
    %v3265 = vsel %vm335, %v2813, 0
    %v3268 = vsel %vm335, %v3263, 0
    %3270 = vmatprep.subr.bf16.mxu0 0
    %3271 = vmatpush1.bf16.xpose.msra.mxu0 %v3268
    %3272 = vmatprep.subr.bf16.mxu0 0
    %3273 = vmatpush1.bf16.xpose.msra.mxu0 0
    %3274 = vmatprep.subr.bf16.mxu0 0
    %3275 = vmatpush1.bf16.xpose.msra.mxu0 0
    %3276 = vmatprep.subr.bf16.mxu0 0
    %3277 = vmatpush1.bf16.xpose.msra.mxu0 0
    %3278 = vmatprep.subr.bf16.mxu0 0
    %3279 = vmatpush1.bf16.xpose.msra.mxu0 0
    %3280 = vmatprep.subr.bf16.mxu0 0
    %3281 = vmatpush1.bf16.xpose.msra.mxu0 0
    %3282 = vmatprep.subr.bf16.mxu0 0
    %3283 = vmatpush1.bf16.xpose.msra.mxu0 0
    %3284 = vmatprep.subr.bf16.mxu0 0
    %3285 = vmatpush1.bf16.xpose.msra.mxu0 0
    %3286 = vmatprep.subr.bf16.mxu0 0
    %3287 = vmatpush1.bf16.xpose.msra.mxu0 0
    %3288 = vmatprep.subr.bf16.mxu0 0
    %3289 = vmatpush1.bf16.xpose.msra.mxu0 0
    %3290 = vmatprep.subr.bf16.mxu0 0
    %3291 = vmatpush1.bf16.xpose.msra.mxu0 0
    %3292 = vmatprep.subr.bf16.mxu0 0
    %3293 = vmatpush1.bf16.xpose.msra.mxu0 0
    %3294 = vmatprep.subr.bf16.mxu0 0
    %3295 = vmatpush1.bf16.xpose.msra.mxu0 0
    %3296 = vmatprep.subr.bf16.mxu0 0
    %3297 = vmatpush1.bf16.xpose.msra.mxu0 0
    %3298 = vmatprep.subr.bf16.mxu0 0
    %3299 = vmatpush1.bf16.xpose.msra.mxu0 0
    %3300 = vmatprep.subr.bf16.mxu0 0
    %3301 = vmatpush1.bf16.xpose.msra.mxu0 0
    %3302 = vmatprep.mubr.bf16.mxu0 0
    %3303 = vmatmul.mubr.bf16.gmra.mrb[0].mxu0 %v3265
    %v3304 = vpop.f32.mrb[0].mxu0
    %v3305 = vadd.f32 0.0, %v3304
    %v3306 = vpop.f32.mrb[0].mxu0
    %v3307 = vpop.f32.mrb[0].mxu0
    %v3308 = vpop.f32.mrb[0].mxu0
    %3309 = vdwg.mxu0
    %3311 = vrot.lane.b32.xlu0 %v2814, 96
    %v3312 = vpop.permute.xlu0 %3311
    %v3314 = vsel %vm335, %v2814, 0
    %v3317 = vsel %vm335, %v3312, 0
    %3319 = vmatprep.subr.bf16.mxu0 0
    %3320 = vmatpush1.bf16.xpose.msra.mxu0 %v3317
    %3321 = vmatprep.subr.bf16.mxu0 0
    %3322 = vmatpush1.bf16.xpose.msra.mxu0 0
    %3323 = vmatprep.subr.bf16.mxu0 0
    %3324 = vmatpush1.bf16.xpose.msra.mxu0 0
    %3325 = vmatprep.subr.bf16.mxu0 0
    %3326 = vmatpush1.bf16.xpose.msra.mxu0 0
    %3327 = vmatprep.subr.bf16.mxu0 0
    %3328 = vmatpush1.bf16.xpose.msra.mxu0 0
    %3329 = vmatprep.subr.bf16.mxu0 0
    %3330 = vmatpush1.bf16.xpose.msra.mxu0 0
    %3331 = vmatprep.subr.bf16.mxu0 0
    %3332 = vmatpush1.bf16.xpose.msra.mxu0 0
    %3333 = vmatprep.subr.bf16.mxu0 0
    %3334 = vmatpush1.bf16.xpose.msra.mxu0 0
    %3335 = vmatprep.subr.bf16.mxu0 0
    %3336 = vmatpush1.bf16.xpose.msra.mxu0 0
    %3337 = vmatprep.subr.bf16.mxu0 0
    %3338 = vmatpush1.bf16.xpose.msra.mxu0 0
    %3339 = vmatprep.subr.bf16.mxu0 0
    %3340 = vmatpush1.bf16.xpose.msra.mxu0 0
    %3341 = vmatprep.subr.bf16.mxu0 0
    %3342 = vmatpush1.bf16.xpose.msra.mxu0 0
    %3343 = vmatprep.subr.bf16.mxu0 0
    %3344 = vmatpush1.bf16.xpose.msra.mxu0 0
    %3345 = vmatprep.subr.bf16.mxu0 0
    %3346 = vmatpush1.bf16.xpose.msra.mxu0 0
    %3347 = vmatprep.subr.bf16.mxu0 0
    %3348 = vmatpush1.bf16.xpose.msra.mxu0 0
    %3349 = vmatprep.subr.bf16.mxu0 0
    %3350 = vmatpush1.bf16.xpose.msra.mxu0 0
    %3351 = vmatprep.mubr.bf16.mxu0 0
    %3352 = vmatmul.mubr.bf16.gmra.mrb[0].mxu0 %v3314
    %v3353 = vpop.f32.mrb[0].mxu0
    %v3354 = vadd.f32 0.0, %v3353
    %v3355 = vpop.f32.mrb[0].mxu0
    %v3356 = vpop.f32.mrb[0].mxu0
    %v3357 = vpop.f32.mrb[0].mxu0
    %3358 = vdwg.mxu0
    %3360 = vrot.lane.b32.xlu0 %v2815, 96
    %v3361 = vpop.permute.xlu0 %3360
    %v3363 = vsel %vm335, %v2815, 0
    %v3366 = vsel %vm335, %v3361, 0
    %3368 = vmatprep.subr.bf16.mxu0 0
    %3369 = vmatpush1.bf16.xpose.msra.mxu0 %v3366
    %3370 = vmatprep.subr.bf16.mxu0 0
    %3371 = vmatpush1.bf16.xpose.msra.mxu0 0
    %3372 = vmatprep.subr.bf16.mxu0 0
    %3373 = vmatpush1.bf16.xpose.msra.mxu0 0
    %3374 = vmatprep.subr.bf16.mxu0 0
    %3375 = vmatpush1.bf16.xpose.msra.mxu0 0
    %3376 = vmatprep.subr.bf16.mxu0 0
    %3377 = vmatpush1.bf16.xpose.msra.mxu0 0
    %3378 = vmatprep.subr.bf16.mxu0 0
    %3379 = vmatpush1.bf16.xpose.msra.mxu0 0
    %3380 = vmatprep.subr.bf16.mxu0 0
    %3381 = vmatpush1.bf16.xpose.msra.mxu0 0
    %3382 = vmatprep.subr.bf16.mxu0 0
    %3383 = vmatpush1.bf16.xpose.msra.mxu0 0
    %3384 = vmatprep.subr.bf16.mxu0 0
    %3385 = vmatpush1.bf16.xpose.msra.mxu0 0
    %3386 = vmatprep.subr.bf16.mxu0 0
    %3387 = vmatpush1.bf16.xpose.msra.mxu0 0
    %3388 = vmatprep.subr.bf16.mxu0 0
    %3389 = vmatpush1.bf16.xpose.msra.mxu0 0
    %3390 = vmatprep.subr.bf16.mxu0 0
    %3391 = vmatpush1.bf16.xpose.msra.mxu0 0
    %3392 = vmatprep.subr.bf16.mxu0 0
    %3393 = vmatpush1.bf16.xpose.msra.mxu0 0
    %3394 = vmatprep.subr.bf16.mxu0 0
    %3395 = vmatpush1.bf16.xpose.msra.mxu0 0
    %3396 = vmatprep.subr.bf16.mxu0 0
    %3397 = vmatpush1.bf16.xpose.msra.mxu0 0
    %3398 = vmatprep.subr.bf16.mxu0 0
    %3399 = vmatpush1.bf16.xpose.msra.mxu0 0
    %3400 = vmatprep.mubr.bf16.mxu0 0
    %3401 = vmatmul.mubr.bf16.gmra.mrb[0].mxu0 %v3363
    %v3402 = vpop.f32.mrb[0].mxu0
    %v3403 = vadd.f32 0.0, %v3402
    %v3404 = vpop.f32.mrb[0].mxu0
    %v3405 = vpop.f32.mrb[0].mxu0
    %v3406 = vpop.f32.mrb[0].mxu0
    %3407 = vdwg.mxu0
    %3409 = vrot.lane.b32.xlu0 %v2816, 96
    %v3410 = vpop.permute.xlu0 %3409
    %v3412 = vsel %vm335, %v2816, 0
    %v3415 = vsel %vm335, %v3410, 0
    %3417 = vmatprep.subr.bf16.mxu0 0
    %3418 = vmatpush1.bf16.xpose.msra.mxu0 %v3415
    %3419 = vmatprep.subr.bf16.mxu0 0
    %3420 = vmatpush1.bf16.xpose.msra.mxu0 0
    %3421 = vmatprep.subr.bf16.mxu0 0
    %3422 = vmatpush1.bf16.xpose.msra.mxu0 0
    %3423 = vmatprep.subr.bf16.mxu0 0
    %3424 = vmatpush1.bf16.xpose.msra.mxu0 0
    %3425 = vmatprep.subr.bf16.mxu0 0
    %3426 = vmatpush1.bf16.xpose.msra.mxu0 0
    %3427 = vmatprep.subr.bf16.mxu0 0
    %3428 = vmatpush1.bf16.xpose.msra.mxu0 0
    %3429 = vmatprep.subr.bf16.mxu0 0
    %3430 = vmatpush1.bf16.xpose.msra.mxu0 0
    %3431 = vmatprep.subr.bf16.mxu0 0
    %3432 = vmatpush1.bf16.xpose.msra.mxu0 0
    %3433 = vmatprep.subr.bf16.mxu0 0
    %3434 = vmatpush1.bf16.xpose.msra.mxu0 0
    %3435 = vmatprep.subr.bf16.mxu0 0
    %3436 = vmatpush1.bf16.xpose.msra.mxu0 0
    %3437 = vmatprep.subr.bf16.mxu0 0
    %3438 = vmatpush1.bf16.xpose.msra.mxu0 0
    %3439 = vmatprep.subr.bf16.mxu0 0
    %3440 = vmatpush1.bf16.xpose.msra.mxu0 0
    %3441 = vmatprep.subr.bf16.mxu0 0
    %3442 = vmatpush1.bf16.xpose.msra.mxu0 0
    %3443 = vmatprep.subr.bf16.mxu0 0
    %3444 = vmatpush1.bf16.xpose.msra.mxu0 0
    %3445 = vmatprep.subr.bf16.mxu0 0
    %3446 = vmatpush1.bf16.xpose.msra.mxu0 0
    %3447 = vmatprep.subr.bf16.mxu0 0
    %3448 = vmatpush1.bf16.xpose.msra.mxu0 0
    %3449 = vmatprep.mubr.bf16.mxu0 0
    %3450 = vmatmul.mubr.bf16.gmra.mrb[0].mxu0 %v3412
    %v3451 = vpop.f32.mrb[0].mxu0
    %v3452 = vadd.f32 0.0, %v3451
    %v3453 = vpop.f32.mrb[0].mxu0
    %v3454 = vpop.f32.mrb[0].mxu0
    %v3455 = vpop.f32.mrb[0].mxu0
    %3456 = vdwg.mxu0
    %3458 = vrot.lane.b32.xlu0 %v2817, 96
    %v3459 = vpop.permute.xlu0 %3458
    %v3461 = vsel %vm335, %v2817, 0
    %v3464 = vsel %vm335, %v3459, 0
    %3466 = vmatprep.subr.bf16.mxu0 0
    %3467 = vmatpush1.bf16.xpose.msra.mxu0 %v3464
    %3468 = vmatprep.subr.bf16.mxu0 0
    %3469 = vmatpush1.bf16.xpose.msra.mxu0 0
    %3470 = vmatprep.subr.bf16.mxu0 0
    %3471 = vmatpush1.bf16.xpose.msra.mxu0 0
    %3472 = vmatprep.subr.bf16.mxu0 0
    %3473 = vmatpush1.bf16.xpose.msra.mxu0 0
    %3474 = vmatprep.subr.bf16.mxu0 0
    %3475 = vmatpush1.bf16.xpose.msra.mxu0 0
    %3476 = vmatprep.subr.bf16.mxu0 0
    %3477 = vmatpush1.bf16.xpose.msra.mxu0 0
    %3478 = vmatprep.subr.bf16.mxu0 0
    %3479 = vmatpush1.bf16.xpose.msra.mxu0 0
    %3480 = vmatprep.subr.bf16.mxu0 0
    %3481 = vmatpush1.bf16.xpose.msra.mxu0 0
    %3482 = vmatprep.subr.bf16.mxu0 0
    %3483 = vmatpush1.bf16.xpose.msra.mxu0 0
    %3484 = vmatprep.subr.bf16.mxu0 0
    %3485 = vmatpush1.bf16.xpose.msra.mxu0 0
    %3486 = vmatprep.subr.bf16.mxu0 0
    %3487 = vmatpush1.bf16.xpose.msra.mxu0 0
    %3488 = vmatprep.subr.bf16.mxu0 0
    %3489 = vmatpush1.bf16.xpose.msra.mxu0 0
    %3490 = vmatprep.subr.bf16.mxu0 0
    %3491 = vmatpush1.bf16.xpose.msra.mxu0 0
    %3492 = vmatprep.subr.bf16.mxu0 0
    %3493 = vmatpush1.bf16.xpose.msra.mxu0 0
    %3494 = vmatprep.subr.bf16.mxu0 0
    %3495 = vmatpush1.bf16.xpose.msra.mxu0 0
    %3496 = vmatprep.subr.bf16.mxu0 0
    %3497 = vmatpush1.bf16.xpose.msra.mxu0 0
    %3498 = vmatprep.mubr.bf16.mxu0 0
    %3499 = vmatmul.mubr.bf16.gmra.mrb[0].mxu0 %v3461
    %v3500 = vpop.f32.mrb[0].mxu0
    %v3501 = vadd.f32 0.0, %v3500
    %v3502 = vpop.f32.mrb[0].mxu0
    %v3503 = vpop.f32.mrb[0].mxu0
    %v3504 = vpop.f32.mrb[0].mxu0
    %3505 = vdwg.mxu0
    %3507 = vrot.lane.b32.xlu0 %v2818, 96
    %v3508 = vpop.permute.xlu0 %3507
    %v3510 = vsel %vm335, %v2818, 0
    %v3513 = vsel %vm335, %v3508, 0
    %3515 = vmatprep.subr.bf16.mxu0 0
    %3516 = vmatpush1.bf16.xpose.msra.mxu0 %v3513
    %3517 = vmatprep.subr.bf16.mxu0 0
    %3518 = vmatpush1.bf16.xpose.msra.mxu0 0
    %3519 = vmatprep.subr.bf16.mxu0 0
    %3520 = vmatpush1.bf16.xpose.msra.mxu0 0
    %3521 = vmatprep.subr.bf16.mxu0 0
    %3522 = vmatpush1.bf16.xpose.msra.mxu0 0
    %3523 = vmatprep.subr.bf16.mxu0 0
    %3524 = vmatpush1.bf16.xpose.msra.mxu0 0
    %3525 = vmatprep.subr.bf16.mxu0 0
    %3526 = vmatpush1.bf16.xpose.msra.mxu0 0
    %3527 = vmatprep.subr.bf16.mxu0 0
    %3528 = vmatpush1.bf16.xpose.msra.mxu0 0
    %3529 = vmatprep.subr.bf16.mxu0 0
    %3530 = vmatpush1.bf16.xpose.msra.mxu0 0
    %3531 = vmatprep.subr.bf16.mxu0 0
    %3532 = vmatpush1.bf16.xpose.msra.mxu0 0
    %3533 = vmatprep.subr.bf16.mxu0 0
    %3534 = vmatpush1.bf16.xpose.msra.mxu0 0
    %3535 = vmatprep.subr.bf16.mxu0 0
    %3536 = vmatpush1.bf16.xpose.msra.mxu0 0
    %3537 = vmatprep.subr.bf16.mxu0 0
    %3538 = vmatpush1.bf16.xpose.msra.mxu0 0
    %3539 = vmatprep.subr.bf16.mxu0 0
    %3540 = vmatpush1.bf16.xpose.msra.mxu0 0
    %3541 = vmatprep.subr.bf16.mxu0 0
    %3542 = vmatpush1.bf16.xpose.msra.mxu0 0
    %3543 = vmatprep.subr.bf16.mxu0 0
    %3544 = vmatpush1.bf16.xpose.msra.mxu0 0
    %3545 = vmatprep.subr.bf16.mxu0 0
    %3546 = vmatpush1.bf16.xpose.msra.mxu0 0
    %3547 = vmatprep.mubr.bf16.mxu0 0
    %3548 = vmatmul.mubr.bf16.gmra.mrb[0].mxu0 %v3510
    %v3549 = vpop.f32.mrb[0].mxu0
    %v3550 = vadd.f32 0.0, %v3549
    %v3551 = vpop.f32.mrb[0].mxu0
    %v3552 = vpop.f32.mrb[0].mxu0
    %v3553 = vpop.f32.mrb[0].mxu0
    %3554 = vdwg.mxu0
    %3556 = vrot.lane.b32.xlu0 %v2819, 96
    %v3557 = vpop.permute.xlu0 %3556
    %v3559 = vsel %vm335, %v2819, 0
    %v3562 = vsel %vm335, %v3557, 0
    %3564 = vmatprep.subr.bf16.mxu0 0
    %3565 = vmatpush1.bf16.xpose.msra.mxu0 %v3562
    %3566 = vmatprep.subr.bf16.mxu0 0
    %3567 = vmatpush1.bf16.xpose.msra.mxu0 0
    %3568 = vmatprep.subr.bf16.mxu0 0
    %3569 = vmatpush1.bf16.xpose.msra.mxu0 0
    %3570 = vmatprep.subr.bf16.mxu0 0
    %3571 = vmatpush1.bf16.xpose.msra.mxu0 0
    %3572 = vmatprep.subr.bf16.mxu0 0
    %3573 = vmatpush1.bf16.xpose.msra.mxu0 0
    %3574 = vmatprep.subr.bf16.mxu0 0
    %3575 = vmatpush1.bf16.xpose.msra.mxu0 0
    %3576 = vmatprep.subr.bf16.mxu0 0
    %3577 = vmatpush1.bf16.xpose.msra.mxu0 0
    %3578 = vmatprep.subr.bf16.mxu0 0
    %3579 = vmatpush1.bf16.xpose.msra.mxu0 0
    %3580 = vmatprep.subr.bf16.mxu0 0
    %3581 = vmatpush1.bf16.xpose.msra.mxu0 0
    %3582 = vmatprep.subr.bf16.mxu0 0
    %3583 = vmatpush1.bf16.xpose.msra.mxu0 0
    %3584 = vmatprep.subr.bf16.mxu0 0
    %3585 = vmatpush1.bf16.xpose.msra.mxu0 0
    %3586 = vmatprep.subr.bf16.mxu0 0
    %3587 = vmatpush1.bf16.xpose.msra.mxu0 0
    %3588 = vmatprep.subr.bf16.mxu0 0
    %3589 = vmatpush1.bf16.xpose.msra.mxu0 0
    %3590 = vmatprep.subr.bf16.mxu0 0
    %3591 = vmatpush1.bf16.xpose.msra.mxu0 0
    %3592 = vmatprep.subr.bf16.mxu0 0
    %3593 = vmatpush1.bf16.xpose.msra.mxu0 0
    %3594 = vmatprep.subr.bf16.mxu0 0
    %3595 = vmatpush1.bf16.xpose.msra.mxu0 0
    %3596 = vmatprep.mubr.bf16.mxu0 0
    %3597 = vmatmul.mubr.bf16.gmra.mrb[0].mxu0 %v3559
    %v3598 = vpop.f32.mrb[0].mxu0
    %v3599 = vadd.f32 0.0, %v3598
    %v3600 = vpop.f32.mrb[0].mxu0
    %v3601 = vpop.f32.mrb[0].mxu0
    %v3602 = vpop.f32.mrb[0].mxu0
    %3603 = vdwg.mxu0
    %s3604 = scalar_lea.vmem %s1, 64
    %v3605 = vld [vmem:[%s3604] sm:$0xff]
    %v3606 = vld [vmem:[%s3604 + $0x8] sm:$0xff]
    %v3607 = vld [vmem:[%s3604 + $0x10] sm:$0xff]
    %v3608 = vld [vmem:[%s3604 + $0x18] sm:$0xff]
    %v3609 = vld [vmem:[%s3604 + $0x20] sm:$0xff]
    %v3610 = vld [vmem:[%s3604 + $0x28] sm:$0xff]
    %v3611 = vld [vmem:[%s3604 + $0x30] sm:$0xff]
    %v3612 = vld [vmem:[%s3604 + $0x38] sm:$0xff]
    %v3613 = vadd.f32 %v2864, %v3605
    %v3614 = vadd.f32 %v2913, %v3606
    %v3615 = vadd.f32 %v2962, %v3605
    %v3616 = vadd.f32 %v3011, %v3606
    %v3617 = vadd.f32 %v3060, %v3607
    %v3618 = vadd.f32 %v3109, %v3608
    %v3619 = vadd.f32 %v3158, %v3607
    %v3620 = vadd.f32 %v3207, %v3608
    %v3621 = vadd.f32 %v3256, %v3609
    %v3622 = vadd.f32 %v3305, %v3610
    %v3623 = vadd.f32 %v3354, %v3609
    %v3624 = vadd.f32 %v3403, %v3610
    %v3625 = vadd.f32 %v3452, %v3611
    %v3626 = vadd.f32 %v3501, %v3612
    %v3627 = vadd.f32 %v3550, %v3611
    %v3628 = vadd.f32 %v3599, %v3612
    %v3629 = vsel %vm335, %v3613, -inf
    %3630 = vmax.xlane.f32.xlu0 %v3629
    %v3631 = vpop.xlane.xlu0 %3630
    %v3632 = vsel %vm335, %v3614, -inf
    %3633 = vmax.xlane.f32.xlu0 %v3632
    %v3634 = vpop.xlane.xlu0 %3633
    %v3635 = vsel %vm335, %v3615, -inf
    %3636 = vmax.xlane.f32.xlu0 %v3635
    %v3637 = vpop.xlane.xlu0 %3636
    %v3638 = vsel %vm335, %v3616, -inf
    %3639 = vmax.xlane.f32.xlu0 %v3638
    %v3640 = vpop.xlane.xlu0 %3639
    %v3641 = vsel %vm335, %v3617, -inf
    %3642 = vmax.xlane.f32.xlu0 %v3641
    %v3643 = vpop.xlane.xlu0 %3642
    %v3644 = vsel %vm335, %v3618, -inf
    %3645 = vmax.xlane.f32.xlu0 %v3644
    %v3646 = vpop.xlane.xlu0 %3645
    %v3647 = vsel %vm335, %v3619, -inf
    %3648 = vmax.xlane.f32.xlu0 %v3647
    %v3649 = vpop.xlane.xlu0 %3648
    %v3650 = vsel %vm335, %v3620, -inf
    %3651 = vmax.xlane.f32.xlu0 %v3650
    %v3652 = vpop.xlane.xlu0 %3651
    %v3653 = vsel %vm335, %v3621, -inf
    %3654 = vmax.xlane.f32.xlu0 %v3653
    %v3655 = vpop.xlane.xlu0 %3654
    %v3656 = vsel %vm335, %v3622, -inf
    %3657 = vmax.xlane.f32.xlu0 %v3656
    %v3658 = vpop.xlane.xlu0 %3657
    %v3659 = vsel %vm335, %v3623, -inf
    %3660 = vmax.xlane.f32.xlu0 %v3659
    %v3661 = vpop.xlane.xlu0 %3660
    %v3662 = vsel %vm335, %v3624, -inf
    %3663 = vmax.xlane.f32.xlu0 %v3662
    %v3664 = vpop.xlane.xlu0 %3663
    %v3665 = vsel %vm335, %v3625, -inf
    %3666 = vmax.xlane.f32.xlu0 %v3665
    %v3667 = vpop.xlane.xlu0 %3666
    %v3668 = vsel %vm335, %v3626, -inf
    %3669 = vmax.xlane.f32.xlu0 %v3668
    %v3670 = vpop.xlane.xlu0 %3669
    %v3671 = vsel %vm335, %v3627, -inf
    %3672 = vmax.xlane.f32.xlu0 %v3671
    %v3673 = vpop.xlane.xlu0 %3672
    %v3674 = vsel %vm335, %v3628, -inf
    %3675 = vmax.xlane.f32.xlu0 %v3674
    %v3676 = vpop.xlane.xlu0 %3675
    %v3677 = vsub.f32 %v3613, %v3631
    %v3678 = vsub.f32 %v3614, %v3634
    %v3679 = vsub.f32 %v3615, %v3637
    %v3680 = vsub.f32 %v3616, %v3640
    %v3681 = vsub.f32 %v3617, %v3643
    %v3682 = vsub.f32 %v3618, %v3646
    %v3683 = vsub.f32 %v3619, %v3649
    %v3684 = vsub.f32 %v3620, %v3652
    %v3685 = vsub.f32 %v3621, %v3655
    %v3686 = vsub.f32 %v3622, %v3658
    %v3687 = vsub.f32 %v3623, %v3661
    %v3688 = vsub.f32 %v3624, %v3664
    %v3689 = vsub.f32 %v3625, %v3667
    %v3690 = vsub.f32 %v3626, %v3670
    %v3691 = vsub.f32 %v3627, %v3673
    %v3692 = vsub.f32 %v3628, %v3676
    %v3693 = vmul.f32 %v3677, 1.442695
    %v3694 = vpow.pop %v3693
    %v3695 = vmul.f32 %v3678, 1.442695
    %v3696 = vpow.pop %v3695
    %v3697 = vmul.f32 %v3679, 1.442695
    %v3698 = vpow.pop %v3697
    %v3699 = vmul.f32 %v3680, 1.442695
    %v3700 = vpow.pop %v3699
    %v3701 = vmul.f32 %v3681, 1.442695
    %v3702 = vpow.pop %v3701
    %v3703 = vmul.f32 %v3682, 1.442695
    %v3704 = vpow.pop %v3703
    %v3705 = vmul.f32 %v3683, 1.442695
    %v3706 = vpow.pop %v3705
    %v3707 = vmul.f32 %v3684, 1.442695
    %v3708 = vpow.pop %v3707
    %v3709 = vmul.f32 %v3685, 1.442695
    %v3710 = vpow.pop %v3709
    %v3711 = vmul.f32 %v3686, 1.442695
    %v3712 = vpow.pop %v3711
    %v3713 = vmul.f32 %v3687, 1.442695
    %v3714 = vpow.pop %v3713
    %v3715 = vmul.f32 %v3688, 1.442695
    %v3716 = vpow.pop %v3715
    %v3717 = vmul.f32 %v3689, 1.442695
    %v3718 = vpow.pop %v3717
    %v3719 = vmul.f32 %v3690, 1.442695
    %v3720 = vpow.pop %v3719
    %v3721 = vmul.f32 %v3691, 1.442695
    %v3722 = vpow.pop %v3721
    %v3723 = vmul.f32 %v3692, 1.442695
    %v3724 = vpow.pop %v3723
    %v3725 = vsel %vm335, %v3694, 0.0
    %3726 = vadd.xlane.f32.xlu0 %v3725
    %v3727 = vpop.xlane.xlu0 %3726
    %v3728 = vsel %vm335, %v3696, 0.0
    %3729 = vadd.xlane.f32.xlu0 %v3728
    %v3730 = vpop.xlane.xlu0 %3729
    %v3731 = vsel %vm335, %v3698, 0.0
    %3732 = vadd.xlane.f32.xlu0 %v3731
    %v3733 = vpop.xlane.xlu0 %3732
    %v3734 = vsel %vm335, %v3700, 0.0
    %3735 = vadd.xlane.f32.xlu0 %v3734
    %v3736 = vpop.xlane.xlu0 %3735
    %v3737 = vsel %vm335, %v3702, 0.0
    %3738 = vadd.xlane.f32.xlu0 %v3737
    %v3739 = vpop.xlane.xlu0 %3738
    %v3740 = vsel %vm335, %v3704, 0.0
    %3741 = vadd.xlane.f32.xlu0 %v3740
    %v3742 = vpop.xlane.xlu0 %3741
    %v3743 = vsel %vm335, %v3706, 0.0
    %3744 = vadd.xlane.f32.xlu0 %v3743
    %v3745 = vpop.xlane.xlu0 %3744
    %v3746 = vsel %vm335, %v3708, 0.0
    %3747 = vadd.xlane.f32.xlu0 %v3746
    %v3748 = vpop.xlane.xlu0 %3747
    %v3749 = vsel %vm335, %v3710, 0.0
    %3750 = vadd.xlane.f32.xlu0 %v3749
    %v3751 = vpop.xlane.xlu0 %3750
    %v3752 = vsel %vm335, %v3712, 0.0
    %3753 = vadd.xlane.f32.xlu0 %v3752
    %v3754 = vpop.xlane.xlu0 %3753
    %v3755 = vsel %vm335, %v3714, 0.0
    %3756 = vadd.xlane.f32.xlu0 %v3755
    %v3757 = vpop.xlane.xlu0 %3756
    %v3758 = vsel %vm335, %v3716, 0.0
    %3759 = vadd.xlane.f32.xlu0 %v3758
    %v3760 = vpop.xlane.xlu0 %3759
    %v3761 = vsel %vm335, %v3718, 0.0
    %3762 = vadd.xlane.f32.xlu0 %v3761
    %v3763 = vpop.xlane.xlu0 %3762
    %v3764 = vsel %vm335, %v3720, 0.0
    %3765 = vadd.xlane.f32.xlu0 %v3764
    %v3766 = vpop.xlane.xlu0 %3765
    %v3767 = vsel %vm335, %v3722, 0.0
    %3768 = vadd.xlane.f32.xlu0 %v3767
    %v3769 = vpop.xlane.xlu0 %3768
    %v3770 = vsel %vm335, %v3724, 0.0
    %3771 = vadd.xlane.f32.xlu0 %v3770
    %v3772 = vpop.xlane.xlu0 %3771
    %v3773 = vrcp.pop %v3727
    %v3774 = vrcp.pop %v3730
    %v3775 = vrcp.pop %v3733
    %v3776 = vrcp.pop %v3736
    %v3777 = vrcp.pop %v3739
    %v3778 = vrcp.pop %v3742
    %v3779 = vrcp.pop %v3745
    %v3780 = vrcp.pop %v3748
    %v3781 = vrcp.pop %v3751
    %v3782 = vrcp.pop %v3754
    %v3783 = vrcp.pop %v3757
    %v3784 = vrcp.pop %v3760
    %v3785 = vrcp.pop %v3763
    %v3786 = vrcp.pop %v3766
    %v3787 = vrcp.pop %v3769
    %v3788 = vrcp.pop %v3772
    %v3789 = vmul.f32 %v3694, %v3773
    %v3790 = vmul.f32 %v3696, %v3774
    %v3791 = vmul.f32 %v3698, %v3775
    %v3792 = vmul.f32 %v3700, %v3776
    %v3793 = vmul.f32 %v3702, %v3777
    %v3794 = vmul.f32 %v3704, %v3778
    %v3795 = vmul.f32 %v3706, %v3779
    %v3796 = vmul.f32 %v3708, %v3780
    %v3797 = vmul.f32 %v3710, %v3781
    %v3798 = vmul.f32 %v3712, %v3782
    %v3799 = vmul.f32 %v3714, %v3783
    %v3800 = vmul.f32 %v3716, %v3784
    %v3801 = vmul.f32 %v3718, %v3785
    %v3802 = vmul.f32 %v3720, %v3786
    %v3803 = vmul.f32 %v3722, %v3787
    %v3804 = vmul.f32 %v3724, %v3788
    %v3805 = vpack.c.bf16 %v3789, %v3789
    %v3806 = vpack.c.bf16 %v3790, %v3790
    %v3807 = vpack.c.bf16 %v3791, %v3791
    %v3808 = vpack.c.bf16 %v3792, %v3792
    %v3809 = vpack.c.bf16 %v3793, %v3793
    %v3810 = vpack.c.bf16 %v3794, %v3794
    %v3811 = vpack.c.bf16 %v3795, %v3795
    %v3812 = vpack.c.bf16 %v3796, %v3796
    %v3813 = vpack.c.bf16 %v3797, %v3797
    %v3814 = vpack.c.bf16 %v3798, %v3798
    %v3815 = vpack.c.bf16 %v3799, %v3799
    %v3816 = vpack.c.bf16 %v3800, %v3800
    %v3817 = vpack.c.bf16 %v3801, %v3801
    %v3818 = vpack.c.bf16 %v3802, %v3802
    %v3819 = vpack.c.bf16 %v3803, %v3803
    %v3820 = vpack.c.bf16 %v3804, %v3804
    %3821 = vrot.lane.b32.xlu0 %v2804, 64
    %v3822 = vpop.permute.xlu0 %3821
    %v3824 = vsel %vm335, %v3805, 0
    %v3827 = vsel %vm1338, %v3822, 0
    %3829 = vmatprep.subr.bf16.mxu0 0
    %3830 = vmatpush1.bf16.msra.mxu0 %v3827
    %3831 = vmatprep.subr.bf16.mxu0 0
    %3832 = vmatpush1.bf16.msra.mxu0 0
    %3833 = vmatprep.subr.bf16.mxu0 0
    %3834 = vmatpush1.bf16.msra.mxu0 0
    %3835 = vmatprep.subr.bf16.mxu0 0
    %3836 = vmatpush1.bf16.msra.mxu0 0
    %3837 = vmatprep.subr.bf16.mxu0 0
    %3838 = vmatpush1.bf16.msra.mxu0 0
    %3839 = vmatprep.subr.bf16.mxu0 0
    %3840 = vmatpush1.bf16.msra.mxu0 0
    %3841 = vmatprep.subr.bf16.mxu0 0
    %3842 = vmatpush1.bf16.msra.mxu0 0
    %3843 = vmatprep.subr.bf16.mxu0 0
    %3844 = vmatpush1.bf16.msra.mxu0 0
    %3845 = vmatprep.subr.bf16.mxu0 0
    %3846 = vmatpush1.bf16.msra.mxu0 0
    %3847 = vmatprep.subr.bf16.mxu0 0
    %3848 = vmatpush1.bf16.msra.mxu0 0
    %3849 = vmatprep.subr.bf16.mxu0 0
    %3850 = vmatpush1.bf16.msra.mxu0 0
    %3851 = vmatprep.subr.bf16.mxu0 0
    %3852 = vmatpush1.bf16.msra.mxu0 0
    %3853 = vmatprep.subr.bf16.mxu0 0
    %3854 = vmatpush1.bf16.msra.mxu0 0
    %3855 = vmatprep.subr.bf16.mxu0 0
    %3856 = vmatpush1.bf16.msra.mxu0 0
    %3857 = vmatprep.subr.bf16.mxu0 0
    %3858 = vmatpush1.bf16.msra.mxu0 0
    %3859 = vmatprep.subr.bf16.mxu0 0
    %3860 = vmatpush1.bf16.msra.mxu0 0
    %3861 = vmatprep.mubr.bf16.mxu0 0
    %3862 = vmatmul.mubr.bf16.gmra.mrb[0].mxu0 %v3824
    %v3863 = vpop.f32.mrb[0].mxu0
    %v3864 = vadd.f32 0.0, %v3863
    %v3865 = vpop.f32.mrb[0].mxu0
    %v3866 = vpop.f32.mrb[0].mxu0
    %v3867 = vpop.f32.mrb[0].mxu0
    %3868 = vdwg.mxu0
    %3869 = vrot.lane.b32.xlu0 %v2805, 64
    %v3870 = vpop.permute.xlu0 %3869
    %v3872 = vsel %vm335, %v3806, 0
    %v3875 = vsel %vm1338, %v3870, 0
    %3877 = vmatprep.subr.bf16.mxu0 0
    %3878 = vmatpush1.bf16.msra.mxu0 %v3875
    %3879 = vmatprep.subr.bf16.mxu0 0
    %3880 = vmatpush1.bf16.msra.mxu0 0
    %3881 = vmatprep.subr.bf16.mxu0 0
    %3882 = vmatpush1.bf16.msra.mxu0 0
    %3883 = vmatprep.subr.bf16.mxu0 0
    %3884 = vmatpush1.bf16.msra.mxu0 0
    %3885 = vmatprep.subr.bf16.mxu0 0
    %3886 = vmatpush1.bf16.msra.mxu0 0
    %3887 = vmatprep.subr.bf16.mxu0 0
    %3888 = vmatpush1.bf16.msra.mxu0 0
    %3889 = vmatprep.subr.bf16.mxu0 0
    %3890 = vmatpush1.bf16.msra.mxu0 0
    %3891 = vmatprep.subr.bf16.mxu0 0
    %3892 = vmatpush1.bf16.msra.mxu0 0
    %3893 = vmatprep.subr.bf16.mxu0 0
    %3894 = vmatpush1.bf16.msra.mxu0 0
    %3895 = vmatprep.subr.bf16.mxu0 0
    %3896 = vmatpush1.bf16.msra.mxu0 0
    %3897 = vmatprep.subr.bf16.mxu0 0
    %3898 = vmatpush1.bf16.msra.mxu0 0
    %3899 = vmatprep.subr.bf16.mxu0 0
    %3900 = vmatpush1.bf16.msra.mxu0 0
    %3901 = vmatprep.subr.bf16.mxu0 0
    %3902 = vmatpush1.bf16.msra.mxu0 0
    %3903 = vmatprep.subr.bf16.mxu0 0
    %3904 = vmatpush1.bf16.msra.mxu0 0
    %3905 = vmatprep.subr.bf16.mxu0 0
    %3906 = vmatpush1.bf16.msra.mxu0 0
    %3907 = vmatprep.subr.bf16.mxu0 0
    %3908 = vmatpush1.bf16.msra.mxu0 0
    %3909 = vmatprep.mubr.bf16.mxu0 0
    %3910 = vmatmul.mubr.bf16.gmra.mrb[0].mxu0 %v3872
    %v3911 = vpop.f32.mrb[0].mxu0
    %v3912 = vadd.f32 0.0, %v3911
    %v3913 = vpop.f32.mrb[0].mxu0
    %v3914 = vpop.f32.mrb[0].mxu0
    %v3915 = vpop.f32.mrb[0].mxu0
    %3916 = vdwg.mxu0
    %3917 = vrot.lane.b32.xlu0 %v2806, 64
    %v3918 = vpop.permute.xlu0 %3917
    %v3920 = vsel %vm335, %v3807, 0
    %v3923 = vsel %vm1338, %v3918, 0
    %3925 = vmatprep.subr.bf16.mxu0 0
    %3926 = vmatpush1.bf16.msra.mxu0 %v3923
    %3927 = vmatprep.subr.bf16.mxu0 0
    %3928 = vmatpush1.bf16.msra.mxu0 0
    %3929 = vmatprep.subr.bf16.mxu0 0
    %3930 = vmatpush1.bf16.msra.mxu0 0
    %3931 = vmatprep.subr.bf16.mxu0 0
    %3932 = vmatpush1.bf16.msra.mxu0 0
    %3933 = vmatprep.subr.bf16.mxu0 0
    %3934 = vmatpush1.bf16.msra.mxu0 0
    %3935 = vmatprep.subr.bf16.mxu0 0
    %3936 = vmatpush1.bf16.msra.mxu0 0
    %3937 = vmatprep.subr.bf16.mxu0 0
    %3938 = vmatpush1.bf16.msra.mxu0 0
    %3939 = vmatprep.subr.bf16.mxu0 0
    %3940 = vmatpush1.bf16.msra.mxu0 0
    %3941 = vmatprep.subr.bf16.mxu0 0
    %3942 = vmatpush1.bf16.msra.mxu0 0
    %3943 = vmatprep.subr.bf16.mxu0 0
    %3944 = vmatpush1.bf16.msra.mxu0 0
    %3945 = vmatprep.subr.bf16.mxu0 0
    %3946 = vmatpush1.bf16.msra.mxu0 0
    %3947 = vmatprep.subr.bf16.mxu0 0
    %3948 = vmatpush1.bf16.msra.mxu0 0
    %3949 = vmatprep.subr.bf16.mxu0 0
    %3950 = vmatpush1.bf16.msra.mxu0 0
    %3951 = vmatprep.subr.bf16.mxu0 0
    %3952 = vmatpush1.bf16.msra.mxu0 0
    %3953 = vmatprep.subr.bf16.mxu0 0
    %3954 = vmatpush1.bf16.msra.mxu0 0
    %3955 = vmatprep.subr.bf16.mxu0 0
    %3956 = vmatpush1.bf16.msra.mxu0 0
    %3957 = vmatprep.mubr.bf16.mxu0 0
    %3958 = vmatmul.mubr.bf16.gmra.mrb[0].mxu0 %v3920
    %v3959 = vpop.f32.mrb[0].mxu0
    %v3960 = vadd.f32 0.0, %v3959
    %v3961 = vpop.f32.mrb[0].mxu0
    %v3962 = vpop.f32.mrb[0].mxu0
    %v3963 = vpop.f32.mrb[0].mxu0
    %3964 = vdwg.mxu0
    %3965 = vrot.lane.b32.xlu0 %v2807, 64
    %v3966 = vpop.permute.xlu0 %3965
    %v3968 = vsel %vm335, %v3808, 0
    %v3971 = vsel %vm1338, %v3966, 0
    %3973 = vmatprep.subr.bf16.mxu0 0
    %3974 = vmatpush1.bf16.msra.mxu0 %v3971
    %3975 = vmatprep.subr.bf16.mxu0 0
    %3976 = vmatpush1.bf16.msra.mxu0 0
    %3977 = vmatprep.subr.bf16.mxu0 0
    %3978 = vmatpush1.bf16.msra.mxu0 0
    %3979 = vmatprep.subr.bf16.mxu0 0
    %3980 = vmatpush1.bf16.msra.mxu0 0
    %3981 = vmatprep.subr.bf16.mxu0 0
    %3982 = vmatpush1.bf16.msra.mxu0 0
    %3983 = vmatprep.subr.bf16.mxu0 0
    %3984 = vmatpush1.bf16.msra.mxu0 0
    %3985 = vmatprep.subr.bf16.mxu0 0
    %3986 = vmatpush1.bf16.msra.mxu0 0
    %3987 = vmatprep.subr.bf16.mxu0 0
    %3988 = vmatpush1.bf16.msra.mxu0 0
    %3989 = vmatprep.subr.bf16.mxu0 0
    %3990 = vmatpush1.bf16.msra.mxu0 0
    %3991 = vmatprep.subr.bf16.mxu0 0
    %3992 = vmatpush1.bf16.msra.mxu0 0
    %3993 = vmatprep.subr.bf16.mxu0 0
    %3994 = vmatpush1.bf16.msra.mxu0 0
    %3995 = vmatprep.subr.bf16.mxu0 0
    %3996 = vmatpush1.bf16.msra.mxu0 0
    %3997 = vmatprep.subr.bf16.mxu0 0
    %3998 = vmatpush1.bf16.msra.mxu0 0
    %3999 = vmatprep.subr.bf16.mxu0 0
    %4000 = vmatpush1.bf16.msra.mxu0 0
    %4001 = vmatprep.subr.bf16.mxu0 0
    %4002 = vmatpush1.bf16.msra.mxu0 0
    %4003 = vmatprep.subr.bf16.mxu0 0
    %4004 = vmatpush1.bf16.msra.mxu0 0
    %4005 = vmatprep.mubr.bf16.mxu0 0
    %4006 = vmatmul.mubr.bf16.gmra.mrb[0].mxu0 %v3968
    %v4007 = vpop.f32.mrb[0].mxu0
    %v4008 = vadd.f32 0.0, %v4007
    %v4009 = vpop.f32.mrb[0].mxu0
    %v4010 = vpop.f32.mrb[0].mxu0
    %v4011 = vpop.f32.mrb[0].mxu0
    %4012 = vdwg.mxu0
    %4013 = vrot.lane.b32.xlu0 %v2808, 64
    %v4014 = vpop.permute.xlu0 %4013
    %v4016 = vsel %vm335, %v3809, 0
    %v4019 = vsel %vm1338, %v4014, 0
    %4021 = vmatprep.subr.bf16.mxu0 0
    %4022 = vmatpush1.bf16.msra.mxu0 %v4019
    %4023 = vmatprep.subr.bf16.mxu0 0
    %4024 = vmatpush1.bf16.msra.mxu0 0
    %4025 = vmatprep.subr.bf16.mxu0 0
    %4026 = vmatpush1.bf16.msra.mxu0 0
    %4027 = vmatprep.subr.bf16.mxu0 0
    %4028 = vmatpush1.bf16.msra.mxu0 0
    %4029 = vmatprep.subr.bf16.mxu0 0
    %4030 = vmatpush1.bf16.msra.mxu0 0
    %4031 = vmatprep.subr.bf16.mxu0 0
    %4032 = vmatpush1.bf16.msra.mxu0 0
    %4033 = vmatprep.subr.bf16.mxu0 0
    %4034 = vmatpush1.bf16.msra.mxu0 0
    %4035 = vmatprep.subr.bf16.mxu0 0
    %4036 = vmatpush1.bf16.msra.mxu0 0
    %4037 = vmatprep.subr.bf16.mxu0 0
    %4038 = vmatpush1.bf16.msra.mxu0 0
    %4039 = vmatprep.subr.bf16.mxu0 0
    %4040 = vmatpush1.bf16.msra.mxu0 0
    %4041 = vmatprep.subr.bf16.mxu0 0
    %4042 = vmatpush1.bf16.msra.mxu0 0
    %4043 = vmatprep.subr.bf16.mxu0 0
    %4044 = vmatpush1.bf16.msra.mxu0 0
    %4045 = vmatprep.subr.bf16.mxu0 0
    %4046 = vmatpush1.bf16.msra.mxu0 0
    %4047 = vmatprep.subr.bf16.mxu0 0
    %4048 = vmatpush1.bf16.msra.mxu0 0
    %4049 = vmatprep.subr.bf16.mxu0 0
    %4050 = vmatpush1.bf16.msra.mxu0 0
    %4051 = vmatprep.subr.bf16.mxu0 0
    %4052 = vmatpush1.bf16.msra.mxu0 0
    %4053 = vmatprep.mubr.bf16.mxu0 0
    %4054 = vmatmul.mubr.bf16.gmra.mrb[0].mxu0 %v4016
    %v4055 = vpop.f32.mrb[0].mxu0
    %v4056 = vadd.f32 0.0, %v4055
    %v4057 = vpop.f32.mrb[0].mxu0
    %v4058 = vpop.f32.mrb[0].mxu0
    %v4059 = vpop.f32.mrb[0].mxu0
    %4060 = vdwg.mxu0
    %4061 = vrot.lane.b32.xlu0 %v2809, 64
    %v4062 = vpop.permute.xlu0 %4061
    %v4064 = vsel %vm335, %v3810, 0
    %v4067 = vsel %vm1338, %v4062, 0
    %4069 = vmatprep.subr.bf16.mxu0 0
    %4070 = vmatpush1.bf16.msra.mxu0 %v4067
    %4071 = vmatprep.subr.bf16.mxu0 0
    %4072 = vmatpush1.bf16.msra.mxu0 0
    %4073 = vmatprep.subr.bf16.mxu0 0
    %4074 = vmatpush1.bf16.msra.mxu0 0
    %4075 = vmatprep.subr.bf16.mxu0 0
    %4076 = vmatpush1.bf16.msra.mxu0 0
    %4077 = vmatprep.subr.bf16.mxu0 0
    %4078 = vmatpush1.bf16.msra.mxu0 0
    %4079 = vmatprep.subr.bf16.mxu0 0
    %4080 = vmatpush1.bf16.msra.mxu0 0
    %4081 = vmatprep.subr.bf16.mxu0 0
    %4082 = vmatpush1.bf16.msra.mxu0 0
    %4083 = vmatprep.subr.bf16.mxu0 0
    %4084 = vmatpush1.bf16.msra.mxu0 0
    %4085 = vmatprep.subr.bf16.mxu0 0
    %4086 = vmatpush1.bf16.msra.mxu0 0
    %4087 = vmatprep.subr.bf16.mxu0 0
    %4088 = vmatpush1.bf16.msra.mxu0 0
    %4089 = vmatprep.subr.bf16.mxu0 0
    %4090 = vmatpush1.bf16.msra.mxu0 0
    %4091 = vmatprep.subr.bf16.mxu0 0
    %4092 = vmatpush1.bf16.msra.mxu0 0
    %4093 = vmatprep.subr.bf16.mxu0 0
    %4094 = vmatpush1.bf16.msra.mxu0 0
    %4095 = vmatprep.subr.bf16.mxu0 0
    %4096 = vmatpush1.bf16.msra.mxu0 0
    %4097 = vmatprep.subr.bf16.mxu0 0
    %4098 = vmatpush1.bf16.msra.mxu0 0
    %4099 = vmatprep.subr.bf16.mxu0 0
    %4100 = vmatpush1.bf16.msra.mxu0 0
    %4101 = vmatprep.mubr.bf16.mxu0 0
    %4102 = vmatmul.mubr.bf16.gmra.mrb[0].mxu0 %v4064
    %v4103 = vpop.f32.mrb[0].mxu0
    %v4104 = vadd.f32 0.0, %v4103
    %v4105 = vpop.f32.mrb[0].mxu0
    %v4106 = vpop.f32.mrb[0].mxu0
    %v4107 = vpop.f32.mrb[0].mxu0
    %4108 = vdwg.mxu0
    %4109 = vrot.lane.b32.xlu0 %v2810, 64
    %v4110 = vpop.permute.xlu0 %4109
    %v4112 = vsel %vm335, %v3811, 0
    %v4115 = vsel %vm1338, %v4110, 0
    %4117 = vmatprep.subr.bf16.mxu0 0
    %4118 = vmatpush1.bf16.msra.mxu0 %v4115
    %4119 = vmatprep.subr.bf16.mxu0 0
    %4120 = vmatpush1.bf16.msra.mxu0 0
    %4121 = vmatprep.subr.bf16.mxu0 0
    %4122 = vmatpush1.bf16.msra.mxu0 0
    %4123 = vmatprep.subr.bf16.mxu0 0
    %4124 = vmatpush1.bf16.msra.mxu0 0
    %4125 = vmatprep.subr.bf16.mxu0 0
    %4126 = vmatpush1.bf16.msra.mxu0 0
    %4127 = vmatprep.subr.bf16.mxu0 0
    %4128 = vmatpush1.bf16.msra.mxu0 0
    %4129 = vmatprep.subr.bf16.mxu0 0
    %4130 = vmatpush1.bf16.msra.mxu0 0
    %4131 = vmatprep.subr.bf16.mxu0 0
    %4132 = vmatpush1.bf16.msra.mxu0 0
    %4133 = vmatprep.subr.bf16.mxu0 0
    %4134 = vmatpush1.bf16.msra.mxu0 0
    %4135 = vmatprep.subr.bf16.mxu0 0
    %4136 = vmatpush1.bf16.msra.mxu0 0
    %4137 = vmatprep.subr.bf16.mxu0 0
    %4138 = vmatpush1.bf16.msra.mxu0 0
    %4139 = vmatprep.subr.bf16.mxu0 0
    %4140 = vmatpush1.bf16.msra.mxu0 0
    %4141 = vmatprep.subr.bf16.mxu0 0
    %4142 = vmatpush1.bf16.msra.mxu0 0
    %4143 = vmatprep.subr.bf16.mxu0 0
    %4144 = vmatpush1.bf16.msra.mxu0 0
    %4145 = vmatprep.subr.bf16.mxu0 0
    %4146 = vmatpush1.bf16.msra.mxu0 0
    %4147 = vmatprep.subr.bf16.mxu0 0
    %4148 = vmatpush1.bf16.msra.mxu0 0
    %4149 = vmatprep.mubr.bf16.mxu0 0
    %4150 = vmatmul.mubr.bf16.gmra.mrb[0].mxu0 %v4112
    %v4151 = vpop.f32.mrb[0].mxu0
    %v4152 = vadd.f32 0.0, %v4151
    %v4153 = vpop.f32.mrb[0].mxu0
    %v4154 = vpop.f32.mrb[0].mxu0
    %v4155 = vpop.f32.mrb[0].mxu0
    %4156 = vdwg.mxu0
    %4157 = vrot.lane.b32.xlu0 %v2811, 64
    %v4158 = vpop.permute.xlu0 %4157
    %v4160 = vsel %vm335, %v3812, 0
    %v4163 = vsel %vm1338, %v4158, 0
    %4165 = vmatprep.subr.bf16.mxu0 0
    %4166 = vmatpush1.bf16.msra.mxu0 %v4163
    %4167 = vmatprep.subr.bf16.mxu0 0
    %4168 = vmatpush1.bf16.msra.mxu0 0
    %4169 = vmatprep.subr.bf16.mxu0 0
    %4170 = vmatpush1.bf16.msra.mxu0 0
    %4171 = vmatprep.subr.bf16.mxu0 0
    %4172 = vmatpush1.bf16.msra.mxu0 0
    %4173 = vmatprep.subr.bf16.mxu0 0
    %4174 = vmatpush1.bf16.msra.mxu0 0
    %4175 = vmatprep.subr.bf16.mxu0 0
    %4176 = vmatpush1.bf16.msra.mxu0 0
    %4177 = vmatprep.subr.bf16.mxu0 0
    %4178 = vmatpush1.bf16.msra.mxu0 0
    %4179 = vmatprep.subr.bf16.mxu0 0
    %4180 = vmatpush1.bf16.msra.mxu0 0
    %4181 = vmatprep.subr.bf16.mxu0 0
    %4182 = vmatpush1.bf16.msra.mxu0 0
    %4183 = vmatprep.subr.bf16.mxu0 0
    %4184 = vmatpush1.bf16.msra.mxu0 0
    %4185 = vmatprep.subr.bf16.mxu0 0
    %4186 = vmatpush1.bf16.msra.mxu0 0
    %4187 = vmatprep.subr.bf16.mxu0 0
    %4188 = vmatpush1.bf16.msra.mxu0 0
    %4189 = vmatprep.subr.bf16.mxu0 0
    %4190 = vmatpush1.bf16.msra.mxu0 0
    %4191 = vmatprep.subr.bf16.mxu0 0
    %4192 = vmatpush1.bf16.msra.mxu0 0
    %4193 = vmatprep.subr.bf16.mxu0 0
    %4194 = vmatpush1.bf16.msra.mxu0 0
    %4195 = vmatprep.subr.bf16.mxu0 0
    %4196 = vmatpush1.bf16.msra.mxu0 0
    %4197 = vmatprep.mubr.bf16.mxu0 0
    %4198 = vmatmul.mubr.bf16.gmra.mrb[0].mxu0 %v4160
    %v4199 = vpop.f32.mrb[0].mxu0
    %v4200 = vadd.f32 0.0, %v4199
    %v4201 = vpop.f32.mrb[0].mxu0
    %v4202 = vpop.f32.mrb[0].mxu0
    %v4203 = vpop.f32.mrb[0].mxu0
    %4204 = vdwg.mxu0
    %4205 = vrot.lane.b32.xlu0 %v2812, 64
    %v4206 = vpop.permute.xlu0 %4205
    %v4208 = vsel %vm335, %v3813, 0
    %v4211 = vsel %vm1338, %v4206, 0
    %4213 = vmatprep.subr.bf16.mxu0 0
    %4214 = vmatpush1.bf16.msra.mxu0 %v4211
    %4215 = vmatprep.subr.bf16.mxu0 0
    %4216 = vmatpush1.bf16.msra.mxu0 0
    %4217 = vmatprep.subr.bf16.mxu0 0
    %4218 = vmatpush1.bf16.msra.mxu0 0
    %4219 = vmatprep.subr.bf16.mxu0 0
    %4220 = vmatpush1.bf16.msra.mxu0 0
    %4221 = vmatprep.subr.bf16.mxu0 0
    %4222 = vmatpush1.bf16.msra.mxu0 0
    %4223 = vmatprep.subr.bf16.mxu0 0
    %4224 = vmatpush1.bf16.msra.mxu0 0
    %4225 = vmatprep.subr.bf16.mxu0 0
    %4226 = vmatpush1.bf16.msra.mxu0 0
    %4227 = vmatprep.subr.bf16.mxu0 0
    %4228 = vmatpush1.bf16.msra.mxu0 0
    %4229 = vmatprep.subr.bf16.mxu0 0
    %4230 = vmatpush1.bf16.msra.mxu0 0
    %4231 = vmatprep.subr.bf16.mxu0 0
    %4232 = vmatpush1.bf16.msra.mxu0 0
    %4233 = vmatprep.subr.bf16.mxu0 0
    %4234 = vmatpush1.bf16.msra.mxu0 0
    %4235 = vmatprep.subr.bf16.mxu0 0
    %4236 = vmatpush1.bf16.msra.mxu0 0
    %4237 = vmatprep.subr.bf16.mxu0 0
    %4238 = vmatpush1.bf16.msra.mxu0 0
    %4239 = vmatprep.subr.bf16.mxu0 0
    %4240 = vmatpush1.bf16.msra.mxu0 0
    %4241 = vmatprep.subr.bf16.mxu0 0
    %4242 = vmatpush1.bf16.msra.mxu0 0
    %4243 = vmatprep.subr.bf16.mxu0 0
    %4244 = vmatpush1.bf16.msra.mxu0 0
    %4245 = vmatprep.mubr.bf16.mxu0 0
    %4246 = vmatmul.mubr.bf16.gmra.mrb[0].mxu0 %v4208
    %v4247 = vpop.f32.mrb[0].mxu0
    %v4248 = vadd.f32 0.0, %v4247
    %v4249 = vpop.f32.mrb[0].mxu0
    %v4250 = vpop.f32.mrb[0].mxu0
    %v4251 = vpop.f32.mrb[0].mxu0
    %4252 = vdwg.mxu0
    %4253 = vrot.lane.b32.xlu0 %v2813, 64
    %v4254 = vpop.permute.xlu0 %4253
    %v4256 = vsel %vm335, %v3814, 0
    %v4259 = vsel %vm1338, %v4254, 0
    %4261 = vmatprep.subr.bf16.mxu0 0
    %4262 = vmatpush1.bf16.msra.mxu0 %v4259
    %4263 = vmatprep.subr.bf16.mxu0 0
    %4264 = vmatpush1.bf16.msra.mxu0 0
    %4265 = vmatprep.subr.bf16.mxu0 0
    %4266 = vmatpush1.bf16.msra.mxu0 0
    %4267 = vmatprep.subr.bf16.mxu0 0
    %4268 = vmatpush1.bf16.msra.mxu0 0
    %4269 = vmatprep.subr.bf16.mxu0 0
    %4270 = vmatpush1.bf16.msra.mxu0 0
    %4271 = vmatprep.subr.bf16.mxu0 0
    %4272 = vmatpush1.bf16.msra.mxu0 0
    %4273 = vmatprep.subr.bf16.mxu0 0
    %4274 = vmatpush1.bf16.msra.mxu0 0
    %4275 = vmatprep.subr.bf16.mxu0 0
    %4276 = vmatpush1.bf16.msra.mxu0 0
    %4277 = vmatprep.subr.bf16.mxu0 0
    %4278 = vmatpush1.bf16.msra.mxu0 0
    %4279 = vmatprep.subr.bf16.mxu0 0
    %4280 = vmatpush1.bf16.msra.mxu0 0
    %4281 = vmatprep.subr.bf16.mxu0 0
    %4282 = vmatpush1.bf16.msra.mxu0 0
    %4283 = vmatprep.subr.bf16.mxu0 0
    %4284 = vmatpush1.bf16.msra.mxu0 0
    %4285 = vmatprep.subr.bf16.mxu0 0
    %4286 = vmatpush1.bf16.msra.mxu0 0
    %4287 = vmatprep.subr.bf16.mxu0 0
    %4288 = vmatpush1.bf16.msra.mxu0 0
    %4289 = vmatprep.subr.bf16.mxu0 0
    %4290 = vmatpush1.bf16.msra.mxu0 0
    %4291 = vmatprep.subr.bf16.mxu0 0
    %4292 = vmatpush1.bf16.msra.mxu0 0
    %4293 = vmatprep.mubr.bf16.mxu0 0
    %4294 = vmatmul.mubr.bf16.gmra.mrb[0].mxu0 %v4256
    %v4295 = vpop.f32.mrb[0].mxu0
    %v4296 = vadd.f32 0.0, %v4295
    %v4297 = vpop.f32.mrb[0].mxu0
    %v4298 = vpop.f32.mrb[0].mxu0
    %v4299 = vpop.f32.mrb[0].mxu0
    %4300 = vdwg.mxu0
    %4301 = vrot.lane.b32.xlu0 %v2814, 64
    %v4302 = vpop.permute.xlu0 %4301
    %v4304 = vsel %vm335, %v3815, 0
    %v4307 = vsel %vm1338, %v4302, 0
    %4309 = vmatprep.subr.bf16.mxu0 0
    %4310 = vmatpush1.bf16.msra.mxu0 %v4307
    %4311 = vmatprep.subr.bf16.mxu0 0
    %4312 = vmatpush1.bf16.msra.mxu0 0
    %4313 = vmatprep.subr.bf16.mxu0 0
    %4314 = vmatpush1.bf16.msra.mxu0 0
    %4315 = vmatprep.subr.bf16.mxu0 0
    %4316 = vmatpush1.bf16.msra.mxu0 0
    %4317 = vmatprep.subr.bf16.mxu0 0
    %4318 = vmatpush1.bf16.msra.mxu0 0
    %4319 = vmatprep.subr.bf16.mxu0 0
    %4320 = vmatpush1.bf16.msra.mxu0 0
    %4321 = vmatprep.subr.bf16.mxu0 0
    %4322 = vmatpush1.bf16.msra.mxu0 0
    %4323 = vmatprep.subr.bf16.mxu0 0
    %4324 = vmatpush1.bf16.msra.mxu0 0
    %4325 = vmatprep.subr.bf16.mxu0 0
    %4326 = vmatpush1.bf16.msra.mxu0 0
    %4327 = vmatprep.subr.bf16.mxu0 0
    %4328 = vmatpush1.bf16.msra.mxu0 0
    %4329 = vmatprep.subr.bf16.mxu0 0
    %4330 = vmatpush1.bf16.msra.mxu0 0
    %4331 = vmatprep.subr.bf16.mxu0 0
    %4332 = vmatpush1.bf16.msra.mxu0 0
    %4333 = vmatprep.subr.bf16.mxu0 0
    %4334 = vmatpush1.bf16.msra.mxu0 0
    %4335 = vmatprep.subr.bf16.mxu0 0
    %4336 = vmatpush1.bf16.msra.mxu0 0
    %4337 = vmatprep.subr.bf16.mxu0 0
    %4338 = vmatpush1.bf16.msra.mxu0 0
    %4339 = vmatprep.subr.bf16.mxu0 0
    %4340 = vmatpush1.bf16.msra.mxu0 0
    %4341 = vmatprep.mubr.bf16.mxu0 0
    %4342 = vmatmul.mubr.bf16.gmra.mrb[0].mxu0 %v4304
    %v4343 = vpop.f32.mrb[0].mxu0
    %v4344 = vadd.f32 0.0, %v4343
    %v4345 = vpop.f32.mrb[0].mxu0
    %v4346 = vpop.f32.mrb[0].mxu0
    %v4347 = vpop.f32.mrb[0].mxu0
    %4348 = vdwg.mxu0
    %4349 = vrot.lane.b32.xlu0 %v2815, 64
    %v4350 = vpop.permute.xlu0 %4349
    %v4352 = vsel %vm335, %v3816, 0
    %v4355 = vsel %vm1338, %v4350, 0
    %4357 = vmatprep.subr.bf16.mxu0 0
    %4358 = vmatpush1.bf16.msra.mxu0 %v4355
    %4359 = vmatprep.subr.bf16.mxu0 0
    %4360 = vmatpush1.bf16.msra.mxu0 0
    %4361 = vmatprep.subr.bf16.mxu0 0
    %4362 = vmatpush1.bf16.msra.mxu0 0
    %4363 = vmatprep.subr.bf16.mxu0 0
    %4364 = vmatpush1.bf16.msra.mxu0 0
    %4365 = vmatprep.subr.bf16.mxu0 0
    %4366 = vmatpush1.bf16.msra.mxu0 0
    %4367 = vmatprep.subr.bf16.mxu0 0
    %4368 = vmatpush1.bf16.msra.mxu0 0
    %4369 = vmatprep.subr.bf16.mxu0 0
    %4370 = vmatpush1.bf16.msra.mxu0 0
    %4371 = vmatprep.subr.bf16.mxu0 0
    %4372 = vmatpush1.bf16.msra.mxu0 0
    %4373 = vmatprep.subr.bf16.mxu0 0
    %4374 = vmatpush1.bf16.msra.mxu0 0
    %4375 = vmatprep.subr.bf16.mxu0 0
    %4376 = vmatpush1.bf16.msra.mxu0 0
    %4377 = vmatprep.subr.bf16.mxu0 0
    %4378 = vmatpush1.bf16.msra.mxu0 0
    %4379 = vmatprep.subr.bf16.mxu0 0
    %4380 = vmatpush1.bf16.msra.mxu0 0
    %4381 = vmatprep.subr.bf16.mxu0 0
    %4382 = vmatpush1.bf16.msra.mxu0 0
    %4383 = vmatprep.subr.bf16.mxu0 0
    %4384 = vmatpush1.bf16.msra.mxu0 0
    %4385 = vmatprep.subr.bf16.mxu0 0
    %4386 = vmatpush1.bf16.msra.mxu0 0
    %4387 = vmatprep.subr.bf16.mxu0 0
    %4388 = vmatpush1.bf16.msra.mxu0 0
    %4389 = vmatprep.mubr.bf16.mxu0 0
    %4390 = vmatmul.mubr.bf16.gmra.mrb[0].mxu0 %v4352
    %v4391 = vpop.f32.mrb[0].mxu0
    %v4392 = vadd.f32 0.0, %v4391
    %v4393 = vpop.f32.mrb[0].mxu0
    %v4394 = vpop.f32.mrb[0].mxu0
    %v4395 = vpop.f32.mrb[0].mxu0
    %4396 = vdwg.mxu0
    %4397 = vrot.lane.b32.xlu0 %v2816, 64
    %v4398 = vpop.permute.xlu0 %4397
    %v4400 = vsel %vm335, %v3817, 0
    %v4403 = vsel %vm1338, %v4398, 0
    %4405 = vmatprep.subr.bf16.mxu0 0
    %4406 = vmatpush1.bf16.msra.mxu0 %v4403
    %4407 = vmatprep.subr.bf16.mxu0 0
    %4408 = vmatpush1.bf16.msra.mxu0 0
    %4409 = vmatprep.subr.bf16.mxu0 0
    %4410 = vmatpush1.bf16.msra.mxu0 0
    %4411 = vmatprep.subr.bf16.mxu0 0
    %4412 = vmatpush1.bf16.msra.mxu0 0
    %4413 = vmatprep.subr.bf16.mxu0 0
    %4414 = vmatpush1.bf16.msra.mxu0 0
    %4415 = vmatprep.subr.bf16.mxu0 0
    %4416 = vmatpush1.bf16.msra.mxu0 0
    %4417 = vmatprep.subr.bf16.mxu0 0
    %4418 = vmatpush1.bf16.msra.mxu0 0
    %4419 = vmatprep.subr.bf16.mxu0 0
    %4420 = vmatpush1.bf16.msra.mxu0 0
    %4421 = vmatprep.subr.bf16.mxu0 0
    %4422 = vmatpush1.bf16.msra.mxu0 0
    %4423 = vmatprep.subr.bf16.mxu0 0
    %4424 = vmatpush1.bf16.msra.mxu0 0
    %4425 = vmatprep.subr.bf16.mxu0 0
    %4426 = vmatpush1.bf16.msra.mxu0 0
    %4427 = vmatprep.subr.bf16.mxu0 0
    %4428 = vmatpush1.bf16.msra.mxu0 0
    %4429 = vmatprep.subr.bf16.mxu0 0
    %4430 = vmatpush1.bf16.msra.mxu0 0
    %4431 = vmatprep.subr.bf16.mxu0 0
    %4432 = vmatpush1.bf16.msra.mxu0 0
    %4433 = vmatprep.subr.bf16.mxu0 0
    %4434 = vmatpush1.bf16.msra.mxu0 0
    %4435 = vmatprep.subr.bf16.mxu0 0
    %4436 = vmatpush1.bf16.msra.mxu0 0
    %4437 = vmatprep.mubr.bf16.mxu0 0
    %4438 = vmatmul.mubr.bf16.gmra.mrb[0].mxu0 %v4400
    %v4439 = vpop.f32.mrb[0].mxu0
    %v4440 = vadd.f32 0.0, %v4439
    %v4441 = vpop.f32.mrb[0].mxu0
    %v4442 = vpop.f32.mrb[0].mxu0
    %v4443 = vpop.f32.mrb[0].mxu0
    %4444 = vdwg.mxu0
    %4445 = vrot.lane.b32.xlu0 %v2817, 64
    %v4446 = vpop.permute.xlu0 %4445
    %v4448 = vsel %vm335, %v3818, 0
    %v4451 = vsel %vm1338, %v4446, 0
    %4453 = vmatprep.subr.bf16.mxu0 0
    %4454 = vmatpush1.bf16.msra.mxu0 %v4451
    %4455 = vmatprep.subr.bf16.mxu0 0
    %4456 = vmatpush1.bf16.msra.mxu0 0
    %4457 = vmatprep.subr.bf16.mxu0 0
    %4458 = vmatpush1.bf16.msra.mxu0 0
    %4459 = vmatprep.subr.bf16.mxu0 0
    %4460 = vmatpush1.bf16.msra.mxu0 0
    %4461 = vmatprep.subr.bf16.mxu0 0
    %4462 = vmatpush1.bf16.msra.mxu0 0
    %4463 = vmatprep.subr.bf16.mxu0 0
    %4464 = vmatpush1.bf16.msra.mxu0 0
    %4465 = vmatprep.subr.bf16.mxu0 0
    %4466 = vmatpush1.bf16.msra.mxu0 0
    %4467 = vmatprep.subr.bf16.mxu0 0
    %4468 = vmatpush1.bf16.msra.mxu0 0
    %4469 = vmatprep.subr.bf16.mxu0 0
    %4470 = vmatpush1.bf16.msra.mxu0 0
    %4471 = vmatprep.subr.bf16.mxu0 0
    %4472 = vmatpush1.bf16.msra.mxu0 0
    %4473 = vmatprep.subr.bf16.mxu0 0
    %4474 = vmatpush1.bf16.msra.mxu0 0
    %4475 = vmatprep.subr.bf16.mxu0 0
    %4476 = vmatpush1.bf16.msra.mxu0 0
    %4477 = vmatprep.subr.bf16.mxu0 0
    %4478 = vmatpush1.bf16.msra.mxu0 0
    %4479 = vmatprep.subr.bf16.mxu0 0
    %4480 = vmatpush1.bf16.msra.mxu0 0
    %4481 = vmatprep.subr.bf16.mxu0 0
    %4482 = vmatpush1.bf16.msra.mxu0 0
    %4483 = vmatprep.subr.bf16.mxu0 0
    %4484 = vmatpush1.bf16.msra.mxu0 0
    %4485 = vmatprep.mubr.bf16.mxu0 0
    %4486 = vmatmul.mubr.bf16.gmra.mrb[0].mxu0 %v4448
    %v4487 = vpop.f32.mrb[0].mxu0
    %v4488 = vadd.f32 0.0, %v4487
    %v4489 = vpop.f32.mrb[0].mxu0
    %v4490 = vpop.f32.mrb[0].mxu0
    %v4491 = vpop.f32.mrb[0].mxu0
    %4492 = vdwg.mxu0
    %4493 = vrot.lane.b32.xlu0 %v2818, 64
    %v4494 = vpop.permute.xlu0 %4493
    %v4496 = vsel %vm335, %v3819, 0
    %v4499 = vsel %vm1338, %v4494, 0
    %4501 = vmatprep.subr.bf16.mxu0 0
    %4502 = vmatpush1.bf16.msra.mxu0 %v4499
    %4503 = vmatprep.subr.bf16.mxu0 0
    %4504 = vmatpush1.bf16.msra.mxu0 0
    %4505 = vmatprep.subr.bf16.mxu0 0
    %4506 = vmatpush1.bf16.msra.mxu0 0
    %4507 = vmatprep.subr.bf16.mxu0 0
    %4508 = vmatpush1.bf16.msra.mxu0 0
    %4509 = vmatprep.subr.bf16.mxu0 0
    %4510 = vmatpush1.bf16.msra.mxu0 0
    %4511 = vmatprep.subr.bf16.mxu0 0
    %4512 = vmatpush1.bf16.msra.mxu0 0
    %4513 = vmatprep.subr.bf16.mxu0 0
    %4514 = vmatpush1.bf16.msra.mxu0 0
    %4515 = vmatprep.subr.bf16.mxu0 0
    %4516 = vmatpush1.bf16.msra.mxu0 0
    %4517 = vmatprep.subr.bf16.mxu0 0
    %4518 = vmatpush1.bf16.msra.mxu0 0
    %4519 = vmatprep.subr.bf16.mxu0 0
    %4520 = vmatpush1.bf16.msra.mxu0 0
    %4521 = vmatprep.subr.bf16.mxu0 0
    %4522 = vmatpush1.bf16.msra.mxu0 0
    %4523 = vmatprep.subr.bf16.mxu0 0
    %4524 = vmatpush1.bf16.msra.mxu0 0
    %4525 = vmatprep.subr.bf16.mxu0 0
    %4526 = vmatpush1.bf16.msra.mxu0 0
    %4527 = vmatprep.subr.bf16.mxu0 0
    %4528 = vmatpush1.bf16.msra.mxu0 0
    %4529 = vmatprep.subr.bf16.mxu0 0
    %4530 = vmatpush1.bf16.msra.mxu0 0
    %4531 = vmatprep.subr.bf16.mxu0 0
    %4532 = vmatpush1.bf16.msra.mxu0 0
    %4533 = vmatprep.mubr.bf16.mxu0 0
    %4534 = vmatmul.mubr.bf16.gmra.mrb[0].mxu0 %v4496
    %v4535 = vpop.f32.mrb[0].mxu0
    %v4536 = vadd.f32 0.0, %v4535
    %v4537 = vpop.f32.mrb[0].mxu0
    %v4538 = vpop.f32.mrb[0].mxu0
    %v4539 = vpop.f32.mrb[0].mxu0
    %4540 = vdwg.mxu0
    %4541 = vrot.lane.b32.xlu0 %v2819, 64
    %v4542 = vpop.permute.xlu0 %4541
    %v4544 = vsel %vm335, %v3820, 0
    %v4547 = vsel %vm1338, %v4542, 0
    %4549 = vmatprep.subr.bf16.mxu0 0
    %4550 = vmatpush1.bf16.msra.mxu0 %v4547
    %4551 = vmatprep.subr.bf16.mxu0 0
    %4552 = vmatpush1.bf16.msra.mxu0 0
    %4553 = vmatprep.subr.bf16.mxu0 0
    %4554 = vmatpush1.bf16.msra.mxu0 0
    %4555 = vmatprep.subr.bf16.mxu0 0
    %4556 = vmatpush1.bf16.msra.mxu0 0
    %4557 = vmatprep.subr.bf16.mxu0 0
    %4558 = vmatpush1.bf16.msra.mxu0 0
    %4559 = vmatprep.subr.bf16.mxu0 0
    %4560 = vmatpush1.bf16.msra.mxu0 0
    %4561 = vmatprep.subr.bf16.mxu0 0
    %4562 = vmatpush1.bf16.msra.mxu0 0
    %4563 = vmatprep.subr.bf16.mxu0 0
    %4564 = vmatpush1.bf16.msra.mxu0 0
    %4565 = vmatprep.subr.bf16.mxu0 0
    %4566 = vmatpush1.bf16.msra.mxu0 0
    %4567 = vmatprep.subr.bf16.mxu0 0
    %4568 = vmatpush1.bf16.msra.mxu0 0
    %4569 = vmatprep.subr.bf16.mxu0 0
    %4570 = vmatpush1.bf16.msra.mxu0 0
    %4571 = vmatprep.subr.bf16.mxu0 0
    %4572 = vmatpush1.bf16.msra.mxu0 0
    %4573 = vmatprep.subr.bf16.mxu0 0
    %4574 = vmatpush1.bf16.msra.mxu0 0
    %4575 = vmatprep.subr.bf16.mxu0 0
    %4576 = vmatpush1.bf16.msra.mxu0 0
    %4577 = vmatprep.subr.bf16.mxu0 0
    %4578 = vmatpush1.bf16.msra.mxu0 0
    %4579 = vmatprep.subr.bf16.mxu0 0
    %4580 = vmatpush1.bf16.msra.mxu0 0
    %4581 = vmatprep.mubr.bf16.mxu0 0
    %4582 = vmatmul.mubr.bf16.gmra.mrb[0].mxu0 %v4544
    %v4583 = vpop.f32.mrb[0].mxu0
    %v4584 = vadd.f32 0.0, %v4583
    %v4585 = vpop.f32.mrb[0].mxu0
    %v4586 = vpop.f32.mrb[0].mxu0
    %v4587 = vpop.f32.mrb[0].mxu0
    %4588 = vdwg.mxu0
    %4593 = vrot.lane.b32.xlu0 %v4056, 8
    %v4594 = vpop.permute.xlu0 %4593
    %4595 = vrot.lane.b32.xlu0 %v4104, 8
    %v4596 = vpop.permute.xlu0 %4595
    %4597 = vrot.lane.b32.xlu0 %v4152, 8
    %v4598 = vpop.permute.xlu0 %4597
    %4599 = vrot.lane.b32.xlu0 %v4200, 8
    %v4600 = vpop.permute.xlu0 %4599
    %4609 = vrot.lane.b32.xlu0 %v4248, 16
    %v4610 = vpop.permute.xlu0 %4609
    %4611 = vrot.lane.b32.xlu0 %v4296, 16
    %v4612 = vpop.permute.xlu0 %4611
    %4613 = vrot.lane.b32.xlu0 %v4344, 16
    %v4614 = vpop.permute.xlu0 %4613
    %4615 = vrot.lane.b32.xlu0 %v4392, 16
    %v4616 = vpop.permute.xlu0 %4615
    %4625 = vrot.lane.b32.xlu0 %v4440, 24
    %v4626 = vpop.permute.xlu0 %4625
    %4627 = vrot.lane.b32.xlu0 %v4488, 24
    %v4628 = vpop.permute.xlu0 %4627
    %4629 = vrot.lane.b32.xlu0 %v4536, 24
    %v4630 = vpop.permute.xlu0 %4629
    %4631 = vrot.lane.b32.xlu0 %v4584, 24
    %v4632 = vpop.permute.xlu0 %4631
    %v4637 = vsel %vm335, %v3864, %v4594
    %v4638 = vsel %vm335, %v3912, %v4596
    %v4639 = vsel %vm335, %v3960, %v4598
    %v4640 = vsel %vm335, %v4008, %v4600
    %v4641 = vsel %vm2154, %v4637, %v4610
    %v4642 = vsel %vm2154, %v4638, %v4612
    %v4643 = vsel %vm2154, %v4639, %v4614
    %v4644 = vsel %vm2154, %v4640, %v4616
    %v4645 = vsel %vm2159, %v4641, %v4626
    %v4646 = vsel %vm2159, %v4642, %v4628
    %v4647 = vsel %vm2159, %v4643, %v4630
    %v4648 = vsel %vm2159, %v4644, %v4632
    %v4649 = vpack.c.bf16 %v4646, %v4645
    %v4650 = vpack.c.bf16 %v4648, %v4647
    %s4651 = scalar_lea.vmem [#allocation5], 16
    %v4652 = vld [vmem:[%s4651] sm:$0xf]
    %v4653 = vld [vmem:[%s4651 + $0x4] sm:$0xf]
    %v4654 = vld [vmem:[%s4651 + $0x8] sm:$0xf]
    %v4655 = vld [vmem:[%s4651 + $0xc] sm:$0xf]
    %s4656 = scalar_lea.vmem %s7, 1
    %v4657 = vld [vmem:[%s4656] sm:$0x1]
    %v4659 = vlaneseq
    %v4660 = vshrl.u32 %v4659, 7
    %v4661 = vsub.s32 0, %v4660
    %v4662 = vrot.slane %v4657, %v4661
    %v4668 = vunpack.c.l.b16 %v4652
    %v4669 = vunpack.c.l.b16 %v4653
    %v4670 = vunpack.c.l.b16 %v4654
    %v4671 = vunpack.c.l.b16 %v4655
    %v4672 = vpack.c.b16 %v4669, %v4668
    %v4673 = vpack.c.b16 %v4671, %v4670
    %v4677 = vsel %vm110, %v4649, 0
    %v4680 = vsel %vm110, %v4650, 0
    %4682 = vmatprep.subr.bf16.mxu0 0
    %4683 = vmatpush1.bf16.msra.mxu0 %v4672
    %4684 = vmatprep.subr.bf16.mxu0 0
    %4685 = vmatpush1.bf16.msra.mxu0 %v4673
    %4686 = vmatprep.subr.bf16.mxu0 0
    %4687 = vmatpush1.bf16.msra.mxu0 0
    %4688 = vmatprep.subr.bf16.mxu0 0
    %4689 = vmatpush1.bf16.msra.mxu0 0
    %4690 = vmatprep.subr.bf16.mxu0 0
    %4691 = vmatpush1.bf16.msra.mxu0 0
    %4692 = vmatprep.subr.bf16.mxu0 0
    %4693 = vmatpush1.bf16.msra.mxu0 0
    %4694 = vmatprep.subr.bf16.mxu0 0
    %4695 = vmatpush1.bf16.msra.mxu0 0
    %4696 = vmatprep.subr.bf16.mxu0 0
    %4697 = vmatpush1.bf16.msra.mxu0 0
    %4698 = vmatprep.subr.bf16.mxu0 0
    %4699 = vmatpush1.bf16.msra.mxu0 0
    %4700 = vmatprep.subr.bf16.mxu0 0
    %4701 = vmatpush1.bf16.msra.mxu0 0
    %4702 = vmatprep.subr.bf16.mxu0 0
    %4703 = vmatpush1.bf16.msra.mxu0 0
    %4704 = vmatprep.subr.bf16.mxu0 0
    %4705 = vmatpush1.bf16.msra.mxu0 0
    %4706 = vmatprep.subr.bf16.mxu0 0
    %4707 = vmatpush1.bf16.msra.mxu0 0
    %4708 = vmatprep.subr.bf16.mxu0 0
    %4709 = vmatpush1.bf16.msra.mxu0 0
    %4710 = vmatprep.subr.bf16.mxu0 0
    %4711 = vmatpush1.bf16.msra.mxu0 0
    %4712 = vmatprep.subr.bf16.mxu0 0
    %4713 = vmatpush1.bf16.msra.mxu0 0
    %4714 = vmatprep.mubr.bf16.mxu0 0
    %4715 = vmatmul.mubr.bf16.gmra.mrb[0].mxu0 %v4677
    %v4716 = vpop.f32.mrb[0].mxu0
    %v4717 = vadd.f32 %v4662, %v4716
    %v4718 = vpop.f32.mrb[0].mxu0
    %v4719 = vpop.f32.mrb[0].mxu0
    %v4720 = vadd.f32 %v4662, %v4719
    %v4721 = vpop.f32.mrb[0].mxu0
    %4722 = vmatprep.mubr.bf16.mxu0 0
    %4723 = vmatmul.mubr.bf16.gmra.mrb[0].mxu0 %v4680
    %v4724 = vpop.f32.mrb[0].mxu0
    %v4725 = vadd.f32 %v4662, %v4724
    %v4726 = vpop.f32.mrb[0].mxu0
    %v4727 = vpop.f32.mrb[0].mxu0
    %v4728 = vadd.f32 %v4662, %v4727
    %v4729 = vpop.f32.mrb[0].mxu0
    %4730 = vdwg.mxu0
    %v4733 = vrot.slane %v4720, 4
    %v4734 = vrot.slane %v4728, 4
    %v4739 = vrot.slane %v4717, 4
    %v4740 = vsel %vm1338, %v4739, %v4733
    %v4741 = vrot.slane %v4725, 4
    %v4742 = vsel %vm1338, %v4741, %v4734
    %v4747 = vsel %vm1338, %v4733, %v4739
    %v4748 = vsel %vm1338, %v4734, %v4741
    %v4749 = vadd.f32 %v2572, %v4747
    %v4750 = vadd.f32 %v2573, %v4740
    %v4751 = vadd.f32 %v2574, %v4748
    %v4752 = vadd.f32 %v2575, %v4742
    %s4753 = scalar_lea.vmem %s8, 1
    %v4754 = vld [vmem:[%s4753] sm:$0x1]
    %s4755 = scalar_lea.vmem %s9, 1
    %v4756 = vld [vmem:[%s4755] sm:$0x1]
    %v4757 = vsel %vm110, %v4749, 0.0
    %4758 = vadd.xlane.f32.xlu0 %v4757
    %v4759 = vpop.xlane.xlu0 %4758
    %v4760 = vsel %vm110, %v4750, 0.0
    %4761 = vadd.xlane.f32.xlu0 %v4760
    %v4762 = vpop.xlane.xlu0 %4761
    %v4763 = vsel %vm110, %v4751, 0.0
    %4764 = vadd.xlane.f32.xlu0 %v4763
    %v4765 = vpop.xlane.xlu0 %4764
    %v4766 = vsel %vm110, %v4752, 0.0
    %4767 = vadd.xlane.f32.xlu0 %v4766
    %v4768 = vpop.xlane.xlu0 %4767
    %v4769 = vmul.f32 %v4759, %v123
    %v4770 = vmul.f32 %v4762, %v123
    %v4771 = vmul.f32 %v4765, %v123
    %v4772 = vmul.f32 %v4768, %v123
    %v4773 = vmul.f32 %v4749, %v4749
    %v4774 = vmul.f32 %v4750, %v4750
    %v4775 = vmul.f32 %v4751, %v4751
    %v4776 = vmul.f32 %v4752, %v4752
    %v4777 = vsel %vm110, %v4773, 0.0
    %4778 = vadd.xlane.f32.xlu0 %v4777
    %v4779 = vpop.xlane.xlu0 %4778
    %v4780 = vsel %vm110, %v4774, 0.0
    %4781 = vadd.xlane.f32.xlu0 %v4780
    %v4782 = vpop.xlane.xlu0 %4781
    %v4783 = vsel %vm110, %v4775, 0.0
    %4784 = vadd.xlane.f32.xlu0 %v4783
    %v4785 = vpop.xlane.xlu0 %4784
    %v4786 = vsel %vm110, %v4776, 0.0
    %4787 = vadd.xlane.f32.xlu0 %v4786
    %v4788 = vpop.xlane.xlu0 %4787
    %v4789 = vmul.f32 %v4779, %v123
    %v4790 = vmul.f32 %v4782, %v123
    %v4791 = vmul.f32 %v4785, %v123
    %v4792 = vmul.f32 %v4788, %v123
    %v4793 = vmul.f32 %v4769, %v4769
    %v4794 = vmul.f32 %v4770, %v4770
    %v4795 = vmul.f32 %v4771, %v4771
    %v4796 = vmul.f32 %v4772, %v4772
    %v4797 = vsub.f32 %v4789, %v4793
    %v4798 = vsub.f32 %v4790, %v4794
    %v4799 = vsub.f32 %v4791, %v4795
    %v4800 = vsub.f32 %v4792, %v4796
    %v4801 = vmax.f32 %v4797, 0.0
    %v4802 = vmax.f32 %v4798, 0.0
    %v4803 = vmax.f32 %v4799, 0.0
    %v4804 = vmax.f32 %v4800, 0.0
    %v4805 = vsub.f32 %v4749, %v4769
    %v4806 = vsub.f32 %v4750, %v4770
    %v4807 = vsub.f32 %v4751, %v4771
    %v4808 = vsub.f32 %v4752, %v4772
    %v4809 = vadd.f32 %v4801, 1e-05
    %v4810 = vadd.f32 %v4802, 1e-05
    %v4811 = vadd.f32 %v4803, 1e-05
    %v4812 = vadd.f32 %v4804, 1e-05
    %v4813 = vrsqrt.pop %v4809
    %v4814 = vrsqrt.pop %v4810
    %v4815 = vrsqrt.pop %v4811
    %v4816 = vrsqrt.pop %v4812
    %v4817 = vmul.f32 %v4805, %v4813
    %v4818 = vmul.f32 %v4806, %v4814
    %v4819 = vmul.f32 %v4807, %v4815
    %v4820 = vmul.f32 %v4808, %v4816
    %v4822 = vlaneseq
    %v4823 = vshrl.u32 %v4822, 7
    %v4824 = vsub.s32 0, %v4823
    %v4825 = vrot.slane %v4754, %v4824
    %v4827 = vmul.f32 %v4817, %v4825
    %v4828 = vmul.f32 %v4818, %v4825
    %v4829 = vmul.f32 %v4819, %v4825
    %v4830 = vmul.f32 %v4820, %v4825
    %v4832 = vlaneseq
    %v4833 = vshrl.u32 %v4832, 7
    %v4834 = vsub.s32 0, %v4833
    %v4835 = vrot.slane %v4756, %v4834
    %v4837 = vadd.f32 %v4827, %v4835
    %v4838 = vadd.f32 %v4828, %v4835
    %v4839 = vadd.f32 %v4829, %v4835
    %v4840 = vadd.f32 %v4830, %v4835
    %v4841 = vpack.c.bf16 %v4838, %v4837
    %v4842 = vpack.c.bf16 %v4840, %v4839
    %s4843 = scalar_lea.vmem [#allocation7], 16
    %v4844 = vld [vmem:[%s4843] sm:$0xf]
    %v4845 = vld [vmem:[%s4843 + $0x4] sm:$0xf]
    %v4846 = vld [vmem:[%s4843 + $0x8] sm:$0xf]
    %v4847 = vld [vmem:[%s4843 + $0xc] sm:$0xf]
    %s4848 = scalar_lea.vmem [#allocation8], 1
    %v4849 = vld [vmem:[%s4848] sm:$0x1]
    %v4851 = vlaneseq
    %v4852 = vshrl.u32 %v4851, 7
    %v4853 = vsub.s32 0, %v4852
    %v4854 = vrot.slane %v4849, %v4853
    %v4860 = vunpack.c.l.b16 %v4844
    %v4861 = vunpack.c.l.b16 %v4845
    %v4862 = vunpack.c.l.b16 %v4846
    %v4863 = vunpack.c.l.b16 %v4847
    %v4864 = vpack.c.b16 %v4861, %v4860
    %v4865 = vpack.c.b16 %v4863, %v4862
    %v4869 = vsel %vm110, %v4841, 0
    %v4872 = vsel %vm110, %v4842, 0
    %4874 = vmatprep.subr.bf16.mxu0 0
    %4875 = vmatpush1.bf16.msra.mxu0 %v4864
    %4876 = vmatprep.subr.bf16.mxu0 0
    %4877 = vmatpush1.bf16.msra.mxu0 %v4865
    %4878 = vmatprep.subr.bf16.mxu0 0
    %4879 = vmatpush1.bf16.msra.mxu0 0
    %4880 = vmatprep.subr.bf16.mxu0 0
    %4881 = vmatpush1.bf16.msra.mxu0 0
    %4882 = vmatprep.subr.bf16.mxu0 0
    %4883 = vmatpush1.bf16.msra.mxu0 0
    %4884 = vmatprep.subr.bf16.mxu0 0
    %4885 = vmatpush1.bf16.msra.mxu0 0
    %4886 = vmatprep.subr.bf16.mxu0 0
    %4887 = vmatpush1.bf16.msra.mxu0 0
    %4888 = vmatprep.subr.bf16.mxu0 0
    %4889 = vmatpush1.bf16.msra.mxu0 0
    %4890 = vmatprep.subr.bf16.mxu0 0
    %4891 = vmatpush1.bf16.msra.mxu0 0
    %4892 = vmatprep.subr.bf16.mxu0 0
    %4893 = vmatpush1.bf16.msra.mxu0 0
    %4894 = vmatprep.subr.bf16.mxu0 0
    %4895 = vmatpush1.bf16.msra.mxu0 0
    %4896 = vmatprep.subr.bf16.mxu0 0
    %4897 = vmatpush1.bf16.msra.mxu0 0
    %4898 = vmatprep.subr.bf16.mxu0 0
    %4899 = vmatpush1.bf16.msra.mxu0 0
    %4900 = vmatprep.subr.bf16.mxu0 0
    %4901 = vmatpush1.bf16.msra.mxu0 0
    %4902 = vmatprep.subr.bf16.mxu0 0
    %4903 = vmatpush1.bf16.msra.mxu0 0
    %4904 = vmatprep.subr.bf16.mxu0 0
    %4905 = vmatpush1.bf16.msra.mxu0 0
    %4906 = vmatprep.mubr.bf16.mxu0 0
    %4907 = vmatmul.mubr.bf16.gmra.mrb[0].mxu0 %v4869
    %v4908 = vpop.f32.mrb[0].mxu0
    %v4909 = vadd.f32 %v4854, %v4908
    %v4910 = vpop.f32.mrb[0].mxu0
    %v4911 = vpop.f32.mrb[0].mxu0
    %v4912 = vadd.f32 %v4854, %v4911
    %v4913 = vpop.f32.mrb[0].mxu0
    %4914 = vmatprep.mubr.bf16.mxu0 0
    %4915 = vmatmul.mubr.bf16.gmra.mrb[0].mxu0 %v4872
    %v4916 = vpop.f32.mrb[0].mxu0
    %v4917 = vadd.f32 %v4854, %v4916
    %v4918 = vpop.f32.mrb[0].mxu0
    %v4919 = vpop.f32.mrb[0].mxu0
    %v4920 = vadd.f32 %v4854, %v4919
    %v4921 = vpop.f32.mrb[0].mxu0
    %4922 = vdwg.mxu0
    %v4923 = vmul.f32 %v4909, 0.5
    %v4924 = vmul.f32 %v4912, 0.5
    %v4925 = vmul.f32 %v4917, 0.5
    %v4926 = vmul.f32 %v4920, 0.5
    %v4927 = vmul.f32 %v4909, 0.044715
    %v4928 = vmul.f32 %v4912, 0.044715
    %v4929 = vmul.f32 %v4917, 0.044715
    %v4930 = vmul.f32 %v4920, 0.044715
    %v4931 = vmul.f32 %v4927, %v4909
    %v4932 = vmul.f32 %v4928, %v4912
    %v4933 = vmul.f32 %v4929, %v4917
    %v4934 = vmul.f32 %v4930, %v4920
    %v4935 = vmul.f32 %v4931, %v4909
    %v4936 = vmul.f32 %v4932, %v4912
    %v4937 = vmul.f32 %v4933, %v4917
    %v4938 = vmul.f32 %v4934, %v4920
    %v4939 = vadd.f32 %v4909, %v4935
    %v4940 = vadd.f32 %v4912, %v4936
    %v4941 = vadd.f32 %v4917, %v4937
    %v4942 = vadd.f32 %v4920, %v4938
    %v4943 = vmul.f32 %v4939, 0.7978846
    %v4944 = vmul.f32 %v4940, 0.7978846
    %v4945 = vmul.f32 %v4941, 0.7978846
    %v4946 = vmul.f32 %v4942, 0.7978846
    %v4947 = vtanh.pop %v4943
    %v4948 = vtanh.pop %v4944
    %v4949 = vtanh.pop %v4945
    %v4950 = vtanh.pop %v4946
    %v4951 = vadd.f32 %v4947, 1.0
    %v4952 = vadd.f32 %v4948, 1.0
    %v4953 = vadd.f32 %v4949, 1.0
    %v4954 = vadd.f32 %v4950, 1.0
    %v4955 = vmul.f32 %v4923, %v4951
    %v4956 = vmul.f32 %v4924, %v4952
    %v4957 = vmul.f32 %v4925, %v4953
    %v4958 = vmul.f32 %v4926, %v4954
    %v4959 = vpack.c.bf16 %v4956, %v4955
    %v4960 = vpack.c.bf16 %v4958, %v4957
    %s4961 = scalar_lea.vmem %s12, 64
    %v4962 = vld [vmem:[%s4961] sm:$0xf]
    %v4963 = vld [vmem:[%s4961 + $0x4] sm:$0xf]
    %v4964 = vld [vmem:[%s4961 + $0x8] sm:$0xf]
    %v4965 = vld [vmem:[%s4961 + $0xc] sm:$0xf]
    %v4966 = vld [vmem:[%s4961 + $0x10] sm:$0xf]
    %v4967 = vld [vmem:[%s4961 + $0x14] sm:$0xf]
    %v4968 = vld [vmem:[%s4961 + $0x18] sm:$0xf]
    %v4969 = vld [vmem:[%s4961 + $0x1c] sm:$0xf]
    %v4970 = vld [vmem:[%s4961 + $0x20] sm:$0xf]
    %v4971 = vld [vmem:[%s4961 + $0x24] sm:$0xf]
    %v4972 = vld [vmem:[%s4961 + $0x28] sm:$0xf]
    %v4973 = vld [vmem:[%s4961 + $0x2c] sm:$0xf]
    %v4974 = vld [vmem:[%s4961 + $0x30] sm:$0xf]
    %v4975 = vld [vmem:[%s4961 + $0x34] sm:$0xf]
    %v4976 = vld [vmem:[%s4961 + $0x38] sm:$0xf]
    %v4977 = vld [vmem:[%s4961 + $0x3c] sm:$0xf]
    %s4978 = scalar_lea.vmem %s13, 1
    %v4979 = vld [vmem:[%s4978] sm:$0x1]
    %v4981 = vlaneseq
    %v4982 = vshrl.u32 %v4981, 7
    %v4983 = vsub.s32 0, %v4982
    %v4984 = vrot.slane %v4979, %v4983
    %v5002 = vunpack.c.l.b16 %v4962
    %v5003 = vunpack.c.l.b16 %v4963
    %v5004 = vunpack.c.l.b16 %v4964
    %v5005 = vunpack.c.l.b16 %v4965
    %v5006 = vunpack.c.l.b16 %v4966
    %v5007 = vunpack.c.l.b16 %v4967
    %v5008 = vunpack.c.l.b16 %v4968
    %v5009 = vunpack.c.l.b16 %v4969
    %v5010 = vunpack.c.l.b16 %v4970
    %v5011 = vunpack.c.l.b16 %v4971
    %v5012 = vunpack.c.l.b16 %v4972
    %v5013 = vunpack.c.l.b16 %v4973
    %v5014 = vunpack.c.l.b16 %v4974
    %v5015 = vunpack.c.l.b16 %v4975
    %v5016 = vunpack.c.l.b16 %v4976
    %v5017 = vunpack.c.l.b16 %v4977
    %v5018 = vpack.c.b16 %v5003, %v5002
    %v5019 = vpack.c.b16 %v5005, %v5004
    %v5020 = vpack.c.b16 %v5007, %v5006
    %v5021 = vpack.c.b16 %v5009, %v5008
    %v5022 = vpack.c.b16 %v5011, %v5010
    %v5023 = vpack.c.b16 %v5013, %v5012
    %v5024 = vpack.c.b16 %v5015, %v5014
    %v5025 = vpack.c.b16 %v5017, %v5016
    %5034 = vmatprep.subr.bf16.mxu0 0
    %5035 = vmatpush1.bf16.msra.mxu0 %v5018
    %5036 = vmatprep.subr.bf16.mxu0 0
    %5037 = vmatpush1.bf16.msra.mxu0 %v5019
    %5038 = vmatprep.subr.bf16.mxu0 0
    %5039 = vmatpush1.bf16.msra.mxu0 %v5020
    %5040 = vmatprep.subr.bf16.mxu0 0
    %5041 = vmatpush1.bf16.msra.mxu0 %v5021
    %5042 = vmatprep.subr.bf16.mxu0 0
    %5043 = vmatpush1.bf16.msra.mxu0 %v5022
    %5044 = vmatprep.subr.bf16.mxu0 0
    %5045 = vmatpush1.bf16.msra.mxu0 %v5023
    %5046 = vmatprep.subr.bf16.mxu0 0
    %5047 = vmatpush1.bf16.msra.mxu0 %v5024
    %5048 = vmatprep.subr.bf16.mxu0 0
    %5049 = vmatpush1.bf16.msra.mxu0 %v5025
    %5050 = vmatprep.subr.bf16.mxu0 0
    %5051 = vmatpush1.bf16.msra.mxu0 0
    %5052 = vmatprep.subr.bf16.mxu0 0
    %5053 = vmatpush1.bf16.msra.mxu0 0
    %5054 = vmatprep.subr.bf16.mxu0 0
    %5055 = vmatpush1.bf16.msra.mxu0 0
    %5056 = vmatprep.subr.bf16.mxu0 0
    %5057 = vmatpush1.bf16.msra.mxu0 0
    %5058 = vmatprep.subr.bf16.mxu0 0
    %5059 = vmatpush1.bf16.msra.mxu0 0
    %5060 = vmatprep.subr.bf16.mxu0 0
    %5061 = vmatpush1.bf16.msra.mxu0 0
    %5062 = vmatprep.subr.bf16.mxu0 0
    %5063 = vmatpush1.bf16.msra.mxu0 0
    %5064 = vmatprep.subr.bf16.mxu0 0
    %5065 = vmatpush1.bf16.msra.mxu0 0
    %5066 = vmatprep.mubr.bf16.mxu0 0
    %5067 = vmatmul.mubr.bf16.gmra.mrb[0].mxu0 %v4959
    %v5068 = vpop.f32.mrb[0].mxu0
    %v5069 = vadd.f32 %v4984, %v5068
    %v5070 = vpop.f32.mrb[0].mxu0
    %v5071 = vpop.f32.mrb[0].mxu0
    %v5072 = vadd.f32 %v4984, %v5071
    %v5073 = vpop.f32.mrb[0].mxu0
    %5074 = vmatprep.mubr.bf16.mxu0 0
    %5075 = vmatmul.mubr.bf16.gmra.mrb[0].mxu0 %v4960
    %v5076 = vpop.f32.mrb[0].mxu0
    %v5077 = vadd.f32 %v4984, %v5076
    %v5078 = vpop.f32.mrb[0].mxu0
    %v5079 = vpop.f32.mrb[0].mxu0
    %v5080 = vadd.f32 %v4984, %v5079
    %v5081 = vpop.f32.mrb[0].mxu0
    %5082 = vdwg.mxu0
    %v5083 = vadd.f32 %v4749, %v5069
    %v5084 = vadd.f32 %v4750, %v5072
    %v5085 = vadd.f32 %v4751, %v5077
    %v5086 = vadd.f32 %v4752, %v5080
    %5087 = vst.msk [vmem:[#allocation10] sm:$0xff] %vm110, %v5083
    %5088 = vst.msk [vmem:[#allocation10 + $0x8] sm:$0xff] %vm110, %v5084
    %5089 = vst.msk [vmem:[#allocation10 + $0x10] sm:$0xff] %vm110, %v5085
    %5090 = vst.msk [vmem:[#allocation10 + $0x18] sm:$0xff] %vm110, %v5086
    // Predicated region
    $region74: #{tpu_custom_call.1} parent=1 // pred_check
      _
    $region75: #{tpu_custom_call.1} parent=1 // pred_check_branch
      %5092 = sbr.rel (0) target = $region77
    $region76: #{tpu_custom_call.1} parent=1 // pred_region
      %s5094 = ssub.s32 512, 512
      %5095 = vsyncadd [#allocation4], %s5094
      %s5096 = sshll.u32 [#allocation10], 4
      %s5097 = int_to_ptr.vmem [resolvable:$true] %s5096
      %5102 = dma.vmem_to_hbm [thread:$0]  %s5097, 512, %s14, [#allocation4], 128, 128, 8
    $region77: #{tpu_custom_call.1} parent=1 // pred_fallthru
      _
    // Predicated region
    $region78: #{tpu_custom_call.1} parent=1 // pred_check
      _
    $region79: #{tpu_custom_call.1} parent=1 // pred_check_branch
      %5104 = sbr.rel (0) target = $region81
    $region80: #{tpu_custom_call.1} parent=1 // pred_region
      %5105 = dma.done [#allocation4], 512
    $region81: #{tpu_custom_call.1} parent=1 // pred_fallthru
      _
    %5106 = vsyncpa [#allocation3], 1
    %5107 = vsyncpa [#allocation6], 1
    %5108 = vsyncpa [#allocation9], 1
    %5109 = vsyncpa [#allocation4], 1

// kernel: tpu_custom_call.1
$region0: #{tpu_custom_call.1}
  #allocation0 [shape = 'u32[]', space=smem, size = 0x4, offset = 0x4, fixed_abs, tag = 'smem constant byte address 0x4 - core index']
  #allocation1 [shape = 'u32[144,128]{1,0:T(1,128)}', space=vmem, size = 0x12000, scoped, tag = 'internal scratch']
  %s0 = inlined_call_operand.vmem [shape: f32[32,32], index: 0, kind: input, shape index: {}]
  %s1 = inlined_call_operand.vmem [shape: f32[2,4,2,8,8], index: 1, kind: input, shape index: {}]
  %s2 = inlined_call_operand.vmem [shape: f32[2,1,32], index: 2, kind: input, shape index: {}]
  %s3 = inlined_call_operand.vmem [shape: f32[2,1,32], index: 3, kind: input, shape index: {}]
  %s4 = inlined_call_operand.hbm [shape: bf16[2,32,96], index: 4, kind: input, shape index: {}]
  %s5 = inlined_call_operand.vmem [shape: f32[2,1,96], index: 5, kind: input, shape index: {}]
  %s6 = inlined_call_operand.hbm [shape: bf16[2,32,32], index: 6, kind: input, shape index: {}]
  %s7 = inlined_call_operand.vmem [shape: f32[2,1,32], index: 7, kind: input, shape index: {}]
  %s8 = inlined_call_operand.vmem [shape: f32[2,1,32], index: 8, kind: input, shape index: {}]
  %s9 = inlined_call_operand.vmem [shape: f32[2,1,32], index: 9, kind: input, shape index: {}]
  %s10 = inlined_call_operand.hbm [shape: bf16[2,32,128], index: 10, kind: input, shape index: {}]
  %s11 = inlined_call_operand.hbm [shape: f32[2,1,128], index: 11, kind: input, shape index: {}]
  %s12 = inlined_call_operand.vmem [shape: bf16[2,128,32], index: 12, kind: input, shape index: {}]
  %s13 = inlined_call_operand.vmem [shape: f32[2,1,32], index: 13, kind: input, shape index: {}]
  %s14 = inlined_call_operand.hbm [shape: f32[32,32], index: 14, kind: output, shape index: {}]
  %s15 = sld [smem:[#allocation0]]
  $region82: #{tpu_custom_call.1} parent=0
    _
  %s17 = ssub.s32 1, %s15
  %s18 = scalar_select 0, %s17, %s15
  $region1: #{tpu_custom_call.1} parent=0
    #allocation2 [shape = 'u8[16384]{0}', space=vmem, size = 0x4000, scoped, tag = 'input window, operand 4, single buffered']
    #allocation3 [shape = 's32[1]{0}', space=sflag, size = 0x4, scoped, tag = 'scoped memory for tpu_custom_call.1']
    #allocation4 [shape = 's32[1]{0}', space=sflag, size = 0x4, scoped, tag = 'scoped memory for tpu_custom_call.1']
    #allocation5 [shape = 'u8[16384]{0}', space=vmem, size = 0x4000, scoped, tag = 'input window, operand 6, single buffered']
    #allocation6 [shape = 's32[1]{0}', space=sflag, size = 0x4, scoped, tag = 'scoped memory for tpu_custom_call.1']
    #allocation7 [shape = 'u8[16384]{0}', space=vmem, size = 0x4000, scoped, tag = 'input window, operand 10, single buffered']
    #allocation8 [shape = 'u8[1024]{0}', space=vmem, size = 0x400, scoped, tag = 'input window, operand 11, single buffered']
    #allocation9 [shape = 's32[1]{0}', space=sflag, size = 0x4, scoped, tag = 'scoped memory for tpu_custom_call.1']
    #allocation10 [shape = 'u8[16384]{0}', space=vmem, size = 0x4000, scoped, tag = 'output window, operand 0, single buffered']
    %19 = vsyncpa [#allocation3], 0
    %20 = vsyncpa [#allocation6], 0
    %21 = vsyncpa [#allocation9], 0
    %22 = vsyncpa [#allocation4], 0
    // Predicated region
    $region2: #{tpu_custom_call.1} parent=1 // pred_check
      _
    $region3: #{tpu_custom_call.1} parent=1 // pred_check_branch
      %24 = sbr.rel (0) target = $region5
    $region4: #{tpu_custom_call.1} parent=1 // pred_region
      _
    $region5: #{tpu_custom_call.1} parent=1 // pred_fallthru
      _
    // Predicated region
    $region6: #{tpu_custom_call.1} parent=1 // pred_check
      _
    $region7: #{tpu_custom_call.1} parent=1 // pred_check_branch
      %26 = sbr.rel (0) target = $region9
    $region8: #{tpu_custom_call.1} parent=1 // pred_region
      _
    $region9: #{tpu_custom_call.1} parent=1 // pred_fallthru
      _
    // Predicated region
    $region10: #{tpu_custom_call.1} parent=1 // pred_check
      _
    $region11: #{tpu_custom_call.1} parent=1 // pred_check_branch
      %28 = sbr.rel (0) target = $region13
    $region12: #{tpu_custom_call.1} parent=1 // pred_region
      _
    $region13: #{tpu_custom_call.1} parent=1 // pred_fallthru
      _
    // Predicated region
    $region14: #{tpu_custom_call.1} parent=1 // pred_check
      _
    $region15: #{tpu_custom_call.1} parent=1 // pred_check_branch
      %30 = sbr.rel (0) target = $region17
    $region16: #{tpu_custom_call.1} parent=1 // pred_region
      _
    $region17: #{tpu_custom_call.1} parent=1 // pred_fallthru
      _
    // Predicated region
    $region18: #{tpu_custom_call.1} parent=1 // pred_check
      _
    $region19: #{tpu_custom_call.1} parent=1 // pred_check_branch
      %32 = sbr.rel (0) target = $region21
    $region20: #{tpu_custom_call.1} parent=1 // pred_region
      %s34 = ssub.s32 512, 512
      %35 = vsyncadd [#allocation3], %s34
      %s36 = sshll.u32 [#allocation2], 4
      %s37 = int_to_ptr.vmem [resolvable:$true] %s36
      %42 = dma.hbm_to_vmem [thread:$0]  %s4, 512, %s37, [#allocation3], 64, 64, 4
    $region21: #{tpu_custom_call.1} parent=1 // pred_fallthru
      _
    // Predicated region
    $region22: #{tpu_custom_call.1} parent=1 // pred_check
      _
    $region23: #{tpu_custom_call.1} parent=1 // pred_check_branch
      %44 = sbr.rel (0) target = $region25
    $region24: #{tpu_custom_call.1} parent=1 // pred_region
      _
    $region25: #{tpu_custom_call.1} parent=1 // pred_fallthru
      _
    // Predicated region
    $region26: #{tpu_custom_call.1} parent=1 // pred_check
      _
    $region27: #{tpu_custom_call.1} parent=1 // pred_check_branch
      %46 = sbr.rel (0) target = $region29
    $region28: #{tpu_custom_call.1} parent=1 // pred_region
      %s48 = ssub.s32 512, 512
      %49 = vsyncadd [#allocation6], %s48
      %s50 = sshll.u32 [#allocation5], 4
      %s51 = int_to_ptr.vmem [resolvable:$true] %s50
      %56 = dma.hbm_to_vmem [thread:$0]  %s6, 512, %s51, [#allocation6], 64, 64, 4
    $region29: #{tpu_custom_call.1} parent=1 // pred_fallthru
      _
    // Predicated region
    $region30: #{tpu_custom_call.1} parent=1 // pred_check
      _
    $region31: #{tpu_custom_call.1} parent=1 // pred_check_branch
      %58 = sbr.rel (0) target = $region33
    $region32: #{tpu_custom_call.1} parent=1 // pred_region
      _
    $region33: #{tpu_custom_call.1} parent=1 // pred_fallthru
      _
    // Predicated region
    $region34: #{tpu_custom_call.1} parent=1 // pred_check
      _
    $region35: #{tpu_custom_call.1} parent=1 // pred_check_branch
      %60 = sbr.rel (0) target = $region37
    $region36: #{tpu_custom_call.1} parent=1 // pred_region
      _
    $region37: #{tpu_custom_call.1} parent=1 // pred_fallthru
      _
    // Predicated region
    $region38: #{tpu_custom_call.1} parent=1 // pred_check
      _
    $region39: #{tpu_custom_call.1} parent=1 // pred_check_branch
      %62 = sbr.rel (0) target = $region41
    $region40: #{tpu_custom_call.1} parent=1 // pred_region
      _
    $region41: #{tpu_custom_call.1} parent=1 // pred_fallthru
      _
    // Predicated region
    $region42: #{tpu_custom_call.1} parent=1 // pred_check
      _
    $region43: #{tpu_custom_call.1} parent=1 // pred_check_branch
      %64 = sbr.rel (0) target = $region45
    $region44: #{tpu_custom_call.1} parent=1 // pred_region
      %s66 = ssub.s32 512, 512
      %67 = vsyncadd [#allocation6], %s66
      %s68 = sshll.u32 [#allocation7], 4
      %s69 = int_to_ptr.vmem [resolvable:$true] %s68
      %74 = dma.hbm_to_vmem [thread:$0]  %s10, 512, %s69, [#allocation6], 64, 64, 4
    $region45: #{tpu_custom_call.1} parent=1 // pred_fallthru
      _
    // Predicated region
    $region46: #{tpu_custom_call.1} parent=1 // pred_check
      _
    $region47: #{tpu_custom_call.1} parent=1 // pred_check_branch
      %76 = sbr.rel (0) target = $region49
    $region48: #{tpu_custom_call.1} parent=1 // pred_region
      %s78 = ssub.s32 32, 32
      %79 = vsyncadd [#allocation9], %s78
      %s80 = sshll.u32 [#allocation8], 4
      %s81 = int_to_ptr.vmem [resolvable:$true] %s80
      %86 = dma.hbm_to_vmem [thread:$0]  %s11, 32, %s81, [#allocation9], 16, 16, 1
    $region49: #{tpu_custom_call.1} parent=1 // pred_fallthru
      _
    // Predicated region
    $region50: #{tpu_custom_call.1} parent=1 // pred_check
      _
    $region51: #{tpu_custom_call.1} parent=1 // pred_check_branch
      %88 = sbr.rel (0) target = $region53
    $region52: #{tpu_custom_call.1} parent=1 // pred_region
      _
    $region53: #{tpu_custom_call.1} parent=1 // pred_fallthru
      _
    // Predicated region
    $region54: #{tpu_custom_call.1} parent=1 // pred_check
      _
    $region55: #{tpu_custom_call.1} parent=1 // pred_check_branch
      %90 = sbr.rel (0) target = $region57
    $region56: #{tpu_custom_call.1} parent=1 // pred_region
      _
    $region57: #{tpu_custom_call.1} parent=1 // pred_fallthru
      _
    // Predicated region
    $region58: #{tpu_custom_call.1} parent=1 // pred_check
      _
    $region59: #{tpu_custom_call.1} parent=1 // pred_check_branch
      %92 = sbr.rel (0) target = $region61
    $region60: #{tpu_custom_call.1} parent=1 // pred_region
      %93 = dma.done [#allocation3], 512
    $region61: #{tpu_custom_call.1} parent=1 // pred_fallthru
      _
    // Predicated region
    $region62: #{tpu_custom_call.1} parent=1 // pred_check
      _
    $region63: #{tpu_custom_call.1} parent=1 // pred_check_branch
      %95 = sbr.rel (0) target = $region65
    $region64: #{tpu_custom_call.1} parent=1 // pred_region
      %96 = dma.done [#allocation6], 512
    $region65: #{tpu_custom_call.1} parent=1 // pred_fallthru
      _
    // Predicated region
    $region66: #{tpu_custom_call.1} parent=1 // pred_check
      _
    $region67: #{tpu_custom_call.1} parent=1 // pred_check_branch
      %98 = sbr.rel (0) target = $region69
    $region68: #{tpu_custom_call.1} parent=1 // pred_region
      %99 = dma.done [#allocation6], 512
    $region69: #{tpu_custom_call.1} parent=1 // pred_fallthru
      _
    // Predicated region
    $region70: #{tpu_custom_call.1} parent=1 // pred_check
      _
    $region71: #{tpu_custom_call.1} parent=1 // pred_check_branch
      %101 = sbr.rel (0) target = $region73
    $region72: #{tpu_custom_call.1} parent=1 // pred_region
      %102 = dma.done [#allocation9], 32
    $region73: #{tpu_custom_call.1} parent=1 // pred_fallthru
      _
    %v104 = vld [vmem:[%s0] sm:$0xff]
    %v105 = vld [vmem:[%s0 + $0x8] sm:$0xff]
    %v106 = vld [vmem:[%s0 + $0x10] sm:$0xff]
    %v107 = vld [vmem:[%s0 + $0x18] sm:$0xff]
    %v108 = vld [vmem:[%s2] sm:$0x1]
    %v109 = vld [vmem:[%s3] sm:$0x1]
    %vm110 = vcmask 261120
    %v111 = vsel %vm110, %v104, 0.0
    %112 = vadd.xlane.f32.xlu0 %v111
    %v113 = vpop.xlane.xlu0 %112
    %v114 = vsel %vm110, %v105, 0.0
    %115 = vadd.xlane.f32.xlu0 %v114
    %v116 = vpop.xlane.xlu0 %115
    %v117 = vsel %vm110, %v106, 0.0
    %118 = vadd.xlane.f32.xlu0 %v117
    %v119 = vpop.xlane.xlu0 %118
    %v120 = vsel %vm110, %v107, 0.0
    %121 = vadd.xlane.f32.xlu0 %v120
    %v122 = vpop.xlane.xlu0 %121
    %v123 = vrcp.pop 32.0
    %v124 = vmul.f32 %v113, %v123
    %v125 = vmul.f32 %v116, %v123
    %v126 = vmul.f32 %v119, %v123
    %v127 = vmul.f32 %v122, %v123
    %v128 = vmul.f32 %v104, %v104
    %v129 = vmul.f32 %v105, %v105
    %v130 = vmul.f32 %v106, %v106
    %v131 = vmul.f32 %v107, %v107
    %v132 = vsel %vm110, %v128, 0.0
    %133 = vadd.xlane.f32.xlu0 %v132
    %v134 = vpop.xlane.xlu0 %133
    %v135 = vsel %vm110, %v129, 0.0
    %136 = vadd.xlane.f32.xlu0 %v135
    %v137 = vpop.xlane.xlu0 %136
    %v138 = vsel %vm110, %v130, 0.0
    %139 = vadd.xlane.f32.xlu0 %v138
    %v140 = vpop.xlane.xlu0 %139
    %v141 = vsel %vm110, %v131, 0.0
    %142 = vadd.xlane.f32.xlu0 %v141
    %v143 = vpop.xlane.xlu0 %142
    %v144 = vmul.f32 %v134, %v123
    %v145 = vmul.f32 %v137, %v123
    %v146 = vmul.f32 %v140, %v123
    %v147 = vmul.f32 %v143, %v123
    %v148 = vmul.f32 %v124, %v124
    %v149 = vmul.f32 %v125, %v125
    %v150 = vmul.f32 %v126, %v126
    %v151 = vmul.f32 %v127, %v127
    %v152 = vsub.f32 %v144, %v148
    %v153 = vsub.f32 %v145, %v149
    %v154 = vsub.f32 %v146, %v150
    %v155 = vsub.f32 %v147, %v151
    %v156 = vmax.f32 %v152, 0.0
    %v157 = vmax.f32 %v153, 0.0
    %v158 = vmax.f32 %v154, 0.0
    %v159 = vmax.f32 %v155, 0.0
    %v160 = vsub.f32 %v104, %v124
    %v161 = vsub.f32 %v105, %v125
    %v162 = vsub.f32 %v106, %v126
    %v163 = vsub.f32 %v107, %v127
    %v164 = vadd.f32 %v156, 1e-05
    %v165 = vadd.f32 %v157, 1e-05
    %v166 = vadd.f32 %v158, 1e-05
    %v167 = vadd.f32 %v159, 1e-05
    %v168 = vrsqrt.pop %v164
    %v169 = vrsqrt.pop %v165
    %v170 = vrsqrt.pop %v166
    %v171 = vrsqrt.pop %v167
    %v172 = vmul.f32 %v160, %v168
    %v173 = vmul.f32 %v161, %v169
    %v174 = vmul.f32 %v162, %v170
    %v175 = vmul.f32 %v163, %v171
    %v177 = vlaneseq
    %v178 = vshrl.u32 %v177, 7
    %v179 = vsub.s32 0, %v178
    %v180 = vrot.slane %v108, %v179
    %v182 = vmul.f32 %v172, %v180
    %v183 = vmul.f32 %v173, %v180
    %v184 = vmul.f32 %v174, %v180
    %v185 = vmul.f32 %v175, %v180
    %v187 = vlaneseq
    %v188 = vshrl.u32 %v187, 7
    %v189 = vsub.s32 0, %v188
    %v190 = vrot.slane %v109, %v189
    %v192 = vadd.f32 %v182, %v190
    %v193 = vadd.f32 %v183, %v190
    %v194 = vadd.f32 %v184, %v190
    %v195 = vadd.f32 %v185, %v190
    %v196 = vpack.c.bf16 %v193, %v192
    %v197 = vpack.c.bf16 %v195, %v194
    %v198 = vld [vmem:[#allocation2] sm:$0xf]
    %v199 = vld [vmem:[#allocation2 + $0x4] sm:$0xf]
    %v200 = vld [vmem:[#allocation2 + $0x8] sm:$0xf]
    %v201 = vld [vmem:[#allocation2 + $0xc] sm:$0xf]
    %v202 = vld [vmem:[%s5] sm:$0x1]
    %v204 = vlaneseq
    %v205 = vshrl.u32 %v204, 7
    %v206 = vsub.s32 0, %v205
    %v207 = vrot.slane %v202, %v206
    %v213 = vunpack.c.l.b16 %v198
    %v214 = vunpack.c.l.b16 %v199
    %v215 = vunpack.c.l.b16 %v200
    %v216 = vunpack.c.l.b16 %v201
    %v217 = vpack.c.b16 %v214, %v213
    %v218 = vpack.c.b16 %v216, %v215
    %v222 = vsel %vm110, %v196, 0
    %v225 = vsel %vm110, %v197, 0
    %227 = vmatprep.subr.bf16.mxu0 0
    %228 = vmatpush1.bf16.msra.mxu0 %v217
    %229 = vmatprep.subr.bf16.mxu0 0
    %230 = vmatpush1.bf16.msra.mxu0 %v218
    %231 = vmatprep.subr.bf16.mxu0 0
    %232 = vmatpush1.bf16.msra.mxu0 0
    %233 = vmatprep.subr.bf16.mxu0 0
    %234 = vmatpush1.bf16.msra.mxu0 0
    %235 = vmatprep.subr.bf16.mxu0 0
    %236 = vmatpush1.bf16.msra.mxu0 0
    %237 = vmatprep.subr.bf16.mxu0 0
    %238 = vmatpush1.bf16.msra.mxu0 0
    %239 = vmatprep.subr.bf16.mxu0 0
    %240 = vmatpush1.bf16.msra.mxu0 0
    %241 = vmatprep.subr.bf16.mxu0 0
    %242 = vmatpush1.bf16.msra.mxu0 0
    %243 = vmatprep.subr.bf16.mxu0 0
    %244 = vmatpush1.bf16.msra.mxu0 0
    %245 = vmatprep.subr.bf16.mxu0 0
    %246 = vmatpush1.bf16.msra.mxu0 0
    %247 = vmatprep.subr.bf16.mxu0 0
    %248 = vmatpush1.bf16.msra.mxu0 0
    %249 = vmatprep.subr.bf16.mxu0 0
    %250 = vmatpush1.bf16.msra.mxu0 0
    %251 = vmatprep.subr.bf16.mxu0 0
    %252 = vmatpush1.bf16.msra.mxu0 0
    %253 = vmatprep.subr.bf16.mxu0 0
    %254 = vmatpush1.bf16.msra.mxu0 0
    %255 = vmatprep.subr.bf16.mxu0 0
    %256 = vmatpush1.bf16.msra.mxu0 0
    %257 = vmatprep.subr.bf16.mxu0 0
    %258 = vmatpush1.bf16.msra.mxu0 0
    %259 = vmatprep.mubr.bf16.mxu0 0
    %260 = vmatmul.mubr.bf16.gmra.mrb[0].mxu0 %v222
    %v261 = vpop.f32.mrb[0].mxu0
    %v262 = vadd.f32 %v207, %v261
    %v263 = vpop.f32.mrb[0].mxu0
    %v264 = vpop.f32.mrb[0].mxu0
    %v265 = vadd.f32 %v207, %v264
    %v266 = vpop.f32.mrb[0].mxu0
    %267 = vmatprep.mubr.bf16.mxu0 0
    %268 = vmatmul.mubr.bf16.gmra.mrb[0].mxu0 %v225
    %v269 = vpop.f32.mrb[0].mxu0
    %v270 = vadd.f32 %v207, %v269
    %v271 = vpop.f32.mrb[0].mxu0
    %v272 = vpop.f32.mrb[0].mxu0
    %v273 = vadd.f32 %v207, %v272
    %v274 = vpop.f32.mrb[0].mxu0
    %275 = vdwg.mxu0
    %280 = vrot.lane.b32.xlu0 %v262, 120
    %v281 = vpop.permute.xlu0 %280
    %282 = vrot.lane.b32.xlu0 %v265, 120
    %v283 = vpop.permute.xlu0 %282
    %284 = vrot.lane.b32.xlu0 %v270, 120
    %v285 = vpop.permute.xlu0 %284
    %286 = vrot.lane.b32.xlu0 %v273, 120
    %v287 = vpop.permute.xlu0 %286
    %292 = vrot.lane.b32.xlu0 %v262, 112
    %v293 = vpop.permute.xlu0 %292
    %294 = vrot.lane.b32.xlu0 %v265, 112
    %v295 = vpop.permute.xlu0 %294
    %296 = vrot.lane.b32.xlu0 %v270, 112
    %v297 = vpop.permute.xlu0 %296
    %298 = vrot.lane.b32.xlu0 %v273, 112
    %v299 = vpop.permute.xlu0 %298
    %304 = vrot.lane.b32.xlu0 %v262, 104
    %v305 = vpop.permute.xlu0 %304
    %306 = vrot.lane.b32.xlu0 %v265, 104
    %v307 = vpop.permute.xlu0 %306
    %308 = vrot.lane.b32.xlu0 %v270, 104
    %v309 = vpop.permute.xlu0 %308
    %310 = vrot.lane.b32.xlu0 %v273, 104
    %v311 = vpop.permute.xlu0 %310
    %v316 = vpack.c.bf16 %v262, %v262
    %v317 = vpack.c.bf16 %v265, %v265
    %v318 = vpack.c.bf16 %v270, %v270
    %v319 = vpack.c.bf16 %v273, %v273
    %v320 = vpack.c.bf16 %v281, %v281
    %v321 = vpack.c.bf16 %v283, %v283
    %v322 = vpack.c.bf16 %v285, %v285
    %v323 = vpack.c.bf16 %v287, %v287
    %v324 = vpack.c.bf16 %v293, %v293
    %v325 = vpack.c.bf16 %v295, %v295
    %v326 = vpack.c.bf16 %v297, %v297
    %v327 = vpack.c.bf16 %v299, %v299
    %v328 = vpack.c.bf16 %v305, %v305
    %v329 = vpack.c.bf16 %v307, %v307
    %v330 = vpack.c.bf16 %v309, %v309
    %v331 = vpack.c.bf16 %v311, %v311
    %333 = vrot.lane.b32.xlu0 %v316, 96
    %v334 = vpop.permute.xlu0 %333
    %vm335 = vcmask 64512
    %v337 = vsel %vm335, %v316, 0
    %v340 = vsel %vm335, %v334, 0
    %342 = vmatprep.subr.bf16.mxu0 0
    %343 = vmatpush1.bf16.xpose.msra.mxu0 %v340
    %344 = vmatprep.subr.bf16.mxu0 0
    %345 = vmatpush1.bf16.xpose.msra.mxu0 0
    %346 = vmatprep.subr.bf16.mxu0 0
    %347 = vmatpush1.bf16.xpose.msra.mxu0 0
    %348 = vmatprep.subr.bf16.mxu0 0
    %349 = vmatpush1.bf16.xpose.msra.mxu0 0
    %350 = vmatprep.subr.bf16.mxu0 0
    %351 = vmatpush1.bf16.xpose.msra.mxu0 0
    %352 = vmatprep.subr.bf16.mxu0 0
    %353 = vmatpush1.bf16.xpose.msra.mxu0 0
    %354 = vmatprep.subr.bf16.mxu0 0
    %355 = vmatpush1.bf16.xpose.msra.mxu0 0
    %356 = vmatprep.subr.bf16.mxu0 0
    %357 = vmatpush1.bf16.xpose.msra.mxu0 0
    %358 = vmatprep.subr.bf16.mxu0 0
    %359 = vmatpush1.bf16.xpose.msra.mxu0 0
    %360 = vmatprep.subr.bf16.mxu0 0
    %361 = vmatpush1.bf16.xpose.msra.mxu0 0
    %362 = vmatprep.subr.bf16.mxu0 0
    %363 = vmatpush1.bf16.xpose.msra.mxu0 0
    %364 = vmatprep.subr.bf16.mxu0 0
    %365 = vmatpush1.bf16.xpose.msra.mxu0 0
    %366 = vmatprep.subr.bf16.mxu0 0
    %367 = vmatpush1.bf16.xpose.msra.mxu0 0
    %368 = vmatprep.subr.bf16.mxu0 0
    %369 = vmatpush1.bf16.xpose.msra.mxu0 0
    %370 = vmatprep.subr.bf16.mxu0 0
    %371 = vmatpush1.bf16.xpose.msra.mxu0 0
    %372 = vmatprep.subr.bf16.mxu0 0
    %373 = vmatpush1.bf16.xpose.msra.mxu0 0
    %374 = vmatprep.mubr.bf16.mxu0 0
    %375 = vmatmul.mubr.bf16.gmra.mrb[0].mxu0 %v337
    %v376 = vpop.f32.mrb[0].mxu0
    %v377 = vadd.f32 0.0, %v376
    %v378 = vpop.f32.mrb[0].mxu0
    %v379 = vpop.f32.mrb[0].mxu0
    %v380 = vpop.f32.mrb[0].mxu0
    %381 = vdwg.mxu0
    %383 = vrot.lane.b32.xlu0 %v317, 96
    %v384 = vpop.permute.xlu0 %383
    %v386 = vsel %vm335, %v317, 0
    %v389 = vsel %vm335, %v384, 0
    %391 = vmatprep.subr.bf16.mxu0 0
    %392 = vmatpush1.bf16.xpose.msra.mxu0 %v389
    %393 = vmatprep.subr.bf16.mxu0 0
    %394 = vmatpush1.bf16.xpose.msra.mxu0 0
    %395 = vmatprep.subr.bf16.mxu0 0
    %396 = vmatpush1.bf16.xpose.msra.mxu0 0
    %397 = vmatprep.subr.bf16.mxu0 0
    %398 = vmatpush1.bf16.xpose.msra.mxu0 0
    %399 = vmatprep.subr.bf16.mxu0 0
    %400 = vmatpush1.bf16.xpose.msra.mxu0 0
    %401 = vmatprep.subr.bf16.mxu0 0
    %402 = vmatpush1.bf16.xpose.msra.mxu0 0
    %403 = vmatprep.subr.bf16.mxu0 0
    %404 = vmatpush1.bf16.xpose.msra.mxu0 0
    %405 = vmatprep.subr.bf16.mxu0 0
    %406 = vmatpush1.bf16.xpose.msra.mxu0 0
    %407 = vmatprep.subr.bf16.mxu0 0
    %408 = vmatpush1.bf16.xpose.msra.mxu0 0
    %409 = vmatprep.subr.bf16.mxu0 0
    %410 = vmatpush1.bf16.xpose.msra.mxu0 0
    %411 = vmatprep.subr.bf16.mxu0 0
    %412 = vmatpush1.bf16.xpose.msra.mxu0 0
    %413 = vmatprep.subr.bf16.mxu0 0
    %414 = vmatpush1.bf16.xpose.msra.mxu0 0
    %415 = vmatprep.subr.bf16.mxu0 0
    %416 = vmatpush1.bf16.xpose.msra.mxu0 0
    %417 = vmatprep.subr.bf16.mxu0 0
    %418 = vmatpush1.bf16.xpose.msra.mxu0 0
    %419 = vmatprep.subr.bf16.mxu0 0
    %420 = vmatpush1.bf16.xpose.msra.mxu0 0
    %421 = vmatprep.subr.bf16.mxu0 0
    %422 = vmatpush1.bf16.xpose.msra.mxu0 0
    %423 = vmatprep.mubr.bf16.mxu0 0
    %424 = vmatmul.mubr.bf16.gmra.mrb[0].mxu0 %v386
    %v425 = vpop.f32.mrb[0].mxu0
    %v426 = vadd.f32 0.0, %v425
    %v427 = vpop.f32.mrb[0].mxu0
    %v428 = vpop.f32.mrb[0].mxu0
    %v429 = vpop.f32.mrb[0].mxu0
    %430 = vdwg.mxu0
    %432 = vrot.lane.b32.xlu0 %v318, 96
    %v433 = vpop.permute.xlu0 %432
    %v435 = vsel %vm335, %v318, 0
    %v438 = vsel %vm335, %v433, 0
    %440 = vmatprep.subr.bf16.mxu0 0
    %441 = vmatpush1.bf16.xpose.msra.mxu0 %v438
    %442 = vmatprep.subr.bf16.mxu0 0
    %443 = vmatpush1.bf16.xpose.msra.mxu0 0
    %444 = vmatprep.subr.bf16.mxu0 0
    %445 = vmatpush1.bf16.xpose.msra.mxu0 0
    %446 = vmatprep.subr.bf16.mxu0 0
    %447 = vmatpush1.bf16.xpose.msra.mxu0 0
    %448 = vmatprep.subr.bf16.mxu0 0
    %449 = vmatpush1.bf16.xpose.msra.mxu0 0
    %450 = vmatprep.subr.bf16.mxu0 0
    %451 = vmatpush1.bf16.xpose.msra.mxu0 0
    %452 = vmatprep.subr.bf16.mxu0 0
    %453 = vmatpush1.bf16.xpose.msra.mxu0 0
    %454 = vmatprep.subr.bf16.mxu0 0
    %455 = vmatpush1.bf16.xpose.msra.mxu0 0
    %456 = vmatprep.subr.bf16.mxu0 0
    %457 = vmatpush1.bf16.xpose.msra.mxu0 0
    %458 = vmatprep.subr.bf16.mxu0 0
    %459 = vmatpush1.bf16.xpose.msra.mxu0 0
    %460 = vmatprep.subr.bf16.mxu0 0
    %461 = vmatpush1.bf16.xpose.msra.mxu0 0
    %462 = vmatprep.subr.bf16.mxu0 0
    %463 = vmatpush1.bf16.xpose.msra.mxu0 0
    %464 = vmatprep.subr.bf16.mxu0 0
    %465 = vmatpush1.bf16.xpose.msra.mxu0 0
    %466 = vmatprep.subr.bf16.mxu0 0
    %467 = vmatpush1.bf16.xpose.msra.mxu0 0
    %468 = vmatprep.subr.bf16.mxu0 0
    %469 = vmatpush1.bf16.xpose.msra.mxu0 0
    %470 = vmatprep.subr.bf16.mxu0 0
    %471 = vmatpush1.bf16.xpose.msra.mxu0 0
    %472 = vmatprep.mubr.bf16.mxu0 0
    %473 = vmatmul.mubr.bf16.gmra.mrb[0].mxu0 %v435
    %v474 = vpop.f32.mrb[0].mxu0
    %v475 = vadd.f32 0.0, %v474
    %v476 = vpop.f32.mrb[0].mxu0
    %v477 = vpop.f32.mrb[0].mxu0
    %v478 = vpop.f32.mrb[0].mxu0
    %479 = vdwg.mxu0
    %481 = vrot.lane.b32.xlu0 %v319, 96
    %v482 = vpop.permute.xlu0 %481
    %v484 = vsel %vm335, %v319, 0
    %v487 = vsel %vm335, %v482, 0
    %489 = vmatprep.subr.bf16.mxu0 0
    %490 = vmatpush1.bf16.xpose.msra.mxu0 %v487
    %491 = vmatprep.subr.bf16.mxu0 0
    %492 = vmatpush1.bf16.xpose.msra.mxu0 0
    %493 = vmatprep.subr.bf16.mxu0 0
    %494 = vmatpush1.bf16.xpose.msra.mxu0 0
    %495 = vmatprep.subr.bf16.mxu0 0
    %496 = vmatpush1.bf16.xpose.msra.mxu0 0
    %497 = vmatprep.subr.bf16.mxu0 0
    %498 = vmatpush1.bf16.xpose.msra.mxu0 0
    %499 = vmatprep.subr.bf16.mxu0 0
    %500 = vmatpush1.bf16.xpose.msra.mxu0 0
    %501 = vmatprep.subr.bf16.mxu0 0
    %502 = vmatpush1.bf16.xpose.msra.mxu0 0
    %503 = vmatprep.subr.bf16.mxu0 0
    %504 = vmatpush1.bf16.xpose.msra.mxu0 0
    %505 = vmatprep.subr.bf16.mxu0 0
    %506 = vmatpush1.bf16.xpose.msra.mxu0 0
    %507 = vmatprep.subr.bf16.mxu0 0
    %508 = vmatpush1.bf16.xpose.msra.mxu0 0
    %509 = vmatprep.subr.bf16.mxu0 0
    %510 = vmatpush1.bf16.xpose.msra.mxu0 0
    %511 = vmatprep.subr.bf16.mxu0 0
    %512 = vmatpush1.bf16.xpose.msra.mxu0 0
    %513 = vmatprep.subr.bf16.mxu0 0
    %514 = vmatpush1.bf16.xpose.msra.mxu0 0
    %515 = vmatprep.subr.bf16.mxu0 0
    %516 = vmatpush1.bf16.xpose.msra.mxu0 0
    %517 = vmatprep.subr.bf16.mxu0 0
    %518 = vmatpush1.bf16.xpose.msra.mxu0 0
    %519 = vmatprep.subr.bf16.mxu0 0
    %520 = vmatpush1.bf16.xpose.msra.mxu0 0
    %521 = vmatprep.mubr.bf16.mxu0 0
    %522 = vmatmul.mubr.bf16.gmra.mrb[0].mxu0 %v484
    %v523 = vpop.f32.mrb[0].mxu0
    %v524 = vadd.f32 0.0, %v523
    %v525 = vpop.f32.mrb[0].mxu0
    %v526 = vpop.f32.mrb[0].mxu0
    %v527 = vpop.f32.mrb[0].mxu0
    %528 = vdwg.mxu0
    %530 = vrot.lane.b32.xlu0 %v320, 96
    %v531 = vpop.permute.xlu0 %530
    %v533 = vsel %vm335, %v320, 0
    %v536 = vsel %vm335, %v531, 0
    %538 = vmatprep.subr.bf16.mxu0 0
    %539 = vmatpush1.bf16.xpose.msra.mxu0 %v536
    %540 = vmatprep.subr.bf16.mxu0 0
    %541 = vmatpush1.bf16.xpose.msra.mxu0 0
    %542 = vmatprep.subr.bf16.mxu0 0
    %543 = vmatpush1.bf16.xpose.msra.mxu0 0
    %544 = vmatprep.subr.bf16.mxu0 0
    %545 = vmatpush1.bf16.xpose.msra.mxu0 0
    %546 = vmatprep.subr.bf16.mxu0 0
    %547 = vmatpush1.bf16.xpose.msra.mxu0 0
    %548 = vmatprep.subr.bf16.mxu0 0
    %549 = vmatpush1.bf16.xpose.msra.mxu0 0
    %550 = vmatprep.subr.bf16.mxu0 0
    %551 = vmatpush1.bf16.xpose.msra.mxu0 0
    %552 = vmatprep.subr.bf16.mxu0 0
    %553 = vmatpush1.bf16.xpose.msra.mxu0 0
    %554 = vmatprep.subr.bf16.mxu0 0
    %555 = vmatpush1.bf16.xpose.msra.mxu0 0
    %556 = vmatprep.subr.bf16.mxu0 0
    %557 = vmatpush1.bf16.xpose.msra.mxu0 0
    %558 = vmatprep.subr.bf16.mxu0 0
    %559 = vmatpush1.bf16.xpose.msra.mxu0 0
    %560 = vmatprep.subr.bf16.mxu0 0
    %561 = vmatpush1.bf16.xpose.msra.mxu0 0
    %562 = vmatprep.subr.bf16.mxu0 0
    %563 = vmatpush1.bf16.xpose.msra.mxu0 0
    %564 = vmatprep.subr.bf16.mxu0 0
    %565 = vmatpush1.bf16.xpose.msra.mxu0 0
    %566 = vmatprep.subr.bf16.mxu0 0
    %567 = vmatpush1.bf16.xpose.msra.mxu0 0
    %568 = vmatprep.subr.bf16.mxu0 0
    %569 = vmatpush1.bf16.xpose.msra.mxu0 0
    %570 = vmatprep.mubr.bf16.mxu0 0
    %571 = vmatmul.mubr.bf16.gmra.mrb[0].mxu0 %v533
    %v572 = vpop.f32.mrb[0].mxu0
    %v573 = vadd.f32 0.0, %v572
    %v574 = vpop.f32.mrb[0].mxu0
    %v575 = vpop.f32.mrb[0].mxu0
    %v576 = vpop.f32.mrb[0].mxu0
    %577 = vdwg.mxu0
    %579 = vrot.lane.b32.xlu0 %v321, 96
    %v580 = vpop.permute.xlu0 %579
    %v582 = vsel %vm335, %v321, 0
    %v585 = vsel %vm335, %v580, 0
    %587 = vmatprep.subr.bf16.mxu0 0
    %588 = vmatpush1.bf16.xpose.msra.mxu0 %v585
    %589 = vmatprep.subr.bf16.mxu0 0
    %590 = vmatpush1.bf16.xpose.msra.mxu0 0
    %591 = vmatprep.subr.bf16.mxu0 0
    %592 = vmatpush1.bf16.xpose.msra.mxu0 0
    %593 = vmatprep.subr.bf16.mxu0 0
    %594 = vmatpush1.bf16.xpose.msra.mxu0 0
    %595 = vmatprep.subr.bf16.mxu0 0
    %596 = vmatpush1.bf16.xpose.msra.mxu0 0
    %597 = vmatprep.subr.bf16.mxu0 0
    %598 = vmatpush1.bf16.xpose.msra.mxu0 0
    %599 = vmatprep.subr.bf16.mxu0 0
    %600 = vmatpush1.bf16.xpose.msra.mxu0 0
    %601 = vmatprep.subr.bf16.mxu0 0
    %602 = vmatpush1.bf16.xpose.msra.mxu0 0
    %603 = vmatprep.subr.bf16.mxu0 0
    %604 = vmatpush1.bf16.xpose.msra.mxu0 0
    %605 = vmatprep.subr.bf16.mxu0 0
    %606 = vmatpush1.bf16.xpose.msra.mxu0 0
    %607 = vmatprep.subr.bf16.mxu0 0
    %608 = vmatpush1.bf16.xpose.msra.mxu0 0
    %609 = vmatprep.subr.bf16.mxu0 0
    %610 = vmatpush1.bf16.xpose.msra.mxu0 0
    %611 = vmatprep.subr.bf16.mxu0 0
    %612 = vmatpush1.bf16.xpose.msra.mxu0 0
    %613 = vmatprep.subr.bf16.mxu0 0
    %614 = vmatpush1.bf16.xpose.msra.mxu0 0
    %615 = vmatprep.subr.bf16.mxu0 0
    %616 = vmatpush1.bf16.xpose.msra.mxu0 0
    %617 = vmatprep.subr.bf16.mxu0 0
    %618 = vmatpush1.bf16.xpose.msra.mxu0 0
    %619 = vmatprep.mubr.bf16.mxu0 0
    %620 = vmatmul.mubr.bf16.gmra.mrb[0].mxu0 %v582
    %v621 = vpop.f32.mrb[0].mxu0
    %v622 = vadd.f32 0.0, %v621
    %v623 = vpop.f32.mrb[0].mxu0
    %v624 = vpop.f32.mrb[0].mxu0
    %v625 = vpop.f32.mrb[0].mxu0
    %626 = vdwg.mxu0
    %628 = vrot.lane.b32.xlu0 %v322, 96
    %v629 = vpop.permute.xlu0 %628
    %v631 = vsel %vm335, %v322, 0
    %v634 = vsel %vm335, %v629, 0
    %636 = vmatprep.subr.bf16.mxu0 0
    %637 = vmatpush1.bf16.xpose.msra.mxu0 %v634
    %638 = vmatprep.subr.bf16.mxu0 0
    %639 = vmatpush1.bf16.xpose.msra.mxu0 0
    %640 = vmatprep.subr.bf16.mxu0 0
    %641 = vmatpush1.bf16.xpose.msra.mxu0 0
    %642 = vmatprep.subr.bf16.mxu0 0
    %643 = vmatpush1.bf16.xpose.msra.mxu0 0
    %644 = vmatprep.subr.bf16.mxu0 0
    %645 = vmatpush1.bf16.xpose.msra.mxu0 0
    %646 = vmatprep.subr.bf16.mxu0 0
    %647 = vmatpush1.bf16.xpose.msra.mxu0 0
    %648 = vmatprep.subr.bf16.mxu0 0
    %649 = vmatpush1.bf16.xpose.msra.mxu0 0
    %650 = vmatprep.subr.bf16.mxu0 0
    %651 = vmatpush1.bf16.xpose.msra.mxu0 0
    %652 = vmatprep.subr.bf16.mxu0 0
    %653 = vmatpush1.bf16.xpose.msra.mxu0 0
    %654 = vmatprep.subr.bf16.mxu0 0
    %655 = vmatpush1.bf16.xpose.msra.mxu0 0
    %656 = vmatprep.subr.bf16.mxu0 0
    %657 = vmatpush1.bf16.xpose.msra.mxu0 0
    %658 = vmatprep.subr.bf16.mxu0 0
    %659 = vmatpush1.bf16.xpose.msra.mxu0 0
    %660 = vmatprep.subr.bf16.mxu0 0
    %661 = vmatpush1.bf16.xpose.msra.mxu0 0
    %662 = vmatprep.subr.bf16.mxu0 0
    %663 = vmatpush1.bf16.xpose.msra.mxu0 0
    %664 = vmatprep.subr.bf16.mxu0 0
    %665 = vmatpush1.bf16.xpose.msra.mxu0 0
    %666 = vmatprep.subr.bf16.mxu0 0
    %667 = vmatpush1.bf16.xpose.msra.mxu0 0
    %668 = vmatprep.mubr.bf16.mxu0 0
    %669 = vmatmul.mubr.bf16.gmra.mrb[0].mxu0 %v631
    %v670 = vpop.f32.mrb[0].mxu0
    %v671 = vadd.f32 0.0, %v670
    %v672 = vpop.f32.mrb[0].mxu0
    %v673 = vpop.f32.mrb[0].mxu0
    %v674 = vpop.f32.mrb[0].mxu0
    %675 = vdwg.mxu0
    %677 = vrot.lane.b32.xlu0 %v323, 96
    %v678 = vpop.permute.xlu0 %677
    %v680 = vsel %vm335, %v323, 0
    %v683 = vsel %vm335, %v678, 0
    %685 = vmatprep.subr.bf16.mxu0 0
    %686 = vmatpush1.bf16.xpose.msra.mxu0 %v683
    %687 = vmatprep.subr.bf16.mxu0 0
    %688 = vmatpush1.bf16.xpose.msra.mxu0 0
    %689 = vmatprep.subr.bf16.mxu0 0
    %690 = vmatpush1.bf16.xpose.msra.mxu0 0
    %691 = vmatprep.subr.bf16.mxu0 0
    %692 = vmatpush1.bf16.xpose.msra.mxu0 0
    %693 = vmatprep.subr.bf16.mxu0 0
    %694 = vmatpush1.bf16.xpose.msra.mxu0 0
    %695 = vmatprep.subr.bf16.mxu0 0
    %696 = vmatpush1.bf16.xpose.msra.mxu0 0
    %697 = vmatprep.subr.bf16.mxu0 0
    %698 = vmatpush1.bf16.xpose.msra.mxu0 0
    %699 = vmatprep.subr.bf16.mxu0 0
    %700 = vmatpush1.bf16.xpose.msra.mxu0 0
    %701 = vmatprep.subr.bf16.mxu0 0
    %702 = vmatpush1.bf16.xpose.msra.mxu0 0
    %703 = vmatprep.subr.bf16.mxu0 0
    %704 = vmatpush1.bf16.xpose.msra.mxu0 0
    %705 = vmatprep.subr.bf16.mxu0 0
    %706 = vmatpush1.bf16.xpose.msra.mxu0 0
    %707 = vmatprep.subr.bf16.mxu0 0
    %708 = vmatpush1.bf16.xpose.msra.mxu0 0
    %709 = vmatprep.subr.bf16.mxu0 0
    %710 = vmatpush1.bf16.xpose.msra.mxu0 0
    %711 = vmatprep.subr.bf16.mxu0 0
    %712 = vmatpush1.bf16.xpose.msra.mxu0 0
    %713 = vmatprep.subr.bf16.mxu0 0
    %714 = vmatpush1.bf16.xpose.msra.mxu0 0
    %715 = vmatprep.subr.bf16.mxu0 0
    %716 = vmatpush1.bf16.xpose.msra.mxu0 0
    %717 = vmatprep.mubr.bf16.mxu0 0
    %718 = vmatmul.mubr.bf16.gmra.mrb[0].mxu0 %v680
    %v719 = vpop.f32.mrb[0].mxu0
    %v720 = vadd.f32 0.0, %v719
    %v721 = vpop.f32.mrb[0].mxu0
    %v722 = vpop.f32.mrb[0].mxu0
    %v723 = vpop.f32.mrb[0].mxu0
    %724 = vdwg.mxu0
    %726 = vrot.lane.b32.xlu0 %v324, 96
    %v727 = vpop.permute.xlu0 %726
    %v729 = vsel %vm335, %v324, 0
    %v732 = vsel %vm335, %v727, 0
    %734 = vmatprep.subr.bf16.mxu0 0
    %735 = vmatpush1.bf16.xpose.msra.mxu0 %v732
    %736 = vmatprep.subr.bf16.mxu0 0
    %737 = vmatpush1.bf16.xpose.msra.mxu0 0
    %738 = vmatprep.subr.bf16.mxu0 0
    %739 = vmatpush1.bf16.xpose.msra.mxu0 0
    %740 = vmatprep.subr.bf16.mxu0 0
    %741 = vmatpush1.bf16.xpose.msra.mxu0 0
    %742 = vmatprep.subr.bf16.mxu0 0
    %743 = vmatpush1.bf16.xpose.msra.mxu0 0
    %744 = vmatprep.subr.bf16.mxu0 0
    %745 = vmatpush1.bf16.xpose.msra.mxu0 0
    %746 = vmatprep.subr.bf16.mxu0 0
    %747 = vmatpush1.bf16.xpose.msra.mxu0 0
    %748 = vmatprep.subr.bf16.mxu0 0
    %749 = vmatpush1.bf16.xpose.msra.mxu0 0
    %750 = vmatprep.subr.bf16.mxu0 0
    %751 = vmatpush1.bf16.xpose.msra.mxu0 0
    %752 = vmatprep.subr.bf16.mxu0 0
    %753 = vmatpush1.bf16.xpose.msra.mxu0 0
    %754 = vmatprep.subr.bf16.mxu0 0
    %755 = vmatpush1.bf16.xpose.msra.mxu0 0
    %756 = vmatprep.subr.bf16.mxu0 0
    %757 = vmatpush1.bf16.xpose.msra.mxu0 0
    %758 = vmatprep.subr.bf16.mxu0 0
    %759 = vmatpush1.bf16.xpose.msra.mxu0 0
    %760 = vmatprep.subr.bf16.mxu0 0
    %761 = vmatpush1.bf16.xpose.msra.mxu0 0
    %762 = vmatprep.subr.bf16.mxu0 0
    %763 = vmatpush1.bf16.xpose.msra.mxu0 0
    %764 = vmatprep.subr.bf16.mxu0 0
    %765 = vmatpush1.bf16.xpose.msra.mxu0 0
    %766 = vmatprep.mubr.bf16.mxu0 0
    %767 = vmatmul.mubr.bf16.gmra.mrb[0].mxu0 %v729
    %v768 = vpop.f32.mrb[0].mxu0
    %v769 = vadd.f32 0.0, %v768
    %v770 = vpop.f32.mrb[0].mxu0
    %v771 = vpop.f32.mrb[0].mxu0
    %v772 = vpop.f32.mrb[0].mxu0
    %773 = vdwg.mxu0
    %775 = vrot.lane.b32.xlu0 %v325, 96
    %v776 = vpop.permute.xlu0 %775
    %v778 = vsel %vm335, %v325, 0
    %v781 = vsel %vm335, %v776, 0
    %783 = vmatprep.subr.bf16.mxu0 0
    %784 = vmatpush1.bf16.xpose.msra.mxu0 %v781
    %785 = vmatprep.subr.bf16.mxu0 0
    %786 = vmatpush1.bf16.xpose.msra.mxu0 0
    %787 = vmatprep.subr.bf16.mxu0 0
    %788 = vmatpush1.bf16.xpose.msra.mxu0 0
    %789 = vmatprep.subr.bf16.mxu0 0
    %790 = vmatpush1.bf16.xpose.msra.mxu0 0
    %791 = vmatprep.subr.bf16.mxu0 0
    %792 = vmatpush1.bf16.xpose.msra.mxu0 0
    %793 = vmatprep.subr.bf16.mxu0 0
    %794 = vmatpush1.bf16.xpose.msra.mxu0 0
    %795 = vmatprep.subr.bf16.mxu0 0
    %796 = vmatpush1.bf16.xpose.msra.mxu0 0
    %797 = vmatprep.subr.bf16.mxu0 0
    %798 = vmatpush1.bf16.xpose.msra.mxu0 0
    %799 = vmatprep.subr.bf16.mxu0 0
    %800 = vmatpush1.bf16.xpose.msra.mxu0 0
    %801 = vmatprep.subr.bf16.mxu0 0
    %802 = vmatpush1.bf16.xpose.msra.mxu0 0
    %803 = vmatprep.subr.bf16.mxu0 0
    %804 = vmatpush1.bf16.xpose.msra.mxu0 0
    %805 = vmatprep.subr.bf16.mxu0 0
    %806 = vmatpush1.bf16.xpose.msra.mxu0 0
    %807 = vmatprep.subr.bf16.mxu0 0
    %808 = vmatpush1.bf16.xpose.msra.mxu0 0
    %809 = vmatprep.subr.bf16.mxu0 0
    %810 = vmatpush1.bf16.xpose.msra.mxu0 0
    %811 = vmatprep.subr.bf16.mxu0 0
    %812 = vmatpush1.bf16.xpose.msra.mxu0 0
    %813 = vmatprep.subr.bf16.mxu0 0
    %814 = vmatpush1.bf16.xpose.msra.mxu0 0
    %815 = vmatprep.mubr.bf16.mxu0 0
    %816 = vmatmul.mubr.bf16.gmra.mrb[0].mxu0 %v778
    %v817 = vpop.f32.mrb[0].mxu0
    %v818 = vadd.f32 0.0, %v817
    %v819 = vpop.f32.mrb[0].mxu0
    %v820 = vpop.f32.mrb[0].mxu0
    %v821 = vpop.f32.mrb[0].mxu0
    %822 = vdwg.mxu0
    %824 = vrot.lane.b32.xlu0 %v326, 96
    %v825 = vpop.permute.xlu0 %824
    %v827 = vsel %vm335, %v326, 0
    %v830 = vsel %vm335, %v825, 0
    %832 = vmatprep.subr.bf16.mxu0 0
    %833 = vmatpush1.bf16.xpose.msra.mxu0 %v830
    %834 = vmatprep.subr.bf16.mxu0 0
    %835 = vmatpush1.bf16.xpose.msra.mxu0 0
    %836 = vmatprep.subr.bf16.mxu0 0
    %837 = vmatpush1.bf16.xpose.msra.mxu0 0
    %838 = vmatprep.subr.bf16.mxu0 0
    %839 = vmatpush1.bf16.xpose.msra.mxu0 0
    %840 = vmatprep.subr.bf16.mxu0 0
    %841 = vmatpush1.bf16.xpose.msra.mxu0 0
    %842 = vmatprep.subr.bf16.mxu0 0
    %843 = vmatpush1.bf16.xpose.msra.mxu0 0
    %844 = vmatprep.subr.bf16.mxu0 0
    %845 = vmatpush1.bf16.xpose.msra.mxu0 0
    %846 = vmatprep.subr.bf16.mxu0 0
    %847 = vmatpush1.bf16.xpose.msra.mxu0 0
    %848 = vmatprep.subr.bf16.mxu0 0
    %849 = vmatpush1.bf16.xpose.msra.mxu0 0
    %850 = vmatprep.subr.bf16.mxu0 0
    %851 = vmatpush1.bf16.xpose.msra.mxu0 0
    %852 = vmatprep.subr.bf16.mxu0 0
    %853 = vmatpush1.bf16.xpose.msra.mxu0 0
    %854 = vmatprep.subr.bf16.mxu0 0
    %855 = vmatpush1.bf16.xpose.msra.mxu0 0
    %856 = vmatprep.subr.bf16.mxu0 0
    %857 = vmatpush1.bf16.xpose.msra.mxu0 0
    %858 = vmatprep.subr.bf16.mxu0 0
    %859 = vmatpush1.bf16.xpose.msra.mxu0 0
    %860 = vmatprep.subr.bf16.mxu0 0
    %861 = vmatpush1.bf16.xpose.msra.mxu0 0
    %862 = vmatprep.subr.bf16.mxu0 0
    %863 = vmatpush1.bf16.xpose.msra.mxu0 0
    %864 = vmatprep.mubr.bf16.mxu0 0
    %865 = vmatmul.mubr.bf16.gmra.mrb[0].mxu0 %v827
    %v866 = vpop.f32.mrb[0].mxu0
    %v867 = vadd.f32 0.0, %v866
    %v868 = vpop.f32.mrb[0].mxu0
    %v869 = vpop.f32.mrb[0].mxu0
    %v870 = vpop.f32.mrb[0].mxu0
    %871 = vdwg.mxu0
    %873 = vrot.lane.b32.xlu0 %v327, 96
    %v874 = vpop.permute.xlu0 %873
    %v876 = vsel %vm335, %v327, 0
    %v879 = vsel %vm335, %v874, 0
    %881 = vmatprep.subr.bf16.mxu0 0
    %882 = vmatpush1.bf16.xpose.msra.mxu0 %v879
    %883 = vmatprep.subr.bf16.mxu0 0
    %884 = vmatpush1.bf16.xpose.msra.mxu0 0
    %885 = vmatprep.subr.bf16.mxu0 0
    %886 = vmatpush1.bf16.xpose.msra.mxu0 0
    %887 = vmatprep.subr.bf16.mxu0 0
    %888 = vmatpush1.bf16.xpose.msra.mxu0 0
    %889 = vmatprep.subr.bf16.mxu0 0
    %890 = vmatpush1.bf16.xpose.msra.mxu0 0
    %891 = vmatprep.subr.bf16.mxu0 0
    %892 = vmatpush1.bf16.xpose.msra.mxu0 0
    %893 = vmatprep.subr.bf16.mxu0 0
    %894 = vmatpush1.bf16.xpose.msra.mxu0 0
    %895 = vmatprep.subr.bf16.mxu0 0
    %896 = vmatpush1.bf16.xpose.msra.mxu0 0
    %897 = vmatprep.subr.bf16.mxu0 0
    %898 = vmatpush1.bf16.xpose.msra.mxu0 0
    %899 = vmatprep.subr.bf16.mxu0 0
    %900 = vmatpush1.bf16.xpose.msra.mxu0 0
    %901 = vmatprep.subr.bf16.mxu0 0
    %902 = vmatpush1.bf16.xpose.msra.mxu0 0
    %903 = vmatprep.subr.bf16.mxu0 0
    %904 = vmatpush1.bf16.xpose.msra.mxu0 0
    %905 = vmatprep.subr.bf16.mxu0 0
    %906 = vmatpush1.bf16.xpose.msra.mxu0 0
    %907 = vmatprep.subr.bf16.mxu0 0
    %908 = vmatpush1.bf16.xpose.msra.mxu0 0
    %909 = vmatprep.subr.bf16.mxu0 0
    %910 = vmatpush1.bf16.xpose.msra.mxu0 0
    %911 = vmatprep.subr.bf16.mxu0 0
    %912 = vmatpush1.bf16.xpose.msra.mxu0 0
    %913 = vmatprep.mubr.bf16.mxu0 0
    %914 = vmatmul.mubr.bf16.gmra.mrb[0].mxu0 %v876
    %v915 = vpop.f32.mrb[0].mxu0
    %v916 = vadd.f32 0.0, %v915
    %v917 = vpop.f32.mrb[0].mxu0
    %v918 = vpop.f32.mrb[0].mxu0
    %v919 = vpop.f32.mrb[0].mxu0
    %920 = vdwg.mxu0
    %922 = vrot.lane.b32.xlu0 %v328, 96
    %v923 = vpop.permute.xlu0 %922
    %v925 = vsel %vm335, %v328, 0
    %v928 = vsel %vm335, %v923, 0
    %930 = vmatprep.subr.bf16.mxu0 0
    %931 = vmatpush1.bf16.xpose.msra.mxu0 %v928
    %932 = vmatprep.subr.bf16.mxu0 0
    %933 = vmatpush1.bf16.xpose.msra.mxu0 0
    %934 = vmatprep.subr.bf16.mxu0 0
    %935 = vmatpush1.bf16.xpose.msra.mxu0 0
    %936 = vmatprep.subr.bf16.mxu0 0
    %937 = vmatpush1.bf16.xpose.msra.mxu0 0
    %938 = vmatprep.subr.bf16.mxu0 0
    %939 = vmatpush1.bf16.xpose.msra.mxu0 0
    %940 = vmatprep.subr.bf16.mxu0 0
    %941 = vmatpush1.bf16.xpose.msra.mxu0 0
    %942 = vmatprep.subr.bf16.mxu0 0
    %943 = vmatpush1.bf16.xpose.msra.mxu0 0
    %944 = vmatprep.subr.bf16.mxu0 0
    %945 = vmatpush1.bf16.xpose.msra.mxu0 0
    %946 = vmatprep.subr.bf16.mxu0 0
    %947 = vmatpush1.bf16.xpose.msra.mxu0 0
    %948 = vmatprep.subr.bf16.mxu0 0
    %949 = vmatpush1.bf16.xpose.msra.mxu0 0
    %950 = vmatprep.subr.bf16.mxu0 0
    %951 = vmatpush1.bf16.xpose.msra.mxu0 0
    %952 = vmatprep.subr.bf16.mxu0 0
    %953 = vmatpush1.bf16.xpose.msra.mxu0 0
    %954 = vmatprep.subr.bf16.mxu0 0
    %955 = vmatpush1.bf16.xpose.msra.mxu0 0
    %956 = vmatprep.subr.bf16.mxu0 0
    %957 = vmatpush1.bf16.xpose.msra.mxu0 0
    %958 = vmatprep.subr.bf16.mxu0 0
    %959 = vmatpush1.bf16.xpose.msra.mxu0 0
    %960 = vmatprep.subr.bf16.mxu0 0
    %961 = vmatpush1.bf16.xpose.msra.mxu0 0
    %962 = vmatprep.mubr.bf16.mxu0 0
    %963 = vmatmul.mubr.bf16.gmra.mrb[0].mxu0 %v925
    %v964 = vpop.f32.mrb[0].mxu0
    %v965 = vadd.f32 0.0, %v964
    %v966 = vpop.f32.mrb[0].mxu0
    %v967 = vpop.f32.mrb[0].mxu0
    %v968 = vpop.f32.mrb[0].mxu0
    %969 = vdwg.mxu0
    %971 = vrot.lane.b32.xlu0 %v329, 96
    %v972 = vpop.permute.xlu0 %971
    %v974 = vsel %vm335, %v329, 0
    %v977 = vsel %vm335, %v972, 0
    %979 = vmatprep.subr.bf16.mxu0 0
    %980 = vmatpush1.bf16.xpose.msra.mxu0 %v977
    %981 = vmatprep.subr.bf16.mxu0 0
    %982 = vmatpush1.bf16.xpose.msra.mxu0 0
    %983 = vmatprep.subr.bf16.mxu0 0
    %984 = vmatpush1.bf16.xpose.msra.mxu0 0
    %985 = vmatprep.subr.bf16.mxu0 0
    %986 = vmatpush1.bf16.xpose.msra.mxu0 0
    %987 = vmatprep.subr.bf16.mxu0 0
    %988 = vmatpush1.bf16.xpose.msra.mxu0 0
    %989 = vmatprep.subr.bf16.mxu0 0
    %990 = vmatpush1.bf16.xpose.msra.mxu0 0
    %991 = vmatprep.subr.bf16.mxu0 0
    %992 = vmatpush1.bf16.xpose.msra.mxu0 0
    %993 = vmatprep.subr.bf16.mxu0 0
    %994 = vmatpush1.bf16.xpose.msra.mxu0 0
    %995 = vmatprep.subr.bf16.mxu0 0
    %996 = vmatpush1.bf16.xpose.msra.mxu0 0
    %997 = vmatprep.subr.bf16.mxu0 0
    %998 = vmatpush1.bf16.xpose.msra.mxu0 0
    %999 = vmatprep.subr.bf16.mxu0 0
    %1000 = vmatpush1.bf16.xpose.msra.mxu0 0
    %1001 = vmatprep.subr.bf16.mxu0 0
    %1002 = vmatpush1.bf16.xpose.msra.mxu0 0
    %1003 = vmatprep.subr.bf16.mxu0 0
    %1004 = vmatpush1.bf16.xpose.msra.mxu0 0
    %1005 = vmatprep.subr.bf16.mxu0 0
    %1006 = vmatpush1.bf16.xpose.msra.mxu0 0
    %1007 = vmatprep.subr.bf16.mxu0 0
    %1008 = vmatpush1.bf16.xpose.msra.mxu0 0
    %1009 = vmatprep.subr.bf16.mxu0 0
    %1010 = vmatpush1.bf16.xpose.msra.mxu0 0
    %1011 = vmatprep.mubr.bf16.mxu0 0
    %1012 = vmatmul.mubr.bf16.gmra.mrb[0].mxu0 %v974
    %v1013 = vpop.f32.mrb[0].mxu0
    %v1014 = vadd.f32 0.0, %v1013
    %v1015 = vpop.f32.mrb[0].mxu0
    %v1016 = vpop.f32.mrb[0].mxu0
    %v1017 = vpop.f32.mrb[0].mxu0
    %1018 = vdwg.mxu0
    %1020 = vrot.lane.b32.xlu0 %v330, 96
    %v1021 = vpop.permute.xlu0 %1020
    %v1023 = vsel %vm335, %v330, 0
    %v1026 = vsel %vm335, %v1021, 0
    %1028 = vmatprep.subr.bf16.mxu0 0
    %1029 = vmatpush1.bf16.xpose.msra.mxu0 %v1026
    %1030 = vmatprep.subr.bf16.mxu0 0
    %1031 = vmatpush1.bf16.xpose.msra.mxu0 0
    %1032 = vmatprep.subr.bf16.mxu0 0
    %1033 = vmatpush1.bf16.xpose.msra.mxu0 0
    %1034 = vmatprep.subr.bf16.mxu0 0
    %1035 = vmatpush1.bf16.xpose.msra.mxu0 0
    %1036 = vmatprep.subr.bf16.mxu0 0
    %1037 = vmatpush1.bf16.xpose.msra.mxu0 0
    %1038 = vmatprep.subr.bf16.mxu0 0
    %1039 = vmatpush1.bf16.xpose.msra.mxu0 0
    %1040 = vmatprep.subr.bf16.mxu0 0
    %1041 = vmatpush1.bf16.xpose.msra.mxu0 0
    %1042 = vmatprep.subr.bf16.mxu0 0
    %1043 = vmatpush1.bf16.xpose.msra.mxu0 0
    %1044 = vmatprep.subr.bf16.mxu0 0
    %1045 = vmatpush1.bf16.xpose.msra.mxu0 0
    %1046 = vmatprep.subr.bf16.mxu0 0
    %1047 = vmatpush1.bf16.xpose.msra.mxu0 0
    %1048 = vmatprep.subr.bf16.mxu0 0
    %1049 = vmatpush1.bf16.xpose.msra.mxu0 0
    %1050 = vmatprep.subr.bf16.mxu0 0
    %1051 = vmatpush1.bf16.xpose.msra.mxu0 0
    %1052 = vmatprep.subr.bf16.mxu0 0
    %1053 = vmatpush1.bf16.xpose.msra.mxu0 0
    %1054 = vmatprep.subr.bf16.mxu0 0
    %1055 = vmatpush1.bf16.xpose.msra.mxu0 0
    %1056 = vmatprep.subr.bf16.mxu0 0
    %1057 = vmatpush1.bf16.xpose.msra.mxu0 0
    %1058 = vmatprep.subr.bf16.mxu0 0
    %1059 = vmatpush1.bf16.xpose.msra.mxu0 0
    %1060 = vmatprep.mubr.bf16.mxu0 0
    %1061 = vmatmul.mubr.bf16.gmra.mrb[0].mxu0 %v1023
    %v1062 = vpop.f32.mrb[0].mxu0
    %v1063 = vadd.f32 0.0, %v1062
    %v1064 = vpop.f32.mrb[0].mxu0
    %v1065 = vpop.f32.mrb[0].mxu0
    %v1066 = vpop.f32.mrb[0].mxu0
    %1067 = vdwg.mxu0
    %1069 = vrot.lane.b32.xlu0 %v331, 96
    %v1070 = vpop.permute.xlu0 %1069
    %v1072 = vsel %vm335, %v331, 0
    %v1075 = vsel %vm335, %v1070, 0
    %1077 = vmatprep.subr.bf16.mxu0 0
    %1078 = vmatpush1.bf16.xpose.msra.mxu0 %v1075
    %1079 = vmatprep.subr.bf16.mxu0 0
    %1080 = vmatpush1.bf16.xpose.msra.mxu0 0
    %1081 = vmatprep.subr.bf16.mxu0 0
    %1082 = vmatpush1.bf16.xpose.msra.mxu0 0
    %1083 = vmatprep.subr.bf16.mxu0 0
    %1084 = vmatpush1.bf16.xpose.msra.mxu0 0
    %1085 = vmatprep.subr.bf16.mxu0 0
    %1086 = vmatpush1.bf16.xpose.msra.mxu0 0
    %1087 = vmatprep.subr.bf16.mxu0 0
    %1088 = vmatpush1.bf16.xpose.msra.mxu0 0
    %1089 = vmatprep.subr.bf16.mxu0 0
    %1090 = vmatpush1.bf16.xpose.msra.mxu0 0
    %1091 = vmatprep.subr.bf16.mxu0 0
    %1092 = vmatpush1.bf16.xpose.msra.mxu0 0
    %1093 = vmatprep.subr.bf16.mxu0 0
    %1094 = vmatpush1.bf16.xpose.msra.mxu0 0
    %1095 = vmatprep.subr.bf16.mxu0 0
    %1096 = vmatpush1.bf16.xpose.msra.mxu0 0
    %1097 = vmatprep.subr.bf16.mxu0 0
    %1098 = vmatpush1.bf16.xpose.msra.mxu0 0
    %1099 = vmatprep.subr.bf16.mxu0 0
    %1100 = vmatpush1.bf16.xpose.msra.mxu0 0
    %1101 = vmatprep.subr.bf16.mxu0 0
    %1102 = vmatpush1.bf16.xpose.msra.mxu0 0
    %1103 = vmatprep.subr.bf16.mxu0 0
    %1104 = vmatpush1.bf16.xpose.msra.mxu0 0
    %1105 = vmatprep.subr.bf16.mxu0 0
    %1106 = vmatpush1.bf16.xpose.msra.mxu0 0
    %1107 = vmatprep.subr.bf16.mxu0 0
    %1108 = vmatpush1.bf16.xpose.msra.mxu0 0
    %1109 = vmatprep.mubr.bf16.mxu0 0
    %1110 = vmatmul.mubr.bf16.gmra.mrb[0].mxu0 %v1072
    %v1111 = vpop.f32.mrb[0].mxu0
    %v1112 = vadd.f32 0.0, %v1111
    %v1113 = vpop.f32.mrb[0].mxu0
    %v1114 = vpop.f32.mrb[0].mxu0
    %v1115 = vpop.f32.mrb[0].mxu0
    %1116 = vdwg.mxu0
    %v1117 = vld [vmem:[%s1] sm:$0xff]
    %v1118 = vld [vmem:[%s1 + $0x8] sm:$0xff]
    %v1119 = vld [vmem:[%s1 + $0x10] sm:$0xff]
    %v1120 = vld [vmem:[%s1 + $0x18] sm:$0xff]
    %v1121 = vld [vmem:[%s1 + $0x20] sm:$0xff]
    %v1122 = vld [vmem:[%s1 + $0x28] sm:$0xff]
    %v1123 = vld [vmem:[%s1 + $0x30] sm:$0xff]
    %v1124 = vld [vmem:[%s1 + $0x38] sm:$0xff]
    %v1125 = vadd.f32 %v377, %v1117
    %v1126 = vadd.f32 %v426, %v1118
    %v1127 = vadd.f32 %v475, %v1117
    %v1128 = vadd.f32 %v524, %v1118
    %v1129 = vadd.f32 %v573, %v1119
    %v1130 = vadd.f32 %v622, %v1120
    %v1131 = vadd.f32 %v671, %v1119
    %v1132 = vadd.f32 %v720, %v1120
    %v1133 = vadd.f32 %v769, %v1121
    %v1134 = vadd.f32 %v818, %v1122
    %v1135 = vadd.f32 %v867, %v1121
    %v1136 = vadd.f32 %v916, %v1122
    %v1137 = vadd.f32 %v965, %v1123
    %v1138 = vadd.f32 %v1014, %v1124
    %v1139 = vadd.f32 %v1063, %v1123
    %v1140 = vadd.f32 %v1112, %v1124
    %v1141 = vsel %vm335, %v1125, -inf
    %1142 = vmax.xlane.f32.xlu0 %v1141
    %v1143 = vpop.xlane.xlu0 %1142
    %v1144 = vsel %vm335, %v1126, -inf
    %1145 = vmax.xlane.f32.xlu0 %v1144
    %v1146 = vpop.xlane.xlu0 %1145
    %v1147 = vsel %vm335, %v1127, -inf
    %1148 = vmax.xlane.f32.xlu0 %v1147
    %v1149 = vpop.xlane.xlu0 %1148
    %v1150 = vsel %vm335, %v1128, -inf
    %1151 = vmax.xlane.f32.xlu0 %v1150
    %v1152 = vpop.xlane.xlu0 %1151
    %v1153 = vsel %vm335, %v1129, -inf
    %1154 = vmax.xlane.f32.xlu0 %v1153
    %v1155 = vpop.xlane.xlu0 %1154
    %v1156 = vsel %vm335, %v1130, -inf
    %1157 = vmax.xlane.f32.xlu0 %v1156
    %v1158 = vpop.xlane.xlu0 %1157
    %v1159 = vsel %vm335, %v1131, -inf
    %1160 = vmax.xlane.f32.xlu0 %v1159
    %v1161 = vpop.xlane.xlu0 %1160
    %v1162 = vsel %vm335, %v1132, -inf
    %1163 = vmax.xlane.f32.xlu0 %v1162
    %v1164 = vpop.xlane.xlu0 %1163
    %v1165 = vsel %vm335, %v1133, -inf
    %1166 = vmax.xlane.f32.xlu0 %v1165
    %v1167 = vpop.xlane.xlu0 %1166
    %v1168 = vsel %vm335, %v1134, -inf
    %1169 = vmax.xlane.f32.xlu0 %v1168
    %v1170 = vpop.xlane.xlu0 %1169
    %v1171 = vsel %vm335, %v1135, -inf
    %1172 = vmax.xlane.f32.xlu0 %v1171
    %v1173 = vpop.xlane.xlu0 %1172
    %v1174 = vsel %vm335, %v1136, -inf
    %1175 = vmax.xlane.f32.xlu0 %v1174
    %v1176 = vpop.xlane.xlu0 %1175
    %v1177 = vsel %vm335, %v1137, -inf
    %1178 = vmax.xlane.f32.xlu0 %v1177
    %v1179 = vpop.xlane.xlu0 %1178
    %v1180 = vsel %vm335, %v1138, -inf
    %1181 = vmax.xlane.f32.xlu0 %v1180
    %v1182 = vpop.xlane.xlu0 %1181
    %v1183 = vsel %vm335, %v1139, -inf
    %1184 = vmax.xlane.f32.xlu0 %v1183
    %v1185 = vpop.xlane.xlu0 %1184
    %v1186 = vsel %vm335, %v1140, -inf
    %1187 = vmax.xlane.f32.xlu0 %v1186
    %v1188 = vpop.xlane.xlu0 %1187
    %v1189 = vsub.f32 %v1125, %v1143
    %v1190 = vsub.f32 %v1126, %v1146
    %v1191 = vsub.f32 %v1127, %v1149
    %v1192 = vsub.f32 %v1128, %v1152
    %v1193 = vsub.f32 %v1129, %v1155
    %v1194 = vsub.f32 %v1130, %v1158
    %v1195 = vsub.f32 %v1131, %v1161
    %v1196 = vsub.f32 %v1132, %v1164
    %v1197 = vsub.f32 %v1133, %v1167
    %v1198 = vsub.f32 %v1134, %v1170
    %v1199 = vsub.f32 %v1135, %v1173
    %v1200 = vsub.f32 %v1136, %v1176
    %v1201 = vsub.f32 %v1137, %v1179
    %v1202 = vsub.f32 %v1138, %v1182
    %v1203 = vsub.f32 %v1139, %v1185
    %v1204 = vsub.f32 %v1140, %v1188
    %v1205 = vmul.f32 %v1189, 1.442695
    %v1206 = vpow.pop %v1205
    %v1207 = vmul.f32 %v1190, 1.442695
    %v1208 = vpow.pop %v1207
    %v1209 = vmul.f32 %v1191, 1.442695
    %v1210 = vpow.pop %v1209
    %v1211 = vmul.f32 %v1192, 1.442695
    %v1212 = vpow.pop %v1211
    %v1213 = vmul.f32 %v1193, 1.442695
    %v1214 = vpow.pop %v1213
    %v1215 = vmul.f32 %v1194, 1.442695
    %v1216 = vpow.pop %v1215
    %v1217 = vmul.f32 %v1195, 1.442695
    %v1218 = vpow.pop %v1217
    %v1219 = vmul.f32 %v1196, 1.442695
    %v1220 = vpow.pop %v1219
    %v1221 = vmul.f32 %v1197, 1.442695
    %v1222 = vpow.pop %v1221
    %v1223 = vmul.f32 %v1198, 1.442695
    %v1224 = vpow.pop %v1223
    %v1225 = vmul.f32 %v1199, 1.442695
    %v1226 = vpow.pop %v1225
    %v1227 = vmul.f32 %v1200, 1.442695
    %v1228 = vpow.pop %v1227
    %v1229 = vmul.f32 %v1201, 1.442695
    %v1230 = vpow.pop %v1229
    %v1231 = vmul.f32 %v1202, 1.442695
    %v1232 = vpow.pop %v1231
    %v1233 = vmul.f32 %v1203, 1.442695
    %v1234 = vpow.pop %v1233
    %v1235 = vmul.f32 %v1204, 1.442695
    %v1236 = vpow.pop %v1235
    %v1237 = vsel %vm335, %v1206, 0.0
    %1238 = vadd.xlane.f32.xlu0 %v1237
    %v1239 = vpop.xlane.xlu0 %1238
    %v1240 = vsel %vm335, %v1208, 0.0
    %1241 = vadd.xlane.f32.xlu0 %v1240
    %v1242 = vpop.xlane.xlu0 %1241
    %v1243 = vsel %vm335, %v1210, 0.0
    %1244 = vadd.xlane.f32.xlu0 %v1243
    %v1245 = vpop.xlane.xlu0 %1244
    %v1246 = vsel %vm335, %v1212, 0.0
    %1247 = vadd.xlane.f32.xlu0 %v1246
    %v1248 = vpop.xlane.xlu0 %1247
    %v1249 = vsel %vm335, %v1214, 0.0
    %1250 = vadd.xlane.f32.xlu0 %v1249
    %v1251 = vpop.xlane.xlu0 %1250
    %v1252 = vsel %vm335, %v1216, 0.0
    %1253 = vadd.xlane.f32.xlu0 %v1252
    %v1254 = vpop.xlane.xlu0 %1253
    %v1255 = vsel %vm335, %v1218, 0.0
    %1256 = vadd.xlane.f32.xlu0 %v1255
    %v1257 = vpop.xlane.xlu0 %1256
    %v1258 = vsel %vm335, %v1220, 0.0
    %1259 = vadd.xlane.f32.xlu0 %v1258
    %v1260 = vpop.xlane.xlu0 %1259
    %v1261 = vsel %vm335, %v1222, 0.0
    %1262 = vadd.xlane.f32.xlu0 %v1261
    %v1263 = vpop.xlane.xlu0 %1262
    %v1264 = vsel %vm335, %v1224, 0.0
    %1265 = vadd.xlane.f32.xlu0 %v1264
    %v1266 = vpop.xlane.xlu0 %1265
    %v1267 = vsel %vm335, %v1226, 0.0
    %1268 = vadd.xlane.f32.xlu0 %v1267
    %v1269 = vpop.xlane.xlu0 %1268
    %v1270 = vsel %vm335, %v1228, 0.0
    %1271 = vadd.xlane.f32.xlu0 %v1270
    %v1272 = vpop.xlane.xlu0 %1271
    %v1273 = vsel %vm335, %v1230, 0.0
    %1274 = vadd.xlane.f32.xlu0 %v1273
    %v1275 = vpop.xlane.xlu0 %1274
    %v1276 = vsel %vm335, %v1232, 0.0
    %1277 = vadd.xlane.f32.xlu0 %v1276
    %v1278 = vpop.xlane.xlu0 %1277
    %v1279 = vsel %vm335, %v1234, 0.0
    %1280 = vadd.xlane.f32.xlu0 %v1279
    %v1281 = vpop.xlane.xlu0 %1280
    %v1282 = vsel %vm335, %v1236, 0.0
    %1283 = vadd.xlane.f32.xlu0 %v1282
    %v1284 = vpop.xlane.xlu0 %1283
    %v1285 = vrcp.pop %v1239
    %v1286 = vrcp.pop %v1242
    %v1287 = vrcp.pop %v1245
    %v1288 = vrcp.pop %v1248
    %v1289 = vrcp.pop %v1251
    %v1290 = vrcp.pop %v1254
    %v1291 = vrcp.pop %v1257
    %v1292 = vrcp.pop %v1260
    %v1293 = vrcp.pop %v1263
    %v1294 = vrcp.pop %v1266
    %v1295 = vrcp.pop %v1269
    %v1296 = vrcp.pop %v1272
    %v1297 = vrcp.pop %v1275
    %v1298 = vrcp.pop %v1278
    %v1299 = vrcp.pop %v1281
    %v1300 = vrcp.pop %v1284
    %v1301 = vmul.f32 %v1206, %v1285
    %v1302 = vmul.f32 %v1208, %v1286
    %v1303 = vmul.f32 %v1210, %v1287
    %v1304 = vmul.f32 %v1212, %v1288
    %v1305 = vmul.f32 %v1214, %v1289
    %v1306 = vmul.f32 %v1216, %v1290
    %v1307 = vmul.f32 %v1218, %v1291
    %v1308 = vmul.f32 %v1220, %v1292
    %v1309 = vmul.f32 %v1222, %v1293
    %v1310 = vmul.f32 %v1224, %v1294
    %v1311 = vmul.f32 %v1226, %v1295
    %v1312 = vmul.f32 %v1228, %v1296
    %v1313 = vmul.f32 %v1230, %v1297
    %v1314 = vmul.f32 %v1232, %v1298
    %v1315 = vmul.f32 %v1234, %v1299
    %v1316 = vmul.f32 %v1236, %v1300
    %v1317 = vpack.c.bf16 %v1301, %v1301
    %v1318 = vpack.c.bf16 %v1302, %v1302
    %v1319 = vpack.c.bf16 %v1303, %v1303
    %v1320 = vpack.c.bf16 %v1304, %v1304
    %v1321 = vpack.c.bf16 %v1305, %v1305
    %v1322 = vpack.c.bf16 %v1306, %v1306
    %v1323 = vpack.c.bf16 %v1307, %v1307
    %v1324 = vpack.c.bf16 %v1308, %v1308
    %v1325 = vpack.c.bf16 %v1309, %v1309
    %v1326 = vpack.c.bf16 %v1310, %v1310
    %v1327 = vpack.c.bf16 %v1311, %v1311
    %v1328 = vpack.c.bf16 %v1312, %v1312
    %v1329 = vpack.c.bf16 %v1313, %v1313
    %v1330 = vpack.c.bf16 %v1314, %v1314
    %v1331 = vpack.c.bf16 %v1315, %v1315
    %v1332 = vpack.c.bf16 %v1316, %v1316
    %1333 = vrot.lane.b32.xlu0 %v316, 64
    %v1334 = vpop.permute.xlu0 %1333
    %v1336 = vsel %vm335, %v1317, 0
    %vm1338 = vcmask 1043456
    %v1340 = vsel %vm1338, %v1334, 0
    %1342 = vmatprep.subr.bf16.mxu0 0
    %1343 = vmatpush1.bf16.msra.mxu0 %v1340
    %1344 = vmatprep.subr.bf16.mxu0 0
    %1345 = vmatpush1.bf16.msra.mxu0 0
    %1346 = vmatprep.subr.bf16.mxu0 0
    %1347 = vmatpush1.bf16.msra.mxu0 0
    %1348 = vmatprep.subr.bf16.mxu0 0
    %1349 = vmatpush1.bf16.msra.mxu0 0
    %1350 = vmatprep.subr.bf16.mxu0 0
    %1351 = vmatpush1.bf16.msra.mxu0 0
    %1352 = vmatprep.subr.bf16.mxu0 0
    %1353 = vmatpush1.bf16.msra.mxu0 0
    %1354 = vmatprep.subr.bf16.mxu0 0
    %1355 = vmatpush1.bf16.msra.mxu0 0
    %1356 = vmatprep.subr.bf16.mxu0 0
    %1357 = vmatpush1.bf16.msra.mxu0 0
    %1358 = vmatprep.subr.bf16.mxu0 0
    %1359 = vmatpush1.bf16.msra.mxu0 0
    %1360 = vmatprep.subr.bf16.mxu0 0
    %1361 = vmatpush1.bf16.msra.mxu0 0
    %1362 = vmatprep.subr.bf16.mxu0 0
    %1363 = vmatpush1.bf16.msra.mxu0 0
    %1364 = vmatprep.subr.bf16.mxu0 0
    %1365 = vmatpush1.bf16.msra.mxu0 0
    %1366 = vmatprep.subr.bf16.mxu0 0
    %1367 = vmatpush1.bf16.msra.mxu0 0
    %1368 = vmatprep.subr.bf16.mxu0 0
    %1369 = vmatpush1.bf16.msra.mxu0 0
    %1370 = vmatprep.subr.bf16.mxu0 0
    %1371 = vmatpush1.bf16.msra.mxu0 0
    %1372 = vmatprep.subr.bf16.mxu0 0
    %1373 = vmatpush1.bf16.msra.mxu0 0
    %1374 = vmatprep.mubr.bf16.mxu0 0
    %1375 = vmatmul.mubr.bf16.gmra.mrb[0].mxu0 %v1336
    %v1376 = vpop.f32.mrb[0].mxu0
    %v1377 = vadd.f32 0.0, %v1376
    %v1378 = vpop.f32.mrb[0].mxu0
    %v1379 = vpop.f32.mrb[0].mxu0
    %v1380 = vpop.f32.mrb[0].mxu0
    %1381 = vdwg.mxu0
    %1382 = vrot.lane.b32.xlu0 %v317, 64
    %v1383 = vpop.permute.xlu0 %1382
    %v1385 = vsel %vm335, %v1318, 0
    %v1388 = vsel %vm1338, %v1383, 0
    %1390 = vmatprep.subr.bf16.mxu0 0
    %1391 = vmatpush1.bf16.msra.mxu0 %v1388
    %1392 = vmatprep.subr.bf16.mxu0 0
    %1393 = vmatpush1.bf16.msra.mxu0 0
    %1394 = vmatprep.subr.bf16.mxu0 0
    %1395 = vmatpush1.bf16.msra.mxu0 0
    %1396 = vmatprep.subr.bf16.mxu0 0
    %1397 = vmatpush1.bf16.msra.mxu0 0
    %1398 = vmatprep.subr.bf16.mxu0 0
    %1399 = vmatpush1.bf16.msra.mxu0 0
    %1400 = vmatprep.subr.bf16.mxu0 0
    %1401 = vmatpush1.bf16.msra.mxu0 0
    %1402 = vmatprep.subr.bf16.mxu0 0
    %1403 = vmatpush1.bf16.msra.mxu0 0
    %1404 = vmatprep.subr.bf16.mxu0 0
    %1405 = vmatpush1.bf16.msra.mxu0 0
    %1406 = vmatprep.subr.bf16.mxu0 0
    %1407 = vmatpush1.bf16.msra.mxu0 0
    %1408 = vmatprep.subr.bf16.mxu0 0
    %1409 = vmatpush1.bf16.msra.mxu0 0
    %1410 = vmatprep.subr.bf16.mxu0 0
    %1411 = vmatpush1.bf16.msra.mxu0 0
    %1412 = vmatprep.subr.bf16.mxu0 0
    %1413 = vmatpush1.bf16.msra.mxu0 0
    %1414 = vmatprep.subr.bf16.mxu0 0
    %1415 = vmatpush1.bf16.msra.mxu0 0
    %1416 = vmatprep.subr.bf16.mxu0 0
    %1417 = vmatpush1.bf16.msra.mxu0 0
    %1418 = vmatprep.subr.bf16.mxu0 0
    %1419 = vmatpush1.bf16.msra.mxu0 0
    %1420 = vmatprep.subr.bf16.mxu0 0
    %1421 = vmatpush1.bf16.msra.mxu0 0
    %1422 = vmatprep.mubr.bf16.mxu0 0
    %1423 = vmatmul.mubr.bf16.gmra.mrb[0].mxu0 %v1385
    %v1424 = vpop.f32.mrb[0].mxu0
    %v1425 = vadd.f32 0.0, %v1424
    %v1426 = vpop.f32.mrb[0].mxu0
    %v1427 = vpop.f32.mrb[0].mxu0
    %v1428 = vpop.f32.mrb[0].mxu0
    %1429 = vdwg.mxu0
    %1430 = vrot.lane.b32.xlu0 %v318, 64
    %v1431 = vpop.permute.xlu0 %1430
    %v1433 = vsel %vm335, %v1319, 0
    %v1436 = vsel %vm1338, %v1431, 0
    %1438 = vmatprep.subr.bf16.mxu0 0
    %1439 = vmatpush1.bf16.msra.mxu0 %v1436
    %1440 = vmatprep.subr.bf16.mxu0 0
    %1441 = vmatpush1.bf16.msra.mxu0 0
    %1442 = vmatprep.subr.bf16.mxu0 0
    %1443 = vmatpush1.bf16.msra.mxu0 0
    %1444 = vmatprep.subr.bf16.mxu0 0
    %1445 = vmatpush1.bf16.msra.mxu0 0
    %1446 = vmatprep.subr.bf16.mxu0 0
    %1447 = vmatpush1.bf16.msra.mxu0 0
    %1448 = vmatprep.subr.bf16.mxu0 0
    %1449 = vmatpush1.bf16.msra.mxu0 0
    %1450 = vmatprep.subr.bf16.mxu0 0
    %1451 = vmatpush1.bf16.msra.mxu0 0
    %1452 = vmatprep.subr.bf16.mxu0 0
    %1453 = vmatpush1.bf16.msra.mxu0 0
    %1454 = vmatprep.subr.bf16.mxu0 0
    %1455 = vmatpush1.bf16.msra.mxu0 0
    %1456 = vmatprep.subr.bf16.mxu0 0
    %1457 = vmatpush1.bf16.msra.mxu0 0
    %1458 = vmatprep.subr.bf16.mxu0 0
    %1459 = vmatpush1.bf16.msra.mxu0 0
    %1460 = vmatprep.subr.bf16.mxu0 0
    %1461 = vmatpush1.bf16.msra.mxu0 0
    %1462 = vmatprep.subr.bf16.mxu0 0
    %1463 = vmatpush1.bf16.msra.mxu0 0
    %1464 = vmatprep.subr.bf16.mxu0 0
    %1465 = vmatpush1.bf16.msra.mxu0 0
    %1466 = vmatprep.subr.bf16.mxu0 0
    %1467 = vmatpush1.bf16.msra.mxu0 0
    %1468 = vmatprep.subr.bf16.mxu0 0
    %1469 = vmatpush1.bf16.msra.mxu0 0
    %1470 = vmatprep.mubr.bf16.mxu0 0
    %1471 = vmatmul.mubr.bf16.gmra.mrb[0].mxu0 %v1433
    %v1472 = vpop.f32.mrb[0].mxu0
    %v1473 = vadd.f32 0.0, %v1472
    %v1474 = vpop.f32.mrb[0].mxu0
    %v1475 = vpop.f32.mrb[0].mxu0
    %v1476 = vpop.f32.mrb[0].mxu0
    %1477 = vdwg.mxu0
    %1478 = vrot.lane.b32.xlu0 %v319, 64
    %v1479 = vpop.permute.xlu0 %1478
    %v1481 = vsel %vm335, %v1320, 0
    %v1484 = vsel %vm1338, %v1479, 0
    %1486 = vmatprep.subr.bf16.mxu0 0
    %1487 = vmatpush1.bf16.msra.mxu0 %v1484
    %1488 = vmatprep.subr.bf16.mxu0 0
    %1489 = vmatpush1.bf16.msra.mxu0 0
    %1490 = vmatprep.subr.bf16.mxu0 0
    %1491 = vmatpush1.bf16.msra.mxu0 0
    %1492 = vmatprep.subr.bf16.mxu0 0
    %1493 = vmatpush1.bf16.msra.mxu0 0
    %1494 = vmatprep.subr.bf16.mxu0 0
    %1495 = vmatpush1.bf16.msra.mxu0 0
    %1496 = vmatprep.subr.bf16.mxu0 0
    %1497 = vmatpush1.bf16.msra.mxu0 0
    %1498 = vmatprep.subr.bf16.mxu0 0
    %1499 = vmatpush1.bf16.msra.mxu0 0
    %1500 = vmatprep.subr.bf16.mxu0 0
    %1501 = vmatpush1.bf16.msra.mxu0 0
    %1502 = vmatprep.subr.bf16.mxu0 0
    %1503 = vmatpush1.bf16.msra.mxu0 0
    %1504 = vmatprep.subr.bf16.mxu0 0
    %1505 = vmatpush1.bf16.msra.mxu0 0
    %1506 = vmatprep.subr.bf16.mxu0 0
    %1507 = vmatpush1.bf16.msra.mxu0 0
    %1508 = vmatprep.subr.bf16.mxu0 0
    %1509 = vmatpush1.bf16.msra.mxu0 0
    %1510 = vmatprep.subr.bf16.mxu0 0
    %1511 = vmatpush1.bf16.msra.mxu0 0
    %1512 = vmatprep.subr.bf16.mxu0 0
    %1513 = vmatpush1.bf16.msra.mxu0 0
    %1514 = vmatprep.subr.bf16.mxu0 0
    %1515 = vmatpush1.bf16.msra.mxu0 0
    %1516 = vmatprep.subr.bf16.mxu0 0
    %1517 = vmatpush1.bf16.msra.mxu0 0
    %1518 = vmatprep.mubr.bf16.mxu0 0
    %1519 = vmatmul.mubr.bf16.gmra.mrb[0].mxu0 %v1481
    %v1520 = vpop.f32.mrb[0].mxu0
    %v1521 = vadd.f32 0.0, %v1520
    %v1522 = vpop.f32.mrb[0].mxu0
    %v1523 = vpop.f32.mrb[0].mxu0
    %v1524 = vpop.f32.mrb[0].mxu0
    %1525 = vdwg.mxu0
    %1526 = vrot.lane.b32.xlu0 %v320, 64
    %v1527 = vpop.permute.xlu0 %1526
    %v1529 = vsel %vm335, %v1321, 0
    %v1532 = vsel %vm1338, %v1527, 0
    %1534 = vmatprep.subr.bf16.mxu0 0
    %1535 = vmatpush1.bf16.msra.mxu0 %v1532
    %1536 = vmatprep.subr.bf16.mxu0 0
    %1537 = vmatpush1.bf16.msra.mxu0 0
    %1538 = vmatprep.subr.bf16.mxu0 0
    %1539 = vmatpush1.bf16.msra.mxu0 0
    %1540 = vmatprep.subr.bf16.mxu0 0
    %1541 = vmatpush1.bf16.msra.mxu0 0
    %1542 = vmatprep.subr.bf16.mxu0 0
    %1543 = vmatpush1.bf16.msra.mxu0 0
    %1544 = vmatprep.subr.bf16.mxu0 0
    %1545 = vmatpush1.bf16.msra.mxu0 0
    %1546 = vmatprep.subr.bf16.mxu0 0
    %1547 = vmatpush1.bf16.msra.mxu0 0
    %1548 = vmatprep.subr.bf16.mxu0 0
    %1549 = vmatpush1.bf16.msra.mxu0 0
    %1550 = vmatprep.subr.bf16.mxu0 0
    %1551 = vmatpush1.bf16.msra.mxu0 0
    %1552 = vmatprep.subr.bf16.mxu0 0
    %1553 = vmatpush1.bf16.msra.mxu0 0
    %1554 = vmatprep.subr.bf16.mxu0 0
    %1555 = vmatpush1.bf16.msra.mxu0 0
    %1556 = vmatprep.subr.bf16.mxu0 0
    %1557 = vmatpush1.bf16.msra.mxu0 0
    %1558 = vmatprep.subr.bf16.mxu0 0
    %1559 = vmatpush1.bf16.msra.mxu0 0
    %1560 = vmatprep.subr.bf16.mxu0 0
    %1561 = vmatpush1.bf16.msra.mxu0 0
    %1562 = vmatprep.subr.bf16.mxu0 0
    %1563 = vmatpush1.bf16.msra.mxu0 0
    %1564 = vmatprep.subr.bf16.mxu0 0
    %1565 = vmatpush1.bf16.msra.mxu0 0
    %1566 = vmatprep.mubr.bf16.mxu0 0
    %1567 = vmatmul.mubr.bf16.gmra.mrb[0].mxu0 %v1529
    %v1568 = vpop.f32.mrb[0].mxu0
    %v1569 = vadd.f32 0.0, %v1568
    %v1570 = vpop.f32.mrb[0].mxu0
    %v1571 = vpop.f32.mrb[0].mxu0
    %v1572 = vpop.f32.mrb[0].mxu0
    %1573 = vdwg.mxu0
    %1574 = vrot.lane.b32.xlu0 %v321, 64
    %v1575 = vpop.permute.xlu0 %1574
    %v1577 = vsel %vm335, %v1322, 0
    %v1580 = vsel %vm1338, %v1575, 0
    %1582 = vmatprep.subr.bf16.mxu0 0
    %1583 = vmatpush1.bf16.msra.mxu0 %v1580
    %1584 = vmatprep.subr.bf16.mxu0 0
    %1585 = vmatpush1.bf16.msra.mxu0 0
    %1586 = vmatprep.subr.bf16.mxu0 0
    %1587 = vmatpush1.bf16.msra.mxu0 0
    %1588 = vmatprep.subr.bf16.mxu0 0
    %1589 = vmatpush1.bf16.msra.mxu0 0
    %1590 = vmatprep.subr.bf16.mxu0 0
    %1591 = vmatpush1.bf16.msra.mxu0 0
    %1592 = vmatprep.subr.bf16.mxu0 0
    %1593 = vmatpush1.bf16.msra.mxu0 0
    %1594 = vmatprep.subr.bf16.mxu0 0
    %1595 = vmatpush1.bf16.msra.mxu0 0
    %1596 = vmatprep.subr.bf16.mxu0 0
    %1597 = vmatpush1.bf16.msra.mxu0 0
    %1598 = vmatprep.subr.bf16.mxu0 0
    %1599 = vmatpush1.bf16.msra.mxu0 0
    %1600 = vmatprep.subr.bf16.mxu0 0
    %1601 = vmatpush1.bf16.msra.mxu0 0
    %1602 = vmatprep.subr.bf16.mxu0 0
    %1603 = vmatpush1.bf16.msra.mxu0 0
    %1604 = vmatprep.subr.bf16.mxu0 0
    %1605 = vmatpush1.bf16.msra.mxu0 0
    %1606 = vmatprep.subr.bf16.mxu0 0
    %1607 = vmatpush1.bf16.msra.mxu0 0
    %1608 = vmatprep.subr.bf16.mxu0 0
    %1609 = vmatpush1.bf16.msra.mxu0 0
    %1610 = vmatprep.subr.bf16.mxu0 0
    %1611 = vmatpush1.bf16.msra.mxu0 0
    %1612 = vmatprep.subr.bf16.mxu0 0
    %1613 = vmatpush1.bf16.msra.mxu0 0
    %1614 = vmatprep.mubr.bf16.mxu0 0
    %1615 = vmatmul.mubr.bf16.gmra.mrb[0].mxu0 %v1577
    %v1616 = vpop.f32.mrb[0].mxu0
    %v1617 = vadd.f32 0.0, %v1616
    %v1618 = vpop.f32.mrb[0].mxu0
    %v1619 = vpop.f32.mrb[0].mxu0
    %v1620 = vpop.f32.mrb[0].mxu0
    %1621 = vdwg.mxu0
    %1622 = vrot.lane.b32.xlu0 %v322, 64
    %v1623 = vpop.permute.xlu0 %1622
    %v1625 = vsel %vm335, %v1323, 0
    %v1628 = vsel %vm1338, %v1623, 0
    %1630 = vmatprep.subr.bf16.mxu0 0
    %1631 = vmatpush1.bf16.msra.mxu0 %v1628
    %1632 = vmatprep.subr.bf16.mxu0 0
    %1633 = vmatpush1.bf16.msra.mxu0 0
    %1634 = vmatprep.subr.bf16.mxu0 0
    %1635 = vmatpush1.bf16.msra.mxu0 0
    %1636 = vmatprep.subr.bf16.mxu0 0
    %1637 = vmatpush1.bf16.msra.mxu0 0
    %1638 = vmatprep.subr.bf16.mxu0 0
    %1639 = vmatpush1.bf16.msra.mxu0 0
    %1640 = vmatprep.subr.bf16.mxu0 0
    %1641 = vmatpush1.bf16.msra.mxu0 0
    %1642 = vmatprep.subr.bf16.mxu0 0
    %1643 = vmatpush1.bf16.msra.mxu0 0
    %1644 = vmatprep.subr.bf16.mxu0 0
    %1645 = vmatpush1.bf16.msra.mxu0 0
    %1646 = vmatprep.subr.bf16.mxu0 0
    %1647 = vmatpush1.bf16.msra.mxu0 0
    %1648 = vmatprep.subr.bf16.mxu0 0
    %1649 = vmatpush1.bf16.msra.mxu0 0
    %1650 = vmatprep.subr.bf16.mxu0 0
    %1651 = vmatpush1.bf16.msra.mxu0 0
    %1652 = vmatprep.subr.bf16.mxu0 0
    %1653 = vmatpush1.bf16.msra.mxu0 0
    %1654 = vmatprep.subr.bf16.mxu0 0
    %1655 = vmatpush1.bf16.msra.mxu0 0
    %1656 = vmatprep.subr.bf16.mxu0 0
    %1657 = vmatpush1.bf16.msra.mxu0 0
    %1658 = vmatprep.subr.bf16.mxu0 0
    %1659 = vmatpush1.bf16.msra.mxu0 0
    %1660 = vmatprep.subr.bf16.mxu0 0
    %1661 = vmatpush1.bf16.msra.mxu0 0
    %1662 = vmatprep.mubr.bf16.mxu0 0
    %1663 = vmatmul.mubr.bf16.gmra.mrb[0].mxu0 %v1625
    %v1664 = vpop.f32.mrb[0].mxu0
    %v1665 = vadd.f32 0.0, %v1664
    %v1666 = vpop.f32.mrb[0].mxu0
    %v1667 = vpop.f32.mrb[0].mxu0
    %v1668 = vpop.f32.mrb[0].mxu0
    %1669 = vdwg.mxu0
    %1670 = vrot.lane.b32.xlu0 %v323, 64
    %v1671 = vpop.permute.xlu0 %1670
    %v1673 = vsel %vm335, %v1324, 0
    %v1676 = vsel %vm1338, %v1671, 0
    %1678 = vmatprep.subr.bf16.mxu0 0
    %1679 = vmatpush1.bf16.msra.mxu0 %v1676
    %1680 = vmatprep.subr.bf16.mxu0 0
    %1681 = vmatpush1.bf16.msra.mxu0 0
    %1682 = vmatprep.subr.bf16.mxu0 0
    %1683 = vmatpush1.bf16.msra.mxu0 0
    %1684 = vmatprep.subr.bf16.mxu0 0
    %1685 = vmatpush1.bf16.msra.mxu0 0
    %1686 = vmatprep.subr.bf16.mxu0 0
    %1687 = vmatpush1.bf16.msra.mxu0 0
    %1688 = vmatprep.subr.bf16.mxu0 0
    %1689 = vmatpush1.bf16.msra.mxu0 0
    %1690 = vmatprep.subr.bf16.mxu0 0
    %1691 = vmatpush1.bf16.msra.mxu0 0
    %1692 = vmatprep.subr.bf16.mxu0 0
    %1693 = vmatpush1.bf16.msra.mxu0 0
    %1694 = vmatprep.subr.bf16.mxu0 0
    %1695 = vmatpush1.bf16.msra.mxu0 0
    %1696 = vmatprep.subr.bf16.mxu0 0
    %1697 = vmatpush1.bf16.msra.mxu0 0
    %1698 = vmatprep.subr.bf16.mxu0 0
    %1699 = vmatpush1.bf16.msra.mxu0 0
    %1700 = vmatprep.subr.bf16.mxu0 0
    %1701 = vmatpush1.bf16.msra.mxu0 0
    %1702 = vmatprep.subr.bf16.mxu0 0
    %1703 = vmatpush1.bf16.msra.mxu0 0
    %1704 = vmatprep.subr.bf16.mxu0 0
    %1705 = vmatpush1.bf16.msra.mxu0 0
    %1706 = vmatprep.subr.bf16.mxu0 0
    %1707 = vmatpush1.bf16.msra.mxu0 0
    %1708 = vmatprep.subr.bf16.mxu0 0
    %1709 = vmatpush1.bf16.msra.mxu0 0
    %1710 = vmatprep.mubr.bf16.mxu0 0
    %1711 = vmatmul.mubr.bf16.gmra.mrb[0].mxu0 %v1673
    %v1712 = vpop.f32.mrb[0].mxu0
    %v1713 = vadd.f32 0.0, %v1712
    %v1714 = vpop.f32.mrb[0].mxu0
    %v1715 = vpop.f32.mrb[0].mxu0
    %v1716 = vpop.f32.mrb[0].mxu0
    %1717 = vdwg.mxu0
    %1718 = vrot.lane.b32.xlu0 %v324, 64
    %v1719 = vpop.permute.xlu0 %1718
    %v1721 = vsel %vm335, %v1325, 0
    %v1724 = vsel %vm1338, %v1719, 0
    %1726 = vmatprep.subr.bf16.mxu0 0
    %1727 = vmatpush1.bf16.msra.mxu0 %v1724
    %1728 = vmatprep.subr.bf16.mxu0 0
    %1729 = vmatpush1.bf16.msra.mxu0 0
    %1730 = vmatprep.subr.bf16.mxu0 0
    %1731 = vmatpush1.bf16.msra.mxu0 0
    %1732 = vmatprep.subr.bf16.mxu0 0
    %1733 = vmatpush1.bf16.msra.mxu0 0
    %1734 = vmatprep.subr.bf16.mxu0 0
    %1735 = vmatpush1.bf16.msra.mxu0 0
    %1736 = vmatprep.subr.bf16.mxu0 0
    %1737 = vmatpush1.bf16.msra.mxu0 0
    %1738 = vmatprep.subr.bf16.mxu0 0
    %1739 = vmatpush1.bf16.msra.mxu0 0
    %1740 = vmatprep.subr.bf16.mxu0 0
    %1741 = vmatpush1.bf16.msra.mxu0 0
    %1742 = vmatprep.subr.bf16.mxu0 0
    %1743 = vmatpush1.bf16.msra.mxu0 0
    %1744 = vmatprep.subr.bf16.mxu0 0
    %1745 = vmatpush1.bf16.msra.mxu0 0
    %1746 = vmatprep.subr.bf16.mxu0 0
    %1747 = vmatpush1.bf16.msra.mxu0 0
    %1748 = vmatprep.subr.bf16.mxu0 0
    %1749 = vmatpush1.bf16.msra.mxu0 0
    %1750 = vmatprep.subr.bf16.mxu0 0
    %1751 = vmatpush1.bf16.msra.mxu0 0
    %1752 = vmatprep.subr.bf16.mxu0 0
    %1753 = vmatpush1.bf16.msra.mxu0 0
    %1754 = vmatprep.subr.bf16.mxu0 0
    %1755 = vmatpush1.bf16.msra.mxu0 0
    %1756 = vmatprep.subr.bf16.mxu0 0
    %1757 = vmatpush1.bf16.msra.mxu0 0
    %1758 = vmatprep.mubr.bf16.mxu0 0
    %1759 = vmatmul.mubr.bf16.gmra.mrb[0].mxu0 %v1721
    %v1760 = vpop.f32.mrb[0].mxu0
    %v1761 = vadd.f32 0.0, %v1760
    %v1762 = vpop.f32.mrb[0].mxu0
    %v1763 = vpop.f32.mrb[0].mxu0
    %v1764 = vpop.f32.mrb[0].mxu0
    %1765 = vdwg.mxu0
    %1766 = vrot.lane.b32.xlu0 %v325, 64
    %v1767 = vpop.permute.xlu0 %1766
    %v1769 = vsel %vm335, %v1326, 0
    %v1772 = vsel %vm1338, %v1767, 0
    %1774 = vmatprep.subr.bf16.mxu0 0
    %1775 = vmatpush1.bf16.msra.mxu0 %v1772
    %1776 = vmatprep.subr.bf16.mxu0 0
    %1777 = vmatpush1.bf16.msra.mxu0 0
    %1778 = vmatprep.subr.bf16.mxu0 0
    %1779 = vmatpush1.bf16.msra.mxu0 0
    %1780 = vmatprep.subr.bf16.mxu0 0
    %1781 = vmatpush1.bf16.msra.mxu0 0
    %1782 = vmatprep.subr.bf16.mxu0 0
    %1783 = vmatpush1.bf16.msra.mxu0 0
    %1784 = vmatprep.subr.bf16.mxu0 0
    %1785 = vmatpush1.bf16.msra.mxu0 0
    %1786 = vmatprep.subr.bf16.mxu0 0
    %1787 = vmatpush1.bf16.msra.mxu0 0
    %1788 = vmatprep.subr.bf16.mxu0 0
    %1789 = vmatpush1.bf16.msra.mxu0 0
    %1790 = vmatprep.subr.bf16.mxu0 0
    %1791 = vmatpush1.bf16.msra.mxu0 0
    %1792 = vmatprep.subr.bf16.mxu0 0
    %1793 = vmatpush1.bf16.msra.mxu0 0
    %1794 = vmatprep.subr.bf16.mxu0 0
    %1795 = vmatpush1.bf16.msra.mxu0 0
    %1796 = vmatprep.subr.bf16.mxu0 0
    %1797 = vmatpush1.bf16.msra.mxu0 0
    %1798 = vmatprep.subr.bf16.mxu0 0
    %1799 = vmatpush1.bf16.msra.mxu0 0
    %1800 = vmatprep.subr.bf16.mxu0 0
    %1801 = vmatpush1.bf16.msra.mxu0 0
    %1802 = vmatprep.subr.bf16.mxu0 0
    %1803 = vmatpush1.bf16.msra.mxu0 0
    %1804 = vmatprep.subr.bf16.mxu0 0
    %1805 = vmatpush1.bf16.msra.mxu0 0
    %1806 = vmatprep.mubr.bf16.mxu0 0
    %1807 = vmatmul.mubr.bf16.gmra.mrb[0].mxu0 %v1769
    %v1808 = vpop.f32.mrb[0].mxu0
    %v1809 = vadd.f32 0.0, %v1808
    %v1810 = vpop.f32.mrb[0].mxu0
    %v1811 = vpop.f32.mrb[0].mxu0
    %v1812 = vpop.f32.mrb[0].mxu0
    %1813 = vdwg.mxu0
    %1814 = vrot.lane.b32.xlu0 %v326, 64
    %v1815 = vpop.permute.xlu0 %1814
    %v1817 = vsel %vm335, %v1327, 0
    %v1820 = vsel %vm1338, %v1815, 0
    %1822 = vmatprep.subr.bf16.mxu0 0
    %1823 = vmatpush1.bf16.msra.mxu0 %v1820
    %1824 = vmatprep.subr.bf16.mxu0 0
    %1825 = vmatpush1.bf16.msra.mxu0 0
    %1826 = vmatprep.subr.bf16.mxu0 0
    %1827 = vmatpush1.bf16.msra.mxu0 0
    %1828 = vmatprep.subr.bf16.mxu0 0
    %1829 = vmatpush1.bf16.msra.mxu0 0
    %1830 = vmatprep.subr.bf16.mxu0 0
    %1831 = vmatpush1.bf16.msra.mxu0 0
    %1832 = vmatprep.subr.bf16.mxu0 0
    %1833 = vmatpush1.bf16.msra.mxu0 0
    %1834 = vmatprep.subr.bf16.mxu0 0
    %1835 = vmatpush1.bf16.msra.mxu0 0
    %1836 = vmatprep.subr.bf16.mxu0 0
    %1837 = vmatpush1.bf16.msra.mxu0 0
    %1838 = vmatprep.subr.bf16.mxu0 0
    %1839 = vmatpush1.bf16.msra.mxu0 0
    %1840 = vmatprep.subr.bf16.mxu0 0
    %1841 = vmatpush1.bf16.msra.mxu0 0
    %1842 = vmatprep.subr.bf16.mxu0 0
    %1843 = vmatpush1.bf16.msra.mxu0 0
    %1844 = vmatprep.subr.bf16.mxu0 0
    %1845 = vmatpush1.bf16.msra.mxu0 0
    %1846 = vmatprep.subr.bf16.mxu0 0
    %1847 = vmatpush1.bf16.msra.mxu0 0
    %1848 = vmatprep.subr.bf16.mxu0 0
    %1849 = vmatpush1.bf16.msra.mxu0 0
    %1850 = vmatprep.subr.bf16.mxu0 0
    %1851 = vmatpush1.bf16.msra.mxu0 0
    %1852 = vmatprep.subr.bf16.mxu0 0
    %1853 = vmatpush1.bf16.msra.mxu0 0
    %1854 = vmatprep.mubr.bf16.mxu0 0
    %1855 = vmatmul.mubr.bf16.gmra.mrb[0].mxu0 %v1817
    %v1856 = vpop.f32.mrb[0].mxu0
    %v1857 = vadd.f32 0.0, %v1856
    %v1858 = vpop.f32.mrb[0].mxu0
    %v1859 = vpop.f32.mrb[0].mxu0
    %v1860 = vpop.f32.mrb[0].mxu0
    %1861 = vdwg.mxu0
    %1862 = vrot.lane.b32.xlu0 %v327, 64
    %v1863 = vpop.permute.xlu0 %1862
    %v1865 = vsel %vm335, %v1328, 0
    %v1868 = vsel %vm1338, %v1863, 0
    %1870 = vmatprep.subr.bf16.mxu0 0
    %1871 = vmatpush1.bf16.msra.mxu0 %v1868
    %1872 = vmatprep.subr.bf16.mxu0 0
    %1873 = vmatpush1.bf16.msra.mxu0 0
    %1874 = vmatprep.subr.bf16.mxu0 0
    %1875 = vmatpush1.bf16.msra.mxu0 0
    %1876 = vmatprep.subr.bf16.mxu0 0
    %1877 = vmatpush1.bf16.msra.mxu0 0
    %1878 = vmatprep.subr.bf16.mxu0 0
    %1879 = vmatpush1.bf16.msra.mxu0 0
    %1880 = vmatprep.subr.bf16.mxu0 0
    %1881 = vmatpush1.bf16.msra.mxu0 0
    %1882 = vmatprep.subr.bf16.mxu0 0
    %1883 = vmatpush1.bf16.msra.mxu0 0
    %1884 = vmatprep.subr.bf16.mxu0 0
    %1885 = vmatpush1.bf16.msra.mxu0 0
    %1886 = vmatprep.subr.bf16.mxu0 0
    %1887 = vmatpush1.bf16.msra.mxu0 0
    %1888 = vmatprep.subr.bf16.mxu0 0
    %1889 = vmatpush1.bf16.msra.mxu0 0
    %1890 = vmatprep.subr.bf16.mxu0 0
    %1891 = vmatpush1.bf16.msra.mxu0 0
    %1892 = vmatprep.subr.bf16.mxu0 0
    %1893 = vmatpush1.bf16.msra.mxu0 0
    %1894 = vmatprep.subr.bf16.mxu0 0
    %1895 = vmatpush1.bf16.msra.mxu0 0
    %1896 = vmatprep.subr.bf16.mxu0 0
    %1897 = vmatpush1.bf16.msra.mxu0 0
    %1898 = vmatprep.subr.bf16.mxu0 0
    %1899 = vmatpush1.bf16.msra.mxu0 0
    %1900 = vmatprep.subr.bf16.mxu0 0
    %1901 = vmatpush1.bf16.msra.mxu0 0
    %1902 = vmatprep.mubr.bf16.mxu0 0
    %1903 = vmatmul.mubr.bf16.gmra.mrb[0].mxu0 %v1865
    %v1904 = vpop.f32.mrb[0].mxu0
    %v1905 = vadd.f32 0.0, %v1904
    %v1906 = vpop.f32.mrb[0].mxu0
    %v1907 = vpop.f32.mrb[0].mxu0
    %v1908 = vpop.f32.mrb[0].mxu0
    %1909 = vdwg.mxu0
    %1910 = vrot.lane.b32.xlu0 %v328, 64
    %v1911 = vpop.permute.xlu0 %1910
    %v1913 = vsel %vm335, %v1329, 0
    %v1916 = vsel %vm1338, %v1911, 0
    %1918 = vmatprep.subr.bf16.mxu0 0
    %1919 = vmatpush1.bf16.msra.mxu0 %v1916
    %1920 = vmatprep.subr.bf16.mxu0 0
    %1921 = vmatpush1.bf16.msra.mxu0 0
    %1922 = vmatprep.subr.bf16.mxu0 0
    %1923 = vmatpush1.bf16.msra.mxu0 0
    %1924 = vmatprep.subr.bf16.mxu0 0
    %1925 = vmatpush1.bf16.msra.mxu0 0
    %1926 = vmatprep.subr.bf16.mxu0 0
    %1927 = vmatpush1.bf16.msra.mxu0 0
    %1928 = vmatprep.subr.bf16.mxu0 0
    %1929 = vmatpush1.bf16.msra.mxu0 0
    %1930 = vmatprep.subr.bf16.mxu0 0
    %1931 = vmatpush1.bf16.msra.mxu0 0
    %1932 = vmatprep.subr.bf16.mxu0 0
    %1933 = vmatpush1.bf16.msra.mxu0 0
    %1934 = vmatprep.subr.bf16.mxu0 0
    %1935 = vmatpush1.bf16.msra.mxu0 0
    %1936 = vmatprep.subr.bf16.mxu0 0
    %1937 = vmatpush1.bf16.msra.mxu0 0
    %1938 = vmatprep.subr.bf16.mxu0 0
    %1939 = vmatpush1.bf16.msra.mxu0 0
    %1940 = vmatprep.subr.bf16.mxu0 0
    %1941 = vmatpush1.bf16.msra.mxu0 0
    %1942 = vmatprep.subr.bf16.mxu0 0
    %1943 = vmatpush1.bf16.msra.mxu0 0
    %1944 = vmatprep.subr.bf16.mxu0 0
    %1945 = vmatpush1.bf16.msra.mxu0 0
    %1946 = vmatprep.subr.bf16.mxu0 0
    %1947 = vmatpush1.bf16.msra.mxu0 0
    %1948 = vmatprep.subr.bf16.mxu0 0
    %1949 = vmatpush1.bf16.msra.mxu0 0
    %1950 = vmatprep.mubr.bf16.mxu0 0
    %1951 = vmatmul.mubr.bf16.gmra.mrb[0].mxu0 %v1913
    %v1952 = vpop.f32.mrb[0].mxu0
    %v1953 = vadd.f32 0.0, %v1952
    %v1954 = vpop.f32.mrb[0].mxu0
    %v1955 = vpop.f32.mrb[0].mxu0
    %v1956 = vpop.f32.mrb[0].mxu0
    %1957 = vdwg.mxu0
    %1958 = vrot.lane.b32.xlu0 %v329, 64
    %v1959 = vpop.permute.xlu0 %1958
    %v1961 = vsel %vm335, %v1330, 0
    %v1964 = vsel %vm1338, %v1959, 0
    %1966 = vmatprep.subr.bf16.mxu0 0
    %1967 = vmatpush1.bf16.msra.mxu0 %v1964
    %1968 = vmatprep.subr.bf16.mxu0 0
    %1969 = vmatpush1.bf16.msra.mxu0 0
    %1970 = vmatprep.subr.bf16.mxu0 0
    %1971 = vmatpush1.bf16.msra.mxu0 0
    %1972 = vmatprep.subr.bf16.mxu0 0
    %1973 = vmatpush1.bf16.msra.mxu0 0
    %1974 = vmatprep.subr.bf16.mxu0 0
    %1975 = vmatpush1.bf16.msra.mxu0 0
    %1976 = vmatprep.subr.bf16.mxu0 0
    %1977 = vmatpush1.bf16.msra.mxu0 0
    %1978 = vmatprep.subr.bf16.mxu0 0
    %1979 = vmatpush1.bf16.msra.mxu0 0
    %1980 = vmatprep.subr.bf16.mxu0 0
    %1981 = vmatpush1.bf16.msra.mxu0 0
    %1982 = vmatprep.subr.bf16.mxu0 0
    %1983 = vmatpush1.bf16.msra.mxu0 0
    %1984 = vmatprep.subr.bf16.mxu0 0
    %1985 = vmatpush1.bf16.msra.mxu0 0
    %1986 = vmatprep.subr.bf16.mxu0 0
    %1987 = vmatpush1.bf16.msra.mxu0 0
    %1988 = vmatprep.subr.bf16.mxu0 0
    %1989 = vmatpush1.bf16.msra.mxu0 0
    %1990 = vmatprep.subr.bf16.mxu0 0
    %1991 = vmatpush1.bf16.msra.mxu0 0
    %1992 = vmatprep.subr.bf16.mxu0 0
    %1993 = vmatpush1.bf16.msra.mxu0 0
    %1994 = vmatprep.subr.bf16.mxu0 0
    %1995 = vmatpush1.bf16.msra.mxu0 0
    %1996 = vmatprep.subr.bf16.mxu0 0
    %1997 = vmatpush1.bf16.msra.mxu0 0
    %1998 = vmatprep.mubr.bf16.mxu0 0
    %1999 = vmatmul.mubr.bf16.gmra.mrb[0].mxu0 %v1961
    %v2000 = vpop.f32.mrb[0].mxu0
    %v2001 = vadd.f32 0.0, %v2000
    %v2002 = vpop.f32.mrb[0].mxu0
    %v2003 = vpop.f32.mrb[0].mxu0
    %v2004 = vpop.f32.mrb[0].mxu0
    %2005 = vdwg.mxu0
    %2006 = vrot.lane.b32.xlu0 %v330, 64
    %v2007 = vpop.permute.xlu0 %2006
    %v2009 = vsel %vm335, %v1331, 0
    %v2012 = vsel %vm1338, %v2007, 0
    %2014 = vmatprep.subr.bf16.mxu0 0
    %2015 = vmatpush1.bf16.msra.mxu0 %v2012
    %2016 = vmatprep.subr.bf16.mxu0 0
    %2017 = vmatpush1.bf16.msra.mxu0 0
    %2018 = vmatprep.subr.bf16.mxu0 0
    %2019 = vmatpush1.bf16.msra.mxu0 0
    %2020 = vmatprep.subr.bf16.mxu0 0
    %2021 = vmatpush1.bf16.msra.mxu0 0
    %2022 = vmatprep.subr.bf16.mxu0 0
    %2023 = vmatpush1.bf16.msra.mxu0 0
    %2024 = vmatprep.subr.bf16.mxu0 0
    %2025 = vmatpush1.bf16.msra.mxu0 0
    %2026 = vmatprep.subr.bf16.mxu0 0
    %2027 = vmatpush1.bf16.msra.mxu0 0
    %2028 = vmatprep.subr.bf16.mxu0 0
    %2029 = vmatpush1.bf16.msra.mxu0 0
    %2030 = vmatprep.subr.bf16.mxu0 0
    %2031 = vmatpush1.bf16.msra.mxu0 0
    %2032 = vmatprep.subr.bf16.mxu0 0
    %2033 = vmatpush1.bf16.msra.mxu0 0
    %2034 = vmatprep.subr.bf16.mxu0 0
    %2035 = vmatpush1.bf16.msra.mxu0 0
    %2036 = vmatprep.subr.bf16.mxu0 0
    %2037 = vmatpush1.bf16.msra.mxu0 0
    %2038 = vmatprep.subr.bf16.mxu0 0
    %2039 = vmatpush1.bf16.msra.mxu0 0
    %2040 = vmatprep.subr.bf16.mxu0 0
    %2041 = vmatpush1.bf16.msra.mxu0 0
    %2042 = vmatprep.subr.bf16.mxu0 0
    %2043 = vmatpush1.bf16.msra.mxu0 0
    %2044 = vmatprep.subr.bf16.mxu0 0
    %2045 = vmatpush1.bf16.msra.mxu0 0
    %2046 = vmatprep.mubr.bf16.mxu0 0
    %2047 = vmatmul.mubr.bf16.gmra.mrb[0].mxu0 %v2009
    %v2048 = vpop.f32.mrb[0].mxu0
    %v2049 = vadd.f32 0.0, %v2048
    %v2050 = vpop.f32.mrb[0].mxu0
    %v2051 = vpop.f32.mrb[0].mxu0
    %v2052 = vpop.f32.mrb[0].mxu0
    %2053 = vdwg.mxu0
    %2054 = vrot.lane.b32.xlu0 %v331, 64
    %v2055 = vpop.permute.xlu0 %2054
    %v2057 = vsel %vm335, %v1332, 0
    %v2060 = vsel %vm1338, %v2055, 0
    %2062 = vmatprep.subr.bf16.mxu0 0
    %2063 = vmatpush1.bf16.msra.mxu0 %v2060
    %2064 = vmatprep.subr.bf16.mxu0 0
    %2065 = vmatpush1.bf16.msra.mxu0 0
    %2066 = vmatprep.subr.bf16.mxu0 0
    %2067 = vmatpush1.bf16.msra.mxu0 0
    %2068 = vmatprep.subr.bf16.mxu0 0
    %2069 = vmatpush1.bf16.msra.mxu0 0
    %2070 = vmatprep.subr.bf16.mxu0 0
    %2071 = vmatpush1.bf16.msra.mxu0 0
    %2072 = vmatprep.subr.bf16.mxu0 0
    %2073 = vmatpush1.bf16.msra.mxu0 0
    %2074 = vmatprep.subr.bf16.mxu0 0
    %2075 = vmatpush1.bf16.msra.mxu0 0
    %2076 = vmatprep.subr.bf16.mxu0 0
    %2077 = vmatpush1.bf16.msra.mxu0 0
    %2078 = vmatprep.subr.bf16.mxu0 0
    %2079 = vmatpush1.bf16.msra.mxu0 0
    %2080 = vmatprep.subr.bf16.mxu0 0
    %2081 = vmatpush1.bf16.msra.mxu0 0
    %2082 = vmatprep.subr.bf16.mxu0 0
    %2083 = vmatpush1.bf16.msra.mxu0 0
    %2084 = vmatprep.subr.bf16.mxu0 0
    %2085 = vmatpush1.bf16.msra.mxu0 0
    %2086 = vmatprep.subr.bf16.mxu0 0
    %2087 = vmatpush1.bf16.msra.mxu0 0
    %2088 = vmatprep.subr.bf16.mxu0 0
    %2089 = vmatpush1.bf16.msra.mxu0 0
    %2090 = vmatprep.subr.bf16.mxu0 0
    %2091 = vmatpush1.bf16.msra.mxu0 0
    %2092 = vmatprep.subr.bf16.mxu0 0
    %2093 = vmatpush1.bf16.msra.mxu0 0
    %2094 = vmatprep.mubr.bf16.mxu0 0
    %2095 = vmatmul.mubr.bf16.gmra.mrb[0].mxu0 %v2057
    %v2096 = vpop.f32.mrb[0].mxu0
    %v2097 = vadd.f32 0.0, %v2096
    %v2098 = vpop.f32.mrb[0].mxu0
    %v2099 = vpop.f32.mrb[0].mxu0
    %v2100 = vpop.f32.mrb[0].mxu0
    %2101 = vdwg.mxu0
    %2106 = vrot.lane.b32.xlu0 %v1569, 8
    %v2107 = vpop.permute.xlu0 %2106
    %2108 = vrot.lane.b32.xlu0 %v1617, 8
    %v2109 = vpop.permute.xlu0 %2108
    %2110 = vrot.lane.b32.xlu0 %v1665, 8
    %v2111 = vpop.permute.xlu0 %2110
    %2112 = vrot.lane.b32.xlu0 %v1713, 8
    %v2113 = vpop.permute.xlu0 %2112
    %2122 = vrot.lane.b32.xlu0 %v1761, 16
    %v2123 = vpop.permute.xlu0 %2122
    %2124 = vrot.lane.b32.xlu0 %v1809, 16
    %v2125 = vpop.permute.xlu0 %2124
    %2126 = vrot.lane.b32.xlu0 %v1857, 16
    %v2127 = vpop.permute.xlu0 %2126
    %2128 = vrot.lane.b32.xlu0 %v1905, 16
    %v2129 = vpop.permute.xlu0 %2128
    %2138 = vrot.lane.b32.xlu0 %v1953, 24
    %v2139 = vpop.permute.xlu0 %2138
    %2140 = vrot.lane.b32.xlu0 %v2001, 24
    %v2141 = vpop.permute.xlu0 %2140
    %2142 = vrot.lane.b32.xlu0 %v2049, 24
    %v2143 = vpop.permute.xlu0 %2142
    %2144 = vrot.lane.b32.xlu0 %v2097, 24
    %v2145 = vpop.permute.xlu0 %2144
    %v2150 = vsel %vm335, %v1377, %v2107
    %v2151 = vsel %vm335, %v1425, %v2109
    %v2152 = vsel %vm335, %v1473, %v2111
    %v2153 = vsel %vm335, %v1521, %v2113
    %vm2154 = vcmask 130048
    %v2155 = vsel %vm2154, %v2150, %v2123
    %v2156 = vsel %vm2154, %v2151, %v2125
    %v2157 = vsel %vm2154, %v2152, %v2127
    %v2158 = vsel %vm2154, %v2153, %v2129
    %vm2159 = vcmask 195584
    %v2160 = vsel %vm2159, %v2155, %v2139
    %v2161 = vsel %vm2159, %v2156, %v2141
    %v2162 = vsel %vm2159, %v2157, %v2143
    %v2163 = vsel %vm2159, %v2158, %v2145
    %v2164 = vpack.c.bf16 %v2161, %v2160
    %v2165 = vpack.c.bf16 %v2163, %v2162
    %v2166 = vld [vmem:[#allocation5] sm:$0xf]
    %v2167 = vld [vmem:[#allocation5 + $0x4] sm:$0xf]
    %v2168 = vld [vmem:[#allocation5 + $0x8] sm:$0xf]
    %v2169 = vld [vmem:[#allocation5 + $0xc] sm:$0xf]
    %v2170 = vld [vmem:[%s7] sm:$0x1]
    %v2172 = vlaneseq
    %v2173 = vshrl.u32 %v2172, 7
    %v2174 = vsub.s32 0, %v2173
    %v2175 = vrot.slane %v2170, %v2174
    %v2181 = vunpack.c.l.b16 %v2166
    %v2182 = vunpack.c.l.b16 %v2167
    %v2183 = vunpack.c.l.b16 %v2168
    %v2184 = vunpack.c.l.b16 %v2169
    %v2185 = vpack.c.b16 %v2182, %v2181
    %v2186 = vpack.c.b16 %v2184, %v2183
    %v2190 = vsel %vm110, %v2164, 0
    %v2193 = vsel %vm110, %v2165, 0
    %2195 = vmatprep.subr.bf16.mxu0 0
    %2196 = vmatpush1.bf16.msra.mxu0 %v2185
    %2197 = vmatprep.subr.bf16.mxu0 0
    %2198 = vmatpush1.bf16.msra.mxu0 %v2186
    %2199 = vmatprep.subr.bf16.mxu0 0
    %2200 = vmatpush1.bf16.msra.mxu0 0
    %2201 = vmatprep.subr.bf16.mxu0 0
    %2202 = vmatpush1.bf16.msra.mxu0 0
    %2203 = vmatprep.subr.bf16.mxu0 0
    %2204 = vmatpush1.bf16.msra.mxu0 0
    %2205 = vmatprep.subr.bf16.mxu0 0
    %2206 = vmatpush1.bf16.msra.mxu0 0
    %2207 = vmatprep.subr.bf16.mxu0 0
    %2208 = vmatpush1.bf16.msra.mxu0 0
    %2209 = vmatprep.subr.bf16.mxu0 0
    %2210 = vmatpush1.bf16.msra.mxu0 0
    %2211 = vmatprep.subr.bf16.mxu0 0
    %2212 = vmatpush1.bf16.msra.mxu0 0
    %2213 = vmatprep.subr.bf16.mxu0 0
    %2214 = vmatpush1.bf16.msra.mxu0 0
    %2215 = vmatprep.subr.bf16.mxu0 0
    %2216 = vmatpush1.bf16.msra.mxu0 0
    %2217 = vmatprep.subr.bf16.mxu0 0
    %2218 = vmatpush1.bf16.msra.mxu0 0
    %2219 = vmatprep.subr.bf16.mxu0 0
    %2220 = vmatpush1.bf16.msra.mxu0 0
    %2221 = vmatprep.subr.bf16.mxu0 0
    %2222 = vmatpush1.bf16.msra.mxu0 0
    %2223 = vmatprep.subr.bf16.mxu0 0
    %2224 = vmatpush1.bf16.msra.mxu0 0
    %2225 = vmatprep.subr.bf16.mxu0 0
    %2226 = vmatpush1.bf16.msra.mxu0 0
    %2227 = vmatprep.mubr.bf16.mxu0 0
    %2228 = vmatmul.mubr.bf16.gmra.mrb[0].mxu0 %v2190
    %v2229 = vpop.f32.mrb[0].mxu0
    %v2230 = vadd.f32 %v2175, %v2229
    %v2231 = vpop.f32.mrb[0].mxu0
    %v2232 = vpop.f32.mrb[0].mxu0
    %v2233 = vadd.f32 %v2175, %v2232
    %v2234 = vpop.f32.mrb[0].mxu0
    %2235 = vmatprep.mubr.bf16.mxu0 0
    %2236 = vmatmul.mubr.bf16.gmra.mrb[0].mxu0 %v2193
    %v2237 = vpop.f32.mrb[0].mxu0
    %v2238 = vadd.f32 %v2175, %v2237
    %v2239 = vpop.f32.mrb[0].mxu0
    %v2240 = vpop.f32.mrb[0].mxu0
    %v2241 = vadd.f32 %v2175, %v2240
    %v2242 = vpop.f32.mrb[0].mxu0
    %2243 = vdwg.mxu0
    %v2244 = vadd.f32 %v104, %v2230
    %v2245 = vadd.f32 %v105, %v2233
    %v2246 = vadd.f32 %v106, %v2238
    %v2247 = vadd.f32 %v107, %v2241
    %v2248 = vld [vmem:[%s8] sm:$0x1]
    %v2249 = vld [vmem:[%s9] sm:$0x1]
    %v2250 = vsel %vm110, %v2244, 0.0
    %2251 = vadd.xlane.f32.xlu0 %v2250
    %v2252 = vpop.xlane.xlu0 %2251
    %v2253 = vsel %vm110, %v2245, 0.0
    %2254 = vadd.xlane.f32.xlu0 %v2253
    %v2255 = vpop.xlane.xlu0 %2254
    %v2256 = vsel %vm110, %v2246, 0.0
    %2257 = vadd.xlane.f32.xlu0 %v2256
    %v2258 = vpop.xlane.xlu0 %2257
    %v2259 = vsel %vm110, %v2247, 0.0
    %2260 = vadd.xlane.f32.xlu0 %v2259
    %v2261 = vpop.xlane.xlu0 %2260
    %v2262 = vmul.f32 %v2252, %v123
    %v2263 = vmul.f32 %v2255, %v123
    %v2264 = vmul.f32 %v2258, %v123
    %v2265 = vmul.f32 %v2261, %v123
    %v2266 = vmul.f32 %v2244, %v2244
    %v2267 = vmul.f32 %v2245, %v2245
    %v2268 = vmul.f32 %v2246, %v2246
    %v2269 = vmul.f32 %v2247, %v2247
    %v2270 = vsel %vm110, %v2266, 0.0
    %2271 = vadd.xlane.f32.xlu0 %v2270
    %v2272 = vpop.xlane.xlu0 %2271
    %v2273 = vsel %vm110, %v2267, 0.0
    %2274 = vadd.xlane.f32.xlu0 %v2273
    %v2275 = vpop.xlane.xlu0 %2274
    %v2276 = vsel %vm110, %v2268, 0.0
    %2277 = vadd.xlane.f32.xlu0 %v2276
    %v2278 = vpop.xlane.xlu0 %2277
    %v2279 = vsel %vm110, %v2269, 0.0
    %2280 = vadd.xlane.f32.xlu0 %v2279
    %v2281 = vpop.xlane.xlu0 %2280
    %v2282 = vmul.f32 %v2272, %v123
    %v2283 = vmul.f32 %v2275, %v123
    %v2284 = vmul.f32 %v2278, %v123
    %v2285 = vmul.f32 %v2281, %v123
    %v2286 = vmul.f32 %v2262, %v2262
    %v2287 = vmul.f32 %v2263, %v2263
    %v2288 = vmul.f32 %v2264, %v2264
    %v2289 = vmul.f32 %v2265, %v2265
    %v2290 = vsub.f32 %v2282, %v2286
    %v2291 = vsub.f32 %v2283, %v2287
    %v2292 = vsub.f32 %v2284, %v2288
    %v2293 = vsub.f32 %v2285, %v2289
    %v2294 = vmax.f32 %v2290, 0.0
    %v2295 = vmax.f32 %v2291, 0.0
    %v2296 = vmax.f32 %v2292, 0.0
    %v2297 = vmax.f32 %v2293, 0.0
    %v2298 = vsub.f32 %v2244, %v2262
    %v2299 = vsub.f32 %v2245, %v2263
    %v2300 = vsub.f32 %v2246, %v2264
    %v2301 = vsub.f32 %v2247, %v2265
    %v2302 = vadd.f32 %v2294, 1e-05
    %v2303 = vadd.f32 %v2295, 1e-05
    %v2304 = vadd.f32 %v2296, 1e-05
    %v2305 = vadd.f32 %v2297, 1e-05
    %v2306 = vrsqrt.pop %v2302
    %v2307 = vrsqrt.pop %v2303
    %v2308 = vrsqrt.pop %v2304
    %v2309 = vrsqrt.pop %v2305
    %v2310 = vmul.f32 %v2298, %v2306
    %v2311 = vmul.f32 %v2299, %v2307
    %v2312 = vmul.f32 %v2300, %v2308
    %v2313 = vmul.f32 %v2301, %v2309
    %v2315 = vlaneseq
    %v2316 = vshrl.u32 %v2315, 7
    %v2317 = vsub.s32 0, %v2316
    %v2318 = vrot.slane %v2248, %v2317
    %v2320 = vmul.f32 %v2310, %v2318
    %v2321 = vmul.f32 %v2311, %v2318
    %v2322 = vmul.f32 %v2312, %v2318
    %v2323 = vmul.f32 %v2313, %v2318
    %v2325 = vlaneseq
    %v2326 = vshrl.u32 %v2325, 7
    %v2327 = vsub.s32 0, %v2326
    %v2328 = vrot.slane %v2249, %v2327
    %v2330 = vadd.f32 %v2320, %v2328
    %v2331 = vadd.f32 %v2321, %v2328
    %v2332 = vadd.f32 %v2322, %v2328
    %v2333 = vadd.f32 %v2323, %v2328
    %v2334 = vpack.c.bf16 %v2331, %v2330
    %v2335 = vpack.c.bf16 %v2333, %v2332
    %v2336 = vld [vmem:[#allocation7] sm:$0xf]
    %v2337 = vld [vmem:[#allocation7 + $0x4] sm:$0xf]
    %v2338 = vld [vmem:[#allocation7 + $0x8] sm:$0xf]
    %v2339 = vld [vmem:[#allocation7 + $0xc] sm:$0xf]
    %v2340 = vld [vmem:[#allocation8] sm:$0x1]
    %v2342 = vlaneseq
    %v2343 = vshrl.u32 %v2342, 7
    %v2344 = vsub.s32 0, %v2343
    %v2345 = vrot.slane %v2340, %v2344
    %v2351 = vunpack.c.l.b16 %v2336
    %v2352 = vunpack.c.l.b16 %v2337
    %v2353 = vunpack.c.l.b16 %v2338
    %v2354 = vunpack.c.l.b16 %v2339
    %v2355 = vpack.c.b16 %v2352, %v2351
    %v2356 = vpack.c.b16 %v2354, %v2353
    %v2360 = vsel %vm110, %v2334, 0
    %v2363 = vsel %vm110, %v2335, 0
    %2365 = vmatprep.subr.bf16.mxu0 0
    %2366 = vmatpush1.bf16.msra.mxu0 %v2355
    %2367 = vmatprep.subr.bf16.mxu0 0
    %2368 = vmatpush1.bf16.msra.mxu0 %v2356
    %2369 = vmatprep.subr.bf16.mxu0 0
    %2370 = vmatpush1.bf16.msra.mxu0 0
    %2371 = vmatprep.subr.bf16.mxu0 0
    %2372 = vmatpush1.bf16.msra.mxu0 0
    %2373 = vmatprep.subr.bf16.mxu0 0
    %2374 = vmatpush1.bf16.msra.mxu0 0
    %2375 = vmatprep.subr.bf16.mxu0 0
    %2376 = vmatpush1.bf16.msra.mxu0 0
    %2377 = vmatprep.subr.bf16.mxu0 0
    %2378 = vmatpush1.bf16.msra.mxu0 0
    %2379 = vmatprep.subr.bf16.mxu0 0
    %2380 = vmatpush1.bf16.msra.mxu0 0
    %2381 = vmatprep.subr.bf16.mxu0 0
    %2382 = vmatpush1.bf16.msra.mxu0 0
    %2383 = vmatprep.subr.bf16.mxu0 0
    %2384 = vmatpush1.bf16.msra.mxu0 0
    %2385 = vmatprep.subr.bf16.mxu0 0
    %2386 = vmatpush1.bf16.msra.mxu0 0
    %2387 = vmatprep.subr.bf16.mxu0 0
    %2388 = vmatpush1.bf16.msra.mxu0 0
    %2389 = vmatprep.subr.bf16.mxu0 0
    %2390 = vmatpush1.bf16.msra.mxu0 0
    %2391 = vmatprep.subr.bf16.mxu0 0
    %2392 = vmatpush1.bf16.msra.mxu0 0
    %2393 = vmatprep.subr.bf16.mxu0 0
    %2394 = vmatpush1.bf16.msra.mxu0 0
    %2395 = vmatprep.subr.bf16.mxu0 0
    %2396 = vmatpush1.bf16.msra.mxu0 0
    %2397 = vmatprep.mubr.bf16.mxu0 0
    %2398 = vmatmul.mubr.bf16.gmra.mrb[0].mxu0 %v2360
    %v2399 = vpop.f32.mrb[0].mxu0
    %v2400 = vadd.f32 %v2345, %v2399
    %v2401 = vpop.f32.mrb[0].mxu0
    %v2402 = vpop.f32.mrb[0].mxu0
    %v2403 = vadd.f32 %v2345, %v2402
    %v2404 = vpop.f32.mrb[0].mxu0
    %2405 = vmatprep.mubr.bf16.mxu0 0
    %2406 = vmatmul.mubr.bf16.gmra.mrb[0].mxu0 %v2363
    %v2407 = vpop.f32.mrb[0].mxu0
    %v2408 = vadd.f32 %v2345, %v2407
    %v2409 = vpop.f32.mrb[0].mxu0
    %v2410 = vpop.f32.mrb[0].mxu0
    %v2411 = vadd.f32 %v2345, %v2410
    %v2412 = vpop.f32.mrb[0].mxu0
    %2413 = vdwg.mxu0
    %v2414 = vmul.f32 %v2400, 0.5
    %v2415 = vmul.f32 %v2403, 0.5
    %v2416 = vmul.f32 %v2408, 0.5
    %v2417 = vmul.f32 %v2411, 0.5
    %v2418 = vmul.f32 %v2400, 0.044715
    %v2419 = vmul.f32 %v2403, 0.044715
    %v2420 = vmul.f32 %v2408, 0.044715
    %v2421 = vmul.f32 %v2411, 0.044715
    %v2422 = vmul.f32 %v2418, %v2400
    %v2423 = vmul.f32 %v2419, %v2403
    %v2424 = vmul.f32 %v2420, %v2408
    %v2425 = vmul.f32 %v2421, %v2411
    %v2426 = vmul.f32 %v2422, %v2400
    %v2427 = vmul.f32 %v2423, %v2403
    %v2428 = vmul.f32 %v2424, %v2408
    %v2429 = vmul.f32 %v2425, %v2411
    %v2430 = vadd.f32 %v2400, %v2426
    %v2431 = vadd.f32 %v2403, %v2427
    %v2432 = vadd.f32 %v2408, %v2428
    %v2433 = vadd.f32 %v2411, %v2429
    %v2434 = vmul.f32 %v2430, 0.7978846
    %v2435 = vmul.f32 %v2431, 0.7978846
    %v2436 = vmul.f32 %v2432, 0.7978846
    %v2437 = vmul.f32 %v2433, 0.7978846
    %v2438 = vtanh.pop %v2434
    %v2439 = vtanh.pop %v2435
    %v2440 = vtanh.pop %v2436
    %v2441 = vtanh.pop %v2437
    %v2442 = vadd.f32 %v2438, 1.0
    %v2443 = vadd.f32 %v2439, 1.0
    %v2444 = vadd.f32 %v2440, 1.0
    %v2445 = vadd.f32 %v2441, 1.0
    %v2446 = vmul.f32 %v2414, %v2442
    %v2447 = vmul.f32 %v2415, %v2443
    %v2448 = vmul.f32 %v2416, %v2444
    %v2449 = vmul.f32 %v2417, %v2445
    %v2450 = vpack.c.bf16 %v2447, %v2446
    %v2451 = vpack.c.bf16 %v2449, %v2448
    %v2452 = vld [vmem:[%s12] sm:$0xf]
    %v2453 = vld [vmem:[%s12 + $0x4] sm:$0xf]
    %v2454 = vld [vmem:[%s12 + $0x8] sm:$0xf]
    %v2455 = vld [vmem:[%s12 + $0xc] sm:$0xf]
    %v2456 = vld [vmem:[%s12 + $0x10] sm:$0xf]
    %v2457 = vld [vmem:[%s12 + $0x14] sm:$0xf]
    %v2458 = vld [vmem:[%s12 + $0x18] sm:$0xf]
    %v2459 = vld [vmem:[%s12 + $0x1c] sm:$0xf]
    %v2460 = vld [vmem:[%s12 + $0x20] sm:$0xf]
    %v2461 = vld [vmem:[%s12 + $0x24] sm:$0xf]
    %v2462 = vld [vmem:[%s12 + $0x28] sm:$0xf]
    %v2463 = vld [vmem:[%s12 + $0x2c] sm:$0xf]
    %v2464 = vld [vmem:[%s12 + $0x30] sm:$0xf]
    %v2465 = vld [vmem:[%s12 + $0x34] sm:$0xf]
    %v2466 = vld [vmem:[%s12 + $0x38] sm:$0xf]
    %v2467 = vld [vmem:[%s12 + $0x3c] sm:$0xf]
    %v2468 = vld [vmem:[%s13] sm:$0x1]
    %v2470 = vlaneseq
    %v2471 = vshrl.u32 %v2470, 7
    %v2472 = vsub.s32 0, %v2471
    %v2473 = vrot.slane %v2468, %v2472
    %v2491 = vunpack.c.l.b16 %v2452
    %v2492 = vunpack.c.l.b16 %v2453
    %v2493 = vunpack.c.l.b16 %v2454
    %v2494 = vunpack.c.l.b16 %v2455
    %v2495 = vunpack.c.l.b16 %v2456
    %v2496 = vunpack.c.l.b16 %v2457
    %v2497 = vunpack.c.l.b16 %v2458
    %v2498 = vunpack.c.l.b16 %v2459
    %v2499 = vunpack.c.l.b16 %v2460
    %v2500 = vunpack.c.l.b16 %v2461
    %v2501 = vunpack.c.l.b16 %v2462
    %v2502 = vunpack.c.l.b16 %v2463
    %v2503 = vunpack.c.l.b16 %v2464
    %v2504 = vunpack.c.l.b16 %v2465
    %v2505 = vunpack.c.l.b16 %v2466
    %v2506 = vunpack.c.l.b16 %v2467
    %v2507 = vpack.c.b16 %v2492, %v2491
    %v2508 = vpack.c.b16 %v2494, %v2493
    %v2509 = vpack.c.b16 %v2496, %v2495
    %v2510 = vpack.c.b16 %v2498, %v2497
    %v2511 = vpack.c.b16 %v2500, %v2499
    %v2512 = vpack.c.b16 %v2502, %v2501
    %v2513 = vpack.c.b16 %v2504, %v2503
    %v2514 = vpack.c.b16 %v2506, %v2505
    %2523 = vmatprep.subr.bf16.mxu0 0
    %2524 = vmatpush1.bf16.msra.mxu0 %v2507
    %2525 = vmatprep.subr.bf16.mxu0 0
    %2526 = vmatpush1.bf16.msra.mxu0 %v2508
    %2527 = vmatprep.subr.bf16.mxu0 0
    %2528 = vmatpush1.bf16.msra.mxu0 %v2509
    %2529 = vmatprep.subr.bf16.mxu0 0
    %2530 = vmatpush1.bf16.msra.mxu0 %v2510
    %2531 = vmatprep.subr.bf16.mxu0 0
    %2532 = vmatpush1.bf16.msra.mxu0 %v2511
    %2533 = vmatprep.subr.bf16.mxu0 0
    %2534 = vmatpush1.bf16.msra.mxu0 %v2512
    %2535 = vmatprep.subr.bf16.mxu0 0
    %2536 = vmatpush1.bf16.msra.mxu0 %v2513
    %2537 = vmatprep.subr.bf16.mxu0 0
    %2538 = vmatpush1.bf16.msra.mxu0 %v2514
    %2539 = vmatprep.subr.bf16.mxu0 0
    %2540 = vmatpush1.bf16.msra.mxu0 0
    %2541 = vmatprep.subr.bf16.mxu0 0
    %2542 = vmatpush1.bf16.msra.mxu0 0
    %2543 = vmatprep.subr.bf16.mxu0 0
    %2544 = vmatpush1.bf16.msra.mxu0 0
    %2545 = vmatprep.subr.bf16.mxu0 0
    %2546 = vmatpush1.bf16.msra.mxu0 0
    %2547 = vmatprep.subr.bf16.mxu0 0
    %2548 = vmatpush1.bf16.msra.mxu0 0
    %2549 = vmatprep.subr.bf16.mxu0 0
    %2550 = vmatpush1.bf16.msra.mxu0 0
    %2551 = vmatprep.subr.bf16.mxu0 0
    %2552 = vmatpush1.bf16.msra.mxu0 0
    %2553 = vmatprep.subr.bf16.mxu0 0
    %2554 = vmatpush1.bf16.msra.mxu0 0
    %2555 = vmatprep.mubr.bf16.mxu0 0
    %2556 = vmatmul.mubr.bf16.gmra.mrb[0].mxu0 %v2450
    %v2557 = vpop.f32.mrb[0].mxu0
    %v2558 = vadd.f32 %v2473, %v2557
    %v2559 = vpop.f32.mrb[0].mxu0
    %v2560 = vpop.f32.mrb[0].mxu0
    %v2561 = vadd.f32 %v2473, %v2560
    %v2562 = vpop.f32.mrb[0].mxu0
    %2563 = vmatprep.mubr.bf16.mxu0 0
    %2564 = vmatmul.mubr.bf16.gmra.mrb[0].mxu0 %v2451
    %v2565 = vpop.f32.mrb[0].mxu0
    %v2566 = vadd.f32 %v2473, %v2565
    %v2567 = vpop.f32.mrb[0].mxu0
    %v2568 = vpop.f32.mrb[0].mxu0
    %v2569 = vadd.f32 %v2473, %v2568
    %v2570 = vpop.f32.mrb[0].mxu0
    %2571 = vdwg.mxu0
    %v2572 = vadd.f32 %v2244, %v2558
    %v2573 = vadd.f32 %v2245, %v2561
    %v2574 = vadd.f32 %v2246, %v2566
    %v2575 = vadd.f32 %v2247, %v2569
    %s2576 = scalar_lea.vmem %s2, 1
    %v2577 = vld [vmem:[%s2576] sm:$0x1]
    %s2578 = scalar_lea.vmem %s3, 1
    %v2579 = vld [vmem:[%s2578] sm:$0x1]
    %v2580 = vsel %vm110, %v2572, 0.0
    %2581 = vadd.xlane.f32.xlu0 %v2580
    %v2582 = vpop.xlane.xlu0 %2581
    %v2583 = vsel %vm110, %v2573, 0.0
    %2584 = vadd.xlane.f32.xlu0 %v2583
    %v2585 = vpop.xlane.xlu0 %2584
    %v2586 = vsel %vm110, %v2574, 0.0
    %2587 = vadd.xlane.f32.xlu0 %v2586
    %v2588 = vpop.xlane.xlu0 %2587
    %v2589 = vsel %vm110, %v2575, 0.0
    %2590 = vadd.xlane.f32.xlu0 %v2589
    %v2591 = vpop.xlane.xlu0 %2590
    %v2592 = vmul.f32 %v2582, %v123
    %v2593 = vmul.f32 %v2585, %v123
    %v2594 = vmul.f32 %v2588, %v123
    %v2595 = vmul.f32 %v2591, %v123
    %v2596 = vmul.f32 %v2572, %v2572
    %v2597 = vmul.f32 %v2573, %v2573
    %v2598 = vmul.f32 %v2574, %v2574
    %v2599 = vmul.f32 %v2575, %v2575
    %v2600 = vsel %vm110, %v2596, 0.0
    %2601 = vadd.xlane.f32.xlu0 %v2600
    %v2602 = vpop.xlane.xlu0 %2601
    %v2603 = vsel %vm110, %v2597, 0.0
    %2604 = vadd.xlane.f32.xlu0 %v2603
    %v2605 = vpop.xlane.xlu0 %2604
    %v2606 = vsel %vm110, %v2598, 0.0
    %2607 = vadd.xlane.f32.xlu0 %v2606
    %v2608 = vpop.xlane.xlu0 %2607
    %v2609 = vsel %vm110, %v2599, 0.0
    %2610 = vadd.xlane.f32.xlu0 %v2609
    %v2611 = vpop.xlane.xlu0 %2610
    %v2612 = vmul.f32 %v2602, %v123
    %v2613 = vmul.f32 %v2605, %v123
    %v2614 = vmul.f32 %v2608, %v123
    %v2615 = vmul.f32 %v2611, %v123
    %v2616 = vmul.f32 %v2592, %v2592
    %v2617 = vmul.f32 %v2593, %v2593
    %v2618 = vmul.f32 %v2594, %v2594
    %v2619 = vmul.f32 %v2595, %v2595
    %v2620 = vsub.f32 %v2612, %v2616
    %v2621 = vsub.f32 %v2613, %v2617
    %v2622 = vsub.f32 %v2614, %v2618
    %v2623 = vsub.f32 %v2615, %v2619
    %v2624 = vmax.f32 %v2620, 0.0
    %v2625 = vmax.f32 %v2621, 0.0
    %v2626 = vmax.f32 %v2622, 0.0
    %v2627 = vmax.f32 %v2623, 0.0
    %v2628 = vsub.f32 %v2572, %v2592
    %v2629 = vsub.f32 %v2573, %v2593
    %v2630 = vsub.f32 %v2574, %v2594
    %v2631 = vsub.f32 %v2575, %v2595
    %v2632 = vadd.f32 %v2624, 1e-05
    %v2633 = vadd.f32 %v2625, 1e-05
    %v2634 = vadd.f32 %v2626, 1e-05
    %v2635 = vadd.f32 %v2627, 1e-05
    %v2636 = vrsqrt.pop %v2632
    %v2637 = vrsqrt.pop %v2633
    %v2638 = vrsqrt.pop %v2634
    %v2639 = vrsqrt.pop %v2635
    %v2640 = vmul.f32 %v2628, %v2636
    %v2641 = vmul.f32 %v2629, %v2637
    %v2642 = vmul.f32 %v2630, %v2638
    %v2643 = vmul.f32 %v2631, %v2639
    %v2645 = vlaneseq
    %v2646 = vshrl.u32 %v2645, 7
    %v2647 = vsub.s32 0, %v2646
    %v2648 = vrot.slane %v2577, %v2647
    %v2650 = vmul.f32 %v2640, %v2648
    %v2651 = vmul.f32 %v2641, %v2648
    %v2652 = vmul.f32 %v2642, %v2648
    %v2653 = vmul.f32 %v2643, %v2648
    %v2655 = vlaneseq
    %v2656 = vshrl.u32 %v2655, 7
    %v2657 = vsub.s32 0, %v2656
    %v2658 = vrot.slane %v2579, %v2657
    %v2660 = vadd.f32 %v2650, %v2658
    %v2661 = vadd.f32 %v2651, %v2658
    %v2662 = vadd.f32 %v2652, %v2658
    %v2663 = vadd.f32 %v2653, %v2658
    %v2668 = vrot.slane %v2660, 4
    %v2669 = vrot.slane %v2661, 4
    %v2670 = vsel %vm1338, %v2668, %v2669
    %v2671 = vrot.slane %v2662, 4
    %v2672 = vrot.slane %v2663, 4
    %v2673 = vsel %vm1338, %v2671, %v2672
    %v2680 = vsel %vm1338, %v2669, %v2668
    %v2681 = vsel %vm1338, %v2672, %v2671
    %v2682 = vpack.c.bf16 %v2680, %v2670
    %v2683 = vpack.c.bf16 %v2681, %v2673
    %s2684 = scalar_lea.vmem [#allocation2], 16
    %v2685 = vld [vmem:[%s2684] sm:$0xf]
    %v2686 = vld [vmem:[%s2684 + $0x4] sm:$0xf]
    %v2687 = vld [vmem:[%s2684 + $0x8] sm:$0xf]
    %v2688 = vld [vmem:[%s2684 + $0xc] sm:$0xf]
    %s2689 = scalar_lea.vmem %s5, 1
    %v2690 = vld [vmem:[%s2689] sm:$0x1]
    %v2692 = vlaneseq
    %v2693 = vshrl.u32 %v2692, 7
    %v2694 = vsub.s32 0, %v2693
    %v2695 = vrot.slane %v2690, %v2694
    %v2701 = vunpack.c.l.b16 %v2685
    %v2702 = vunpack.c.l.b16 %v2686
    %v2703 = vunpack.c.l.b16 %v2687
    %v2704 = vunpack.c.l.b16 %v2688
    %v2705 = vpack.c.b16 %v2702, %v2701
    %v2706 = vpack.c.b16 %v2704, %v2703
    %v2710 = vsel %vm110, %v2682, 0
    %v2713 = vsel %vm110, %v2683, 0
    %2715 = vmatprep.subr.bf16.mxu0 0
    %2716 = vmatpush1.bf16.msra.mxu0 %v2705
    %2717 = vmatprep.subr.bf16.mxu0 0
    %2718 = vmatpush1.bf16.msra.mxu0 %v2706
    %2719 = vmatprep.subr.bf16.mxu0 0
    %2720 = vmatpush1.bf16.msra.mxu0 0
    %2721 = vmatprep.subr.bf16.mxu0 0
    %2722 = vmatpush1.bf16.msra.mxu0 0
    %2723 = vmatprep.subr.bf16.mxu0 0
    %2724 = vmatpush1.bf16.msra.mxu0 0
    %2725 = vmatprep.subr.bf16.mxu0 0
    %2726 = vmatpush1.bf16.msra.mxu0 0
    %2727 = vmatprep.subr.bf16.mxu0 0
    %2728 = vmatpush1.bf16.msra.mxu0 0
    %2729 = vmatprep.subr.bf16.mxu0 0
    %2730 = vmatpush1.bf16.msra.mxu0 0
    %2731 = vmatprep.subr.bf16.mxu0 0
    %2732 = vmatpush1.bf16.msra.mxu0 0
    %2733 = vmatprep.subr.bf16.mxu0 0
    %2734 = vmatpush1.bf16.msra.mxu0 0
    %2735 = vmatprep.subr.bf16.mxu0 0
    %2736 = vmatpush1.bf16.msra.mxu0 0
    %2737 = vmatprep.subr.bf16.mxu0 0
    %2738 = vmatpush1.bf16.msra.mxu0 0
    %2739 = vmatprep.subr.bf16.mxu0 0
    %2740 = vmatpush1.bf16.msra.mxu0 0
    %2741 = vmatprep.subr.bf16.mxu0 0
    %2742 = vmatpush1.bf16.msra.mxu0 0
    %2743 = vmatprep.subr.bf16.mxu0 0
    %2744 = vmatpush1.bf16.msra.mxu0 0
    %2745 = vmatprep.subr.bf16.mxu0 0
    %2746 = vmatpush1.bf16.msra.mxu0 0
    %2747 = vmatprep.mubr.bf16.mxu0 0
    %2748 = vmatmul.mubr.bf16.gmra.mrb[0].mxu0 %v2710
    %v2749 = vpop.f32.mrb[0].mxu0
    %v2750 = vadd.f32 %v2695, %v2749
    %v2751 = vpop.f32.mrb[0].mxu0
    %v2752 = vpop.f32.mrb[0].mxu0
    %v2753 = vadd.f32 %v2695, %v2752
    %v2754 = vpop.f32.mrb[0].mxu0
    %2755 = vmatprep.mubr.bf16.mxu0 0
    %2756 = vmatmul.mubr.bf16.gmra.mrb[0].mxu0 %v2713
    %v2757 = vpop.f32.mrb[0].mxu0
    %v2758 = vadd.f32 %v2695, %v2757
    %v2759 = vpop.f32.mrb[0].mxu0
    %v2760 = vpop.f32.mrb[0].mxu0
    %v2761 = vadd.f32 %v2695, %v2760
    %v2762 = vpop.f32.mrb[0].mxu0
    %2763 = vdwg.mxu0
    %2768 = vrot.lane.b32.xlu0 %v2750, 120
    %v2769 = vpop.permute.xlu0 %2768
    %2770 = vrot.lane.b32.xlu0 %v2753, 120
    %v2771 = vpop.permute.xlu0 %2770
    %2772 = vrot.lane.b32.xlu0 %v2758, 120
    %v2773 = vpop.permute.xlu0 %2772
    %2774 = vrot.lane.b32.xlu0 %v2761, 120
    %v2775 = vpop.permute.xlu0 %2774
    %2780 = vrot.lane.b32.xlu0 %v2750, 112
    %v2781 = vpop.permute.xlu0 %2780
    %2782 = vrot.lane.b32.xlu0 %v2753, 112
    %v2783 = vpop.permute.xlu0 %2782
    %2784 = vrot.lane.b32.xlu0 %v2758, 112
    %v2785 = vpop.permute.xlu0 %2784
    %2786 = vrot.lane.b32.xlu0 %v2761, 112
    %v2787 = vpop.permute.xlu0 %2786
    %2792 = vrot.lane.b32.xlu0 %v2750, 104
    %v2793 = vpop.permute.xlu0 %2792
    %2794 = vrot.lane.b32.xlu0 %v2753, 104
    %v2795 = vpop.permute.xlu0 %2794
    %2796 = vrot.lane.b32.xlu0 %v2758, 104
    %v2797 = vpop.permute.xlu0 %2796
    %2798 = vrot.lane.b32.xlu0 %v2761, 104
    %v2799 = vpop.permute.xlu0 %2798
    %v2804 = vpack.c.bf16 %v2750, %v2750
    %v2805 = vpack.c.bf16 %v2753, %v2753
    %v2806 = vpack.c.bf16 %v2758, %v2758
    %v2807 = vpack.c.bf16 %v2761, %v2761
    %v2808 = vpack.c.bf16 %v2769, %v2769
    %v2809 = vpack.c.bf16 %v2771, %v2771
    %v2810 = vpack.c.bf16 %v2773, %v2773
    %v2811 = vpack.c.bf16 %v2775, %v2775
    %v2812 = vpack.c.bf16 %v2781, %v2781
    %v2813 = vpack.c.bf16 %v2783, %v2783
    %v2814 = vpack.c.bf16 %v2785, %v2785
    %v2815 = vpack.c.bf16 %v2787, %v2787
    %v2816 = vpack.c.bf16 %v2793, %v2793
    %v2817 = vpack.c.bf16 %v2795, %v2795
    %v2818 = vpack.c.bf16 %v2797, %v2797
    %v2819 = vpack.c.bf16 %v2799, %v2799
    %2821 = vrot.lane.b32.xlu0 %v2804, 96
    %v2822 = vpop.permute.xlu0 %2821
    %v2824 = vsel %vm335, %v2804, 0
    %v2827 = vsel %vm335, %v2822, 0
    %2829 = vmatprep.subr.bf16.mxu0 0
    %2830 = vmatpush1.bf16.xpose.msra.mxu0 %v2827
    %2831 = vmatprep.subr.bf16.mxu0 0
    %2832 = vmatpush1.bf16.xpose.msra.mxu0 0
    %2833 = vmatprep.subr.bf16.mxu0 0
    %2834 = vmatpush1.bf16.xpose.msra.mxu0 0
    %2835 = vmatprep.subr.bf16.mxu0 0
    %2836 = vmatpush1.bf16.xpose.msra.mxu0 0
    %2837 = vmatprep.subr.bf16.mxu0 0
    %2838 = vmatpush1.bf16.xpose.msra.mxu0 0
    %2839 = vmatprep.subr.bf16.mxu0 0
    %2840 = vmatpush1.bf16.xpose.msra.mxu0 0
    %2841 = vmatprep.subr.bf16.mxu0 0
    %2842 = vmatpush1.bf16.xpose.msra.mxu0 0
    %2843 = vmatprep.subr.bf16.mxu0 0
    %2844 = vmatpush1.bf16.xpose.msra.mxu0 0
    %2845 = vmatprep.subr.bf16.mxu0 0
    %2846 = vmatpush1.bf16.xpose.msra.mxu0 0
    %2847 = vmatprep.subr.bf16.mxu0 0
    %2848 = vmatpush1.bf16.xpose.msra.mxu0 0
    %2849 = vmatprep.subr.bf16.mxu0 0
    %2850 = vmatpush1.bf16.xpose.msra.mxu0 0
    %2851 = vmatprep.subr.bf16.mxu0 0
    %2852 = vmatpush1.bf16.xpose.msra.mxu0 0
    %2853 = vmatprep.subr.bf16.mxu0 0
    %2854 = vmatpush1.bf16.xpose.msra.mxu0 0
    %2855 = vmatprep.subr.bf16.mxu0 0
    %2856 = vmatpush1.bf16.xpose.msra.mxu0 0
    %2857 = vmatprep.subr.bf16.mxu0 0
    %2858 = vmatpush1.bf16.xpose.msra.mxu0 0
    %2859 = vmatprep.subr.bf16.mxu0 0
    %2860 = vmatpush1.bf16.xpose.msra.mxu0 0
    %2861 = vmatprep.mubr.bf16.mxu0 0
    %2862 = vmatmul.mubr.bf16.gmra.mrb[0].mxu0 %v2824
    %v2863 = vpop.f32.mrb[0].mxu0
    %v2864 = vadd.f32 0.0, %v2863
    %v2865 = vpop.f32.mrb[0].mxu0
    %v2866 = vpop.f32.mrb[0].mxu0
    %v2867 = vpop.f32.mrb[0].mxu0
    %2868 = vdwg.mxu0
    %2870 = vrot.lane.b32.xlu0 %v2805, 96
    %v2871 = vpop.permute.xlu0 %2870
    %v2873 = vsel %vm335, %v2805, 0
    %v2876 = vsel %vm335, %v2871, 0
    %2878 = vmatprep.subr.bf16.mxu0 0
    %2879 = vmatpush1.bf16.xpose.msra.mxu0 %v2876
    %2880 = vmatprep.subr.bf16.mxu0 0
    %2881 = vmatpush1.bf16.xpose.msra.mxu0 0
    %2882 = vmatprep.subr.bf16.mxu0 0
    %2883 = vmatpush1.bf16.xpose.msra.mxu0 0
    %2884 = vmatprep.subr.bf16.mxu0 0
    %2885 = vmatpush1.bf16.xpose.msra.mxu0 0
    %2886 = vmatprep.subr.bf16.mxu0 0
    %2887 = vmatpush1.bf16.xpose.msra.mxu0 0
    %2888 = vmatprep.subr.bf16.mxu0 0
    %2889 = vmatpush1.bf16.xpose.msra.mxu0 0
    %2890 = vmatprep.subr.bf16.mxu0 0
    %2891 = vmatpush1.bf16.xpose.msra.mxu0 0
    %2892 = vmatprep.subr.bf16.mxu0 0
    %2893 = vmatpush1.bf16.xpose.msra.mxu0 0
    %2894 = vmatprep.subr.bf16.mxu0 0
    %2895 = vmatpush1.bf16.xpose.msra.mxu0 0
    %2896 = vmatprep.subr.bf16.mxu0 0
    %2897 = vmatpush1.bf16.xpose.msra.mxu0 0
    %2898 = vmatprep.subr.bf16.mxu0 0
    %2899 = vmatpush1.bf16.xpose.msra.mxu0 0
    %2900 = vmatprep.subr.bf16.mxu0 0
    %2901 = vmatpush1.bf16.xpose.msra.mxu0 0
    %2902 = vmatprep.subr.bf16.mxu0 0
    %2903 = vmatpush1.bf16.xpose.msra.mxu0 0
    %2904 = vmatprep.subr.bf16.mxu0 0
    %2905 = vmatpush1.bf16.xpose.msra.mxu0 0
    %2906 = vmatprep.subr.bf16.mxu0 0
    %2907 = vmatpush1.bf16.xpose.msra.mxu0 0
    %2908 = vmatprep.subr.bf16.mxu0 0
    %2909 = vmatpush1.bf16.xpose.msra.mxu0 0
    %2910 = vmatprep.mubr.bf16.mxu0 0
    %2911 = vmatmul.mubr.bf16.gmra.mrb[0].mxu0 %v2873
    %v2912 = vpop.f32.mrb[0].mxu0
    %v2913 = vadd.f32 0.0, %v2912
    %v2914 = vpop.f32.mrb[0].mxu0
    %v2915 = vpop.f32.mrb[0].mxu0
    %v2916 = vpop.f32.mrb[0].mxu0
    %2917 = vdwg.mxu0
    %2919 = vrot.lane.b32.xlu0 %v2806, 96
    %v2920 = vpop.permute.xlu0 %2919
    %v2922 = vsel %vm335, %v2806, 0
    %v2925 = vsel %vm335, %v2920, 0
    %2927 = vmatprep.subr.bf16.mxu0 0
    %2928 = vmatpush1.bf16.xpose.msra.mxu0 %v2925
    %2929 = vmatprep.subr.bf16.mxu0 0
    %2930 = vmatpush1.bf16.xpose.msra.mxu0 0
    %2931 = vmatprep.subr.bf16.mxu0 0
    %2932 = vmatpush1.bf16.xpose.msra.mxu0 0
    %2933 = vmatprep.subr.bf16.mxu0 0
    %2934 = vmatpush1.bf16.xpose.msra.mxu0 0
    %2935 = vmatprep.subr.bf16.mxu0 0
    %2936 = vmatpush1.bf16.xpose.msra.mxu0 0
    %2937 = vmatprep.subr.bf16.mxu0 0
    %2938 = vmatpush1.bf16.xpose.msra.mxu0 0
    %2939 = vmatprep.subr.bf16.mxu0 0
    %2940 = vmatpush1.bf16.xpose.msra.mxu0 0
    %2941 = vmatprep.subr.bf16.mxu0 0
    %2942 = vmatpush1.bf16.xpose.msra.mxu0 0
    %2943 = vmatprep.subr.bf16.mxu0 0
    %2944 = vmatpush1.bf16.xpose.msra.mxu0 0
    %2945 = vmatprep.subr.bf16.mxu0 0
    %2946 = vmatpush1.bf16.xpose.msra.mxu0 0
    %2947 = vmatprep.subr.bf16.mxu0 0
    %2948 = vmatpush1.bf16.xpose.msra.mxu0 0
    %2949 = vmatprep.subr.bf16.mxu0 0
    %2950 = vmatpush1.bf16.xpose.msra.mxu0 0
    %2951 = vmatprep.subr.bf16.mxu0 0
    %2952 = vmatpush1.bf16.xpose.msra.mxu0 0
    %2953 = vmatprep.subr.bf16.mxu0 0
    %2954 = vmatpush1.bf16.xpose.msra.mxu0 0
    %2955 = vmatprep.subr.bf16.mxu0 0
    %2956 = vmatpush1.bf16.xpose.msra.mxu0 0
    %2957 = vmatprep.subr.bf16.mxu0 0
    %2958 = vmatpush1.bf16.xpose.msra.mxu0 0
    %2959 = vmatprep.mubr.bf16.mxu0 0
    %2960 = vmatmul.mubr.bf16.gmra.mrb[0].mxu0 %v2922
    %v2961 = vpop.f32.mrb[0].mxu0
    %v2962 = vadd.f32 0.0, %v2961
    %v2963 = vpop.f32.mrb[0].mxu0
    %v2964 = vpop.f32.mrb[0].mxu0
    %v2965 = vpop.f32.mrb[0].mxu0
    %2966 = vdwg.mxu0
    %2968 = vrot.lane.b32.xlu0 %v2807, 96
    %v2969 = vpop.permute.xlu0 %2968
    %v2971 = vsel %vm335, %v2807, 0
    %v2974 = vsel %vm335, %v2969, 0
    %2976 = vmatprep.subr.bf16.mxu0 0
    %2977 = vmatpush1.bf16.xpose.msra.mxu0 %v2974
    %2978 = vmatprep.subr.bf16.mxu0 0
    %2979 = vmatpush1.bf16.xpose.msra.mxu0 0
    %2980 = vmatprep.subr.bf16.mxu0 0
    %2981 = vmatpush1.bf16.xpose.msra.mxu0 0
    %2982 = vmatprep.subr.bf16.mxu0 0
    %2983 = vmatpush1.bf16.xpose.msra.mxu0 0
    %2984 = vmatprep.subr.bf16.mxu0 0
    %2985 = vmatpush1.bf16.xpose.msra.mxu0 0
    %2986 = vmatprep.subr.bf16.mxu0 0
    %2987 = vmatpush1.bf16.xpose.msra.mxu0 0
    %2988 = vmatprep.subr.bf16.mxu0 0
    %2989 = vmatpush1.bf16.xpose.msra.mxu0 0
    %2990 = vmatprep.subr.bf16.mxu0 0
    %2991 = vmatpush1.bf16.xpose.msra.mxu0 0
    %2992 = vmatprep.subr.bf16.mxu0 0
    %2993 = vmatpush1.bf16.xpose.msra.mxu0 0
    %2994 = vmatprep.subr.bf16.mxu0 0
    %2995 = vmatpush1.bf16.xpose.msra.mxu0 0
    %2996 = vmatprep.subr.bf16.mxu0 0
    %2997 = vmatpush1.bf16.xpose.msra.mxu0 0
    %2998 = vmatprep.subr.bf16.mxu0 0
    %2999 = vmatpush1.bf16.xpose.msra.mxu0 0
    %3000 = vmatprep.subr.bf16.mxu0 0
    %3001 = vmatpush1.bf16.xpose.msra.mxu0 0
    %3002 = vmatprep.subr.bf16.mxu0 0
    %3003 = vmatpush1.bf16.xpose.msra.mxu0 0
    %3004 = vmatprep.subr.bf16.mxu0 0
    %3005 = vmatpush1.bf16.xpose.msra.mxu0 0
    %3006 = vmatprep.subr.bf16.mxu0 0
    %3007 = vmatpush1.bf16.xpose.msra.mxu0 0
    %3008 = vmatprep.mubr.bf16.mxu0 0
    %3009 = vmatmul.mubr.bf16.gmra.mrb[0].mxu0 %v2971
    %v3010 = vpop.f32.mrb[0].mxu0
    %v3011 = vadd.f32 0.0, %v3010
    %v3012 = vpop.f32.mrb[0].mxu0
    %v3013 = vpop.f32.mrb[0].mxu0
    %v3014 = vpop.f32.mrb[0].mxu0
    %3015 = vdwg.mxu0
    %3017 = vrot.lane.b32.xlu0 %v2808, 96
    %v3018 = vpop.permute.xlu0 %3017
    %v3020 = vsel %vm335, %v2808, 0
    %v3023 = vsel %vm335, %v3018, 0
    %3025 = vmatprep.subr.bf16.mxu0 0
    %3026 = vmatpush1.bf16.xpose.msra.mxu0 %v3023
    %3027 = vmatprep.subr.bf16.mxu0 0
    %3028 = vmatpush1.bf16.xpose.msra.mxu0 0
    %3029 = vmatprep.subr.bf16.mxu0 0
    %3030 = vmatpush1.bf16.xpose.msra.mxu0 0
    %3031 = vmatprep.subr.bf16.mxu0 0
    %3032 = vmatpush1.bf16.xpose.msra.mxu0 0
    %3033 = vmatprep.subr.bf16.mxu0 0
    %3034 = vmatpush1.bf16.xpose.msra.mxu0 0
    %3035 = vmatprep.subr.bf16.mxu0 0
    %3036 = vmatpush1.bf16.xpose.msra.mxu0 0
    %3037 = vmatprep.subr.bf16.mxu0 0
    %3038 = vmatpush1.bf16.xpose.msra.mxu0 0
    %3039 = vmatprep.subr.bf16.mxu0 0
    %3040 = vmatpush1.bf16.xpose.msra.mxu0 0
    %3041 = vmatprep.subr.bf16.mxu0 0
    %3042 = vmatpush1.bf16.xpose.msra.mxu0 0
    %3043 = vmatprep.subr.bf16.mxu0 0
    %3044 = vmatpush1.bf16.xpose.msra.mxu0 0
    %3045 = vmatprep.subr.bf16.mxu0 0
    %3046 = vmatpush1.bf16.xpose.msra.mxu0 0
    %3047 = vmatprep.subr.bf16.mxu0 0
    %3048 = vmatpush1.bf16.xpose.msra.mxu0 0
    %3049 = vmatprep.subr.bf16.mxu0 0
    %3050 = vmatpush1.bf16.xpose.msra.mxu0 0
    %3051 = vmatprep.subr.bf16.mxu0 0
    %3052 = vmatpush1.bf16.xpose.msra.mxu0 0
    %3053 = vmatprep.subr.bf16.mxu0 0
    %3054 = vmatpush1.bf16.xpose.msra.mxu0 0
    %3055 = vmatprep.subr.bf16.mxu0 0
    %3056 = vmatpush1.bf16.xpose.msra.mxu0 0
    %3057 = vmatprep.mubr.bf16.mxu0 0
    %3058 = vmatmul.mubr.bf16.gmra.mrb[0].mxu0 %v3020
    %v3059 = vpop.f32.mrb[0].mxu0
    %v3060 = vadd.f32 0.0, %v3059
    %v3061 = vpop.f32.mrb[0].mxu0
    %v3062 = vpop.f32.mrb[0].mxu0
    %v3063 = vpop.f32.mrb[0].mxu0
    %3064 = vdwg.mxu0
    %3066 = vrot.lane.b32.xlu0 %v2809, 96
    %v3067 = vpop.permute.xlu0 %3066
    %v3069 = vsel %vm335, %v2809, 0
    %v3072 = vsel %vm335, %v3067, 0
    %3074 = vmatprep.subr.bf16.mxu0 0
    %3075 = vmatpush1.bf16.xpose.msra.mxu0 %v3072
    %3076 = vmatprep.subr.bf16.mxu0 0
    %3077 = vmatpush1.bf16.xpose.msra.mxu0 0
    %3078 = vmatprep.subr.bf16.mxu0 0
    %3079 = vmatpush1.bf16.xpose.msra.mxu0 0
    %3080 = vmatprep.subr.bf16.mxu0 0
    %3081 = vmatpush1.bf16.xpose.msra.mxu0 0
    %3082 = vmatprep.subr.bf16.mxu0 0
    %3083 = vmatpush1.bf16.xpose.msra.mxu0 0
    %3084 = vmatprep.subr.bf16.mxu0 0
    %3085 = vmatpush1.bf16.xpose.msra.mxu0 0
    %3086 = vmatprep.subr.bf16.mxu0 0
    %3087 = vmatpush1.bf16.xpose.msra.mxu0 0
    %3088 = vmatprep.subr.bf16.mxu0 0
    %3089 = vmatpush1.bf16.xpose.msra.mxu0 0
    %3090 = vmatprep.subr.bf16.mxu0 0
    %3091 = vmatpush1.bf16.xpose.msra.mxu0 0
    %3092 = vmatprep.subr.bf16.mxu0 0
    %3093 = vmatpush1.bf16.xpose.msra.mxu0 0
    %3094 = vmatprep.subr.bf16.mxu0 0
    %3095 = vmatpush1.bf16.xpose.msra.mxu0 0
    %3096 = vmatprep.subr.bf16.mxu0 0
    %3097 = vmatpush1.bf16.xpose.msra.mxu0 0
    %3098 = vmatprep.subr.bf16.mxu0 0
    %3099 = vmatpush1.bf16.xpose.msra.mxu0 0
    %3100 = vmatprep.subr.bf16.mxu0 0
    %3101 = vmatpush1.bf16.xpose.msra.mxu0 0
    %3102 = vmatprep.subr.bf16.mxu0 0
    %3103 = vmatpush1.bf16.xpose.msra.mxu0 0
    %3104 = vmatprep.subr.bf16.mxu0 0
    %3105 = vmatpush1.bf16.xpose.msra.mxu0 0
    %3106 = vmatprep.mubr.bf16.mxu0 0
    %3107 = vmatmul.mubr.bf16.gmra.mrb[0].mxu0 %v3069
    %v3108 = vpop.f32.mrb[0].mxu0
    %v3109 = vadd.f32 0.0, %v3108
    %v3110 = vpop.f32.mrb[0].mxu0
    %v3111 = vpop.f32.mrb[0].mxu0
    %v3112 = vpop.f32.mrb[0].mxu0
    %3113 = vdwg.mxu0
    %3115 = vrot.lane.b32.xlu0 %v2810, 96
    %v3116 = vpop.permute.xlu0 %3115
    %v3118 = vsel %vm335, %v2810, 0
    %v3121 = vsel %vm335, %v3116, 0
    %3123 = vmatprep.subr.bf16.mxu0 0
    %3124 = vmatpush1.bf16.xpose.msra.mxu0 %v3121
    %3125 = vmatprep.subr.bf16.mxu0 0
    %3126 = vmatpush1.bf16.xpose.msra.mxu0 0
    %3127 = vmatprep.subr.bf16.mxu0 0
    %3128 = vmatpush1.bf16.xpose.msra.mxu0 0
    %3129 = vmatprep.subr.bf16.mxu0 0
    %3130 = vmatpush1.bf16.xpose.msra.mxu0 0
    %3131 = vmatprep.subr.bf16.mxu0 0
    %3132 = vmatpush1.bf16.xpose.msra.mxu0 0
    %3133 = vmatprep.subr.bf16.mxu0 0
    %3134 = vmatpush1.bf16.xpose.msra.mxu0 0
    %3135 = vmatprep.subr.bf16.mxu0 0
    %3136 = vmatpush1.bf16.xpose.msra.mxu0 0
    %3137 = vmatprep.subr.bf16.mxu0 0
    %3138 = vmatpush1.bf16.xpose.msra.mxu0 0
    %3139 = vmatprep.subr.bf16.mxu0 0
    %3140 = vmatpush1.bf16.xpose.msra.mxu0 0
    %3141 = vmatprep.subr.bf16.mxu0 0
    %3142 = vmatpush1.bf16.xpose.msra.mxu0 0
    %3143 = vmatprep.subr.bf16.mxu0 0
    %3144 = vmatpush1.bf16.xpose.msra.mxu0 0
    %3145 = vmatprep.subr.bf16.mxu0 0
    %3146 = vmatpush1.bf16.xpose.msra.mxu0 0
    %3147 = vmatprep.subr.bf16.mxu0 0
    %3148 = vmatpush1.bf16.xpose.msra.mxu0 0
    %3149 = vmatprep.subr.bf16.mxu0 0
    %3150 = vmatpush1.bf16.xpose.msra.mxu0 0
    %3151 = vmatprep.subr.bf16.mxu0 0
    %3152 = vmatpush1.bf16.xpose.msra.mxu0 0
    %3153 = vmatprep.subr.bf16.mxu0 0
    %3154 = vmatpush1.bf16.xpose.msra.mxu0 0
    %3155 = vmatprep.mubr.bf16.mxu0 0
    %3156 = vmatmul.mubr.bf16.gmra.mrb[0].mxu0 %v3118
    %v3157 = vpop.f32.mrb[0].mxu0
    %v3158 = vadd.f32 0.0, %v3157
    %v3159 = vpop.f32.mrb[0].mxu0
    %v3160 = vpop.f32.mrb[0].mxu0
    %v3161 = vpop.f32.mrb[0].mxu0
    %3162 = vdwg.mxu0
    %3164 = vrot.lane.b32.xlu0 %v2811, 96
    %v3165 = vpop.permute.xlu0 %3164
    %v3167 = vsel %vm335, %v2811, 0
    %v3170 = vsel %vm335, %v3165, 0
    %3172 = vmatprep.subr.bf16.mxu0 0
    %3173 = vmatpush1.bf16.xpose.msra.mxu0 %v3170
    %3174 = vmatprep.subr.bf16.mxu0 0
    %3175 = vmatpush1.bf16.xpose.msra.mxu0 0
    %3176 = vmatprep.subr.bf16.mxu0 0
    %3177 = vmatpush1.bf16.xpose.msra.mxu0 0
    %3178 = vmatprep.subr.bf16.mxu0 0
    %3179 = vmatpush1.bf16.xpose.msra.mxu0 0
    %3180 = vmatprep.subr.bf16.mxu0 0
    %3181 = vmatpush1.bf16.xpose.msra.mxu0 0
    %3182 = vmatprep.subr.bf16.mxu0 0
    %3183 = vmatpush1.bf16.xpose.msra.mxu0 0
    %3184 = vmatprep.subr.bf16.mxu0 0
    %3185 = vmatpush1.bf16.xpose.msra.mxu0 0
    %3186 = vmatprep.subr.bf16.mxu0 0
    %3187 = vmatpush1.bf16.xpose.msra.mxu0 0
    %3188 = vmatprep.subr.bf16.mxu0 0
    %3189 = vmatpush1.bf16.xpose.msra.mxu0 0
    %3190 = vmatprep.subr.bf16.mxu0 0
    %3191 = vmatpush1.bf16.xpose.msra.mxu0 0
    %3192 = vmatprep.subr.bf16.mxu0 0
    %3193 = vmatpush1.bf16.xpose.msra.mxu0 0
    %3194 = vmatprep.subr.bf16.mxu0 0
    %3195 = vmatpush1.bf16.xpose.msra.mxu0 0
    %3196 = vmatprep.subr.bf16.mxu0 0
    %3197 = vmatpush1.bf16.xpose.msra.mxu0 0
    %3198 = vmatprep.subr.bf16.mxu0 0
    %3199 = vmatpush1.bf16.xpose.msra.mxu0 0
    %3200 = vmatprep.subr.bf16.mxu0 0
    %3201 = vmatpush1.bf16.xpose.msra.mxu0 0
    %3202 = vmatprep.subr.bf16.mxu0 0
    %3203 = vmatpush1.bf16.xpose.msra.mxu0 0
    %3204 = vmatprep.mubr.bf16.mxu0 0
    %3205 = vmatmul.mubr.bf16.gmra.mrb[0].mxu0 %v3167
    %v3206 = vpop.f32.mrb[0].mxu0
    %v3207 = vadd.f32 0.0, %v3206
    %v3208 = vpop.f32.mrb[0].mxu0
    %v3209 = vpop.f32.mrb[0].mxu0
    %v3210 = vpop.f32.mrb[0].mxu0
    %3211 = vdwg.mxu0
    %3213 = vrot.lane.b32.xlu0 %v2812, 96
    %v3214 = vpop.permute.xlu0 %3213
    %v3216 = vsel %vm335, %v2812, 0
    %v3219 = vsel %vm335, %v3214, 0
    %3221 = vmatprep.subr.bf16.mxu0 0
    %3222 = vmatpush1.bf16.xpose.msra.mxu0 %v3219
    %3223 = vmatprep.subr.bf16.mxu0 0
    %3224 = vmatpush1.bf16.xpose.msra.mxu0 0
    %3225 = vmatprep.subr.bf16.mxu0 0
    %3226 = vmatpush1.bf16.xpose.msra.mxu0 0
    %3227 = vmatprep.subr.bf16.mxu0 0
    %3228 = vmatpush1.bf16.xpose.msra.mxu0 0
    %3229 = vmatprep.subr.bf16.mxu0 0
    %3230 = vmatpush1.bf16.xpose.msra.mxu0 0
    %3231 = vmatprep.subr.bf16.mxu0 0
    %3232 = vmatpush1.bf16.xpose.msra.mxu0 0
    %3233 = vmatprep.subr.bf16.mxu0 0
    %3234 = vmatpush1.bf16.xpose.msra.mxu0 0
    %3235 = vmatprep.subr.bf16.mxu0 0
    %3236 = vmatpush1.bf16.xpose.msra.mxu0 0
    %3237 = vmatprep.subr.bf16.mxu0 0
    %3238 = vmatpush1.bf16.xpose.msra.mxu0 0
    %3239 = vmatprep.subr.bf16.mxu0 0
    %3240 = vmatpush1.bf16.xpose.msra.mxu0 0
    %3241 = vmatprep.subr.bf16.mxu0 0
    %3242 = vmatpush1.bf16.xpose.msra.mxu0 0
    %3243 = vmatprep.subr.bf16.mxu0 0
    %3244 = vmatpush1.bf16.xpose.msra.mxu0 0
    %3245 = vmatprep.subr.bf16.mxu0 0
    %3246 = vmatpush1.bf16.xpose.msra.mxu0 0
    %3247 = vmatprep.subr.bf16.mxu0 0
    %3248 = vmatpush1.bf16.xpose.msra.mxu0 0
    %3249 = vmatprep.subr.bf16.mxu0 0
    %3250 = vmatpush1.bf16.xpose.msra.mxu0 0
    %3251 = vmatprep.subr.bf16.mxu0 0
    %3252 = vmatpush1.bf16.xpose.msra.mxu0 0
    %3253 = vmatprep.mubr.bf16.mxu0 0
    %3254 = vmatmul.mubr.bf16.gmra.mrb[0].mxu0 %v3216
    %v3255 = vpop.f32.mrb[0].mxu0
    %v3256 = vadd.f32 0.0, %v3255
    %v3257 = vpop.f32.mrb[0].mxu0
    %v3258 = vpop.f32.mrb[0].mxu0
    %v3259 = vpop.f32.mrb[0].mxu0
    %3260 = vdwg.mxu0
    %3262 = vrot.lane.b32.xlu0 %v2813, 96
    %v3263 = vpop.permute.xlu0 %3262
    %v3265 = vsel %vm335, %v2813, 0
    %v3268 = vsel %vm335, %v3263, 0
    %3270 = vmatprep.subr.bf16.mxu0 0
    %3271 = vmatpush1.bf16.xpose.msra.mxu0 %v3268
    %3272 = vmatprep.subr.bf16.mxu0 0
    %3273 = vmatpush1.bf16.xpose.msra.mxu0 0
    %3274 = vmatprep.subr.bf16.mxu0 0
    %3275 = vmatpush1.bf16.xpose.msra.mxu0 0
    %3276 = vmatprep.subr.bf16.mxu0 0
    %3277 = vmatpush1.bf16.xpose.msra.mxu0 0
    %3278 = vmatprep.subr.bf16.mxu0 0
    %3279 = vmatpush1.bf16.xpose.msra.mxu0 0
    %3280 = vmatprep.subr.bf16.mxu0 0
    %3281 = vmatpush1.bf16.xpose.msra.mxu0 0
    %3282 = vmatprep.subr.bf16.mxu0 0
    %3283 = vmatpush1.bf16.xpose.msra.mxu0 0
    %3284 = vmatprep.subr.bf16.mxu0 0
    %3285 = vmatpush1.bf16.xpose.msra.mxu0 0
    %3286 = vmatprep.subr.bf16.mxu0 0
    %3287 = vmatpush1.bf16.xpose.msra.mxu0 0
    %3288 = vmatprep.subr.bf16.mxu0 0
    %3289 = vmatpush1.bf16.xpose.msra.mxu0 0
    %3290 = vmatprep.subr.bf16.mxu0 0
    %3291 = vmatpush1.bf16.xpose.msra.mxu0 0
    %3292 = vmatprep.subr.bf16.mxu0 0
    %3293 = vmatpush1.bf16.xpose.msra.mxu0 0
    %3294 = vmatprep.subr.bf16.mxu0 0
    %3295 = vmatpush1.bf16.xpose.msra.mxu0 0
    %3296 = vmatprep.subr.bf16.mxu0 0
    %3297 = vmatpush1.bf16.xpose.msra.mxu0 0
    %3298 = vmatprep.subr.bf16.mxu0 0
    %3299 = vmatpush1.bf16.xpose.msra.mxu0 0
    %3300 = vmatprep.subr.bf16.mxu0 0
    %3301 = vmatpush1.bf16.xpose.msra.mxu0 0
    %3302 = vmatprep.mubr.bf16.mxu0 0
    %3303 = vmatmul.mubr.bf16.gmra.mrb[0].mxu0 %v3265
    %v3304 = vpop.f32.mrb[0].mxu0
    %v3305 = vadd.f32 0.0, %v3304
    %v3306 = vpop.f32.mrb[0].mxu0
    %v3307 = vpop.f32.mrb[0].mxu0
    %v3308 = vpop.f32.mrb[0].mxu0
    %3309 = vdwg.mxu0
    %3311 = vrot.lane.b32.xlu0 %v2814, 96
    %v3312 = vpop.permute.xlu0 %3311
    %v3314 = vsel %vm335, %v2814, 0
    %v3317 = vsel %vm335, %v3312, 0
    %3319 = vmatprep.subr.bf16.mxu0 0
    %3320 = vmatpush1.bf16.xpose.msra.mxu0 %v3317
    %3321 = vmatprep.subr.bf16.mxu0 0
    %3322 = vmatpush1.bf16.xpose.msra.mxu0 0
    %3323 = vmatprep.subr.bf16.mxu0 0
    %3324 = vmatpush1.bf16.xpose.msra.mxu0 0
    %3325 = vmatprep.subr.bf16.mxu0 0
    %3326 = vmatpush1.bf16.xpose.msra.mxu0 0
    %3327 = vmatprep.subr.bf16.mxu0 0
    %3328 = vmatpush1.bf16.xpose.msra.mxu0 0
    %3329 = vmatprep.subr.bf16.mxu0 0
    %3330 = vmatpush1.bf16.xpose.msra.mxu0 0
    %3331 = vmatprep.subr.bf16.mxu0 0
    %3332 = vmatpush1.bf16.xpose.msra.mxu0 0
    %3333 = vmatprep.subr.bf16.mxu0 0
    %3334 = vmatpush1.bf16.xpose.msra.mxu0 0
    %3335 = vmatprep.subr.bf16.mxu0 0
    %3336 = vmatpush1.bf16.xpose.msra.mxu0 0
    %3337 = vmatprep.subr.bf16.mxu0 0
    %3338 = vmatpush1.bf16.xpose.msra.mxu0 0
    %3339 = vmatprep.subr.bf16.mxu0 0
    %3340 = vmatpush1.bf16.xpose.msra.mxu0 0
    %3341 = vmatprep.subr.bf16.mxu0 0
    %3342 = vmatpush1.bf16.xpose.msra.mxu0 0
    %3343 = vmatprep.subr.bf16.mxu0 0
    %3344 = vmatpush1.bf16.xpose.msra.mxu0 0
    %3345 = vmatprep.subr.bf16.mxu0 0
    %3346 = vmatpush1.bf16.xpose.msra.mxu0 0
    %3347 = vmatprep.subr.bf16.mxu0 0
    %3348 = vmatpush1.bf16.xpose.msra.mxu0 0
    %3349 = vmatprep.subr.bf16.mxu0 0
    %3350 = vmatpush1.bf16.xpose.msra.mxu0 0
    %3351 = vmatprep.mubr.bf16.mxu0 0
    %3352 = vmatmul.mubr.bf16.gmra.mrb[0].mxu0 %v3314
    %v3353 = vpop.f32.mrb[0].mxu0
    %v3354 = vadd.f32 0.0, %v3353
    %v3355 = vpop.f32.mrb[0].mxu0
    %v3356 = vpop.f32.mrb[0].mxu0
    %v3357 = vpop.f32.mrb[0].mxu0
    %3358 = vdwg.mxu0
    %3360 = vrot.lane.b32.xlu0 %v2815, 96
    %v3361 = vpop.permute.xlu0 %3360
    %v3363 = vsel %vm335, %v2815, 0
    %v3366 = vsel %vm335, %v3361, 0
    %3368 = vmatprep.subr.bf16.mxu0 0
    %3369 = vmatpush1.bf16.xpose.msra.mxu0 %v3366
    %3370 = vmatprep.subr.bf16.mxu0 0
    %3371 = vmatpush1.bf16.xpose.msra.mxu0 0
    %3372 = vmatprep.subr.bf16.mxu0 0
    %3373 = vmatpush1.bf16.xpose.msra.mxu0 0
    %3374 = vmatprep.subr.bf16.mxu0 0
    %3375 = vmatpush1.bf16.xpose.msra.mxu0 0
    %3376 = vmatprep.subr.bf16.mxu0 0
    %3377 = vmatpush1.bf16.xpose.msra.mxu0 0
    %3378 = vmatprep.subr.bf16.mxu0 0
    %3379 = vmatpush1.bf16.xpose.msra.mxu0 0
    %3380 = vmatprep.subr.bf16.mxu0 0
    %3381 = vmatpush1.bf16.xpose.msra.mxu0 0
    %3382 = vmatprep.subr.bf16.mxu0 0
    %3383 = vmatpush1.bf16.xpose.msra.mxu0 0
    %3384 = vmatprep.subr.bf16.mxu0 0
    %3385 = vmatpush1.bf16.xpose.msra.mxu0 0
    %3386 = vmatprep.subr.bf16.mxu0 0
    %3387 = vmatpush1.bf16.xpose.msra.mxu0 0
    %3388 = vmatprep.subr.bf16.mxu0 0
    %3389 = vmatpush1.bf16.xpose.msra.mxu0 0
    %3390 = vmatprep.subr.bf16.mxu0 0
    %3391 = vmatpush1.bf16.xpose.msra.mxu0 0
    %3392 = vmatprep.subr.bf16.mxu0 0
    %3393 = vmatpush1.bf16.xpose.msra.mxu0 0
    %3394 = vmatprep.subr.bf16.mxu0 0
    %3395 = vmatpush1.bf16.xpose.msra.mxu0 0
    %3396 = vmatprep.subr.bf16.mxu0 0
    %3397 = vmatpush1.bf16.xpose.msra.mxu0 0
    %3398 = vmatprep.subr.bf16.mxu0 0
    %3399 = vmatpush1.bf16.xpose.msra.mxu0 0
    %3400 = vmatprep.mubr.bf16.mxu0 0
    %3401 = vmatmul.mubr.bf16.gmra.mrb[0].mxu0 %v3363
    %v3402 = vpop.f32.mrb[0].mxu0
    %v3403 = vadd.f32 0.0, %v3402
    %v3404 = vpop.f32.mrb[0].mxu0
    %v3405 = vpop.f32.mrb[0].mxu0
    %v3406 = vpop.f32.mrb[0].mxu0
    %3407 = vdwg.mxu0
    %3409 = vrot.lane.b32.xlu0 %v2816, 96
    %v3410 = vpop.permute.xlu0 %3409
    %v3412 = vsel %vm335, %v2816, 0
    %v3415 = vsel %vm335, %v3410, 0
    %3417 = vmatprep.subr.bf16.mxu0 0
    %3418 = vmatpush1.bf16.xpose.msra.mxu0 %v3415
    %3419 = vmatprep.subr.bf16.mxu0 0
    %3420 = vmatpush1.bf16.xpose.msra.mxu0 0
    %3421 = vmatprep.subr.bf16.mxu0 0
    %3422 = vmatpush1.bf16.xpose.msra.mxu0 0
    %3423 = vmatprep.subr.bf16.mxu0 0
    %3424 = vmatpush1.bf16.xpose.msra.mxu0 0
    %3425 = vmatprep.subr.bf16.mxu0 0
    %3426 = vmatpush1.bf16.xpose.msra.mxu0 0
    %3427 = vmatprep.subr.bf16.mxu0 0
    %3428 = vmatpush1.bf16.xpose.msra.mxu0 0
    %3429 = vmatprep.subr.bf16.mxu0 0
    %3430 = vmatpush1.bf16.xpose.msra.mxu0 0
    %3431 = vmatprep.subr.bf16.mxu0 0
    %3432 = vmatpush1.bf16.xpose.msra.mxu0 0
    %3433 = vmatprep.subr.bf16.mxu0 0
    %3434 = vmatpush1.bf16.xpose.msra.mxu0 0
    %3435 = vmatprep.subr.bf16.mxu0 0
    %3436 = vmatpush1.bf16.xpose.msra.mxu0 0
    %3437 = vmatprep.subr.bf16.mxu0 0
    %3438 = vmatpush1.bf16.xpose.msra.mxu0 0
    %3439 = vmatprep.subr.bf16.mxu0 0
    %3440 = vmatpush1.bf16.xpose.msra.mxu0 0
    %3441 = vmatprep.subr.bf16.mxu0 0
    %3442 = vmatpush1.bf16.xpose.msra.mxu0 0
    %3443 = vmatprep.subr.bf16.mxu0 0
    %3444 = vmatpush1.bf16.xpose.msra.mxu0 0
    %3445 = vmatprep.subr.bf16.mxu0 0
    %3446 = vmatpush1.bf16.xpose.msra.mxu0 0
    %3447 = vmatprep.subr.bf16.mxu0 0
    %3448 = vmatpush1.bf16.xpose.msra.mxu0 0
    %3449 = vmatprep.mubr.bf16.mxu0 0
    %3450 = vmatmul.mubr.bf16.gmra.mrb[0].mxu0 %v3412
    %v3451 = vpop.f32.mrb[0].mxu0
    %v3452 = vadd.f32 0.0, %v3451
    %v3453 = vpop.f32.mrb[0].mxu0
    %v3454 = vpop.f32.mrb[0].mxu0
    %v3455 = vpop.f32.mrb[0].mxu0
    %3456 = vdwg.mxu0
    %3458 = vrot.lane.b32.xlu0 %v2817, 96
    %v3459 = vpop.permute.xlu0 %3458
    %v3461 = vsel %vm335, %v2817, 0
    %v3464 = vsel %vm335, %v3459, 0
    %3466 = vmatprep.subr.bf16.mxu0 0
    %3467 = vmatpush1.bf16.xpose.msra.mxu0 %v3464
    %3468 = vmatprep.subr.bf16.mxu0 0
    %3469 = vmatpush1.bf16.xpose.msra.mxu0 0
    %3470 = vmatprep.subr.bf16.mxu0 0
    %3471 = vmatpush1.bf16.xpose.msra.mxu0 0
    %3472 = vmatprep.subr.bf16.mxu0 0
    %3473 = vmatpush1.bf16.xpose.msra.mxu0 0
    %3474 = vmatprep.subr.bf16.mxu0 0
    %3475 = vmatpush1.bf16.xpose.msra.mxu0 0
    %3476 = vmatprep.subr.bf16.mxu0 0
    %3477 = vmatpush1.bf16.xpose.msra.mxu0 0
    %3478 = vmatprep.subr.bf16.mxu0 0
    %3479 = vmatpush1.bf16.xpose.msra.mxu0 0
    %3480 = vmatprep.subr.bf16.mxu0 0
    %3481 = vmatpush1.bf16.xpose.msra.mxu0 0
    %3482 = vmatprep.subr.bf16.mxu0 0
    %3483 = vmatpush1.bf16.xpose.msra.mxu0 0
    %3484 = vmatprep.subr.bf16.mxu0 0
    %3485 = vmatpush1.bf16.xpose.msra.mxu0 0
    %3486 = vmatprep.subr.bf16.mxu0 0
    %3487 = vmatpush1.bf16.xpose.msra.mxu0 0
    %3488 = vmatprep.subr.bf16.mxu0 0
    %3489 = vmatpush1.bf16.xpose.msra.mxu0 0
    %3490 = vmatprep.subr.bf16.mxu0 0
    %3491 = vmatpush1.bf16.xpose.msra.mxu0 0
    %3492 = vmatprep.subr.bf16.mxu0 0
    %3493 = vmatpush1.bf16.xpose.msra.mxu0 0
    %3494 = vmatprep.subr.bf16.mxu0 0
    %3495 = vmatpush1.bf16.xpose.msra.mxu0 0
    %3496 = vmatprep.subr.bf16.mxu0 0
    %3497 = vmatpush1.bf16.xpose.msra.mxu0 0
    %3498 = vmatprep.mubr.bf16.mxu0 0
    %3499 = vmatmul.mubr.bf16.gmra.mrb[0].mxu0 %v3461
    %v3500 = vpop.f32.mrb[0].mxu0
    %v3501 = vadd.f32 0.0, %v3500
    %v3502 = vpop.f32.mrb[0].mxu0
    %v3503 = vpop.f32.mrb[0].mxu0
    %v3504 = vpop.f32.mrb[0].mxu0
    %3505 = vdwg.mxu0
    %3507 = vrot.lane.b32.xlu0 %v2818, 96
    %v3508 = vpop.permute.xlu0 %3507
    %v3510 = vsel %vm335, %v2818, 0
    %v3513 = vsel %vm335, %v3508, 0
    %3515 = vmatprep.subr.bf16.mxu0 0
    %3516 = vmatpush1.bf16.xpose.msra.mxu0 %v3513
    %3517 = vmatprep.subr.bf16.mxu0 0
    %3518 = vmatpush1.bf16.xpose.msra.mxu0 0
    %3519 = vmatprep.subr.bf16.mxu0 0
    %3520 = vmatpush1.bf16.xpose.msra.mxu0 0
    %3521 = vmatprep.subr.bf16.mxu0 0
    %3522 = vmatpush1.bf16.xpose.msra.mxu0 0
    %3523 = vmatprep.subr.bf16.mxu0 0
    %3524 = vmatpush1.bf16.xpose.msra.mxu0 0
    %3525 = vmatprep.subr.bf16.mxu0 0
    %3526 = vmatpush1.bf16.xpose.msra.mxu0 0
    %3527 = vmatprep.subr.bf16.mxu0 0
    %3528 = vmatpush1.bf16.xpose.msra.mxu0 0
    %3529 = vmatprep.subr.bf16.mxu0 0
    %3530 = vmatpush1.bf16.xpose.msra.mxu0 0
    %3531 = vmatprep.subr.bf16.mxu0 0
    %3532 = vmatpush1.bf16.xpose.msra.mxu0 0
    %3533 = vmatprep.subr.bf16.mxu0 0
    %3534 = vmatpush1.bf16.xpose.msra.mxu0 0
    %3535 = vmatprep.subr.bf16.mxu0 0
    %3536 = vmatpush1.bf16.xpose.msra.mxu0 0
    %3537 = vmatprep.subr.bf16.mxu0 0
    %3538 = vmatpush1.bf16.xpose.msra.mxu0 0
    %3539 = vmatprep.subr.bf16.mxu0 0
    %3540 = vmatpush1.bf16.xpose.msra.mxu0 0
    %3541 = vmatprep.subr.bf16.mxu0 0
    %3542 = vmatpush1.bf16.xpose.msra.mxu0 0
    %3543 = vmatprep.subr.bf16.mxu0 0
    %3544 = vmatpush1.bf16.xpose.msra.mxu0 0
    %3545 = vmatprep.subr.bf16.mxu0 0
    %3546 = vmatpush1.bf16.xpose.msra.mxu0 0
    %3547 = vmatprep.mubr.bf16.mxu0 0
    %3548 = vmatmul.mubr.bf16.gmra.mrb[0].mxu0 %v3510
    %v3549 = vpop.f32.mrb[0].mxu0
    %v3550 = vadd.f32 0.0, %v3549
    %v3551 = vpop.f32.mrb[0].mxu0
    %v3552 = vpop.f32.mrb[0].mxu0
    %v3553 = vpop.f32.mrb[0].mxu0
    %3554 = vdwg.mxu0
    %3556 = vrot.lane.b32.xlu0 %v2819, 96
    %v3557 = vpop.permute.xlu0 %3556
    %v3559 = vsel %vm335, %v2819, 0
    %v3562 = vsel %vm335, %v3557, 0
    %3564 = vmatprep.subr.bf16.mxu0 0
    %3565 = vmatpush1.bf16.xpose.msra.mxu0 %v3562
    %3566 = vmatprep.subr.bf16.mxu0 0
    %3567 = vmatpush1.bf16.xpose.msra.mxu0 0
    %3568 = vmatprep.subr.bf16.mxu0 0
    %3569 = vmatpush1.bf16.xpose.msra.mxu0 0
    %3570 = vmatprep.subr.bf16.mxu0 0
    %3571 = vmatpush1.bf16.xpose.msra.mxu0 0
    %3572 = vmatprep.subr.bf16.mxu0 0
    %3573 = vmatpush1.bf16.xpose.msra.mxu0 0
    %3574 = vmatprep.subr.bf16.mxu0 0
    %3575 = vmatpush1.bf16.xpose.msra.mxu0 0
    %3576 = vmatprep.subr.bf16.mxu0 0
    %3577 = vmatpush1.bf16.xpose.msra.mxu0 0
    %3578 = vmatprep.subr.bf16.mxu0 0
    %3579 = vmatpush1.bf16.xpose.msra.mxu0 0
    %3580 = vmatprep.subr.bf16.mxu0 0
    %3581 = vmatpush1.bf16.xpose.msra.mxu0 0
    %3582 = vmatprep.subr.bf16.mxu0 0
    %3583 = vmatpush1.bf16.xpose.msra.mxu0 0
    %3584 = vmatprep.subr.bf16.mxu0 0
    %3585 = vmatpush1.bf16.xpose.msra.mxu0 0
    %3586 = vmatprep.subr.bf16.mxu0 0
    %3587 = vmatpush1.bf16.xpose.msra.mxu0 0
    %3588 = vmatprep.subr.bf16.mxu0 0
    %3589 = vmatpush1.bf16.xpose.msra.mxu0 0
    %3590 = vmatprep.subr.bf16.mxu0 0
    %3591 = vmatpush1.bf16.xpose.msra.mxu0 0
    %3592 = vmatprep.subr.bf16.mxu0 0
    %3593 = vmatpush1.bf16.xpose.msra.mxu0 0
    %3594 = vmatprep.subr.bf16.mxu0 0
    %3595 = vmatpush1.bf16.xpose.msra.mxu0 0
    %3596 = vmatprep.mubr.bf16.mxu0 0
    %3597 = vmatmul.mubr.bf16.gmra.mrb[0].mxu0 %v3559
    %v3598 = vpop.f32.mrb[0].mxu0
    %v3599 = vadd.f32 0.0, %v3598
    %v3600 = vpop.f32.mrb[0].mxu0
    %v3601 = vpop.f32.mrb[0].mxu0
    %v3602 = vpop.f32.mrb[0].mxu0
    %3603 = vdwg.mxu0
    %s3604 = scalar_lea.vmem %s1, 64
    %v3605 = vld [vmem:[%s3604] sm:$0xff]
    %v3606 = vld [vmem:[%s3604 + $0x8] sm:$0xff]
    %v3607 = vld [vmem:[%s3604 + $0x10] sm:$0xff]
    %v3608 = vld [vmem:[%s3604 + $0x18] sm:$0xff]
    %v3609 = vld [vmem:[%s3604 + $0x20] sm:$0xff]
    %v3610 = vld [vmem:[%s3604 + $0x28] sm:$0xff]
    %v3611 = vld [vmem:[%s3604 + $0x30] sm:$0xff]
    %v3612 = vld [vmem:[%s3604 + $0x38] sm:$0xff]
    %v3613 = vadd.f32 %v2864, %v3605
    %v3614 = vadd.f32 %v2913, %v3606
    %v3615 = vadd.f32 %v2962, %v3605
    %v3616 = vadd.f32 %v3011, %v3606
    %v3617 = vadd.f32 %v3060, %v3607
    %v3618 = vadd.f32 %v3109, %v3608
    %v3619 = vadd.f32 %v3158, %v3607
    %v3620 = vadd.f32 %v3207, %v3608
    %v3621 = vadd.f32 %v3256, %v3609
    %v3622 = vadd.f32 %v3305, %v3610
    %v3623 = vadd.f32 %v3354, %v3609
    %v3624 = vadd.f32 %v3403, %v3610
    %v3625 = vadd.f32 %v3452, %v3611
    %v3626 = vadd.f32 %v3501, %v3612
    %v3627 = vadd.f32 %v3550, %v3611
    %v3628 = vadd.f32 %v3599, %v3612
    %v3629 = vsel %vm335, %v3613, -inf
    %3630 = vmax.xlane.f32.xlu0 %v3629
    %v3631 = vpop.xlane.xlu0 %3630
    %v3632 = vsel %vm335, %v3614, -inf
    %3633 = vmax.xlane.f32.xlu0 %v3632
    %v3634 = vpop.xlane.xlu0 %3633
    %v3635 = vsel %vm335, %v3615, -inf
    %3636 = vmax.xlane.f32.xlu0 %v3635
    %v3637 = vpop.xlane.xlu0 %3636
    %v3638 = vsel %vm335, %v3616, -inf
    %3639 = vmax.xlane.f32.xlu0 %v3638
    %v3640 = vpop.xlane.xlu0 %3639
    %v3641 = vsel %vm335, %v3617, -inf
    %3642 = vmax.xlane.f32.xlu0 %v3641
    %v3643 = vpop.xlane.xlu0 %3642
    %v3644 = vsel %vm335, %v3618, -inf
    %3645 = vmax.xlane.f32.xlu0 %v3644
    %v3646 = vpop.xlane.xlu0 %3645
    %v3647 = vsel %vm335, %v3619, -inf
    %3648 = vmax.xlane.f32.xlu0 %v3647
    %v3649 = vpop.xlane.xlu0 %3648
    %v3650 = vsel %vm335, %v3620, -inf
    %3651 = vmax.xlane.f32.xlu0 %v3650
    %v3652 = vpop.xlane.xlu0 %3651
    %v3653 = vsel %vm335, %v3621, -inf
    %3654 = vmax.xlane.f32.xlu0 %v3653
    %v3655 = vpop.xlane.xlu0 %3654
    %v3656 = vsel %vm335, %v3622, -inf
    %3657 = vmax.xlane.f32.xlu0 %v3656
    %v3658 = vpop.xlane.xlu0 %3657
    %v3659 = vsel %vm335, %v3623, -inf
    %3660 = vmax.xlane.f32.xlu0 %v3659
    %v3661 = vpop.xlane.xlu0 %3660
    %v3662 = vsel %vm335, %v3624, -inf
    %3663 = vmax.xlane.f32.xlu0 %v3662
    %v3664 = vpop.xlane.xlu0 %3663
    %v3665 = vsel %vm335, %v3625, -inf
    %3666 = vmax.xlane.f32.xlu0 %v3665
    %v3667 = vpop.xlane.xlu0 %3666
    %v3668 = vsel %vm335, %v3626, -inf
    %3669 = vmax.xlane.f32.xlu0 %v3668
    %v3670 = vpop.xlane.xlu0 %3669
    %v3671 = vsel %vm335, %v3627, -inf
    %3672 = vmax.xlane.f32.xlu0 %v3671
    %v3673 = vpop.xlane.xlu0 %3672
    %v3674 = vsel %vm335, %v3628, -inf
    %3675 = vmax.xlane.f32.xlu0 %v3674
    %v3676 = vpop.xlane.xlu0 %3675
    %v3677 = vsub.f32 %v3613, %v3631
    %v3678 = vsub.f32 %v3614, %v3634
    %v3679 = vsub.f32 %v3615, %v3637
    %v3680 = vsub.f32 %v3616, %v3640
    %v3681 = vsub.f32 %v3617, %v3643
    %v3682 = vsub.f32 %v3618, %v3646
    %v3683 = vsub.f32 %v3619, %v3649
    %v3684 = vsub.f32 %v3620, %v3652
    %v3685 = vsub.f32 %v3621, %v3655
    %v3686 = vsub.f32 %v3622, %v3658
    %v3687 = vsub.f32 %v3623, %v3661
    %v3688 = vsub.f32 %v3624, %v3664
    %v3689 = vsub.f32 %v3625, %v3667
    %v3690 = vsub.f32 %v3626, %v3670
    %v3691 = vsub.f32 %v3627, %v3673
    %v3692 = vsub.f32 %v3628, %v3676
    %v3693 = vmul.f32 %v3677, 1.442695
    %v3694 = vpow.pop %v3693
    %v3695 = vmul.f32 %v3678, 1.442695
    %v3696 = vpow.pop %v3695
    %v3697 = vmul.f32 %v3679, 1.442695
    %v3698 = vpow.pop %v3697
    %v3699 = vmul.f32 %v3680, 1.442695
    %v3700 = vpow.pop %v3699
    %v3701 = vmul.f32 %v3681, 1.442695
    %v3702 = vpow.pop %v3701
    %v3703 = vmul.f32 %v3682, 1.442695
    %v3704 = vpow.pop %v3703
    %v3705 = vmul.f32 %v3683, 1.442695
    %v3706 = vpow.pop %v3705
    %v3707 = vmul.f32 %v3684, 1.442695
    %v3708 = vpow.pop %v3707
    %v3709 = vmul.f32 %v3685, 1.442695
    %v3710 = vpow.pop %v3709
    %v3711 = vmul.f32 %v3686, 1.442695
    %v3712 = vpow.pop %v3711
    %v3713 = vmul.f32 %v3687, 1.442695
    %v3714 = vpow.pop %v3713
    %v3715 = vmul.f32 %v3688, 1.442695
    %v3716 = vpow.pop %v3715
    %v3717 = vmul.f32 %v3689, 1.442695
    %v3718 = vpow.pop %v3717
    %v3719 = vmul.f32 %v3690, 1.442695
    %v3720 = vpow.pop %v3719
    %v3721 = vmul.f32 %v3691, 1.442695
    %v3722 = vpow.pop %v3721
    %v3723 = vmul.f32 %v3692, 1.442695
    %v3724 = vpow.pop %v3723
    %v3725 = vsel %vm335, %v3694, 0.0
    %3726 = vadd.xlane.f32.xlu0 %v3725
    %v3727 = vpop.xlane.xlu0 %3726
    %v3728 = vsel %vm335, %v3696, 0.0
    %3729 = vadd.xlane.f32.xlu0 %v3728
    %v3730 = vpop.xlane.xlu0 %3729
    %v3731 = vsel %vm335, %v3698, 0.0
    %3732 = vadd.xlane.f32.xlu0 %v3731
    %v3733 = vpop.xlane.xlu0 %3732
    %v3734 = vsel %vm335, %v3700, 0.0
    %3735 = vadd.xlane.f32.xlu0 %v3734
    %v3736 = vpop.xlane.xlu0 %3735
    %v3737 = vsel %vm335, %v3702, 0.0
    %3738 = vadd.xlane.f32.xlu0 %v3737
    %v3739 = vpop.xlane.xlu0 %3738
    %v3740 = vsel %vm335, %v3704, 0.0
    %3741 = vadd.xlane.f32.xlu0 %v3740
    %v3742 = vpop.xlane.xlu0 %3741
    %v3743 = vsel %vm335, %v3706, 0.0
    %3744 = vadd.xlane.f32.xlu0 %v3743
    %v3745 = vpop.xlane.xlu0 %3744
    %v3746 = vsel %vm335, %v3708, 0.0
    %3747 = vadd.xlane.f32.xlu0 %v3746
    %v3748 = vpop.xlane.xlu0 %3747
    %v3749 = vsel %vm335, %v3710, 0.0
    %3750 = vadd.xlane.f32.xlu0 %v3749
    %v3751 = vpop.xlane.xlu0 %3750
    %v3752 = vsel %vm335, %v3712, 0.0
    %3753 = vadd.xlane.f32.xlu0 %v3752
    %v3754 = vpop.xlane.xlu0 %3753
    %v3755 = vsel %vm335, %v3714, 0.0
    %3756 = vadd.xlane.f32.xlu0 %v3755
    %v3757 = vpop.xlane.xlu0 %3756
    %v3758 = vsel %vm335, %v3716, 0.0
    %3759 = vadd.xlane.f32.xlu0 %v3758
    %v3760 = vpop.xlane.xlu0 %3759
    %v3761 = vsel %vm335, %v3718, 0.0
    %3762 = vadd.xlane.f32.xlu0 %v3761
    %v3763 = vpop.xlane.xlu0 %3762
    %v3764 = vsel %vm335, %v3720, 0.0
    %3765 = vadd.xlane.f32.xlu0 %v3764
    %v3766 = vpop.xlane.xlu0 %3765
    %v3767 = vsel %vm335, %v3722, 0.0
    %3768 = vadd.xlane.f32.xlu0 %v3767
    %v3769 = vpop.xlane.xlu0 %3768
    %v3770 = vsel %vm335, %v3724, 0.0
    %3771 = vadd.xlane.f32.xlu0 %v3770
    %v3772 = vpop.xlane.xlu0 %3771
    %v3773 = vrcp.pop %v3727
    %v3774 = vrcp.pop %v3730
    %v3775 = vrcp.pop %v3733
    %v3776 = vrcp.pop %v3736
    %v3777 = vrcp.pop %v3739
    %v3778 = vrcp.pop %v3742
    %v3779 = vrcp.pop %v3745
    %v3780 = vrcp.pop %v3748
    %v3781 = vrcp.pop %v3751
    %v3782 = vrcp.pop %v3754
    %v3783 = vrcp.pop %v3757
    %v3784 = vrcp.pop %v3760
    %v3785 = vrcp.pop %v3763
    %v3786 = vrcp.pop %v3766
    %v3787 = vrcp.pop %v3769
    %v3788 = vrcp.pop %v3772
    %v3789 = vmul.f32 %v3694, %v3773
    %v3790 = vmul.f32 %v3696, %v3774
    %v3791 = vmul.f32 %v3698, %v3775
    %v3792 = vmul.f32 %v3700, %v3776
    %v3793 = vmul.f32 %v3702, %v3777
    %v3794 = vmul.f32 %v3704, %v3778
    %v3795 = vmul.f32 %v3706, %v3779
    %v3796 = vmul.f32 %v3708, %v3780
    %v3797 = vmul.f32 %v3710, %v3781
    %v3798 = vmul.f32 %v3712, %v3782
    %v3799 = vmul.f32 %v3714, %v3783
    %v3800 = vmul.f32 %v3716, %v3784
    %v3801 = vmul.f32 %v3718, %v3785
    %v3802 = vmul.f32 %v3720, %v3786
    %v3803 = vmul.f32 %v3722, %v3787
    %v3804 = vmul.f32 %v3724, %v3788
    %v3805 = vpack.c.bf16 %v3789, %v3789
    %v3806 = vpack.c.bf16 %v3790, %v3790
    %v3807 = vpack.c.bf16 %v3791, %v3791
    %v3808 = vpack.c.bf16 %v3792, %v3792
    %v3809 = vpack.c.bf16 %v3793, %v3793
    %v3810 = vpack.c.bf16 %v3794, %v3794
    %v3811 = vpack.c.bf16 %v3795, %v3795
    %v3812 = vpack.c.bf16 %v3796, %v3796
    %v3813 = vpack.c.bf16 %v3797, %v3797
    %v3814 = vpack.c.bf16 %v3798, %v3798
    %v3815 = vpack.c.bf16 %v3799, %v3799
    %v3816 = vpack.c.bf16 %v3800, %v3800
    %v3817 = vpack.c.bf16 %v3801, %v3801
    %v3818 = vpack.c.bf16 %v3802, %v3802
    %v3819 = vpack.c.bf16 %v3803, %v3803
    %v3820 = vpack.c.bf16 %v3804, %v3804
    %3821 = vrot.lane.b32.xlu0 %v2804, 64
    %v3822 = vpop.permute.xlu0 %3821
    %v3824 = vsel %vm335, %v3805, 0
    %v3827 = vsel %vm1338, %v3822, 0
    %3829 = vmatprep.subr.bf16.mxu0 0
    %3830 = vmatpush1.bf16.msra.mxu0 %v3827
    %3831 = vmatprep.subr.bf16.mxu0 0
    %3832 = vmatpush1.bf16.msra.mxu0 0
    %3833 = vmatprep.subr.bf16.mxu0 0
    %3834 = vmatpush1.bf16.msra.mxu0 0
    %3835 = vmatprep.subr.bf16.mxu0 0
    %3836 = vmatpush1.bf16.msra.mxu0 0
    %3837 = vmatprep.subr.bf16.mxu0 0
    %3838 = vmatpush1.bf16.msra.mxu0 0
    %3839 = vmatprep.subr.bf16.mxu0 0
    %3840 = vmatpush1.bf16.msra.mxu0 0
    %3841 = vmatprep.subr.bf16.mxu0 0
    %3842 = vmatpush1.bf16.msra.mxu0 0
    %3843 = vmatprep.subr.bf16.mxu0 0
    %3844 = vmatpush1.bf16.msra.mxu0 0
    %3845 = vmatprep.subr.bf16.mxu0 0
    %3846 = vmatpush1.bf16.msra.mxu0 0
    %3847 = vmatprep.subr.bf16.mxu0 0
    %3848 = vmatpush1.bf16.msra.mxu0 0
    %3849 = vmatprep.subr.bf16.mxu0 0
    %3850 = vmatpush1.bf16.msra.mxu0 0
    %3851 = vmatprep.subr.bf16.mxu0 0
    %3852 = vmatpush1.bf16.msra.mxu0 0
    %3853 = vmatprep.subr.bf16.mxu0 0
    %3854 = vmatpush1.bf16.msra.mxu0 0
    %3855 = vmatprep.subr.bf16.mxu0 0
    %3856 = vmatpush1.bf16.msra.mxu0 0
    %3857 = vmatprep.subr.bf16.mxu0 0
    %3858 = vmatpush1.bf16.msra.mxu0 0
    %3859 = vmatprep.subr.bf16.mxu0 0
    %3860 = vmatpush1.bf16.msra.mxu0 0
    %3861 = vmatprep.mubr.bf16.mxu0 0
    %3862 = vmatmul.mubr.bf16.gmra.mrb[0].mxu0 %v3824
    %v3863 = vpop.f32.mrb[0].mxu0
    %v3864 = vadd.f32 0.0, %v3863
    %v3865 = vpop.f32.mrb[0].mxu0
    %v3866 = vpop.f32.mrb[0].mxu0
    %v3867 = vpop.f32.mrb[0].mxu0
    %3868 = vdwg.mxu0
    %3869 = vrot.lane.b32.xlu0 %v2805, 64
    %v3870 = vpop.permute.xlu0 %3869
    %v3872 = vsel %vm335, %v3806, 0
    %v3875 = vsel %vm1338, %v3870, 0
    %3877 = vmatprep.subr.bf16.mxu0 0
    %3878 = vmatpush1.bf16.msra.mxu0 %v3875
    %3879 = vmatprep.subr.bf16.mxu0 0
    %3880 = vmatpush1.bf16.msra.mxu0 0
    %3881 = vmatprep.subr.bf16.mxu0 0
    %3882 = vmatpush1.bf16.msra.mxu0 0
    %3883 = vmatprep.subr.bf16.mxu0 0
    %3884 = vmatpush1.bf16.msra.mxu0 0
    %3885 = vmatprep.subr.bf16.mxu0 0
    %3886 = vmatpush1.bf16.msra.mxu0 0
    %3887 = vmatprep.subr.bf16.mxu0 0
    %3888 = vmatpush1.bf16.msra.mxu0 0
    %3889 = vmatprep.subr.bf16.mxu0 0
    %3890 = vmatpush1.bf16.msra.mxu0 0
    %3891 = vmatprep.subr.bf16.mxu0 0
    %3892 = vmatpush1.bf16.msra.mxu0 0
    %3893 = vmatprep.subr.bf16.mxu0 0
    %3894 = vmatpush1.bf16.msra.mxu0 0
    %3895 = vmatprep.subr.bf16.mxu0 0
    %3896 = vmatpush1.bf16.msra.mxu0 0
    %3897 = vmatprep.subr.bf16.mxu0 0
    %3898 = vmatpush1.bf16.msra.mxu0 0
    %3899 = vmatprep.subr.bf16.mxu0 0
    %3900 = vmatpush1.bf16.msra.mxu0 0
    %3901 = vmatprep.subr.bf16.mxu0 0
    %3902 = vmatpush1.bf16.msra.mxu0 0
    %3903 = vmatprep.subr.bf16.mxu0 0
    %3904 = vmatpush1.bf16.msra.mxu0 0
    %3905 = vmatprep.subr.bf16.mxu0 0
    %3906 = vmatpush1.bf16.msra.mxu0 0
    %3907 = vmatprep.subr.bf16.mxu0 0
    %3908 = vmatpush1.bf16.msra.mxu0 0
    %3909 = vmatprep.mubr.bf16.mxu0 0
    %3910 = vmatmul.mubr.bf16.gmra.mrb[0].mxu0 %v3872
    %v3911 = vpop.f32.mrb[0].mxu0
    %v3912 = vadd.f32 0.0, %v3911
    %v3913 = vpop.f32.mrb[0].mxu0
    %v3914 = vpop.f32.mrb[0].mxu0
    %v3915 = vpop.f32.mrb[0].mxu0
    %3916 = vdwg.mxu0
    %3917 = vrot.lane.b32.xlu0 %v2806, 64
    %v3918 = vpop.permute.xlu0 %3917
    %v3920 = vsel %vm335, %v3807, 0
    %v3923 = vsel %vm1338, %v3918, 0
    %3925 = vmatprep.subr.bf16.mxu0 0
    %3926 = vmatpush1.bf16.msra.mxu0 %v3923
    %3927 = vmatprep.subr.bf16.mxu0 0
    %3928 = vmatpush1.bf16.msra.mxu0 0
    %3929 = vmatprep.subr.bf16.mxu0 0
    %3930 = vmatpush1.bf16.msra.mxu0 0
    %3931 = vmatprep.subr.bf16.mxu0 0
    %3932 = vmatpush1.bf16.msra.mxu0 0
    %3933 = vmatprep.subr.bf16.mxu0 0
    %3934 = vmatpush1.bf16.msra.mxu0 0
    %3935 = vmatprep.subr.bf16.mxu0 0
    %3936 = vmatpush1.bf16.msra.mxu0 0
    %3937 = vmatprep.subr.bf16.mxu0 0
    %3938 = vmatpush1.bf16.msra.mxu0 0
    %3939 = vmatprep.subr.bf16.mxu0 0
    %3940 = vmatpush1.bf16.msra.mxu0 0
    %3941 = vmatprep.subr.bf16.mxu0 0
    %3942 = vmatpush1.bf16.msra.mxu0 0
    %3943 = vmatprep.subr.bf16.mxu0 0
    %3944 = vmatpush1.bf16.msra.mxu0 0
    %3945 = vmatprep.subr.bf16.mxu0 0
    %3946 = vmatpush1.bf16.msra.mxu0 0
    %3947 = vmatprep.subr.bf16.mxu0 0
    %3948 = vmatpush1.bf16.msra.mxu0 0
    %3949 = vmatprep.subr.bf16.mxu0 0
    %3950 = vmatpush1.bf16.msra.mxu0 0
    %3951 = vmatprep.subr.bf16.mxu0 0
    %3952 = vmatpush1.bf16.msra.mxu0 0
    %3953 = vmatprep.subr.bf16.mxu0 0
    %3954 = vmatpush1.bf16.msra.mxu0 0
    %3955 = vmatprep.subr.bf16.mxu0 0
    %3956 = vmatpush1.bf16.msra.mxu0 0
    %3957 = vmatprep.mubr.bf16.mxu0 0
    %3958 = vmatmul.mubr.bf16.gmra.mrb[0].mxu0 %v3920
    %v3959 = vpop.f32.mrb[0].mxu0
    %v3960 = vadd.f32 0.0, %v3959
    %v3961 = vpop.f32.mrb[0].mxu0
    %v3962 = vpop.f32.mrb[0].mxu0
    %v3963 = vpop.f32.mrb[0].mxu0
    %3964 = vdwg.mxu0
    %3965 = vrot.lane.b32.xlu0 %v2807, 64
    %v3966 = vpop.permute.xlu0 %3965
    %v3968 = vsel %vm335, %v3808, 0
    %v3971 = vsel %vm1338, %v3966, 0
    %3973 = vmatprep.subr.bf16.mxu0 0
    %3974 = vmatpush1.bf16.msra.mxu0 %v3971
    %3975 = vmatprep.subr.bf16.mxu0 0
    %3976 = vmatpush1.bf16.msra.mxu0 0
    %3977 = vmatprep.subr.bf16.mxu0 0
    %3978 = vmatpush1.bf16.msra.mxu0 0
    %3979 = vmatprep.subr.bf16.mxu0 0
    %3980 = vmatpush1.bf16.msra.mxu0 0
    %3981 = vmatprep.subr.bf16.mxu0 0
    %3982 = vmatpush1.bf16.msra.mxu0 0
    %3983 = vmatprep.subr.bf16.mxu0 0
    %3984 = vmatpush1.bf16.msra.mxu0 0
    %3985 = vmatprep.subr.bf16.mxu0 0
    %3986 = vmatpush1.bf16.msra.mxu0 0
    %3987 = vmatprep.subr.bf16.mxu0 0
    %3988 = vmatpush1.bf16.msra.mxu0 0
    %3989 = vmatprep.subr.bf16.mxu0 0
    %3990 = vmatpush1.bf16.msra.mxu0 0
    %3991 = vmatprep.subr.bf16.mxu0 0
    %3992 = vmatpush1.bf16.msra.mxu0 0
    %3993 = vmatprep.subr.bf16.mxu0 0
    %3994 = vmatpush1.bf16.msra.mxu0 0
    %3995 = vmatprep.subr.bf16.mxu0 0
    %3996 = vmatpush1.bf16.msra.mxu0 0
    %3997 = vmatprep.subr.bf16.mxu0 0
    %3998 = vmatpush1.bf16.msra.mxu0 0
    %3999 = vmatprep.subr.bf16.mxu0 0
    %4000 = vmatpush1.bf16.msra.mxu0 0
    %4001 = vmatprep.subr.bf16.mxu0 0
    %4002 = vmatpush1.bf16.msra.mxu0 0
    %4003 = vmatprep.subr.bf16.mxu0 0
    %4004 = vmatpush1.bf16.msra.mxu0 0
    %4005 = vmatprep.mubr.bf16.mxu0 0
    %4006 = vmatmul.mubr.bf16.gmra.mrb[0].mxu0 %v3968
    %v4007 = vpop.f32.mrb[0].mxu0
    %v4008 = vadd.f32 0.0, %v4007
    %v4009 = vpop.f32.mrb[0].mxu0
    %v4010 = vpop.f32.mrb[0].mxu0
    %v4011 = vpop.f32.mrb[0].mxu0
    %4012 = vdwg.mxu0
    %4013 = vrot.lane.b32.xlu0 %v2808, 64
    %v4014 = vpop.permute.xlu0 %4013
    %v4016 = vsel %vm335, %v3809, 0
    %v4019 = vsel %vm1338, %v4014, 0
    %4021 = vmatprep.subr.bf16.mxu0 0
    %4022 = vmatpush1.bf16.msra.mxu0 %v4019
    %4023 = vmatprep.subr.bf16.mxu0 0
    %4024 = vmatpush1.bf16.msra.mxu0 0
    %4025 = vmatprep.subr.bf16.mxu0 0
    %4026 = vmatpush1.bf16.msra.mxu0 0
    %4027 = vmatprep.subr.bf16.mxu0 0
    %4028 = vmatpush1.bf16.msra.mxu0 0
    %4029 = vmatprep.subr.bf16.mxu0 0
    %4030 = vmatpush1.bf16.msra.mxu0 0
    %4031 = vmatprep.subr.bf16.mxu0 0
    %4032 = vmatpush1.bf16.msra.mxu0 0
    %4033 = vmatprep.subr.bf16.mxu0 0
    %4034 = vmatpush1.bf16.msra.mxu0 0
    %4035 = vmatprep.subr.bf16.mxu0 0
    %4036 = vmatpush1.bf16.msra.mxu0 0
    %4037 = vmatprep.subr.bf16.mxu0 0
    %4038 = vmatpush1.bf16.msra.mxu0 0
    %4039 = vmatprep.subr.bf16.mxu0 0
    %4040 = vmatpush1.bf16.msra.mxu0 0
    %4041 = vmatprep.subr.bf16.mxu0 0
    %4042 = vmatpush1.bf16.msra.mxu0 0
    %4043 = vmatprep.subr.bf16.mxu0 0
    %4044 = vmatpush1.bf16.msra.mxu0 0
    %4045 = vmatprep.subr.bf16.mxu0 0
    %4046 = vmatpush1.bf16.msra.mxu0 0
    %4047 = vmatprep.subr.bf16.mxu0 0
    %4048 = vmatpush1.bf16.msra.mxu0 0
    %4049 = vmatprep.subr.bf16.mxu0 0
    %4050 = vmatpush1.bf16.msra.mxu0 0
    %4051 = vmatprep.subr.bf16.mxu0 0
    %4052 = vmatpush1.bf16.msra.mxu0 0
    %4053 = vmatprep.mubr.bf16.mxu0 0
    %4054 = vmatmul.mubr.bf16.gmra.mrb[0].mxu0 %v4016
    %v4055 = vpop.f32.mrb[0].mxu0
    %v4056 = vadd.f32 0.0, %v4055
    %v4057 = vpop.f32.mrb[0].mxu0
    %v4058 = vpop.f32.mrb[0].mxu0
    %v4059 = vpop.f32.mrb[0].mxu0
    %4060 = vdwg.mxu0
    %4061 = vrot.lane.b32.xlu0 %v2809, 64
    %v4062 = vpop.permute.xlu0 %4061
    %v4064 = vsel %vm335, %v3810, 0
    %v4067 = vsel %vm1338, %v4062, 0
    %4069 = vmatprep.subr.bf16.mxu0 0
    %4070 = vmatpush1.bf16.msra.mxu0 %v4067
    %4071 = vmatprep.subr.bf16.mxu0 0
    %4072 = vmatpush1.bf16.msra.mxu0 0
    %4073 = vmatprep.subr.bf16.mxu0 0
    %4074 = vmatpush1.bf16.msra.mxu0 0
    %4075 = vmatprep.subr.bf16.mxu0 0
    %4076 = vmatpush1.bf16.msra.mxu0 0
    %4077 = vmatprep.subr.bf16.mxu0 0
    %4078 = vmatpush1.bf16.msra.mxu0 0
    %4079 = vmatprep.subr.bf16.mxu0 0
    %4080 = vmatpush1.bf16.msra.mxu0 0
    %4081 = vmatprep.subr.bf16.mxu0 0
    %4082 = vmatpush1.bf16.msra.mxu0 0
    %4083 = vmatprep.subr.bf16.mxu0 0
    %4084 = vmatpush1.bf16.msra.mxu0 0
    %4085 = vmatprep.subr.bf16.mxu0 0
    %4086 = vmatpush1.bf16.msra.mxu0 0
    %4087 = vmatprep.subr.bf16.mxu0 0
    %4088 = vmatpush1.bf16.msra.mxu0 0
    %4089 = vmatprep.subr.bf16.mxu0 0
    %4090 = vmatpush1.bf16.msra.mxu0 0
    %4091 = vmatprep.subr.bf16.mxu0 0
    %4092 = vmatpush1.bf16.msra.mxu0 0
    %4093 = vmatprep.subr.bf16.mxu0 0
    %4094 = vmatpush1.bf16.msra.mxu0 0
    %4095 = vmatprep.subr.bf16.mxu0 0
    %4096 = vmatpush1.bf16.msra.mxu0 0
    %4097 = vmatprep.subr.bf16.mxu0 0
    %4098 = vmatpush1.bf16.msra.mxu0 0
    %4099 = vmatprep.subr.bf16.mxu0 0
    %4100 = vmatpush1.bf16.msra.mxu0 0
    %4101 = vmatprep.mubr.bf16.mxu0 0
    %4102 = vmatmul.mubr.bf16.gmra.mrb[0].mxu0 %v4064
    %v4103 = vpop.f32.mrb[0].mxu0
    %v4104 = vadd.f32 0.0, %v4103
    %v4105 = vpop.f32.mrb[0].mxu0
    %v4106 = vpop.f32.mrb[0].mxu0
    %v4107 = vpop.f32.mrb[0].mxu0
    %4108 = vdwg.mxu0
    %4109 = vrot.lane.b32.xlu0 %v2810, 64
    %v4110 = vpop.permute.xlu0 %4109
    %v4112 = vsel %vm335, %v3811, 0
    %v4115 = vsel %vm1338, %v4110, 0
    %4117 = vmatprep.subr.bf16.mxu0 0
    %4118 = vmatpush1.bf16.msra.mxu0 %v4115
    %4119 = vmatprep.subr.bf16.mxu0 0
    %4120 = vmatpush1.bf16.msra.mxu0 0
    %4121 = vmatprep.subr.bf16.mxu0 0
    %4122 = vmatpush1.bf16.msra.mxu0 0
    %4123 = vmatprep.subr.bf16.mxu0 0
    %4124 = vmatpush1.bf16.msra.mxu0 0
    %4125 = vmatprep.subr.bf16.mxu0 0
    %4126 = vmatpush1.bf16.msra.mxu0 0
    %4127 = vmatprep.subr.bf16.mxu0 0
    %4128 = vmatpush1.bf16.msra.mxu0 0
    %4129 = vmatprep.subr.bf16.mxu0 0
    %4130 = vmatpush1.bf16.msra.mxu0 0
    %4131 = vmatprep.subr.bf16.mxu0 0
    %4132 = vmatpush1.bf16.msra.mxu0 0
    %4133 = vmatprep.subr.bf16.mxu0 0
    %4134 = vmatpush1.bf16.msra.mxu0 0
    %4135 = vmatprep.subr.bf16.mxu0 0
    %4136 = vmatpush1.bf16.msra.mxu0 0
    %4137 = vmatprep.subr.bf16.mxu0 0
    %4138 = vmatpush1.bf16.msra.mxu0 0
    %4139 = vmatprep.subr.bf16.mxu0 0
    %4140 = vmatpush1.bf16.msra.mxu0 0
    %4141 = vmatprep.subr.bf16.mxu0 0
    %4142 = vmatpush1.bf16.msra.mxu0 0
    %4143 = vmatprep.subr.bf16.mxu0 0
    %4144 = vmatpush1.bf16.msra.mxu0 0
    %4145 = vmatprep.subr.bf16.mxu0 0
    %4146 = vmatpush1.bf16.msra.mxu0 0
    %4147 = vmatprep.subr.bf16.mxu0 0
    %4148 = vmatpush1.bf16.msra.mxu0 0
    %4149 = vmatprep.mubr.bf16.mxu0 0
    %4150 = vmatmul.mubr.bf16.gmra.mrb[0].mxu0 %v4112
    %v4151 = vpop.f32.mrb[0].mxu0
    %v4152 = vadd.f32 0.0, %v4151
    %v4153 = vpop.f32.mrb[0].mxu0
    %v4154 = vpop.f32.mrb[0].mxu0
    %v4155 = vpop.f32.mrb[0].mxu0
    %4156 = vdwg.mxu0
    %4157 = vrot.lane.b32.xlu0 %v2811, 64
    %v4158 = vpop.permute.xlu0 %4157
    %v4160 = vsel %vm335, %v3812, 0
    %v4163 = vsel %vm1338, %v4158, 0
    %4165 = vmatprep.subr.bf16.mxu0 0
    %4166 = vmatpush1.bf16.msra.mxu0 %v4163
    %4167 = vmatprep.subr.bf16.mxu0 0
    %4168 = vmatpush1.bf16.msra.mxu0 0
    %4169 = vmatprep.subr.bf16.mxu0 0
    %4170 = vmatpush1.bf16.msra.mxu0 0
    %4171 = vmatprep.subr.bf16.mxu0 0
    %4172 = vmatpush1.bf16.msra.mxu0 0
    %4173 = vmatprep.subr.bf16.mxu0 0
    %4174 = vmatpush1.bf16.msra.mxu0 0
    %4175 = vmatprep.subr.bf16.mxu0 0
    %4176 = vmatpush1.bf16.msra.mxu0 0
    %4177 = vmatprep.subr.bf16.mxu0 0
    %4178 = vmatpush1.bf16.msra.mxu0 0
    %4179 = vmatprep.subr.bf16.mxu0 0
    %4180 = vmatpush1.bf16.msra.mxu0 0
    %4181 = vmatprep.subr.bf16.mxu0 0
    %4182 = vmatpush1.bf16.msra.mxu0 0
    %4183 = vmatprep.subr.bf16.mxu0 0
    %4184 = vmatpush1.bf16.msra.mxu0 0
    %4185 = vmatprep.subr.bf16.mxu0 0
    %4186 = vmatpush1.bf16.msra.mxu0 0
    %4187 = vmatprep.subr.bf16.mxu0 0
    %4188 = vmatpush1.bf16.msra.mxu0 0
    %4189 = vmatprep.subr.bf16.mxu0 0
    %4190 = vmatpush1.bf16.msra.mxu0 0
    %4191 = vmatprep.subr.bf16.mxu0 0
    %4192 = vmatpush1.bf16.msra.mxu0 0
    %4193 = vmatprep.subr.bf16.mxu0 0
    %4194 = vmatpush1.bf16.msra.mxu0 0
    %4195 = vmatprep.subr.bf16.mxu0 0
    %4196 = vmatpush1.bf16.msra.mxu0 0
    %4197 = vmatprep.mubr.bf16.mxu0 0
    %4198 = vmatmul.mubr.bf16.gmra.mrb[0].mxu0 %v4160
    %v4199 = vpop.f32.mrb[0].mxu0
    %v4200 = vadd.f32 0.0, %v4199
    %v4201 = vpop.f32.mrb[0].mxu0
    %v4202 = vpop.f32.mrb[0].mxu0
    %v4203 = vpop.f32.mrb[0].mxu0
    %4204 = vdwg.mxu0
    %4205 = vrot.lane.b32.xlu0 %v2812, 64
    %v4206 = vpop.permute.xlu0 %4205
    %v4208 = vsel %vm335, %v3813, 0
    %v4211 = vsel %vm1338, %v4206, 0
    %4213 = vmatprep.subr.bf16.mxu0 0
    %4214 = vmatpush1.bf16.msra.mxu0 %v4211
    %4215 = vmatprep.subr.bf16.mxu0 0
    %4216 = vmatpush1.bf16.msra.mxu0 0
    %4217 = vmatprep.subr.bf16.mxu0 0
    %4218 = vmatpush1.bf16.msra.mxu0 0
    %4219 = vmatprep.subr.bf16.mxu0 0
    %4220 = vmatpush1.bf16.msra.mxu0 0
    %4221 = vmatprep.subr.bf16.mxu0 0
    %4222 = vmatpush1.bf16.msra.mxu0 0
    %4223 = vmatprep.subr.bf16.mxu0 0
    %4224 = vmatpush1.bf16.msra.mxu0 0
    %4225 = vmatprep.subr.bf16.mxu0 0
    %4226 = vmatpush1.bf16.msra.mxu0 0
    %4227 = vmatprep.subr.bf16.mxu0 0
    %4228 = vmatpush1.bf16.msra.mxu0 0
    %4229 = vmatprep.subr.bf16.mxu0 0
    %4230 = vmatpush1.bf16.msra.mxu0 0
    %4231 = vmatprep.subr.bf16.mxu0 0
    %4232 = vmatpush1.bf16.msra.mxu0 0
    %4233 = vmatprep.subr.bf16.mxu0 0
    %4234 = vmatpush1.bf16.msra.mxu0 0
    %4235 = vmatprep.subr.bf16.mxu0 0
    %4236 = vmatpush1.bf16.msra.mxu0 0
    %4237 = vmatprep.subr.bf16.mxu0 0
    %4238 = vmatpush1.bf16.msra.mxu0 0
    %4239 = vmatprep.subr.bf16.mxu0 0
    %4240 = vmatpush1.bf16.msra.mxu0 0
    %4241 = vmatprep.subr.bf16.mxu0 0
    %4242 = vmatpush1.bf16.msra.mxu0 0
    %4243 = vmatprep.subr.bf16.mxu0 0
    %4244 = vmatpush1.bf16.msra.mxu0 0
    %4245 = vmatprep.mubr.bf16.mxu0 0
    %4246 = vmatmul.mubr.bf16.gmra.mrb[0].mxu0 %v4208
    %v4247 = vpop.f32.mrb[0].mxu0
    %v4248 = vadd.f32 0.0, %v4247
    %v4249 = vpop.f32.mrb[0].mxu0
    %v4250 = vpop.f32.mrb[0].mxu0
    %v4251 = vpop.f32.mrb[0].mxu0
    %4252 = vdwg.mxu0
    %4253 = vrot.lane.b32.xlu0 %v2813, 64
    %v4254 = vpop.permute.xlu0 %4253
    %v4256 = vsel %vm335, %v3814, 0
    %v4259 = vsel %vm1338, %v4254, 0
    %4261 = vmatprep.subr.bf16.mxu0 0
    %4262 = vmatpush1.bf16.msra.mxu0 %v4259
    %4263 = vmatprep.subr.bf16.mxu0 0
    %4264 = vmatpush1.bf16.msra.mxu0 0
    %4265 = vmatprep.subr.bf16.mxu0 0
    %4266 = vmatpush1.bf16.msra.mxu0 0
    %4267 = vmatprep.subr.bf16.mxu0 0
    %4268 = vmatpush1.bf16.msra.mxu0 0
    %4269 = vmatprep.subr.bf16.mxu0 0
    %4270 = vmatpush1.bf16.msra.mxu0 0
    %4271 = vmatprep.subr.bf16.mxu0 0
    %4272 = vmatpush1.bf16.msra.mxu0 0
    %4273 = vmatprep.subr.bf16.mxu0 0
    %4274 = vmatpush1.bf16.msra.mxu0 0
    %4275 = vmatprep.subr.bf16.mxu0 0
    %4276 = vmatpush1.bf16.msra.mxu0 0
    %4277 = vmatprep.subr.bf16.mxu0 0
    %4278 = vmatpush1.bf16.msra.mxu0 0
    %4279 = vmatprep.subr.bf16.mxu0 0
    %4280 = vmatpush1.bf16.msra.mxu0 0
    %4281 = vmatprep.subr.bf16.mxu0 0
    %4282 = vmatpush1.bf16.msra.mxu0 0
    %4283 = vmatprep.subr.bf16.mxu0 0
    %4284 = vmatpush1.bf16.msra.mxu0 0
    %4285 = vmatprep.subr.bf16.mxu0 0
    %4286 = vmatpush1.bf16.msra.mxu0 0
    %4287 = vmatprep.subr.bf16.mxu0 0
    %4288 = vmatpush1.bf16.msra.mxu0 0
    %4289 = vmatprep.subr.bf16.mxu0 0
    %4290 = vmatpush1.bf16.msra.mxu0 0
    %4291 = vmatprep.subr.bf16.mxu0 0
    %4292 = vmatpush1.bf16.msra.mxu0 0
    %4293 = vmatprep.mubr.bf16.mxu0 0
    %4294 = vmatmul.mubr.bf16.gmra.mrb[0].mxu0 %v4256
    %v4295 = vpop.f32.mrb[0].mxu0
    %v4296 = vadd.f32 0.0, %v4295
    %v4297 = vpop.f32.mrb[0].mxu0
    %v4298 = vpop.f32.mrb[0].mxu0
    %v4299 = vpop.f32.mrb[0].mxu0
    %4300 = vdwg.mxu0
    %4301 = vrot.lane.b32.xlu0 %v2814, 64
    %v4302 = vpop.permute.xlu0 %4301
    %v4304 = vsel %vm335, %v3815, 0
    %v4307 = vsel %vm1338, %v4302, 0
    %4309 = vmatprep.subr.bf16.mxu0 0
    %4310 = vmatpush1.bf16.msra.mxu0 %v4307
    %4311 = vmatprep.subr.bf16.mxu0 0
    %4312 = vmatpush1.bf16.msra.mxu0 0
    %4313 = vmatprep.subr.bf16.mxu0 0
    %4314 = vmatpush1.bf16.msra.mxu0 0
    %4315 = vmatprep.subr.bf16.mxu0 0
    %4316 = vmatpush1.bf16.msra.mxu0 0
    %4317 = vmatprep.subr.bf16.mxu0 0
    %4318 = vmatpush1.bf16.msra.mxu0 0
    %4319 = vmatprep.subr.bf16.mxu0 0
    %4320 = vmatpush1.bf16.msra.mxu0 0
    %4321 = vmatprep.subr.bf16.mxu0 0
    %4322 = vmatpush1.bf16.msra.mxu0 0
    %4323 = vmatprep.subr.bf16.mxu0 0
    %4324 = vmatpush1.bf16.msra.mxu0 0
    %4325 = vmatprep.subr.bf16.mxu0 0
    %4326 = vmatpush1.bf16.msra.mxu0 0
    %4327 = vmatprep.subr.bf16.mxu0 0
    %4328 = vmatpush1.bf16.msra.mxu0 0
    %4329 = vmatprep.subr.bf16.mxu0 0
    %4330 = vmatpush1.bf16.msra.mxu0 0
    %4331 = vmatprep.subr.bf16.mxu0 0
    %4332 = vmatpush1.bf16.msra.mxu0 0
    %4333 = vmatprep.subr.bf16.mxu0 0
    %4334 = vmatpush1.bf16.msra.mxu0 0
    %4335 = vmatprep.subr.bf16.mxu0 0
    %4336 = vmatpush1.bf16.msra.mxu0 0
    %4337 = vmatprep.subr.bf16.mxu0 0
    %4338 = vmatpush1.bf16.msra.mxu0 0
    %4339 = vmatprep.subr.bf16.mxu0 0
    %4340 = vmatpush1.bf16.msra.mxu0 0
    %4341 = vmatprep.mubr.bf16.mxu0 0
    %4342 = vmatmul.mubr.bf16.gmra.mrb[0].mxu0 %v4304
    %v4343 = vpop.f32.mrb[0].mxu0
    %v4344 = vadd.f32 0.0, %v4343
    %v4345 = vpop.f32.mrb[0].mxu0
    %v4346 = vpop.f32.mrb[0].mxu0
    %v4347 = vpop.f32.mrb[0].mxu0
    %4348 = vdwg.mxu0
    %4349 = vrot.lane.b32.xlu0 %v2815, 64
    %v4350 = vpop.permute.xlu0 %4349
    %v4352 = vsel %vm335, %v3816, 0
    %v4355 = vsel %vm1338, %v4350, 0
    %4357 = vmatprep.subr.bf16.mxu0 0
    %4358 = vmatpush1.bf16.msra.mxu0 %v4355
    %4359 = vmatprep.subr.bf16.mxu0 0
    %4360 = vmatpush1.bf16.msra.mxu0 0
    %4361 = vmatprep.subr.bf16.mxu0 0
    %4362 = vmatpush1.bf16.msra.mxu0 0
    %4363 = vmatprep.subr.bf16.mxu0 0
    %4364 = vmatpush1.bf16.msra.mxu0 0
    %4365 = vmatprep.subr.bf16.mxu0 0
    %4366 = vmatpush1.bf16.msra.mxu0 0
    %4367 = vmatprep.subr.bf16.mxu0 0
    %4368 = vmatpush1.bf16.msra.mxu0 0
    %4369 = vmatprep.subr.bf16.mxu0 0
    %4370 = vmatpush1.bf16.msra.mxu0 0
    %4371 = vmatprep.subr.bf16.mxu0 0
    %4372 = vmatpush1.bf16.msra.mxu0 0
    %4373 = vmatprep.subr.bf16.mxu0 0
    %4374 = vmatpush1.bf16.msra.mxu0 0
    %4375 = vmatprep.subr.bf16.mxu0 0
    %4376 = vmatpush1.bf16.msra.mxu0 0
    %4377 = vmatprep.subr.bf16.mxu0 0
    %4378 = vmatpush1.bf16.msra.mxu0 0
    %4379 = vmatprep.subr.bf16.mxu0 0
    %4380 = vmatpush1.bf16.msra.mxu0 0
    %4381 = vmatprep.subr.bf16.mxu0 0
    %4382 = vmatpush1.bf16.msra.mxu0 0
    %4383 = vmatprep.subr.bf16.mxu0 0
    %4384 = vmatpush1.bf16.msra.mxu0 0
    %4385 = vmatprep.subr.bf16.mxu0 0
    %4386 = vmatpush1.bf16.msra.mxu0 0
    %4387 = vmatprep.subr.bf16.mxu0 0
    %4388 = vmatpush1.bf16.msra.mxu0 0
    %4389 = vmatprep.mubr.bf16.mxu0 0
    %4390 = vmatmul.mubr.bf16.gmra.mrb[0].mxu0 %v4352
    %v4391 = vpop.f32.mrb[0].mxu0
    %v4392 = vadd.f32 0.0, %v4391
    %v4393 = vpop.f32.mrb[0].mxu0
    %v4394 = vpop.f32.mrb[0].mxu0
    %v4395 = vpop.f32.mrb[0].mxu0
    %4396 = vdwg.mxu0
    %4397 = vrot.lane.b32.xlu0 %v2816, 64
    %v4398 = vpop.permute.xlu0 %4397
    %v4400 = vsel %vm335, %v3817, 0
    %v4403 = vsel %vm1338, %v4398, 0
    %4405 = vmatprep.subr.bf16.mxu0 0
    %4406 = vmatpush1.bf16.msra.mxu0 %v4403
    %4407 = vmatprep.subr.bf16.mxu0 0
    %4408 = vmatpush1.bf16.msra.mxu0 0
    %4409 = vmatprep.subr.bf16.mxu0 0
    %4410 = vmatpush1.bf16.msra.mxu0 0
    %4411 = vmatprep.subr.bf16.mxu0 0
    %4412 = vmatpush1.bf16.msra.mxu0 0
    %4413 = vmatprep.subr.bf16.mxu0 0
    %4414 = vmatpush1.bf16.msra.mxu0 0
    %4415 = vmatprep.subr.bf16.mxu0 0
    %4416 = vmatpush1.bf16.msra.mxu0 0
    %4417 = vmatprep.subr.bf16.mxu0 0
    %4418 = vmatpush1.bf16.msra.mxu0 0
    %4419 = vmatprep.subr.bf16.mxu0 0
    %4420 = vmatpush1.bf16.msra.mxu0 0
    %4421 = vmatprep.subr.bf16.mxu0 0
    %4422 = vmatpush1.bf16.msra.mxu0 0
    %4423 = vmatprep.subr.bf16.mxu0 0
    %4424 = vmatpush1.bf16.msra.mxu0 0
    %4425 = vmatprep.subr.bf16.mxu0 0
    %4426 = vmatpush1.bf16.msra.mxu0 0
    %4427 = vmatprep.subr.bf16.mxu0 0
    %4428 = vmatpush1.bf16.msra.mxu0 0
    %4429 = vmatprep.subr.bf16.mxu0 0
    %4430 = vmatpush1.bf16.msra.mxu0 0
    %4431 = vmatprep.subr.bf16.mxu0 0
    %4432 = vmatpush1.bf16.msra.mxu0 0
    %4433 = vmatprep.subr.bf16.mxu0 0
    %4434 = vmatpush1.bf16.msra.mxu0 0
    %4435 = vmatprep.subr.bf16.mxu0 0
    %4436 = vmatpush1.bf16.msra.mxu0 0
    %4437 = vmatprep.mubr.bf16.mxu0 0
    %4438 = vmatmul.mubr.bf16.gmra.mrb[0].mxu0 %v4400
    %v4439 = vpop.f32.mrb[0].mxu0
    %v4440 = vadd.f32 0.0, %v4439
    %v4441 = vpop.f32.mrb[0].mxu0
    %v4442 = vpop.f32.mrb[0].mxu0
    %v4443 = vpop.f32.mrb[0].mxu0
    %4444 = vdwg.mxu0
    %4445 = vrot.lane.b32.xlu0 %v2817, 64
    %v4446 = vpop.permute.xlu0 %4445
    %v4448 = vsel %vm335, %v3818, 0
    %v4451 = vsel %vm1338, %v4446, 0
    %4453 = vmatprep.subr.bf16.mxu0 0
    %4454 = vmatpush1.bf16.msra.mxu0 %v4451
    %4455 = vmatprep.subr.bf16.mxu0 0
    %4456 = vmatpush1.bf16.msra.mxu0 0
    %4457 = vmatprep.subr.bf16.mxu0 0
    %4458 = vmatpush1.bf16.msra.mxu0 0
    %4459 = vmatprep.subr.bf16.mxu0 0
    %4460 = vmatpush1.bf16.msra.mxu0 0
    %4461 = vmatprep.subr.bf16.mxu0 0
    %4462 = vmatpush1.bf16.msra.mxu0 0
    %4463 = vmatprep.subr.bf16.mxu0 0
    %4464 = vmatpush1.bf16.msra.mxu0 0
    %4465 = vmatprep.subr.bf16.mxu0 0
    %4466 = vmatpush1.bf16.msra.mxu0 0
    %4467 = vmatprep.subr.bf16.mxu0 0
    %4468 = vmatpush1.bf16.msra.mxu0 0
    %4469 = vmatprep.subr.bf16.mxu0 0
    %4470 = vmatpush1.bf16.msra.mxu0 0
    %4471 = vmatprep.subr.bf16.mxu0 0
    %4472 = vmatpush1.bf16.msra.mxu0 0
    %4473 = vmatprep.subr.bf16.mxu0 0
    %4474 = vmatpush1.bf16.msra.mxu0 0
    %4475 = vmatprep.subr.bf16.mxu0 0
    %4476 = vmatpush1.bf16.msra.mxu0 0
    %4477 = vmatprep.subr.bf16.mxu0 0
    %4478 = vmatpush1.bf16.msra.mxu0 0
    %4479 = vmatprep.subr.bf16.mxu0 0
    %4480 = vmatpush1.bf16.msra.mxu0 0
    %4481 = vmatprep.subr.bf16.mxu0 0
    %4482 = vmatpush1.bf16.msra.mxu0 0
    %4483 = vmatprep.subr.bf16.mxu0 0
    %4484 = vmatpush1.bf16.msra.mxu0 0
    %4485 = vmatprep.mubr.bf16.mxu0 0
    %4486 = vmatmul.mubr.bf16.gmra.mrb[0].mxu0 %v4448
    %v4487 = vpop.f32.mrb[0].mxu0
    %v4488 = vadd.f32 0.0, %v4487
    %v4489 = vpop.f32.mrb[0].mxu0
    %v4490 = vpop.f32.mrb[0].mxu0
    %v4491 = vpop.f32.mrb[0].mxu0
    %4492 = vdwg.mxu0
    %4493 = vrot.lane.b32.xlu0 %v2818, 64
    %v4494 = vpop.permute.xlu0 %4493
    %v4496 = vsel %vm335, %v3819, 0
    %v4499 = vsel %vm1338, %v4494, 0
    %4501 = vmatprep.subr.bf16.mxu0 0
    %4502 = vmatpush1.bf16.msra.mxu0 %v4499
    %4503 = vmatprep.subr.bf16.mxu0 0
    %4504 = vmatpush1.bf16.msra.mxu0 0
    %4505 = vmatprep.subr.bf16.mxu0 0
    %4506 = vmatpush1.bf16.msra.mxu0 0
    %4507 = vmatprep.subr.bf16.mxu0 0
    %4508 = vmatpush1.bf16.msra.mxu0 0
    %4509 = vmatprep.subr.bf16.mxu0 0
    %4510 = vmatpush1.bf16.msra.mxu0 0
    %4511 = vmatprep.subr.bf16.mxu0 0
    %4512 = vmatpush1.bf16.msra.mxu0 0
    %4513 = vmatprep.subr.bf16.mxu0 0
    %4514 = vmatpush1.bf16.msra.mxu0 0
    %4515 = vmatprep.subr.bf16.mxu0 0
    %4516 = vmatpush1.bf16.msra.mxu0 0
    %4517 = vmatprep.subr.bf16.mxu0 0
    %4518 = vmatpush1.bf16.msra.mxu0 0
    %4519 = vmatprep.subr.bf16.mxu0 0
    %4520 = vmatpush1.bf16.msra.mxu0 0
    %4521 = vmatprep.subr.bf16.mxu0 0
    %4522 = vmatpush1.bf16.msra.mxu0 0
    %4523 = vmatprep.subr.bf16.mxu0 0
    %4524 = vmatpush1.bf16.msra.mxu0 0
    %4525 = vmatprep.subr.bf16.mxu0 0
    %4526 = vmatpush1.bf16.msra.mxu0 0
    %4527 = vmatprep.subr.bf16.mxu0 0
    %4528 = vmatpush1.bf16.msra.mxu0 0
    %4529 = vmatprep.subr.bf16.mxu0 0
    %4530 = vmatpush1.bf16.msra.mxu0 0
    %4531 = vmatprep.subr.bf16.mxu0 0
    %4532 = vmatpush1.bf16.msra.mxu0 0
    %4533 = vmatprep.mubr.bf16.mxu0 0
    %4534 = vmatmul.mubr.bf16.gmra.mrb[0].mxu0 %v4496
    %v4535 = vpop.f32.mrb[0].mxu0
    %v4536 = vadd.f32 0.0, %v4535
    %v4537 = vpop.f32.mrb[0].mxu0
    %v4538 = vpop.f32.mrb[0].mxu0
    %v4539 = vpop.f32.mrb[0].mxu0
    %4540 = vdwg.mxu0
    %4541 = vrot.lane.b32.xlu0 %v2819, 64
    %v4542 = vpop.permute.xlu0 %4541
    %v4544 = vsel %vm335, %v3820, 0
    %v4547 = vsel %vm1338, %v4542, 0
    %4549 = vmatprep.subr.bf16.mxu0 0
    %4550 = vmatpush1.bf16.msra.mxu0 %v4547
    %4551 = vmatprep.subr.bf16.mxu0 0
    %4552 = vmatpush1.bf16.msra.mxu0 0
    %4553 = vmatprep.subr.bf16.mxu0 0
    %4554 = vmatpush1.bf16.msra.mxu0 0
    %4555 = vmatprep.subr.bf16.mxu0 0
    %4556 = vmatpush1.bf16.msra.mxu0 0
    %4557 = vmatprep.subr.bf16.mxu0 0
    %4558 = vmatpush1.bf16.msra.mxu0 0
    %4559 = vmatprep.subr.bf16.mxu0 0
    %4560 = vmatpush1.bf16.msra.mxu0 0
    %4561 = vmatprep.subr.bf16.mxu0 0
    %4562 = vmatpush1.bf16.msra.mxu0 0
    %4563 = vmatprep.subr.bf16.mxu0 0
    %4564 = vmatpush1.bf16.msra.mxu0 0
    %4565 = vmatprep.subr.bf16.mxu0 0
    %4566 = vmatpush1.bf16.msra.mxu0 0
    %4567 = vmatprep.subr.bf16.mxu0 0
    %4568 = vmatpush1.bf16.msra.mxu0 0
    %4569 = vmatprep.subr.bf16.mxu0 0
    %4570 = vmatpush1.bf16.msra.mxu0 0
    %4571 = vmatprep.subr.bf16.mxu0 0
    %4572 = vmatpush1.bf16.msra.mxu0 0
    %4573 = vmatprep.subr.bf16.mxu0 0
    %4574 = vmatpush1.bf16.msra.mxu0 0
    %4575 = vmatprep.subr.bf16.mxu0 0
    %4576 = vmatpush1.bf16.msra.mxu0 0
    %4577 = vmatprep.subr.bf16.mxu0 0
    %4578 = vmatpush1.bf16.msra.mxu0 0
    %4579 = vmatprep.subr.bf16.mxu0 0
    %4580 = vmatpush1.bf16.msra.mxu0 0
    %4581 = vmatprep.mubr.bf16.mxu0 0
    %4582 = vmatmul.mubr.bf16.gmra.mrb[0].mxu0 %v4544
    %v4583 = vpop.f32.mrb[0].mxu0
    %v4584 = vadd.f32 0.0, %v4583
    %v4585 = vpop.f32.mrb[0].mxu0
    %v4586 = vpop.f32.mrb[0].mxu0
    %v4587 = vpop.f32.mrb[0].mxu0
    %4588 = vdwg.mxu0
    %4593 = vrot.lane.b32.xlu0 %v4056, 8
    %v4594 = vpop.permute.xlu0 %4593
    %4595 = vrot.lane.b32.xlu0 %v4104, 8
    %v4596 = vpop.permute.xlu0 %4595
    %4597 = vrot.lane.b32.xlu0 %v4152, 8
    %v4598 = vpop.permute.xlu0 %4597
    %4599 = vrot.lane.b32.xlu0 %v4200, 8
    %v4600 = vpop.permute.xlu0 %4599
    %4609 = vrot.lane.b32.xlu0 %v4248, 16
    %v4610 = vpop.permute.xlu0 %4609
    %4611 = vrot.lane.b32.xlu0 %v4296, 16
    %v4612 = vpop.permute.xlu0 %4611
    %4613 = vrot.lane.b32.xlu0 %v4344, 16
    %v4614 = vpop.permute.xlu0 %4613
    %4615 = vrot.lane.b32.xlu0 %v4392, 16
    %v4616 = vpop.permute.xlu0 %4615
    %4625 = vrot.lane.b32.xlu0 %v4440, 24
    %v4626 = vpop.permute.xlu0 %4625
    %4627 = vrot.lane.b32.xlu0 %v4488, 24
    %v4628 = vpop.permute.xlu0 %4627
    %4629 = vrot.lane.b32.xlu0 %v4536, 24
    %v4630 = vpop.permute.xlu0 %4629
    %4631 = vrot.lane.b32.xlu0 %v4584, 24
    %v4632 = vpop.permute.xlu0 %4631
    %v4637 = vsel %vm335, %v3864, %v4594
    %v4638 = vsel %vm335, %v3912, %v4596
    %v4639 = vsel %vm335, %v3960, %v4598
    %v4640 = vsel %vm335, %v4008, %v4600
    %v4641 = vsel %vm2154, %v4637, %v4610
    %v4642 = vsel %vm2154, %v4638, %v4612
    %v4643 = vsel %vm2154, %v4639, %v4614
    %v4644 = vsel %vm2154, %v4640, %v4616
    %v4645 = vsel %vm2159, %v4641, %v4626
    %v4646 = vsel %vm2159, %v4642, %v4628
    %v4647 = vsel %vm2159, %v4643, %v4630
    %v4648 = vsel %vm2159, %v4644, %v4632
    %v4649 = vpack.c.bf16 %v4646, %v4645
    %v4650 = vpack.c.bf16 %v4648, %v4647
    %s4651 = scalar_lea.vmem [#allocation5], 16
    %v4652 = vld [vmem:[%s4651] sm:$0xf]
    %v4653 = vld [vmem:[%s4651 + $0x4] sm:$0xf]
    %v4654 = vld [vmem:[%s4651 + $0x8] sm:$0xf]
    %v4655 = vld [vmem:[%s4651 + $0xc] sm:$0xf]
    %s4656 = scalar_lea.vmem %s7, 1
    %v4657 = vld [vmem:[%s4656] sm:$0x1]
    %v4659 = vlaneseq
    %v4660 = vshrl.u32 %v4659, 7
    %v4661 = vsub.s32 0, %v4660
    %v4662 = vrot.slane %v4657, %v4661
    %v4668 = vunpack.c.l.b16 %v4652
    %v4669 = vunpack.c.l.b16 %v4653
    %v4670 = vunpack.c.l.b16 %v4654
    %v4671 = vunpack.c.l.b16 %v4655
    %v4672 = vpack.c.b16 %v4669, %v4668
    %v4673 = vpack.c.b16 %v4671, %v4670
    %v4677 = vsel %vm110, %v4649, 0
    %v4680 = vsel %vm110, %v4650, 0
    %4682 = vmatprep.subr.bf16.mxu0 0
    %4683 = vmatpush1.bf16.msra.mxu0 %v4672
    %4684 = vmatprep.subr.bf16.mxu0 0
    %4685 = vmatpush1.bf16.msra.mxu0 %v4673
    %4686 = vmatprep.subr.bf16.mxu0 0
    %4687 = vmatpush1.bf16.msra.mxu0 0
    %4688 = vmatprep.subr.bf16.mxu0 0
    %4689 = vmatpush1.bf16.msra.mxu0 0
    %4690 = vmatprep.subr.bf16.mxu0 0
    %4691 = vmatpush1.bf16.msra.mxu0 0
    %4692 = vmatprep.subr.bf16.mxu0 0
    %4693 = vmatpush1.bf16.msra.mxu0 0
    %4694 = vmatprep.subr.bf16.mxu0 0
    %4695 = vmatpush1.bf16.msra.mxu0 0
    %4696 = vmatprep.subr.bf16.mxu0 0
    %4697 = vmatpush1.bf16.msra.mxu0 0
    %4698 = vmatprep.subr.bf16.mxu0 0
    %4699 = vmatpush1.bf16.msra.mxu0 0
    %4700 = vmatprep.subr.bf16.mxu0 0
    %4701 = vmatpush1.bf16.msra.mxu0 0
    %4702 = vmatprep.subr.bf16.mxu0 0
    %4703 = vmatpush1.bf16.msra.mxu0 0
    %4704 = vmatprep.subr.bf16.mxu0 0
    %4705 = vmatpush1.bf16.msra.mxu0 0
    %4706 = vmatprep.subr.bf16.mxu0 0
    %4707 = vmatpush1.bf16.msra.mxu0 0
    %4708 = vmatprep.subr.bf16.mxu0 0
    %4709 = vmatpush1.bf16.msra.mxu0 0
    %4710 = vmatprep.subr.bf16.mxu0 0
    %4711 = vmatpush1.bf16.msra.mxu0 0
    %4712 = vmatprep.subr.bf16.mxu0 0
    %4713 = vmatpush1.bf16.msra.mxu0 0
    %4714 = vmatprep.mubr.bf16.mxu0 0
    %4715 = vmatmul.mubr.bf16.gmra.mrb[0].mxu0 %v4677
    %v4716 = vpop.f32.mrb[0].mxu0
    %v4717 = vadd.f32 %v4662, %v4716
    %v4718 = vpop.f32.mrb[0].mxu0
    %v4719 = vpop.f32.mrb[0].mxu0
    %v4720 = vadd.f32 %v4662, %v4719
    %v4721 = vpop.f32.mrb[0].mxu0
    %4722 = vmatprep.mubr.bf16.mxu0 0
    %4723 = vmatmul.mubr.bf16.gmra.mrb[0].mxu0 %v4680
    %v4724 = vpop.f32.mrb[0].mxu0
    %v4725 = vadd.f32 %v4662, %v4724
    %v4726 = vpop.f32.mrb[0].mxu0
    %v4727 = vpop.f32.mrb[0].mxu0
    %v4728 = vadd.f32 %v4662, %v4727
    %v4729 = vpop.f32.mrb[0].mxu0
    %4730 = vdwg.mxu0
    %v4733 = vrot.slane %v4720, 4
    %v4734 = vrot.slane %v4728, 4
    %v4739 = vrot.slane %v4717, 4
    %v4740 = vsel %vm1338, %v4739, %v4733
    %v4741 = vrot.slane %v4725, 4
    %v4742 = vsel %vm1338, %v4741, %v4734
    %v4747 = vsel %vm1338, %v4733, %v4739
    %v4748 = vsel %vm1338, %v4734, %v4741
    %v4749 = vadd.f32 %v2572, %v4747
    %v4750 = vadd.f32 %v2573, %v4740
    %v4751 = vadd.f32 %v2574, %v4748
    %v4752 = vadd.f32 %v2575, %v4742
    %s4753 = scalar_lea.vmem %s8, 1
    %v4754 = vld [vmem:[%s4753] sm:$0x1]
    %s4755 = scalar_lea.vmem %s9, 1
    %v4756 = vld [vmem:[%s4755] sm:$0x1]
    %v4757 = vsel %vm110, %v4749, 0.0
    %4758 = vadd.xlane.f32.xlu0 %v4757
    %v4759 = vpop.xlane.xlu0 %4758
    %v4760 = vsel %vm110, %v4750, 0.0
    %4761 = vadd.xlane.f32.xlu0 %v4760
    %v4762 = vpop.xlane.xlu0 %4761
    %v4763 = vsel %vm110, %v4751, 0.0
    %4764 = vadd.xlane.f32.xlu0 %v4763
    %v4765 = vpop.xlane.xlu0 %4764
    %v4766 = vsel %vm110, %v4752, 0.0
    %4767 = vadd.xlane.f32.xlu0 %v4766
    %v4768 = vpop.xlane.xlu0 %4767
    %v4769 = vmul.f32 %v4759, %v123
    %v4770 = vmul.f32 %v4762, %v123
    %v4771 = vmul.f32 %v4765, %v123
    %v4772 = vmul.f32 %v4768, %v123
    %v4773 = vmul.f32 %v4749, %v4749
    %v4774 = vmul.f32 %v4750, %v4750
    %v4775 = vmul.f32 %v4751, %v4751
    %v4776 = vmul.f32 %v4752, %v4752
    %v4777 = vsel %vm110, %v4773, 0.0
    %4778 = vadd.xlane.f32.xlu0 %v4777
    %v4779 = vpop.xlane.xlu0 %4778
    %v4780 = vsel %vm110, %v4774, 0.0
    %4781 = vadd.xlane.f32.xlu0 %v4780
    %v4782 = vpop.xlane.xlu0 %4781
    %v4783 = vsel %vm110, %v4775, 0.0
    %4784 = vadd.xlane.f32.xlu0 %v4783
    %v4785 = vpop.xlane.xlu0 %4784
    %v4786 = vsel %vm110, %v4776, 0.0
    %4787 = vadd.xlane.f32.xlu0 %v4786
    %v4788 = vpop.xlane.xlu0 %4787
    %v4789 = vmul.f32 %v4779, %v123
    %v4790 = vmul.f32 %v4782, %v123
    %v4791 = vmul.f32 %v4785, %v123
    %v4792 = vmul.f32 %v4788, %v123
    %v4793 = vmul.f32 %v4769, %v4769
    %v4794 = vmul.f32 %v4770, %v4770
    %v4795 = vmul.f32 %v4771, %v4771
    %v4796 = vmul.f32 %v4772, %v4772
    %v4797 = vsub.f32 %v4789, %v4793
    %v4798 = vsub.f32 %v4790, %v4794
    %v4799 = vsub.f32 %v4791, %v4795
    %v4800 = vsub.f32 %v4792, %v4796
    %v4801 = vmax.f32 %v4797, 0.0
    %v4802 = vmax.f32 %v4798, 0.0
    %v4803 = vmax.f32 %v4799, 0.0
    %v4804 = vmax.f32 %v4800, 0.0
    %v4805 = vsub.f32 %v4749, %v4769
    %v4806 = vsub.f32 %v4750, %v4770
    %v4807 = vsub.f32 %v4751, %v4771
    %v4808 = vsub.f32 %v4752, %v4772
    %v4809 = vadd.f32 %v4801, 1e-05
    %v4810 = vadd.f32 %v4802, 1e-05
    %v4811 = vadd.f32 %v4803, 1e-05
    %v4812 = vadd.f32 %v4804, 1e-05
    %v4813 = vrsqrt.pop %v4809
    %v4814 = vrsqrt.pop %v4810
    %v4815 = vrsqrt.pop %v4811
    %v4816 = vrsqrt.pop %v4812
    %v4817 = vmul.f32 %v4805, %v4813
    %v4818 = vmul.f32 %v4806, %v4814
    %v4819 = vmul.f32 %v4807, %v4815
    %v4820 = vmul.f32 %v4808, %v4816
    %v4822 = vlaneseq
    %v4823 = vshrl.u32 %v4822, 7
    %v4824 = vsub.s32 0, %v4823
    %v4825 = vrot.slane %v4754, %v4824
    %v4827 = vmul.f32 %v4817, %v4825
    %v4828 = vmul.f32 %v4818, %v4825
    %v4829 = vmul.f32 %v4819, %v4825
    %v4830 = vmul.f32 %v4820, %v4825
    %v4832 = vlaneseq
    %v4833 = vshrl.u32 %v4832, 7
    %v4834 = vsub.s32 0, %v4833
    %v4835 = vrot.slane %v4756, %v4834
    %v4837 = vadd.f32 %v4827, %v4835
    %v4838 = vadd.f32 %v4828, %v4835
    %v4839 = vadd.f32 %v4829, %v4835
    %v4840 = vadd.f32 %v4830, %v4835
    %v4841 = vpack.c.bf16 %v4838, %v4837
    %v4842 = vpack.c.bf16 %v4840, %v4839
    %s4843 = scalar_lea.vmem [#allocation7], 16
    %v4844 = vld [vmem:[%s4843] sm:$0xf]
    %v4845 = vld [vmem:[%s4843 + $0x4] sm:$0xf]
    %v4846 = vld [vmem:[%s4843 + $0x8] sm:$0xf]
    %v4847 = vld [vmem:[%s4843 + $0xc] sm:$0xf]
    %s4848 = scalar_lea.vmem [#allocation8], 1
    %v4849 = vld [vmem:[%s4848] sm:$0x1]
    %v4851 = vlaneseq
    %v4852 = vshrl.u32 %v4851, 7
    %v4853 = vsub.s32 0, %v4852
    %v4854 = vrot.slane %v4849, %v4853
    %v4860 = vunpack.c.l.b16 %v4844
    %v4861 = vunpack.c.l.b16 %v4845
    %v4862 = vunpack.c.l.b16 %v4846
    %v4863 = vunpack.c.l.b16 %v4847
    %v4864 = vpack.c.b16 %v4861, %v4860
    %v4865 = vpack.c.b16 %v4863, %v4862
    %v4869 = vsel %vm110, %v4841, 0
    %v4872 = vsel %vm110, %v4842, 0
    %4874 = vmatprep.subr.bf16.mxu0 0
    %4875 = vmatpush1.bf16.msra.mxu0 %v4864
    %4876 = vmatprep.subr.bf16.mxu0 0
    %4877 = vmatpush1.bf16.msra.mxu0 %v4865
    %4878 = vmatprep.subr.bf16.mxu0 0
    %4879 = vmatpush1.bf16.msra.mxu0 0
    %4880 = vmatprep.subr.bf16.mxu0 0
    %4881 = vmatpush1.bf16.msra.mxu0 0
    %4882 = vmatprep.subr.bf16.mxu0 0
    %4883 = vmatpush1.bf16.msra.mxu0 0
    %4884 = vmatprep.subr.bf16.mxu0 0
    %4885 = vmatpush1.bf16.msra.mxu0 0
    %4886 = vmatprep.subr.bf16.mxu0 0
    %4887 = vmatpush1.bf16.msra.mxu0 0
    %4888 = vmatprep.subr.bf16.mxu0 0
    %4889 = vmatpush1.bf16.msra.mxu0 0
    %4890 = vmatprep.subr.bf16.mxu0 0
    %4891 = vmatpush1.bf16.msra.mxu0 0
    %4892 = vmatprep.subr.bf16.mxu0 0
    %4893 = vmatpush1.bf16.msra.mxu0 0
    %4894 = vmatprep.subr.bf16.mxu0 0
    %4895 = vmatpush1.bf16.msra.mxu0 0
    %4896 = vmatprep.subr.bf16.mxu0 0
    %4897 = vmatpush1.bf16.msra.mxu0 0
    %4898 = vmatprep.subr.bf16.mxu0 0
    %4899 = vmatpush1.bf16.msra.mxu0 0
    %4900 = vmatprep.subr.bf16.mxu0 0
    %4901 = vmatpush1.bf16.msra.mxu0 0
    %4902 = vmatprep.subr.bf16.mxu0 0
    %4903 = vmatpush1.bf16.msra.mxu0 0
    %4904 = vmatprep.subr.bf16.mxu0 0
    %4905 = vmatpush1.bf16.msra.mxu0 0
    %4906 = vmatprep.mubr.bf16.mxu0 0
    %4907 = vmatmul.mubr.bf16.gmra.mrb[0].mxu0 %v4869
    %v4908 = vpop.f32.mrb[0].mxu0
    %v4909 = vadd.f32 %v4854, %v4908
    %v4910 = vpop.f32.mrb[0].mxu0
    %v4911 = vpop.f32.mrb[0].mxu0
    %v4912 = vadd.f32 %v4854, %v4911
    %v4913 = vpop.f32.mrb[0].mxu0
    %4914 = vmatprep.mubr.bf16.mxu0 0
    %4915 = vmatmul.mubr.bf16.gmra.mrb[0].mxu0 %v4872
    %v4916 = vpop.f32.mrb[0].mxu0
    %v4917 = vadd.f32 %v4854, %v4916
    %v4918 = vpop.f32.mrb[0].mxu0
    %v4919 = vpop.f32.mrb[0].mxu0
    %v4920 = vadd.f32 %v4854, %v4919
    %v4921 = vpop.f32.mrb[0].mxu0
    %4922 = vdwg.mxu0
    %v4923 = vmul.f32 %v4909, 0.5
    %v4924 = vmul.f32 %v4912, 0.5
    %v4925 = vmul.f32 %v4917, 0.5
    %v4926 = vmul.f32 %v4920, 0.5
    %v4927 = vmul.f32 %v4909, 0.044715
    %v4928 = vmul.f32 %v4912, 0.044715
    %v4929 = vmul.f32 %v4917, 0.044715
    %v4930 = vmul.f32 %v4920, 0.044715
    %v4931 = vmul.f32 %v4927, %v4909
    %v4932 = vmul.f32 %v4928, %v4912
    %v4933 = vmul.f32 %v4929, %v4917
    %v4934 = vmul.f32 %v4930, %v4920
    %v4935 = vmul.f32 %v4931, %v4909
    %v4936 = vmul.f32 %v4932, %v4912
    %v4937 = vmul.f32 %v4933, %v4917
    %v4938 = vmul.f32 %v4934, %v4920
    %v4939 = vadd.f32 %v4909, %v4935
    %v4940 = vadd.f32 %v4912, %v4936
    %v4941 = vadd.f32 %v4917, %v4937
    %v4942 = vadd.f32 %v4920, %v4938
    %v4943 = vmul.f32 %v4939, 0.7978846
    %v4944 = vmul.f32 %v4940, 0.7978846
    %v4945 = vmul.f32 %v4941, 0.7978846
    %v4946 = vmul.f32 %v4942, 0.7978846
    %v4947 = vtanh.pop %v4943
    %v4948 = vtanh.pop %v4944
    %v4949 = vtanh.pop %v4945
    %v4950 = vtanh.pop %v4946
    %v4951 = vadd.f32 %v4947, 1.0
    %v4952 = vadd.f32 %v4948, 1.0
    %v4953 = vadd.f32 %v4949, 1.0
    %v4954 = vadd.f32 %v4950, 1.0
    %v4955 = vmul.f32 %v4923, %v4951
    %v4956 = vmul.f32 %v4924, %v4952
    %v4957 = vmul.f32 %v4925, %v4953
    %v4958 = vmul.f32 %v4926, %v4954
    %v4959 = vpack.c.bf16 %v4956, %v4955
    %v4960 = vpack.c.bf16 %v4958, %v4957
    %s4961 = scalar_lea.vmem %s12, 64
    %v4962 = vld [vmem:[%s4961] sm:$0xf]
    %v4963 = vld [vmem:[%s4961 + $0x4] sm:$0xf]
    %v4964 = vld [vmem:[%s4961 + $0x8] sm:$0xf]
    %v4965 = vld [vmem:[%s4961 + $0xc] sm:$0xf]
    %v4966 = vld [vmem:[%s4961 + $0x10] sm:$0xf]
    %v4967 = vld [vmem:[%s4961 + $0x14] sm:$0xf]
    %v4968 = vld [vmem:[%s4961 + $0x18] sm:$0xf]
    %v4969 = vld [vmem:[%s4961 + $0x1c] sm:$0xf]
    %v4970 = vld [vmem:[%s4961 + $0x20] sm:$0xf]
    %v4971 = vld [vmem:[%s4961 + $0x24] sm:$0xf]
    %v4972 = vld [vmem:[%s4961 + $0x28] sm:$0xf]
    %v4973 = vld [vmem:[%s4961 + $0x2c] sm:$0xf]
    %v4974 = vld [vmem:[%s4961 + $0x30] sm:$0xf]
    %v4975 = vld [vmem:[%s4961 + $0x34] sm:$0xf]
    %v4976 = vld [vmem:[%s4961 + $0x38] sm:$0xf]
    %v4977 = vld [vmem:[%s4961 + $0x3c] sm:$0xf]
    %s4978 = scalar_lea.vmem %s13, 1
    %v4979 = vld [vmem:[%s4978] sm:$0x1]
    %v4981 = vlaneseq
    %v4982 = vshrl.u32 %v4981, 7
    %v4983 = vsub.s32 0, %v4982
    %v4984 = vrot.slane %v4979, %v4983
    %v5002 = vunpack.c.l.b16 %v4962
    %v5003 = vunpack.c.l.b16 %v4963
    %v5004 = vunpack.c.l.b16 %v4964
    %v5005 = vunpack.c.l.b16 %v4965
    %v5006 = vunpack.c.l.b16 %v4966
    %v5007 = vunpack.c.l.b16 %v4967
    %v5008 = vunpack.c.l.b16 %v4968
    %v5009 = vunpack.c.l.b16 %v4969
    %v5010 = vunpack.c.l.b16 %v4970
    %v5011 = vunpack.c.l.b16 %v4971
    %v5012 = vunpack.c.l.b16 %v4972
    %v5013 = vunpack.c.l.b16 %v4973
    %v5014 = vunpack.c.l.b16 %v4974
    %v5015 = vunpack.c.l.b16 %v4975
    %v5016 = vunpack.c.l.b16 %v4976
    %v5017 = vunpack.c.l.b16 %v4977
    %v5018 = vpack.c.b16 %v5003, %v5002
    %v5019 = vpack.c.b16 %v5005, %v5004
    %v5020 = vpack.c.b16 %v5007, %v5006
    %v5021 = vpack.c.b16 %v5009, %v5008
    %v5022 = vpack.c.b16 %v5011, %v5010
    %v5023 = vpack.c.b16 %v5013, %v5012
    %v5024 = vpack.c.b16 %v5015, %v5014
    %v5025 = vpack.c.b16 %v5017, %v5016
    %5034 = vmatprep.subr.bf16.mxu0 0
    %5035 = vmatpush1.bf16.msra.mxu0 %v5018
    %5036 = vmatprep.subr.bf16.mxu0 0
    %5037 = vmatpush1.bf16.msra.mxu0 %v5019
    %5038 = vmatprep.subr.bf16.mxu0 0
    %5039 = vmatpush1.bf16.msra.mxu0 %v5020
    %5040 = vmatprep.subr.bf16.mxu0 0
    %5041 = vmatpush1.bf16.msra.mxu0 %v5021
    %5042 = vmatprep.subr.bf16.mxu0 0
    %5043 = vmatpush1.bf16.msra.mxu0 %v5022
    %5044 = vmatprep.subr.bf16.mxu0 0
    %5045 = vmatpush1.bf16.msra.mxu0 %v5023
    %5046 = vmatprep.subr.bf16.mxu0 0
    %5047 = vmatpush1.bf16.msra.mxu0 %v5024
    %5048 = vmatprep.subr.bf16.mxu0 0
    %5049 = vmatpush1.bf16.msra.mxu0 %v5025
    %5050 = vmatprep.subr.bf16.mxu0 0
    %5051 = vmatpush1.bf16.msra.mxu0 0
    %5052 = vmatprep.subr.bf16.mxu0 0
    %5053 = vmatpush1.bf16.msra.mxu0 0
    %5054 = vmatprep.subr.bf16.mxu0 0
    %5055 = vmatpush1.bf16.msra.mxu0 0
    %5056 = vmatprep.subr.bf16.mxu0 0
    %5057 = vmatpush1.bf16.msra.mxu0 0
    %5058 = vmatprep.subr.bf16.mxu0 0
    %5059 = vmatpush1.bf16.msra.mxu0 0
    %5060 = vmatprep.subr.bf16.mxu0 0
    %5061 = vmatpush1.bf16.msra.mxu0 0
    %5062 = vmatprep.subr.bf16.mxu0 0
    %5063 = vmatpush1.bf16.msra.mxu0 0
    %5064 = vmatprep.subr.bf16.mxu0 0
    %5065 = vmatpush1.bf16.msra.mxu0 0
    %5066 = vmatprep.mubr.bf16.mxu0 0
    %5067 = vmatmul.mubr.bf16.gmra.mrb[0].mxu0 %v4959
    %v5068 = vpop.f32.mrb[0].mxu0
    %v5069 = vadd.f32 %v4984, %v5068
    %v5070 = vpop.f32.mrb[0].mxu0
    %v5071 = vpop.f32.mrb[0].mxu0
    %v5072 = vadd.f32 %v4984, %v5071
    %v5073 = vpop.f32.mrb[0].mxu0
    %5074 = vmatprep.mubr.bf16.mxu0 0
    %5075 = vmatmul.mubr.bf16.gmra.mrb[0].mxu0 %v4960
    %v5076 = vpop.f32.mrb[0].mxu0
    %v5077 = vadd.f32 %v4984, %v5076
    %v5078 = vpop.f32.mrb[0].mxu0
    %v5079 = vpop.f32.mrb[0].mxu0
    %v5080 = vadd.f32 %v4984, %v5079
    %v5081 = vpop.f32.mrb[0].mxu0
    %5082 = vdwg.mxu0
    %v5083 = vadd.f32 %v4749, %v5069
    %v5084 = vadd.f32 %v4750, %v5072
    %v5085 = vadd.f32 %v4751, %v5077
    %v5086 = vadd.f32 %v4752, %v5080
    %5087 = vst.msk [vmem:[#allocation10] sm:$0xff] %vm110, %v5083
    %5088 = vst.msk [vmem:[#allocation10 + $0x8] sm:$0xff] %vm110, %v5084
    %5089 = vst.msk [vmem:[#allocation10 + $0x10] sm:$0xff] %vm110, %v5085
    %5090 = vst.msk [vmem:[#allocation10 + $0x18] sm:$0xff] %vm110, %v5086
    // Predicated region
    $region74: #{tpu_custom_call.1} parent=1 // pred_check
      _
    $region75: #{tpu_custom_call.1} parent=1 // pred_check_branch
      %5092 = sbr.rel (0) target = $region77
    $region76: #{tpu_custom_call.1} parent=1 // pred_region
      %s5094 = ssub.s32 512, 512
      %5095 = vsyncadd [#allocation4], %s5094
      %s5096 = sshll.u32 [#allocation10], 4
      %s5097 = int_to_ptr.vmem [resolvable:$true] %s5096
      %5102 = dma.vmem_to_hbm [thread:$0]  %s5097, 512, %s14, [#allocation4], 128, 128, 8
    $region77: #{tpu_custom_call.1} parent=1 // pred_fallthru
      _
    // Predicated region
    $region78: #{tpu_custom_call.1} parent=1 // pred_check
      _
    $region79: #{tpu_custom_call.1} parent=1 // pred_check_branch
      %5104 = sbr.rel (0) target = $region81
    $region80: #{tpu_custom_call.1} parent=1 // pred_region
      %5105 = dma.done [#allocation4], 512
    $region81: #{tpu_custom_call.1} parent=1 // pred_fallthru
      _
    %5106 = vsyncpa [#allocation3], 1
    %5107 = vsyncpa [#allocation6], 1
    %5108 = vsyncpa [#allocation9], 1
    %5109 = vsyncpa [#allocation4], 1

</llo_original>
